<compile_context>
chip_gen: v5e
topology: v5e:2x2
jax: 0.10.0
libtpu: 0.0.40
codegen_flags: <defaults>
</compile_context>

<pallas_src>
import math

import numpy as np
import jax
import jax.numpy as jnp
from jax.experimental import pallas as pl
from jax.experimental.pallas import tpu as pltpu


# Small working sets everywhere; 32 MiB is ample and is legal on every
# generation (v5e/v6e: 128 MiB physical, v7x: 64 MiB physical VMEM).
_VMEM_LIMIT_BYTES = 32 * 1024 * 1024

_SQRT1_2 = 0.7071067811865476


# ----------------------------------------------------------------------------
# In-kernel math helpers
# ----------------------------------------------------------------------------
def _erf_approx(x):
    # Abramowitz & Stegun 7.1.26 rational approximation, |err| < 1.5e-7,
    # i.e. matches the erf-based ("exact") PyTorch F.gelu to fp32 working
    # precision while only needing exp (EUP-supported) inside the kernel.
    a1, a2, a3, a4, a5 = (0.254829592, -0.284496736, 1.421413741,
                          -1.453152027, 1.061405429)
    p = 0.3275911
    sgn = jnp.where(x >= 0.0, 1.0, -1.0)
    z = jnp.abs(x)
    t = 1.0 / (1.0 + p * z)
    poly = ((((a5 * t + a4) * t + a3) * t + a2) * t + a1) * t
    return sgn * (1.0 - poly * jnp.exp(-z * z))


def _gelu_exact(x):
    # PyTorch F.gelu default: 0.5 * x * (1 + erf(x / sqrt(2)))
    return 0.5 * x * (1.0 + _erf_approx(x * _SQRT1_2))


def _mm(a_f32, w_bf16):
    # bf16 operands, f32 accumulation on the MXU.
    return jnp.dot(a_f32.astype(jnp.bfloat16), w_bf16,
                   preferred_element_type=jnp.float32)


def _spatial_conv(a_f32, shifts_ref, w_ref):
    """kxk conv on a flattened (HW, Cin) activation, taps built in-kernel.

    shifts_ref : (T, HW, HW) bf16 0/1 select+border-mask matrices
    w_ref      : (T, Cin, Cout) bf16 per-tap weights
    Returns (HW, Cout) f32 (no bias).
    """
    num_taps = w_ref.shape[0]
    center = num_taps // 2           # (dy, dx) == (0, 0): identity, skip S_t
    a = a_f32.astype(jnp.bfloat16)
    acc = None
    for t in range(num_taps):        # static unroll, T <= 9
        if t == center:
            shifted = a
        else:
            # 0/1 matrix selects neighbour pixel (exact in bf16); HW-deep
            # contraction keeps the MXU well filled even at tiny Cin.
            shifted = jnp.dot(shifts_ref[t], a,
                              preferred_element_type=jnp.float32
                              ).astype(jnp.bfloat16)
        y = jnp.dot(shifted, w_ref[t], preferred_element_type=jnp.float32)
        acc = y if acc is None else acc + y
    return acc


# ----------------------------------------------------------------------------
# Pallas kernels
# ----------------------------------------------------------------------------
def _resblock_kernel(x_ref, sh_ref, w1_ref, b1_ref, w2_ref, b2_ref,
                     w3_ref, b3_ref, w4_ref, b4_ref, o_ref):
    # x_ref/o_ref: (1, HW, Cin) blocks; weights/shifts are whole small arrays.
    x = x_ref[0].astype(jnp.float32)                     # (HW, Cin)
    a = _gelu_exact(x)
    h = _mm(a, w1_ref[...]) + b1_ref[...]                # c1 (1x1)
    a = _gelu_exact(h)
    h = _spatial_conv(a, sh_ref, w2_ref) + b2_ref[...]   # c2 (kxk)
    a = _gelu_exact(h)
    h = _spatial_conv(a, sh_ref, w3_ref) + b3_ref[...]   # c3 (kxk)
    a = _gelu_exact(h)
    h = _mm(a, w4_ref[...]) + b4_ref[...]                # c4 (1x1)
    o_ref[0] = (x + h).astype(o_ref.dtype)               # residual add


def _last_conv_kernel(x_ref, sh_ref, w_ref, b_ref, o_ref):
    # 3x3 conv + bias + sigmoid, grid over batch.
    x = x_ref[0].astype(jnp.float32)                     # (HW, Cin)
    y = _spatial_conv(x, sh_ref, w_ref) + b_ref[...]
    o_ref[0] = jax.nn.sigmoid(y).astype(o_ref.dtype)


def _pointwise_kernel(x_ref, w_ref, b_ref, o_ref):
    # 1x1 conv over a tile of pixels.
    y = _mm(x_ref[...].astype(jnp.float32), w_ref[...]) + b_ref[...]
    o_ref[...] = y.astype(o_ref.dtype)


# ----------------------------------------------------------------------------
# Glue: shift/border-mask matrices (built once, compile-time constants)
# ----------------------------------------------------------------------------
def _shift_matrices_np(h, w, ksize):
    hw = h * w
    if ksize == 1:
        return np.eye(hw, dtype=np.float32)[None, :, :]
    assert ksize == 3
    p = np.arange(hw)
    r, c = p // w, p % w
    mats = []
    for dy in (-1, 0, 1):            # dy = ky - 1  (ky-major, kx-minor order)
        for dx in (-1, 0, 1):
            rr, cc = r + dy, c + dx
            valid = (rr >= 0) & (rr < h) & (cc >= 0) & (cc < w)
            q = np.clip(rr, 0, h - 1) * w + np.clip(cc, 0, w - 1)
            m = np.zeros((hw, hw), np.float32)
            m[p[valid], q[valid]] = 1.0
            mats.append(m)
    return np.stack(mats, axis=0)    # (9, HW, HW)


def _compiler_params():
    return pltpu.CompilerParams(
        dimension_semantics=("parallel",),
        vmem_limit_bytes=_VMEM_LIMIT_BYTES,
    )


# ----------------------------------------------------------------------------
# Host wrappers around pallas_call
# ----------------------------------------------------------------------------
def resblock_pallas(x_nhwc, p):
    b, h, w, cin = x_nhwc.shape
    hw = h * w
    mid = p["c1"]["w"].shape[-1]
    ksize = p["c2"]["ksize"]
    shifts = jnp.asarray(_shift_matrices_np(h, w, ksize), dtype=jnp.bfloat16)
    t = shifts.shape[0]

    x_flat = x_nhwc.reshape(b, hw, cin)
    bf = lambda a: a.astype(jnp.bfloat16)
    args = (
        x_flat, shifts,
        bf(p["c1"]["w"][0]), p["c1"]["b"].reshape(1, -1),
        bf(p["c2"]["w"]),    p["c2"]["b"].reshape(1, -1),
        bf(p["c3"]["w"]),    p["c3"]["b"].reshape(1, -1),
        bf(p["c4"]["w"][0]), p["c4"]["b"].reshape(1, -1),
    )
    in_specs = [
        pl.BlockSpec((1, hw, cin), lambda i: (i, 0, 0)),    # x
        pl.BlockSpec((t, hw, hw), lambda i: (0, 0, 0)),     # shift mats
        pl.BlockSpec((cin, mid), lambda i: (0, 0)),         # w1
        pl.BlockSpec((1, mid), lambda i: (0, 0)),           # b1
        pl.BlockSpec((t, mid, mid), lambda i: (0, 0, 0)),   # w2
        pl.BlockSpec((1, mid), lambda i: (0, 0)),           # b2
        pl.BlockSpec((t, mid, mid), lambda i: (0, 0, 0)),   # w3
        pl.BlockSpec((1, mid), lambda i: (0, 0)),           # b3
        pl.BlockSpec((mid, cin), lambda i: (0, 0)),         # w4
        pl.BlockSpec((1, cin), lambda i: (0, 0)),           # b4
    ]
    out = pl.pallas_call(
        _resblock_kernel,
        out_shape=jax.ShapeDtypeStruct((b, hw, cin), jnp.float32),
        grid=(b,),
        in_specs=in_specs,
        out_specs=pl.BlockSpec((1, hw, cin), lambda i: (i, 0, 0)),
        compiler_params=_compiler_params(),
    )(*args)
    return out.reshape(b, h, w, cin)


def conv1x1_pallas(x_nhwc, p):
    b, h, w, cin = x_nhwc.shape
    cout = p["w"].shape[-1]
    n = b * h * w
    x_flat = x_nhwc.reshape(n, cin)

    tn = min(n, 512)                       # 512-row pixel tiles when large
    n_pad = pl.cdiv(n, tn) * tn
    if n_pad != n:
        x_flat = jnp.pad(x_flat, ((0, n_pad - n), (0, 0)))

    out = pl.pallas_call(
        _pointwise_kernel,
        out_shape=jax.ShapeDtypeStruct((n_pad, cout), jnp.float32),
        grid=(n_pad // tn,),
        in_specs=[
            pl.BlockSpec((tn, cin), lambda i: (i, 0)),
            pl.BlockSpec((cin, cout), lambda i: (0, 0)),
            pl.BlockSpec((1, cout), lambda i: (0, 0)),
        ],
        out_specs=pl.BlockSpec((tn, cout), lambda i: (i, 0)),
        compiler_params=_compiler_params(),
    )(x_flat, p["w"][0].astype(jnp.bfloat16), p["b"].reshape(1, -1))
    return out[:n].reshape(b, h, w, cout)


def last_conv_pallas(x_nhwc, p):
    b, h, w, cin = x_nhwc.shape
    hw = h * w
    cout = p["w"].shape[-1]
    shifts = jnp.asarray(_shift_matrices_np(h, w, p["ksize"]),
                         dtype=jnp.bfloat16)
    t = shifts.shape[0]
    x_flat = x_nhwc.reshape(b, hw, cin)
    out = pl.pallas_call(
        _last_conv_kernel,
        out_shape=jax.ShapeDtypeStruct((b, hw, cout), jnp.float32),
        grid=(b,),
        in_specs=[
            pl.BlockSpec((1, hw, cin), lambda i: (i, 0, 0)),
            pl.BlockSpec((t, hw, hw), lambda i: (0, 0, 0)),
            pl.BlockSpec((t, cin, cout), lambda i: (0, 0, 0)),
            pl.BlockSpec((1, cout), lambda i: (0, 0)),
        ],
        out_specs=pl.BlockSpec((1, hw, cout), lambda i: (i, 0, 0)),
        compiler_params=_compiler_params(),
    )(x_flat, shifts, p["w"].astype(jnp.bfloat16), p["b"].reshape(1, -1))
    return out.reshape(b, h, w, cout)


# ----------------------------------------------------------------------------
# Decoder construction (mirrors the PyTorch __init__ exactly)
# ----------------------------------------------------------------------------
def parse_channel_string(s):
    cfg = {}
    for ss in s.split(","):
        res, c = ss.split(":")
        cfg[int(res)] = int(c)
    return cfg


def parse_layer_string(s):
    layers = []
    for ss in s.split(","):
        if "x" in ss:
            res, num = ss.split("x")
            layers += [(int(res), None) for _ in range(int(num))]
        elif "u" in ss:
            res, mixin = [int(a) for a in ss.split("u")]
            layers.append((res, mixin))
        elif "d" in ss:
            res, down = [int(a) for a in ss.split("d")]
            layers.append((res, down))
        elif "t" in ss:
            r1, r2 = [int(a) for a in ss.split("t")]
            layers.append(((r1, r2), None))
        else:
            layers.append((int(ss), None))
    return layers


def init_conv(key, cin, cout, ksize, *, zero_bias=True, zero_weights=False,
              use_bias=True):
    # Deterministic synthetic init (PyTorch-like uniform(-1/sqrt(fan_in), .)).
    # NOTE: weights are stored as (kH*kW, Cin, Cout) with ky-major / kx-minor
    # tap order.  To load real PyTorch Conv2d weights (OIHW) use:
    #   w_pallas = w_torch.permute(2, 3, 1, 0).reshape(kH * kW, Cin, Cout)
    fan_in = cin * ksize * ksize
    bound = 1.0 / math.sqrt(fan_in)
    kw, kb = jax.random.split(key)
    w = jax.random.uniform(kw, (ksize * ksize, cin, cout), jnp.float32,
                           -bound, bound)
    if zero_weights:
        w = jnp.zeros_like(w)
    if use_bias and not zero_bias:
        b = jax.random.uniform(kb, (cout,), jnp.float32, -bound, bound)
    else:
        b = jnp.zeros((cout,), jnp.float32)   # zero_bias=True or bias=False
    return {"w": w, "b": b, "ksize": ksize}


def build_decoder(key, input_res, block_config_str, channel_config_str):
    block_config = parse_layer_string(block_config_str)
    channel_config = parse_channel_string(channel_config_str)
    blocks = []
    for res, up_rate in block_config:
        key, sub = jax.random.split(key)
        if isinstance(res, tuple):
            r1, r2 = res
            blocks.append(("conv1x1",
                           init_conv(sub, channel_config[r1],
                                     channel_config[r2], 1, use_bias=False)))
            continue
        if up_rate is not None:
            blocks.append(("upsample", up_rate))
            continue
        cin = channel_config[res]
        mid = int(0.5 * cin)
        k = 3 if res > 1 else 1
        k1, k2, k3, k4 = jax.random.split(sub, 4)
        rb = {"c1": init_conv(k1, cin, mid, 1),
              "c2": init_conv(k2, mid, mid, k),
              "c3": init_conv(k3, mid, mid, k),
              "c4": init_conv(k4, mid, cin, 1)}
        blocks.append(("resblock", rb))
    key, sub = jax.random.split(key)
    last = init_conv(sub, channel_config[input_res], 3, zero_bias=False,
                     ksize=3)
    return {"blocks": blocks, "last": last}


def decoder_forward_pallas(params, x_nchw):
    x = jnp.transpose(x_nchw, (0, 2, 3, 1))          # NCHW -> NHWC
    for kind, p in params["blocks"]:
        if kind == "resblock":
            x = resblock_pallas(x, p)
        elif kind == "conv1x1":
            x = conv1x1_pallas(x, p)
        elif kind == "upsample":
            # TODO(synk): fuse nearest-neighbour upsampling into the next
            # conv's pixel gather instead of a jnp.repeat HBM round trip.
            x = jnp.repeat(jnp.repeat(x, p, axis=1), p, axis=2)
    x = last_conv_pallas(x, params["last"])
    return jnp.transpose(x, (0, 3, 1, 2))             # NHWC -> NCHW


# ----------------------------------------------------------------------------
# Pure-JAX reference (erf-based exact GELU, f32 everywhere) for validation
# ----------------------------------------------------------------------------
def _extract_taps(x_nhwc, ksize):
    b, h, w, c = x_nhwc.shape
    if ksize == 1:
        return x_nhwc.reshape(1, b * h * w, c)
    assert ksize == 3
    xp = jnp.pad(x_nhwc, ((0, 0), (1, 1), (1, 1), (0, 0)))
    taps = []
    for ky in range(3):
        for kx in range(3):
            taps.append(xp[:, ky:ky + h, kx:kx + w, :].reshape(b * h * w, c))
    return jnp.stack(taps, axis=0)


def _conv_ref(x_nhwc, p, *, pre_gelu=False, residual=None, post_sigmoid=False):
    b, h, w, _ = x_nhwc.shape
    cout = p["w"].shape[-1]
    xt = _extract_taps(x_nhwc, p["ksize"])
    if pre_gelu:
        xt = jax.nn.gelu(xt, approximate=False)
    y = jnp.einsum("tnc,tcd->nd", xt, p["w"],
                   precision=jax.lax.Precision.HIGHEST) + p["b"]
    if residual is not None:
        y = y + residual.reshape(b * h * w, cout)
    if post_sigmoid:
        y = jax.nn.sigmoid(y)
    return y.reshape(b, h, w, cout)


def decoder_forward_ref(params, x_nchw):
    x = jnp.transpose(x_nchw, (0, 2, 3, 1))
    for kind, p in params["blocks"]:
        if kind == "resblock":
            h = _conv_ref(x, p["c1"], pre_gelu=True)
            h = _conv_ref(h, p["c2"], pre_gelu=True)
            h = _conv_ref(h, p["c3"], pre_gelu=True)
            x = _conv_ref(h, p["c4"], pre_gelu=True, residual=x)
        elif kind == "conv1x1":
            x = _conv_ref(x, p)
        elif kind == "upsample":
            x = jnp.repeat(jnp.repeat(x, p, axis=1), p, axis=2)
    x = _conv_ref(x, params["last"], post_sigmoid=True)
    return jnp.transpose(x, (0, 3, 1, 2))


# ----------------------------------------------------------------------------
if __name__ == "__main__":
    key = jax.random.PRNGKey(0)
    kx, kp = jax.random.split(key)

    # Decoder(input_res=8, "4x1,4t8,8u2,8x1", "4:16,8:8"):
    #   ResBlock(16,8,16) @4x4 -> 1x1 conv 16->8 -> nearest upsample x2
    #   -> ResBlock(8,4,8) @8x8 -> last 3x3 conv 8->3 -> sigmoid
    input_res = 8
    block_config_str = "4x1,4t8,8u2,8x1"
    channel_config_str = "4:16,8:8"

    params = build_decoder(kp, input_res, block_config_str, channel_config_str)

    B = 2
    x = jax.random.normal(kx, (B, 16, 4, 4), jnp.float32)   # NCHW input

    fwd = jax.jit(lambda inp: decoder_forward_pallas(params, inp))
    out = jax.block_until_ready(fwd(x))

    ref = jax.block_until_ready(decoder_forward_ref(params, x))

    assert out.shape == (B, 3, 8, 8), out.shape
    max_diff = float(jnp.max(jnp.abs(out - ref)))
    # Tolerance reflects bf16 MXU operands vs. the all-f32 reference.
    assert max_diff < 3e-2, f"Pallas vs reference mismatch: {max_diff}"
    print("KERNEL_OK")
</pallas_src>

<mosaic_0001>
module attributes {stable_mosaic.version = 11 : i64} {
  func.func @_resblock_kernel(%arg0: i32, %arg1: memref<1x16x16xf32, #tpu.memory_space<vmem>>, %arg2: memref<9x16x16xbf16, #tpu.memory_space<vmem>>, %arg3: memref<16x8xbf16, #tpu.memory_space<vmem>>, %arg4: memref<1x8xf32, #tpu.memory_space<vmem>>, %arg5: memref<9x8x8xbf16, #tpu.memory_space<vmem>>, %arg6: memref<1x8xf32, #tpu.memory_space<vmem>>, %arg7: memref<9x8x8xbf16, #tpu.memory_space<vmem>>, %arg8: memref<1x8xf32, #tpu.memory_space<vmem>>, %arg9: memref<8x16xbf16, #tpu.memory_space<vmem>>, %arg10: memref<1x16xf32, #tpu.memory_space<vmem>>, %arg11: memref<1x16x16xf32, #tpu.memory_space<vmem>>) attributes {dimension_semantics = [#tpu.dimension_semantics<parallel>], iteration_bounds = array<i64: 2>, scalar_prefetch = 0 : i64, scratch_operands = 0 : i64, tpu.core_type = #tpu.core_type<tc>, window_params = [{transform_indices = @transform_0, window_bounds = array<i64: 1, 16, 16>}, {pipeline_mode = #tpu.pipeline_mode<synchronous>, transform_indices = @transform_1, window_bounds = array<i64: 9, 16, 16>}, {pipeline_mode = #tpu.pipeline_mode<synchronous>, transform_indices = @transform_2, window_bounds = array<i64: 16, 8>}, {pipeline_mode = #tpu.pipeline_mode<synchronous>, transform_indices = @transform_3, window_bounds = array<i64: 1, 8>}, {pipeline_mode = #tpu.pipeline_mode<synchronous>, transform_indices = @transform_4, window_bounds = array<i64: 9, 8, 8>}, {pipeline_mode = #tpu.pipeline_mode<synchronous>, transform_indices = @transform_5, window_bounds = array<i64: 1, 8>}, {pipeline_mode = #tpu.pipeline_mode<synchronous>, transform_indices = @transform_6, window_bounds = array<i64: 9, 8, 8>}, {pipeline_mode = #tpu.pipeline_mode<synchronous>, transform_indices = @transform_7, window_bounds = array<i64: 1, 8>}, {pipeline_mode = #tpu.pipeline_mode<synchronous>, transform_indices = @transform_8, window_bounds = array<i64: 8, 16>}, {pipeline_mode = #tpu.pipeline_mode<synchronous>, transform_indices = @transform_9, window_bounds = array<i64: 1, 16>}, {transform_indices = @transform_10, window_bounds = array<i64: 1, 16, 16>}]} {
    %c0 = arith.constant 0 : index
    %c0_0 = arith.constant 0 : index
    %c0_1 = arith.constant 0 : index
    %0 = vector.load %arg1[%c0, %c0_0, %c0_1] : memref<1x16x16xf32, #tpu.memory_space<vmem>>, vector<1x16x16xf32>
    %1 = vector.shape_cast %0 : vector<1x16x16xf32> to vector<16x16xf32>
    %cst = arith.constant 5.000000e-01 : f32
    %2 = vector.broadcast %cst : f32 to vector<16x16xf32>
    %3 = arith.mulf %2, %1 : vector<16x16xf32>
    %cst_2 = arith.constant 0.707106769 : f32
    %4 = vector.broadcast %cst_2 : f32 to vector<16x16xf32>
    %5 = arith.mulf %1, %4 : vector<16x16xf32>
    %cst_3 = arith.constant 0.000000e+00 : f32
    %6 = vector.broadcast %cst_3 : f32 to vector<16x16xf32>
    %7 = arith.cmpf oge, %5, %6 : vector<16x16xf32>
    %cst_4 = arith.constant 1.000000e+00 : f32
    %cst_5 = arith.constant -1.000000e+00 : f32
    %8 = vector.broadcast %cst_4 : f32 to vector<16x16xf32>
    %9 = vector.broadcast %cst_5 : f32 to vector<16x16xf32>
    %10 = arith.select %7, %8, %9 : vector<16x16xi1>, vector<16x16xf32>
    %11 = math.absf %5 : vector<16x16xf32>
    %cst_6 = arith.constant 0.327591091 : f32
    %12 = vector.broadcast %cst_6 : f32 to vector<16x16xf32>
    %13 = arith.mulf %12, %11 : vector<16x16xf32>
    %cst_7 = arith.constant 1.000000e+00 : f32
    %14 = vector.broadcast %cst_7 : f32 to vector<16x16xf32>
    %15 = arith.addf %14, %13 : vector<16x16xf32>
    %cst_8 = arith.constant 1.000000e+00 : f32
    %16 = vector.broadcast %cst_8 : f32 to vector<16x16xf32>
    %17 = arith.divf %16, %15 : vector<16x16xf32>
    %cst_9 = arith.constant 1.06140542 : f32
    %18 = vector.broadcast %cst_9 : f32 to vector<16x16xf32>
    %19 = arith.mulf %18, %17 : vector<16x16xf32>
    %cst_10 = arith.constant -1.45315206 : f32
    %20 = vector.broadcast %cst_10 : f32 to vector<16x16xf32>
    %21 = arith.addf %19, %20 : vector<16x16xf32>
    %22 = arith.mulf %21, %17 : vector<16x16xf32>
    %cst_11 = arith.constant 1.42141378 : f32
    %23 = vector.broadcast %cst_11 : f32 to vector<16x16xf32>
    %24 = arith.addf %22, %23 : vector<16x16xf32>
    %25 = arith.mulf %24, %17 : vector<16x16xf32>
    %cst_12 = arith.constant -0.284496725 : f32
    %26 = vector.broadcast %cst_12 : f32 to vector<16x16xf32>
    %27 = arith.addf %25, %26 : vector<16x16xf32>
    %28 = arith.mulf %27, %17 : vector<16x16xf32>
    %cst_13 = arith.constant 0.254829586 : f32
    %29 = vector.broadcast %cst_13 : f32 to vector<16x16xf32>
    %30 = arith.addf %28, %29 : vector<16x16xf32>
    %31 = arith.mulf %30, %17 : vector<16x16xf32>
    %cst_14 = arith.constant 0.000000e+00 : f32
    %32 = vector.broadcast %cst_14 : f32 to vector<16x16xf32>
    %33 = arith.subf %32, %11 : vector<16x16xf32>
    %34 = arith.mulf %33, %11 : vector<16x16xf32>
    %35 = math.exp %34 : vector<16x16xf32>
    %36 = arith.mulf %31, %35 : vector<16x16xf32>
    %cst_15 = arith.constant 1.000000e+00 : f32
    %37 = vector.broadcast %cst_15 : f32 to vector<16x16xf32>
    %38 = arith.subf %37, %36 : vector<16x16xf32>
    %39 = arith.mulf %10, %38 : vector<16x16xf32>
    %cst_16 = arith.constant 1.000000e+00 : f32
    %40 = vector.broadcast %cst_16 : f32 to vector<16x16xf32>
    %41 = arith.addf %40, %39 : vector<16x16xf32>
    %42 = arith.mulf %3, %41 : vector<16x16xf32>
    %c0_17 = arith.constant 0 : index
    %c0_18 = arith.constant 0 : index
    %43 = vector.load %arg3[%c0_17, %c0_18] : memref<16x8xbf16, #tpu.memory_space<vmem>>, vector<16x8xbf16>
    %44 = arith.truncf %42 : vector<16x16xf32> to vector<16x16xbf16>
    %cst_19 = arith.constant dense<0.000000e+00> : vector<16x8xf32>
    %45 = tpu.matmul %44, %43, %cst_19 {dimension_numbers = #tpu.dot_dimension_numbers<[1], [0], [0], [1], [0, 0, 1, 1], [], []>} : vector<16x16xbf16>, vector<16x8xbf16>, vector<16x8xf32> -> vector<16x8xf32>
    %c0_20 = arith.constant 0 : index
    %c0_21 = arith.constant 0 : index
    %46 = vector.load %arg4[%c0_20, %c0_21] : memref<1x8xf32, #tpu.memory_space<vmem>>, vector<1x8xf32>
    %47 = vector.broadcast %46 : vector<1x8xf32> to vector<16x8xf32>
    %48 = arith.addf %45, %47 : vector<16x8xf32>
    %cst_22 = arith.constant 5.000000e-01 : f32
    %49 = vector.broadcast %cst_22 : f32 to vector<16x8xf32>
    %50 = arith.mulf %49, %48 : vector<16x8xf32>
    %cst_23 = arith.constant 0.707106769 : f32
    %51 = vector.broadcast %cst_23 : f32 to vector<16x8xf32>
    %52 = arith.mulf %48, %51 : vector<16x8xf32>
    %cst_24 = arith.constant 0.000000e+00 : f32
    %53 = vector.broadcast %cst_24 : f32 to vector<16x8xf32>
    %54 = arith.cmpf oge, %52, %53 : vector<16x8xf32>
    %cst_25 = arith.constant 1.000000e+00 : f32
    %cst_26 = arith.constant -1.000000e+00 : f32
    %55 = vector.broadcast %cst_25 : f32 to vector<16x8xf32>
    %56 = vector.broadcast %cst_26 : f32 to vector<16x8xf32>
    %57 = arith.select %54, %55, %56 : vector<16x8xi1>, vector<16x8xf32>
    %58 = math.absf %52 : vector<16x8xf32>
    %cst_27 = arith.constant 0.327591091 : f32
    %59 = vector.broadcast %cst_27 : f32 to vector<16x8xf32>
    %60 = arith.mulf %59, %58 : vector<16x8xf32>
    %cst_28 = arith.constant 1.000000e+00 : f32
    %61 = vector.broadcast %cst_28 : f32 to vector<16x8xf32>
    %62 = arith.addf %61, %60 : vector<16x8xf32>
    %cst_29 = arith.constant 1.000000e+00 : f32
    %63 = vector.broadcast %cst_29 : f32 to vector<16x8xf32>
    %64 = arith.divf %63, %62 : vector<16x8xf32>
    %cst_30 = arith.constant 1.06140542 : f32
    %65 = vector.broadcast %cst_30 : f32 to vector<16x8xf32>
    %66 = arith.mulf %65, %64 : vector<16x8xf32>
    %cst_31 = arith.constant -1.45315206 : f32
    %67 = vector.broadcast %cst_31 : f32 to vector<16x8xf32>
    %68 = arith.addf %66, %67 : vector<16x8xf32>
    %69 = arith.mulf %68, %64 : vector<16x8xf32>
    %cst_32 = arith.constant 1.42141378 : f32
    %70 = vector.broadcast %cst_32 : f32 to vector<16x8xf32>
    %71 = arith.addf %69, %70 : vector<16x8xf32>
    %72 = arith.mulf %71, %64 : vector<16x8xf32>
    %cst_33 = arith.constant -0.284496725 : f32
    %73 = vector.broadcast %cst_33 : f32 to vector<16x8xf32>
    %74 = arith.addf %72, %73 : vector<16x8xf32>
    %75 = arith.mulf %74, %64 : vector<16x8xf32>
    %cst_34 = arith.constant 0.254829586 : f32
    %76 = vector.broadcast %cst_34 : f32 to vector<16x8xf32>
    %77 = arith.addf %75, %76 : vector<16x8xf32>
    %78 = arith.mulf %77, %64 : vector<16x8xf32>
    %cst_35 = arith.constant 0.000000e+00 : f32
    %79 = vector.broadcast %cst_35 : f32 to vector<16x8xf32>
    %80 = arith.subf %79, %58 : vector<16x8xf32>
    %81 = arith.mulf %80, %58 : vector<16x8xf32>
    %82 = math.exp %81 : vector<16x8xf32>
    %83 = arith.mulf %78, %82 : vector<16x8xf32>
    %cst_36 = arith.constant 1.000000e+00 : f32
    %84 = vector.broadcast %cst_36 : f32 to vector<16x8xf32>
    %85 = arith.subf %84, %83 : vector<16x8xf32>
    %86 = arith.mulf %57, %85 : vector<16x8xf32>
    %cst_37 = arith.constant 1.000000e+00 : f32
    %87 = vector.broadcast %cst_37 : f32 to vector<16x8xf32>
    %88 = arith.addf %87, %86 : vector<16x8xf32>
    %89 = arith.mulf %50, %88 : vector<16x8xf32>
    %90 = arith.truncf %89 : vector<16x8xf32> to vector<16x8xbf16>
    %c0_38 = arith.constant 0 : index
    %c0_39 = arith.constant 0 : index
    %c0_40 = arith.constant 0 : index
    %91 = vector.load %arg2[%c0_38, %c0_39, %c0_40] : memref<9x16x16xbf16, #tpu.memory_space<vmem>>, vector<1x16x16xbf16>
    %92 = vector.shape_cast %91 : vector<1x16x16xbf16> to vector<16x16xbf16>
    %cst_41 = arith.constant dense<0.000000e+00> : vector<16x8xf32>
    %93 = tpu.matmul %92, %90, %cst_41 {dimension_numbers = #tpu.dot_dimension_numbers<[1], [0], [0], [1], [0, 0, 1, 1], [], []>} : vector<16x16xbf16>, vector<16x8xbf16>, vector<16x8xf32> -> vector<16x8xf32>
    %94 = arith.truncf %93 : vector<16x8xf32> to vector<16x8xbf16>
    %c0_42 = arith.constant 0 : index
    %c0_43 = arith.constant 0 : index
    %c0_44 = arith.constant 0 : index
    %95 = vector.load %arg5[%c0_42, %c0_43, %c0_44] : memref<9x8x8xbf16, #tpu.memory_space<vmem>>, vector<1x8x8xbf16>
    %96 = vector.shape_cast %95 : vector<1x8x8xbf16> to vector<8x8xbf16>
    %cst_45 = arith.constant dense<0.000000e+00> : vector<16x8xf32>
    %97 = tpu.matmul %94, %96, %cst_45 {dimension_numbers = #tpu.dot_dimension_numbers<[1], [0], [0], [1], [0, 0, 1, 1], [], []>} : vector<16x8xbf16>, vector<8x8xbf16>, vector<16x8xf32> -> vector<16x8xf32>
    %c1 = arith.constant 1 : index
    %c0_46 = arith.constant 0 : index
    %c0_47 = arith.constant 0 : index
    %98 = vector.load %arg2[%c1, %c0_46, %c0_47] : memref<9x16x16xbf16, #tpu.memory_space<vmem>>, vector<1x16x16xbf16>
    %99 = vector.shape_cast %98 : vector<1x16x16xbf16> to vector<16x16xbf16>
    %cst_48 = arith.constant dense<0.000000e+00> : vector<16x8xf32>
    %100 = tpu.matmul %99, %90, %cst_48 {dimension_numbers = #tpu.dot_dimension_numbers<[1], [0], [0], [1], [0, 0, 1, 1], [], []>} : vector<16x16xbf16>, vector<16x8xbf16>, vector<16x8xf32> -> vector<16x8xf32>
    %101 = arith.truncf %100 : vector<16x8xf32> to vector<16x8xbf16>
    %c1_49 = arith.constant 1 : index
    %c0_50 = arith.constant 0 : index
    %c0_51 = arith.constant 0 : index
    %102 = vector.load %arg5[%c1_49, %c0_50, %c0_51] : memref<9x8x8xbf16, #tpu.memory_space<vmem>>, vector<1x8x8xbf16>
    %103 = vector.shape_cast %102 : vector<1x8x8xbf16> to vector<8x8xbf16>
    %cst_52 = arith.constant dense<0.000000e+00> : vector<16x8xf32>
    %104 = tpu.matmul %101, %103, %cst_52 {dimension_numbers = #tpu.dot_dimension_numbers<[1], [0], [0], [1], [0, 0, 1, 1], [], []>} : vector<16x8xbf16>, vector<8x8xbf16>, vector<16x8xf32> -> vector<16x8xf32>
    %105 = arith.addf %97, %104 : vector<16x8xf32>
    %c2 = arith.constant 2 : index
    %c0_53 = arith.constant 0 : index
    %c0_54 = arith.constant 0 : index
    %106 = vector.load %arg2[%c2, %c0_53, %c0_54] : memref<9x16x16xbf16, #tpu.memory_space<vmem>>, vector<1x16x16xbf16>
    %107 = vector.shape_cast %106 : vector<1x16x16xbf16> to vector<16x16xbf16>
    %cst_55 = arith.constant dense<0.000000e+00> : vector<16x8xf32>
    %108 = tpu.matmul %107, %90, %cst_55 {dimension_numbers = #tpu.dot_dimension_numbers<[1], [0], [0], [1], [0, 0, 1, 1], [], []>} : vector<16x16xbf16>, vector<16x8xbf16>, vector<16x8xf32> -> vector<16x8xf32>
    %109 = arith.truncf %108 : vector<16x8xf32> to vector<16x8xbf16>
    %c2_56 = arith.constant 2 : index
    %c0_57 = arith.constant 0 : index
    %c0_58 = arith.constant 0 : index
    %110 = vector.load %arg5[%c2_56, %c0_57, %c0_58] : memref<9x8x8xbf16, #tpu.memory_space<vmem>>, vector<1x8x8xbf16>
    %111 = vector.shape_cast %110 : vector<1x8x8xbf16> to vector<8x8xbf16>
    %cst_59 = arith.constant dense<0.000000e+00> : vector<16x8xf32>
    %112 = tpu.matmul %109, %111, %cst_59 {dimension_numbers = #tpu.dot_dimension_numbers<[1], [0], [0], [1], [0, 0, 1, 1], [], []>} : vector<16x8xbf16>, vector<8x8xbf16>, vector<16x8xf32> -> vector<16x8xf32>
    %113 = arith.addf %105, %112 : vector<16x8xf32>
    %c3 = arith.constant 3 : index
    %c0_60 = arith.constant 0 : index
    %c0_61 = arith.constant 0 : index
    %114 = vector.load %arg2[%c3, %c0_60, %c0_61] : memref<9x16x16xbf16, #tpu.memory_space<vmem>>, vector<1x16x16xbf16>
    %115 = vector.shape_cast %114 : vector<1x16x16xbf16> to vector<16x16xbf16>
    %cst_62 = arith.constant dense<0.000000e+00> : vector<16x8xf32>
    %116 = tpu.matmul %115, %90, %cst_62 {dimension_numbers = #tpu.dot_dimension_numbers<[1], [0], [0], [1], [0, 0, 1, 1], [], []>} : vector<16x16xbf16>, vector<16x8xbf16>, vector<16x8xf32> -> vector<16x8xf32>
    %117 = arith.truncf %116 : vector<16x8xf32> to vector<16x8xbf16>
    %c3_63 = arith.constant 3 : index
    %c0_64 = arith.constant 0 : index
    %c0_65 = arith.constant 0 : index
    %118 = vector.load %arg5[%c3_63, %c0_64, %c0_65] : memref<9x8x8xbf16, #tpu.memory_space<vmem>>, vector<1x8x8xbf16>
    %119 = vector.shape_cast %118 : vector<1x8x8xbf16> to vector<8x8xbf16>
    %cst_66 = arith.constant dense<0.000000e+00> : vector<16x8xf32>
    %120 = tpu.matmul %117, %119, %cst_66 {dimension_numbers = #tpu.dot_dimension_numbers<[1], [0], [0], [1], [0, 0, 1, 1], [], []>} : vector<16x8xbf16>, vector<8x8xbf16>, vector<16x8xf32> -> vector<16x8xf32>
    %121 = arith.addf %113, %120 : vector<16x8xf32>
    %c4 = arith.constant 4 : index
    %c0_67 = arith.constant 0 : index
    %c0_68 = arith.constant 0 : index
    %122 = vector.load %arg5[%c4, %c0_67, %c0_68] : memref<9x8x8xbf16, #tpu.memory_space<vmem>>, vector<1x8x8xbf16>
    %123 = vector.shape_cast %122 : vector<1x8x8xbf16> to vector<8x8xbf16>
    %cst_69 = arith.constant dense<0.000000e+00> : vector<16x8xf32>
    %124 = tpu.matmul %90, %123, %cst_69 {dimension_numbers = #tpu.dot_dimension_numbers<[1], [0], [0], [1], [0, 0, 1, 1], [], []>} : vector<16x8xbf16>, vector<8x8xbf16>, vector<16x8xf32> -> vector<16x8xf32>
    %125 = arith.addf %121, %124 : vector<16x8xf32>
    %c5 = arith.constant 5 : index
    %c0_70 = arith.constant 0 : index
    %c0_71 = arith.constant 0 : index
    %126 = vector.load %arg2[%c5, %c0_70, %c0_71] : memref<9x16x16xbf16, #tpu.memory_space<vmem>>, vector<1x16x16xbf16>
    %127 = vector.shape_cast %126 : vector<1x16x16xbf16> to vector<16x16xbf16>
    %cst_72 = arith.constant dense<0.000000e+00> : vector<16x8xf32>
    %128 = tpu.matmul %127, %90, %cst_72 {dimension_numbers = #tpu.dot_dimension_numbers<[1], [0], [0], [1], [0, 0, 1, 1], [], []>} : vector<16x16xbf16>, vector<16x8xbf16>, vector<16x8xf32> -> vector<16x8xf32>
    %129 = arith.truncf %128 : vector<16x8xf32> to vector<16x8xbf16>
    %c5_73 = arith.constant 5 : index
    %c0_74 = arith.constant 0 : index
    %c0_75 = arith.constant 0 : index
    %130 = vector.load %arg5[%c5_73, %c0_74, %c0_75] : memref<9x8x8xbf16, #tpu.memory_space<vmem>>, vector<1x8x8xbf16>
    %131 = vector.shape_cast %130 : vector<1x8x8xbf16> to vector<8x8xbf16>
    %cst_76 = arith.constant dense<0.000000e+00> : vector<16x8xf32>
    %132 = tpu.matmul %129, %131, %cst_76 {dimension_numbers = #tpu.dot_dimension_numbers<[1], [0], [0], [1], [0, 0, 1, 1], [], []>} : vector<16x8xbf16>, vector<8x8xbf16>, vector<16x8xf32> -> vector<16x8xf32>
    %133 = arith.addf %125, %132 : vector<16x8xf32>
    %c6 = arith.constant 6 : index
    %c0_77 = arith.constant 0 : index
    %c0_78 = arith.constant 0 : index
    %134 = vector.load %arg2[%c6, %c0_77, %c0_78] : memref<9x16x16xbf16, #tpu.memory_space<vmem>>, vector<1x16x16xbf16>
    %135 = vector.shape_cast %134 : vector<1x16x16xbf16> to vector<16x16xbf16>
    %cst_79 = arith.constant dense<0.000000e+00> : vector<16x8xf32>
    %136 = tpu.matmul %135, %90, %cst_79 {dimension_numbers = #tpu.dot_dimension_numbers<[1], [0], [0], [1], [0, 0, 1, 1], [], []>} : vector<16x16xbf16>, vector<16x8xbf16>, vector<16x8xf32> -> vector<16x8xf32>
    %137 = arith.truncf %136 : vector<16x8xf32> to vector<16x8xbf16>
    %c6_80 = arith.constant 6 : index
    %c0_81 = arith.constant 0 : index
    %c0_82 = arith.constant 0 : index
    %138 = vector.load %arg5[%c6_80, %c0_81, %c0_82] : memref<9x8x8xbf16, #tpu.memory_space<vmem>>, vector<1x8x8xbf16>
    %139 = vector.shape_cast %138 : vector<1x8x8xbf16> to vector<8x8xbf16>
    %cst_83 = arith.constant dense<0.000000e+00> : vector<16x8xf32>
    %140 = tpu.matmul %137, %139, %cst_83 {dimension_numbers = #tpu.dot_dimension_numbers<[1], [0], [0], [1], [0, 0, 1, 1], [], []>} : vector<16x8xbf16>, vector<8x8xbf16>, vector<16x8xf32> -> vector<16x8xf32>
    %141 = arith.addf %133, %140 : vector<16x8xf32>
    %c7 = arith.constant 7 : index
    %c0_84 = arith.constant 0 : index
    %c0_85 = arith.constant 0 : index
    %142 = vector.load %arg2[%c7, %c0_84, %c0_85] : memref<9x16x16xbf16, #tpu.memory_space<vmem>>, vector<1x16x16xbf16>
    %143 = vector.shape_cast %142 : vector<1x16x16xbf16> to vector<16x16xbf16>
    %cst_86 = arith.constant dense<0.000000e+00> : vector<16x8xf32>
    %144 = tpu.matmul %143, %90, %cst_86 {dimension_numbers = #tpu.dot_dimension_numbers<[1], [0], [0], [1], [0, 0, 1, 1], [], []>} : vector<16x16xbf16>, vector<16x8xbf16>, vector<16x8xf32> -> vector<16x8xf32>
    %145 = arith.truncf %144 : vector<16x8xf32> to vector<16x8xbf16>
    %c7_87 = arith.constant 7 : index
    %c0_88 = arith.constant 0 : index
    %c0_89 = arith.constant 0 : index
    %146 = vector.load %arg5[%c7_87, %c0_88, %c0_89] : memref<9x8x8xbf16, #tpu.memory_space<vmem>>, vector<1x8x8xbf16>
    %147 = vector.shape_cast %146 : vector<1x8x8xbf16> to vector<8x8xbf16>
    %cst_90 = arith.constant dense<0.000000e+00> : vector<16x8xf32>
    %148 = tpu.matmul %145, %147, %cst_90 {dimension_numbers = #tpu.dot_dimension_numbers<[1], [0], [0], [1], [0, 0, 1, 1], [], []>} : vector<16x8xbf16>, vector<8x8xbf16>, vector<16x8xf32> -> vector<16x8xf32>
    %149 = arith.addf %141, %148 : vector<16x8xf32>
    %c8 = arith.constant 8 : index
    %c0_91 = arith.constant 0 : index
    %c0_92 = arith.constant 0 : index
    %150 = vector.load %arg2[%c8, %c0_91, %c0_92] : memref<9x16x16xbf16, #tpu.memory_space<vmem>>, vector<1x16x16xbf16>
    %151 = vector.shape_cast %150 : vector<1x16x16xbf16> to vector<16x16xbf16>
    %cst_93 = arith.constant dense<0.000000e+00> : vector<16x8xf32>
    %152 = tpu.matmul %151, %90, %cst_93 {dimension_numbers = #tpu.dot_dimension_numbers<[1], [0], [0], [1], [0, 0, 1, 1], [], []>} : vector<16x16xbf16>, vector<16x8xbf16>, vector<16x8xf32> -> vector<16x8xf32>
    %153 = arith.truncf %152 : vector<16x8xf32> to vector<16x8xbf16>
    %c8_94 = arith.constant 8 : index
    %c0_95 = arith.constant 0 : index
    %c0_96 = arith.constant 0 : index
    %154 = vector.load %arg5[%c8_94, %c0_95, %c0_96] : memref<9x8x8xbf16, #tpu.memory_space<vmem>>, vector<1x8x8xbf16>
    %155 = vector.shape_cast %154 : vector<1x8x8xbf16> to vector<8x8xbf16>
    %cst_97 = arith.constant dense<0.000000e+00> : vector<16x8xf32>
    %156 = tpu.matmul %153, %155, %cst_97 {dimension_numbers = #tpu.dot_dimension_numbers<[1], [0], [0], [1], [0, 0, 1, 1], [], []>} : vector<16x8xbf16>, vector<8x8xbf16>, vector<16x8xf32> -> vector<16x8xf32>
    %157 = arith.addf %149, %156 : vector<16x8xf32>
    %c0_98 = arith.constant 0 : index
    %c0_99 = arith.constant 0 : index
    %158 = vector.load %arg6[%c0_98, %c0_99] : memref<1x8xf32, #tpu.memory_space<vmem>>, vector<1x8xf32>
    %159 = vector.broadcast %158 : vector<1x8xf32> to vector<16x8xf32>
    %160 = arith.addf %157, %159 : vector<16x8xf32>
    %cst_100 = arith.constant 5.000000e-01 : f32
    %161 = vector.broadcast %cst_100 : f32 to vector<16x8xf32>
    %162 = arith.mulf %161, %160 : vector<16x8xf32>
    %cst_101 = arith.constant 0.707106769 : f32
    %163 = vector.broadcast %cst_101 : f32 to vector<16x8xf32>
    %164 = arith.mulf %160, %163 : vector<16x8xf32>
    %cst_102 = arith.constant 0.000000e+00 : f32
    %165 = vector.broadcast %cst_102 : f32 to vector<16x8xf32>
    %166 = arith.cmpf oge, %164, %165 : vector<16x8xf32>
    %cst_103 = arith.constant 1.000000e+00 : f32
    %cst_104 = arith.constant -1.000000e+00 : f32
    %167 = vector.broadcast %cst_103 : f32 to vector<16x8xf32>
    %168 = vector.broadcast %cst_104 : f32 to vector<16x8xf32>
    %169 = arith.select %166, %167, %168 : vector<16x8xi1>, vector<16x8xf32>
    %170 = math.absf %164 : vector<16x8xf32>
    %cst_105 = arith.constant 0.327591091 : f32
    %171 = vector.broadcast %cst_105 : f32 to vector<16x8xf32>
    %172 = arith.mulf %171, %170 : vector<16x8xf32>
    %cst_106 = arith.constant 1.000000e+00 : f32
    %173 = vector.broadcast %cst_106 : f32 to vector<16x8xf32>
    %174 = arith.addf %173, %172 : vector<16x8xf32>
    %cst_107 = arith.constant 1.000000e+00 : f32
    %175 = vector.broadcast %cst_107 : f32 to vector<16x8xf32>
    %176 = arith.divf %175, %174 : vector<16x8xf32>
    %cst_108 = arith.constant 1.06140542 : f32
    %177 = vector.broadcast %cst_108 : f32 to vector<16x8xf32>
    %178 = arith.mulf %177, %176 : vector<16x8xf32>
    %cst_109 = arith.constant -1.45315206 : f32
    %179 = vector.broadcast %cst_109 : f32 to vector<16x8xf32>
    %180 = arith.addf %178, %179 : vector<16x8xf32>
    %181 = arith.mulf %180, %176 : vector<16x8xf32>
    %cst_110 = arith.constant 1.42141378 : f32
    %182 = vector.broadcast %cst_110 : f32 to vector<16x8xf32>
    %183 = arith.addf %181, %182 : vector<16x8xf32>
    %184 = arith.mulf %183, %176 : vector<16x8xf32>
    %cst_111 = arith.constant -0.284496725 : f32
    %185 = vector.broadcast %cst_111 : f32 to vector<16x8xf32>
    %186 = arith.addf %184, %185 : vector<16x8xf32>
    %187 = arith.mulf %186, %176 : vector<16x8xf32>
    %cst_112 = arith.constant 0.254829586 : f32
    %188 = vector.broadcast %cst_112 : f32 to vector<16x8xf32>
    %189 = arith.addf %187, %188 : vector<16x8xf32>
    %190 = arith.mulf %189, %176 : vector<16x8xf32>
    %cst_113 = arith.constant 0.000000e+00 : f32
    %191 = vector.broadcast %cst_113 : f32 to vector<16x8xf32>
    %192 = arith.subf %191, %170 : vector<16x8xf32>
    %193 = arith.mulf %192, %170 : vector<16x8xf32>
    %194 = math.exp %193 : vector<16x8xf32>
    %195 = arith.mulf %190, %194 : vector<16x8xf32>
    %cst_114 = arith.constant 1.000000e+00 : f32
    %196 = vector.broadcast %cst_114 : f32 to vector<16x8xf32>
    %197 = arith.subf %196, %195 : vector<16x8xf32>
    %198 = arith.mulf %169, %197 : vector<16x8xf32>
    %cst_115 = arith.constant 1.000000e+00 : f32
    %199 = vector.broadcast %cst_115 : f32 to vector<16x8xf32>
    %200 = arith.addf %199, %198 : vector<16x8xf32>
    %201 = arith.mulf %162, %200 : vector<16x8xf32>
    %202 = arith.truncf %201 : vector<16x8xf32> to vector<16x8xbf16>
    %c0_116 = arith.constant 0 : index
    %c0_117 = arith.constant 0 : index
    %c0_118 = arith.constant 0 : index
    %203 = vector.load %arg2[%c0_116, %c0_117, %c0_118] : memref<9x16x16xbf16, #tpu.memory_space<vmem>>, vector<1x16x16xbf16>
    %204 = vector.shape_cast %203 : vector<1x16x16xbf16> to vector<16x16xbf16>
    %cst_119 = arith.constant dense<0.000000e+00> : vector<16x8xf32>
    %205 = tpu.matmul %204, %202, %cst_119 {dimension_numbers = #tpu.dot_dimension_numbers<[1], [0], [0], [1], [0, 0, 1, 1], [], []>} : vector<16x16xbf16>, vector<16x8xbf16>, vector<16x8xf32> -> vector<16x8xf32>
    %206 = arith.truncf %205 : vector<16x8xf32> to vector<16x8xbf16>
    %c0_120 = arith.constant 0 : index
    %c0_121 = arith.constant 0 : index
    %c0_122 = arith.constant 0 : index
    %207 = vector.load %arg7[%c0_120, %c0_121, %c0_122] : memref<9x8x8xbf16, #tpu.memory_space<vmem>>, vector<1x8x8xbf16>
    %208 = vector.shape_cast %207 : vector<1x8x8xbf16> to vector<8x8xbf16>
    %cst_123 = arith.constant dense<0.000000e+00> : vector<16x8xf32>
    %209 = tpu.matmul %206, %208, %cst_123 {dimension_numbers = #tpu.dot_dimension_numbers<[1], [0], [0], [1], [0, 0, 1, 1], [], []>} : vector<16x8xbf16>, vector<8x8xbf16>, vector<16x8xf32> -> vector<16x8xf32>
    %c1_124 = arith.constant 1 : index
    %c0_125 = arith.constant 0 : index
    %c0_126 = arith.constant 0 : index
    %210 = vector.load %arg2[%c1_124, %c0_125, %c0_126] : memref<9x16x16xbf16, #tpu.memory_space<vmem>>, vector<1x16x16xbf16>
    %211 = vector.shape_cast %210 : vector<1x16x16xbf16> to vector<16x16xbf16>
    %cst_127 = arith.constant dense<0.000000e+00> : vector<16x8xf32>
    %212 = tpu.matmul %211, %202, %cst_127 {dimension_numbers = #tpu.dot_dimension_numbers<[1], [0], [0], [1], [0, 0, 1, 1], [], []>} : vector<16x16xbf16>, vector<16x8xbf16>, vector<16x8xf32> -> vector<16x8xf32>
    %213 = arith.truncf %212 : vector<16x8xf32> to vector<16x8xbf16>
    %c1_128 = arith.constant 1 : index
    %c0_129 = arith.constant 0 : index
    %c0_130 = arith.constant 0 : index
    %214 = vector.load %arg7[%c1_128, %c0_129, %c0_130] : memref<9x8x8xbf16, #tpu.memory_space<vmem>>, vector<1x8x8xbf16>
    %215 = vector.shape_cast %214 : vector<1x8x8xbf16> to vector<8x8xbf16>
    %cst_131 = arith.constant dense<0.000000e+00> : vector<16x8xf32>
    %216 = tpu.matmul %213, %215, %cst_131 {dimension_numbers = #tpu.dot_dimension_numbers<[1], [0], [0], [1], [0, 0, 1, 1], [], []>} : vector<16x8xbf16>, vector<8x8xbf16>, vector<16x8xf32> -> vector<16x8xf32>
    %217 = arith.addf %209, %216 : vector<16x8xf32>
    %c2_132 = arith.constant 2 : index
    %c0_133 = arith.constant 0 : index
    %c0_134 = arith.constant 0 : index
    %218 = vector.load %arg2[%c2_132, %c0_133, %c0_134] : memref<9x16x16xbf16, #tpu.memory_space<vmem>>, vector<1x16x16xbf16>
    %219 = vector.shape_cast %218 : vector<1x16x16xbf16> to vector<16x16xbf16>
    %cst_135 = arith.constant dense<0.000000e+00> : vector<16x8xf32>
    %220 = tpu.matmul %219, %202, %cst_135 {dimension_numbers = #tpu.dot_dimension_numbers<[1], [0], [0], [1], [0, 0, 1, 1], [], []>} : vector<16x16xbf16>, vector<16x8xbf16>, vector<16x8xf32> -> vector<16x8xf32>
    %221 = arith.truncf %220 : vector<16x8xf32> to vector<16x8xbf16>
    %c2_136 = arith.constant 2 : index
    %c0_137 = arith.constant 0 : index
    %c0_138 = arith.constant 0 : index
    %222 = vector.load %arg7[%c2_136, %c0_137, %c0_138] : memref<9x8x8xbf16, #tpu.memory_space<vmem>>, vector<1x8x8xbf16>
    %223 = vector.shape_cast %222 : vector<1x8x8xbf16> to vector<8x8xbf16>
    %cst_139 = arith.constant dense<0.000000e+00> : vector<16x8xf32>
    %224 = tpu.matmul %221, %223, %cst_139 {dimension_numbers = #tpu.dot_dimension_numbers<[1], [0], [0], [1], [0, 0, 1, 1], [], []>} : vector<16x8xbf16>, vector<8x8xbf16>, vector<16x8xf32> -> vector<16x8xf32>
    %225 = arith.addf %217, %224 : vector<16x8xf32>
    %c3_140 = arith.constant 3 : index
    %c0_141 = arith.constant 0 : index
    %c0_142 = arith.constant 0 : index
    %226 = vector.load %arg2[%c3_140, %c0_141, %c0_142] : memref<9x16x16xbf16, #tpu.memory_space<vmem>>, vector<1x16x16xbf16>
    %227 = vector.shape_cast %226 : vector<1x16x16xbf16> to vector<16x16xbf16>
    %cst_143 = arith.constant dense<0.000000e+00> : vector<16x8xf32>
    %228 = tpu.matmul %227, %202, %cst_143 {dimension_numbers = #tpu.dot_dimension_numbers<[1], [0], [0], [1], [0, 0, 1, 1], [], []>} : vector<16x16xbf16>, vector<16x8xbf16>, vector<16x8xf32> -> vector<16x8xf32>
    %229 = arith.truncf %228 : vector<16x8xf32> to vector<16x8xbf16>
    %c3_144 = arith.constant 3 : index
    %c0_145 = arith.constant 0 : index
    %c0_146 = arith.constant 0 : index
    %230 = vector.load %arg7[%c3_144, %c0_145, %c0_146] : memref<9x8x8xbf16, #tpu.memory_space<vmem>>, vector<1x8x8xbf16>
    %231 = vector.shape_cast %230 : vector<1x8x8xbf16> to vector<8x8xbf16>
    %cst_147 = arith.constant dense<0.000000e+00> : vector<16x8xf32>
    %232 = tpu.matmul %229, %231, %cst_147 {dimension_numbers = #tpu.dot_dimension_numbers<[1], [0], [0], [1], [0, 0, 1, 1], [], []>} : vector<16x8xbf16>, vector<8x8xbf16>, vector<16x8xf32> -> vector<16x8xf32>
    %233 = arith.addf %225, %232 : vector<16x8xf32>
    %c4_148 = arith.constant 4 : index
    %c0_149 = arith.constant 0 : index
    %c0_150 = arith.constant 0 : index
    %234 = vector.load %arg7[%c4_148, %c0_149, %c0_150] : memref<9x8x8xbf16, #tpu.memory_space<vmem>>, vector<1x8x8xbf16>
    %235 = vector.shape_cast %234 : vector<1x8x8xbf16> to vector<8x8xbf16>
    %cst_151 = arith.constant dense<0.000000e+00> : vector<16x8xf32>
    %236 = tpu.matmul %202, %235, %cst_151 {dimension_numbers = #tpu.dot_dimension_numbers<[1], [0], [0], [1], [0, 0, 1, 1], [], []>} : vector<16x8xbf16>, vector<8x8xbf16>, vector<16x8xf32> -> vector<16x8xf32>
    %237 = arith.addf %233, %236 : vector<16x8xf32>
    %c5_152 = arith.constant 5 : index
    %c0_153 = arith.constant 0 : index
    %c0_154 = arith.constant 0 : index
    %238 = vector.load %arg2[%c5_152, %c0_153, %c0_154] : memref<9x16x16xbf16, #tpu.memory_space<vmem>>, vector<1x16x16xbf16>
    %239 = vector.shape_cast %238 : vector<1x16x16xbf16> to vector<16x16xbf16>
    %cst_155 = arith.constant dense<0.000000e+00> : vector<16x8xf32>
    %240 = tpu.matmul %239, %202, %cst_155 {dimension_numbers = #tpu.dot_dimension_numbers<[1], [0], [0], [1], [0, 0, 1, 1], [], []>} : vector<16x16xbf16>, vector<16x8xbf16>, vector<16x8xf32> -> vector<16x8xf32>
    %241 = arith.truncf %240 : vector<16x8xf32> to vector<16x8xbf16>
    %c5_156 = arith.constant 5 : index
    %c0_157 = arith.constant 0 : index
    %c0_158 = arith.constant 0 : index
    %242 = vector.load %arg7[%c5_156, %c0_157, %c0_158] : memref<9x8x8xbf16, #tpu.memory_space<vmem>>, vector<1x8x8xbf16>
    %243 = vector.shape_cast %242 : vector<1x8x8xbf16> to vector<8x8xbf16>
    %cst_159 = arith.constant dense<0.000000e+00> : vector<16x8xf32>
    %244 = tpu.matmul %241, %243, %cst_159 {dimension_numbers = #tpu.dot_dimension_numbers<[1], [0], [0], [1], [0, 0, 1, 1], [], []>} : vector<16x8xbf16>, vector<8x8xbf16>, vector<16x8xf32> -> vector<16x8xf32>
    %245 = arith.addf %237, %244 : vector<16x8xf32>
    %c6_160 = arith.constant 6 : index
    %c0_161 = arith.constant 0 : index
    %c0_162 = arith.constant 0 : index
    %246 = vector.load %arg2[%c6_160, %c0_161, %c0_162] : memref<9x16x16xbf16, #tpu.memory_space<vmem>>, vector<1x16x16xbf16>
    %247 = vector.shape_cast %246 : vector<1x16x16xbf16> to vector<16x16xbf16>
    %cst_163 = arith.constant dense<0.000000e+00> : vector<16x8xf32>
    %248 = tpu.matmul %247, %202, %cst_163 {dimension_numbers = #tpu.dot_dimension_numbers<[1], [0], [0], [1], [0, 0, 1, 1], [], []>} : vector<16x16xbf16>, vector<16x8xbf16>, vector<16x8xf32> -> vector<16x8xf32>
    %249 = arith.truncf %248 : vector<16x8xf32> to vector<16x8xbf16>
    %c6_164 = arith.constant 6 : index
    %c0_165 = arith.constant 0 : index
    %c0_166 = arith.constant 0 : index
    %250 = vector.load %arg7[%c6_164, %c0_165, %c0_166] : memref<9x8x8xbf16, #tpu.memory_space<vmem>>, vector<1x8x8xbf16>
    %251 = vector.shape_cast %250 : vector<1x8x8xbf16> to vector<8x8xbf16>
    %cst_167 = arith.constant dense<0.000000e+00> : vector<16x8xf32>
    %252 = tpu.matmul %249, %251, %cst_167 {dimension_numbers = #tpu.dot_dimension_numbers<[1], [0], [0], [1], [0, 0, 1, 1], [], []>} : vector<16x8xbf16>, vector<8x8xbf16>, vector<16x8xf32> -> vector<16x8xf32>
    %253 = arith.addf %245, %252 : vector<16x8xf32>
    %c7_168 = arith.constant 7 : index
    %c0_169 = arith.constant 0 : index
    %c0_170 = arith.constant 0 : index
    %254 = vector.load %arg2[%c7_168, %c0_169, %c0_170] : memref<9x16x16xbf16, #tpu.memory_space<vmem>>, vector<1x16x16xbf16>
    %255 = vector.shape_cast %254 : vector<1x16x16xbf16> to vector<16x16xbf16>
    %cst_171 = arith.constant dense<0.000000e+00> : vector<16x8xf32>
    %256 = tpu.matmul %255, %202, %cst_171 {dimension_numbers = #tpu.dot_dimension_numbers<[1], [0], [0], [1], [0, 0, 1, 1], [], []>} : vector<16x16xbf16>, vector<16x8xbf16>, vector<16x8xf32> -> vector<16x8xf32>
    %257 = arith.truncf %256 : vector<16x8xf32> to vector<16x8xbf16>
    %c7_172 = arith.constant 7 : index
    %c0_173 = arith.constant 0 : index
    %c0_174 = arith.constant 0 : index
    %258 = vector.load %arg7[%c7_172, %c0_173, %c0_174] : memref<9x8x8xbf16, #tpu.memory_space<vmem>>, vector<1x8x8xbf16>
    %259 = vector.shape_cast %258 : vector<1x8x8xbf16> to vector<8x8xbf16>
    %cst_175 = arith.constant dense<0.000000e+00> : vector<16x8xf32>
    %260 = tpu.matmul %257, %259, %cst_175 {dimension_numbers = #tpu.dot_dimension_numbers<[1], [0], [0], [1], [0, 0, 1, 1], [], []>} : vector<16x8xbf16>, vector<8x8xbf16>, vector<16x8xf32> -> vector<16x8xf32>
    %261 = arith.addf %253, %260 : vector<16x8xf32>
    %c8_176 = arith.constant 8 : index
    %c0_177 = arith.constant 0 : index
    %c0_178 = arith.constant 0 : index
    %262 = vector.load %arg2[%c8_176, %c0_177, %c0_178] : memref<9x16x16xbf16, #tpu.memory_space<vmem>>, vector<1x16x16xbf16>
    %263 = vector.shape_cast %262 : vector<1x16x16xbf16> to vector<16x16xbf16>
    %cst_179 = arith.constant dense<0.000000e+00> : vector<16x8xf32>
    %264 = tpu.matmul %263, %202, %cst_179 {dimension_numbers = #tpu.dot_dimension_numbers<[1], [0], [0], [1], [0, 0, 1, 1], [], []>} : vector<16x16xbf16>, vector<16x8xbf16>, vector<16x8xf32> -> vector<16x8xf32>
    %265 = arith.truncf %264 : vector<16x8xf32> to vector<16x8xbf16>
    %c8_180 = arith.constant 8 : index
    %c0_181 = arith.constant 0 : index
    %c0_182 = arith.constant 0 : index
    %266 = vector.load %arg7[%c8_180, %c0_181, %c0_182] : memref<9x8x8xbf16, #tpu.memory_space<vmem>>, vector<1x8x8xbf16>
    %267 = vector.shape_cast %266 : vector<1x8x8xbf16> to vector<8x8xbf16>
    %cst_183 = arith.constant dense<0.000000e+00> : vector<16x8xf32>
    %268 = tpu.matmul %265, %267, %cst_183 {dimension_numbers = #tpu.dot_dimension_numbers<[1], [0], [0], [1], [0, 0, 1, 1], [], []>} : vector<16x8xbf16>, vector<8x8xbf16>, vector<16x8xf32> -> vector<16x8xf32>
    %269 = arith.addf %261, %268 : vector<16x8xf32>
    %c0_184 = arith.constant 0 : index
    %c0_185 = arith.constant 0 : index
    %270 = vector.load %arg8[%c0_184, %c0_185] : memref<1x8xf32, #tpu.memory_space<vmem>>, vector<1x8xf32>
    %271 = vector.broadcast %270 : vector<1x8xf32> to vector<16x8xf32>
    %272 = arith.addf %269, %271 : vector<16x8xf32>
    %cst_186 = arith.constant 5.000000e-01 : f32
    %273 = vector.broadcast %cst_186 : f32 to vector<16x8xf32>
    %274 = arith.mulf %273, %272 : vector<16x8xf32>
    %cst_187 = arith.constant 0.707106769 : f32
    %275 = vector.broadcast %cst_187 : f32 to vector<16x8xf32>
    %276 = arith.mulf %272, %275 : vector<16x8xf32>
    %cst_188 = arith.constant 0.000000e+00 : f32
    %277 = vector.broadcast %cst_188 : f32 to vector<16x8xf32>
    %278 = arith.cmpf oge, %276, %277 : vector<16x8xf32>
    %cst_189 = arith.constant 1.000000e+00 : f32
    %cst_190 = arith.constant -1.000000e+00 : f32
    %279 = vector.broadcast %cst_189 : f32 to vector<16x8xf32>
    %280 = vector.broadcast %cst_190 : f32 to vector<16x8xf32>
    %281 = arith.select %278, %279, %280 : vector<16x8xi1>, vector<16x8xf32>
    %282 = math.absf %276 : vector<16x8xf32>
    %cst_191 = arith.constant 0.327591091 : f32
    %283 = vector.broadcast %cst_191 : f32 to vector<16x8xf32>
    %284 = arith.mulf %283, %282 : vector<16x8xf32>
    %cst_192 = arith.constant 1.000000e+00 : f32
    %285 = vector.broadcast %cst_192 : f32 to vector<16x8xf32>
    %286 = arith.addf %285, %284 : vector<16x8xf32>
    %cst_193 = arith.constant 1.000000e+00 : f32
    %287 = vector.broadcast %cst_193 : f32 to vector<16x8xf32>
    %288 = arith.divf %287, %286 : vector<16x8xf32>
    %cst_194 = arith.constant 1.06140542 : f32
    %289 = vector.broadcast %cst_194 : f32 to vector<16x8xf32>
    %290 = arith.mulf %289, %288 : vector<16x8xf32>
    %cst_195 = arith.constant -1.45315206 : f32
    %291 = vector.broadcast %cst_195 : f32 to vector<16x8xf32>
    %292 = arith.addf %290, %291 : vector<16x8xf32>
    %293 = arith.mulf %292, %288 : vector<16x8xf32>
    %cst_196 = arith.constant 1.42141378 : f32
    %294 = vector.broadcast %cst_196 : f32 to vector<16x8xf32>
    %295 = arith.addf %293, %294 : vector<16x8xf32>
    %296 = arith.mulf %295, %288 : vector<16x8xf32>
    %cst_197 = arith.constant -0.284496725 : f32
    %297 = vector.broadcast %cst_197 : f32 to vector<16x8xf32>
    %298 = arith.addf %296, %297 : vector<16x8xf32>
    %299 = arith.mulf %298, %288 : vector<16x8xf32>
    %cst_198 = arith.constant 0.254829586 : f32
    %300 = vector.broadcast %cst_198 : f32 to vector<16x8xf32>
    %301 = arith.addf %299, %300 : vector<16x8xf32>
    %302 = arith.mulf %301, %288 : vector<16x8xf32>
    %cst_199 = arith.constant 0.000000e+00 : f32
    %303 = vector.broadcast %cst_199 : f32 to vector<16x8xf32>
    %304 = arith.subf %303, %282 : vector<16x8xf32>
    %305 = arith.mulf %304, %282 : vector<16x8xf32>
    %306 = math.exp %305 : vector<16x8xf32>
    %307 = arith.mulf %302, %306 : vector<16x8xf32>
    %cst_200 = arith.constant 1.000000e+00 : f32
    %308 = vector.broadcast %cst_200 : f32 to vector<16x8xf32>
    %309 = arith.subf %308, %307 : vector<16x8xf32>
    %310 = arith.mulf %281, %309 : vector<16x8xf32>
    %cst_201 = arith.constant 1.000000e+00 : f32
    %311 = vector.broadcast %cst_201 : f32 to vector<16x8xf32>
    %312 = arith.addf %311, %310 : vector<16x8xf32>
    %313 = arith.mulf %274, %312 : vector<16x8xf32>
    %c0_202 = arith.constant 0 : index
    %c0_203 = arith.constant 0 : index
    %314 = vector.load %arg9[%c0_202, %c0_203] : memref<8x16xbf16, #tpu.memory_space<vmem>>, vector<8x16xbf16>
    %315 = arith.truncf %313 : vector<16x8xf32> to vector<16x8xbf16>
    %cst_204 = arith.constant dense<0.000000e+00> : vector<16x16xf32>
    %316 = tpu.matmul %315, %314, %cst_204 {dimension_numbers = #tpu.dot_dimension_numbers<[1], [0], [0], [1], [0, 0, 1, 1], [], []>} : vector<16x8xbf16>, vector<8x16xbf16>, vector<16x16xf32> -> vector<16x16xf32>
    %c0_205 = arith.constant 0 : index
    %c0_206 = arith.constant 0 : index
    %317 = vector.load %arg10[%c0_205, %c0_206] : memref<1x16xf32, #tpu.memory_space<vmem>>, vector<1x16xf32>
    %318 = vector.broadcast %317 : vector<1x16xf32> to vector<16x16xf32>
    %319 = arith.addf %316, %318 : vector<16x16xf32>
    %320 = arith.addf %1, %319 : vector<16x16xf32>
    %c0_207 = arith.constant 0 : index
    %c0_208 = arith.constant 0 : index
    %c0_209 = arith.constant 0 : index
    %321 = vector.load %arg11[%c0_207, %c0_208, %c0_209] : memref<1x16x16xf32, #tpu.memory_space<vmem>>, vector<1x16x16xf32>
    %322 = vector.shape_cast %321 : vector<1x16x16xf32> to vector<16x16xf32>
    %323 = vector.shape_cast %320 : vector<16x16xf32> to vector<1x16x16xf32>
    tpu.vector_store %arg11[%c0_207, %c0_208, %c0_209], %323 {strides = array<i32>} : memref<1x16x16xf32, #tpu.memory_space<vmem>>, vector<1x16x16xf32>,
    return
  }
  func.func @transform_0(%arg0: i32) -> (i32, i32, i32) {
    %c0_i32 = arith.constant 0 : i32
    %c0_i32_0 = arith.constant 0 : i32
    %c0_i32_1 = arith.constant 0 : i32
    return %arg0, %c0_i32, %c0_i32_0 : i32, i32, i32
  }
  func.func @transform_1(%arg0: i32) -> (i32, i32, i32) {
    %c0_i32 = arith.constant 0 : i32
    %c0_i32_0 = arith.constant 0 : i32
    %c0_i32_1 = arith.constant 0 : i32
    %c0_i32_2 = arith.constant 0 : i32
    return %c0_i32, %c0_i32_0, %c0_i32_1 : i32, i32, i32
  }
  func.func @transform_2(%arg0: i32) -> (i32, i32) {
    %c0_i32 = arith.constant 0 : i32
    %c0_i32_0 = arith.constant 0 : i32
    %c0_i32_1 = arith.constant 0 : i32
    return %c0_i32, %c0_i32_0 : i32, i32
  }
  func.func @transform_3(%arg0: i32) -> (i32, i32) {
    %c0_i32 = arith.constant 0 : i32
    %c0_i32_0 = arith.constant 0 : i32
    %c0_i32_1 = arith.constant 0 : i32
    return %c0_i32, %c0_i32_0 : i32, i32
  }
  func.func @transform_4(%arg0: i32) -> (i32, i32, i32) {
    %c0_i32 = arith.constant 0 : i32
    %c0_i32_0 = arith.constant 0 : i32
    %c0_i32_1 = arith.constant 0 : i32
    %c0_i32_2 = arith.constant 0 : i32
    return %c0_i32, %c0_i32_0, %c0_i32_1 : i32, i32, i32
  }
  func.func @transform_5(%arg0: i32) -> (i32, i32) {
    %c0_i32 = arith.constant 0 : i32
    %c0_i32_0 = arith.constant 0 : i32
    %c0_i32_1 = arith.constant 0 : i32
    return %c0_i32, %c0_i32_0 : i32, i32
  }
  func.func @transform_6(%arg0: i32) -> (i32, i32, i32) {
    %c0_i32 = arith.constant 0 : i32
    %c0_i32_0 = arith.constant 0 : i32
    %c0_i32_1 = arith.constant 0 : i32
    %c0_i32_2 = arith.constant 0 : i32
    return %c0_i32, %c0_i32_0, %c0_i32_1 : i32, i32, i32
  }
  func.func @transform_7(%arg0: i32) -> (i32, i32) {
    %c0_i32 = arith.constant 0 : i32
    %c0_i32_0 = arith.constant 0 : i32
    %c0_i32_1 = arith.constant 0 : i32
    return %c0_i32, %c0_i32_0 : i32, i32
  }
  func.func @transform_8(%arg0: i32) -> (i32, i32) {
    %c0_i32 = arith.constant 0 : i32
    %c0_i32_0 = arith.constant 0 : i32
    %c0_i32_1 = arith.constant 0 : i32
    return %c0_i32, %c0_i32_0 : i32, i32
  }
  func.func @transform_9(%arg0: i32) -> (i32, i32) {
    %c0_i32 = arith.constant 0 : i32
    %c0_i32_0 = arith.constant 0 : i32
    %c0_i32_1 = arith.constant 0 : i32
    return %c0_i32, %c0_i32_0 : i32, i32
  }
  func.func @transform_10(%arg0: i32) -> (i32, i32, i32) {
    %c0_i32 = arith.constant 0 : i32
    %c0_i32_0 = arith.constant 0 : i32
    %c0_i32_1 = arith.constant 0 : i32
    return %arg0, %c0_i32, %c0_i32_0 : i32, i32, i32
  }
}

module attributes {stable_mosaic.version = 11 : i64} {
  func.func @_pointwise_kernel(%arg0: i32, %arg1: memref<32x16xf32, #tpu.memory_space<vmem>>, %arg2: memref<16x8xbf16, #tpu.memory_space<vmem>>, %arg3: memref<1x8xf32, #tpu.memory_space<vmem>>, %arg4: memref<32x8xf32, #tpu.memory_space<vmem>>) attributes {dimension_semantics = [#tpu.dimension_semantics<parallel>], iteration_bounds = array<i64: 1>, scalar_prefetch = 0 : i64, scratch_operands = 0 : i64, tpu.core_type = #tpu.core_type<tc>, window_params = [{transform_indices = @transform_0, window_bounds = array<i64: 32, 16>}, {pipeline_mode = #tpu.pipeline_mode<synchronous>, transform_indices = @transform_1, window_bounds = array<i64: 16, 8>}, {pipeline_mode = #tpu.pipeline_mode<synchronous>, transform_indices = @transform_2, window_bounds = array<i64: 1, 8>}, {transform_indices = @transform_3, window_bounds = array<i64: 32, 8>}]} {
    %c0 = arith.constant 0 : index
    %c0_0 = arith.constant 0 : index
    %0 = vector.load %arg1[%c0, %c0_0] : memref<32x16xf32, #tpu.memory_space<vmem>>, vector<32x16xf32>
    %c0_1 = arith.constant 0 : index
    %c0_2 = arith.constant 0 : index
    %1 = vector.load %arg2[%c0_1, %c0_2] : memref<16x8xbf16, #tpu.memory_space<vmem>>, vector<16x8xbf16>
    %2 = arith.truncf %0 : vector<32x16xf32> to vector<32x16xbf16>
    %cst = arith.constant dense<0.000000e+00> : vector<32x8xf32>
    %3 = tpu.matmul %2, %1, %cst {dimension_numbers = #tpu.dot_dimension_numbers<[1], [0], [0], [1], [0, 0, 1, 1], [], []>} : vector<32x16xbf16>, vector<16x8xbf16>, vector<32x8xf32> -> vector<32x8xf32>
    %c0_3 = arith.constant 0 : index
    %c0_4 = arith.constant 0 : index
    %4 = vector.load %arg3[%c0_3, %c0_4] : memref<1x8xf32, #tpu.memory_space<vmem>>, vector<1x8xf32>
    %5 = vector.broadcast %4 : vector<1x8xf32> to vector<32x8xf32>
    %6 = arith.addf %3, %5 : vector<32x8xf32>
    %c0_5 = arith.constant 0 : index
    %c0_6 = arith.constant 0 : index
    %7 = vector.load %arg4[%c0_5, %c0_6] : memref<32x8xf32, #tpu.memory_space<vmem>>, vector<32x8xf32>
    tpu.vector_store %arg4[%c0_5, %c0_6], %6 {strides = array<i32>} : memref<32x8xf32, #tpu.memory_space<vmem>>, vector<32x8xf32>,
    return
  }
  func.func @transform_0(%arg0: i32) -> (i32, i32) {
    %c0_i32 = arith.constant 0 : i32
    %c0_i32_0 = arith.constant 0 : i32
    return %arg0, %c0_i32 : i32, i32
  }
  func.func @transform_1(%arg0: i32) -> (i32, i32) {
    %c0_i32 = arith.constant 0 : i32
    %c0_i32_0 = arith.constant 0 : i32
    %c0_i32_1 = arith.constant 0 : i32
    return %c0_i32, %c0_i32_0 : i32, i32
  }
  func.func @transform_2(%arg0: i32) -> (i32, i32) {
    %c0_i32 = arith.constant 0 : i32
    %c0_i32_0 = arith.constant 0 : i32
    %c0_i32_1 = arith.constant 0 : i32
    return %c0_i32, %c0_i32_0 : i32, i32
  }
  func.func @transform_3(%arg0: i32) -> (i32, i32) {
    %c0_i32 = arith.constant 0 : i32
    %c0_i32_0 = arith.constant 0 : i32
    return %arg0, %c0_i32 : i32, i32
  }
}

module attributes {stable_mosaic.version = 11 : i64} {
  func.func @_last_conv_kernel(%arg0: i32, %arg1: memref<1x64x8xf32, #tpu.memory_space<vmem>>, %arg2: memref<9x64x64xbf16, #tpu.memory_space<vmem>>, %arg3: memref<9x8x3xbf16, #tpu.memory_space<vmem>>, %arg4: memref<1x3xf32, #tpu.memory_space<vmem>>, %arg5: memref<1x64x3xf32, #tpu.memory_space<vmem>>) attributes {dimension_semantics = [#tpu.dimension_semantics<parallel>], iteration_bounds = array<i64: 2>, scalar_prefetch = 0 : i64, scratch_operands = 0 : i64, tpu.core_type = #tpu.core_type<tc>, window_params = [{transform_indices = @transform_0, window_bounds = array<i64: 1, 64, 8>}, {pipeline_mode = #tpu.pipeline_mode<synchronous>, transform_indices = @transform_1, window_bounds = array<i64: 9, 64, 64>}, {pipeline_mode = #tpu.pipeline_mode<synchronous>, transform_indices = @transform_2, window_bounds = array<i64: 9, 8, 3>}, {pipeline_mode = #tpu.pipeline_mode<synchronous>, transform_indices = @transform_3, window_bounds = array<i64: 1, 3>}, {transform_indices = @transform_4, window_bounds = array<i64: 1, 64, 3>}]} {
    %c0 = arith.constant 0 : index
    %c0_0 = arith.constant 0 : index
    %c0_1 = arith.constant 0 : index
    %0 = vector.load %arg1[%c0, %c0_0, %c0_1] : memref<1x64x8xf32, #tpu.memory_space<vmem>>, vector<1x64x8xf32>
    %1 = vector.shape_cast %0 : vector<1x64x8xf32> to vector<64x8xf32>
    %2 = arith.truncf %1 : vector<64x8xf32> to vector<64x8xbf16>
    %c0_2 = arith.constant 0 : index
    %c0_3 = arith.constant 0 : index
    %c0_4 = arith.constant 0 : index
    %3 = vector.load %arg2[%c0_2, %c0_3, %c0_4] : memref<9x64x64xbf16, #tpu.memory_space<vmem>>, vector<1x64x64xbf16>
    %4 = vector.shape_cast %3 : vector<1x64x64xbf16> to vector<64x64xbf16>
    %cst = arith.constant dense<0.000000e+00> : vector<64x8xf32>
    %5 = tpu.matmul %4, %2, %cst {dimension_numbers = #tpu.dot_dimension_numbers<[1], [0], [0], [1], [0, 0, 1, 1], [], []>} : vector<64x64xbf16>, vector<64x8xbf16>, vector<64x8xf32> -> vector<64x8xf32>
    %6 = arith.truncf %5 : vector<64x8xf32> to vector<64x8xbf16>
    %c0_5 = arith.constant 0 : index
    %c0_6 = arith.constant 0 : index
    %c0_7 = arith.constant 0 : index
    %7 = vector.load %arg3[%c0_5, %c0_6, %c0_7] : memref<9x8x3xbf16, #tpu.memory_space<vmem>>, vector<1x8x3xbf16>
    %8 = vector.shape_cast %7 : vector<1x8x3xbf16> to vector<8x3xbf16>
    %cst_8 = arith.constant dense<0.000000e+00> : vector<64x3xf32>
    %9 = tpu.matmul %6, %8, %cst_8 {dimension_numbers = #tpu.dot_dimension_numbers<[1], [0], [0], [1], [0, 0, 1, 1], [], []>} : vector<64x8xbf16>, vector<8x3xbf16>, vector<64x3xf32> -> vector<64x3xf32>
    %c1 = arith.constant 1 : index
    %c0_9 = arith.constant 0 : index
    %c0_10 = arith.constant 0 : index
    %10 = vector.load %arg2[%c1, %c0_9, %c0_10] : memref<9x64x64xbf16, #tpu.memory_space<vmem>>, vector<1x64x64xbf16>
    %11 = vector.shape_cast %10 : vector<1x64x64xbf16> to vector<64x64xbf16>
    %cst_11 = arith.constant dense<0.000000e+00> : vector<64x8xf32>
    %12 = tpu.matmul %11, %2, %cst_11 {dimension_numbers = #tpu.dot_dimension_numbers<[1], [0], [0], [1], [0, 0, 1, 1], [], []>} : vector<64x64xbf16>, vector<64x8xbf16>, vector<64x8xf32> -> vector<64x8xf32>
    %13 = arith.truncf %12 : vector<64x8xf32> to vector<64x8xbf16>
    %c1_12 = arith.constant 1 : index
    %c0_13 = arith.constant 0 : index
    %c0_14 = arith.constant 0 : index
    %14 = vector.load %arg3[%c1_12, %c0_13, %c0_14] : memref<9x8x3xbf16, #tpu.memory_space<vmem>>, vector<1x8x3xbf16>
    %15 = vector.shape_cast %14 : vector<1x8x3xbf16> to vector<8x3xbf16>
    %cst_15 = arith.constant dense<0.000000e+00> : vector<64x3xf32>
    %16 = tpu.matmul %13, %15, %cst_15 {dimension_numbers = #tpu.dot_dimension_numbers<[1], [0], [0], [1], [0, 0, 1, 1], [], []>} : vector<64x8xbf16>, vector<8x3xbf16>, vector<64x3xf32> -> vector<64x3xf32>
    %17 = arith.addf %9, %16 : vector<64x3xf32>
    %c2 = arith.constant 2 : index
    %c0_16 = arith.constant 0 : index
    %c0_17 = arith.constant 0 : index
    %18 = vector.load %arg2[%c2, %c0_16, %c0_17] : memref<9x64x64xbf16, #tpu.memory_space<vmem>>, vector<1x64x64xbf16>
    %19 = vector.shape_cast %18 : vector<1x64x64xbf16> to vector<64x64xbf16>
    %cst_18 = arith.constant dense<0.000000e+00> : vector<64x8xf32>
    %20 = tpu.matmul %19, %2, %cst_18 {dimension_numbers = #tpu.dot_dimension_numbers<[1], [0], [0], [1], [0, 0, 1, 1], [], []>} : vector<64x64xbf16>, vector<64x8xbf16>, vector<64x8xf32> -> vector<64x8xf32>
    %21 = arith.truncf %20 : vector<64x8xf32> to vector<64x8xbf16>
    %c2_19 = arith.constant 2 : index
    %c0_20 = arith.constant 0 : index
    %c0_21 = arith.constant 0 : index
    %22 = vector.load %arg3[%c2_19, %c0_20, %c0_21] : memref<9x8x3xbf16, #tpu.memory_space<vmem>>, vector<1x8x3xbf16>
    %23 = vector.shape_cast %22 : vector<1x8x3xbf16> to vector<8x3xbf16>
    %cst_22 = arith.constant dense<0.000000e+00> : vector<64x3xf32>
    %24 = tpu.matmul %21, %23, %cst_22 {dimension_numbers = #tpu.dot_dimension_numbers<[1], [0], [0], [1], [0, 0, 1, 1], [], []>} : vector<64x8xbf16>, vector<8x3xbf16>, vector<64x3xf32> -> vector<64x3xf32>
    %25 = arith.addf %17, %24 : vector<64x3xf32>
    %c3 = arith.constant 3 : index
    %c0_23 = arith.constant 0 : index
    %c0_24 = arith.constant 0 : index
    %26 = vector.load %arg2[%c3, %c0_23, %c0_24] : memref<9x64x64xbf16, #tpu.memory_space<vmem>>, vector<1x64x64xbf16>
    %27 = vector.shape_cast %26 : vector<1x64x64xbf16> to vector<64x64xbf16>
    %cst_25 = arith.constant dense<0.000000e+00> : vector<64x8xf32>
    %28 = tpu.matmul %27, %2, %cst_25 {dimension_numbers = #tpu.dot_dimension_numbers<[1], [0], [0], [1], [0, 0, 1, 1], [], []>} : vector<64x64xbf16>, vector<64x8xbf16>, vector<64x8xf32> -> vector<64x8xf32>
    %29 = arith.truncf %28 : vector<64x8xf32> to vector<64x8xbf16>
    %c3_26 = arith.constant 3 : index
    %c0_27 = arith.constant 0 : index
    %c0_28 = arith.constant 0 : index
    %30 = vector.load %arg3[%c3_26, %c0_27, %c0_28] : memref<9x8x3xbf16, #tpu.memory_space<vmem>>, vector<1x8x3xbf16>
    %31 = vector.shape_cast %30 : vector<1x8x3xbf16> to vector<8x3xbf16>
    %cst_29 = arith.constant dense<0.000000e+00> : vector<64x3xf32>
    %32 = tpu.matmul %29, %31, %cst_29 {dimension_numbers = #tpu.dot_dimension_numbers<[1], [0], [0], [1], [0, 0, 1, 1], [], []>} : vector<64x8xbf16>, vector<8x3xbf16>, vector<64x3xf32> -> vector<64x3xf32>
    %33 = arith.addf %25, %32 : vector<64x3xf32>
    %c4 = arith.constant 4 : index
    %c0_30 = arith.constant 0 : index
    %c0_31 = arith.constant 0 : index
    %34 = vector.load %arg3[%c4, %c0_30, %c0_31] : memref<9x8x3xbf16, #tpu.memory_space<vmem>>, vector<1x8x3xbf16>
    %35 = vector.shape_cast %34 : vector<1x8x3xbf16> to vector<8x3xbf16>
    %cst_32 = arith.constant dense<0.000000e+00> : vector<64x3xf32>
    %36 = tpu.matmul %2, %35, %cst_32 {dimension_numbers = #tpu.dot_dimension_numbers<[1], [0], [0], [1], [0, 0, 1, 1], [], []>} : vector<64x8xbf16>, vector<8x3xbf16>, vector<64x3xf32> -> vector<64x3xf32>
    %37 = arith.addf %33, %36 : vector<64x3xf32>
    %c5 = arith.constant 5 : index
    %c0_33 = arith.constant 0 : index
    %c0_34 = arith.constant 0 : index
    %38 = vector.load %arg2[%c5, %c0_33, %c0_34] : memref<9x64x64xbf16, #tpu.memory_space<vmem>>, vector<1x64x64xbf16>
    %39 = vector.shape_cast %38 : vector<1x64x64xbf16> to vector<64x64xbf16>
    %cst_35 = arith.constant dense<0.000000e+00> : vector<64x8xf32>
    %40 = tpu.matmul %39, %2, %cst_35 {dimension_numbers = #tpu.dot_dimension_numbers<[1], [0], [0], [1], [0, 0, 1, 1], [], []>} : vector<64x64xbf16>, vector<64x8xbf16>, vector<64x8xf32> -> vector<64x8xf32>
    %41 = arith.truncf %40 : vector<64x8xf32> to vector<64x8xbf16>
    %c5_36 = arith.constant 5 : index
    %c0_37 = arith.constant 0 : index
    %c0_38 = arith.constant 0 : index
    %42 = vector.load %arg3[%c5_36, %c0_37, %c0_38] : memref<9x8x3xbf16, #tpu.memory_space<vmem>>, vector<1x8x3xbf16>
    %43 = vector.shape_cast %42 : vector<1x8x3xbf16> to vector<8x3xbf16>
    %cst_39 = arith.constant dense<0.000000e+00> : vector<64x3xf32>
    %44 = tpu.matmul %41, %43, %cst_39 {dimension_numbers = #tpu.dot_dimension_numbers<[1], [0], [0], [1], [0, 0, 1, 1], [], []>} : vector<64x8xbf16>, vector<8x3xbf16>, vector<64x3xf32> -> vector<64x3xf32>
    %45 = arith.addf %37, %44 : vector<64x3xf32>
    %c6 = arith.constant 6 : index
    %c0_40 = arith.constant 0 : index
    %c0_41 = arith.constant 0 : index
    %46 = vector.load %arg2[%c6, %c0_40, %c0_41] : memref<9x64x64xbf16, #tpu.memory_space<vmem>>, vector<1x64x64xbf16>
    %47 = vector.shape_cast %46 : vector<1x64x64xbf16> to vector<64x64xbf16>
    %cst_42 = arith.constant dense<0.000000e+00> : vector<64x8xf32>
    %48 = tpu.matmul %47, %2, %cst_42 {dimension_numbers = #tpu.dot_dimension_numbers<[1], [0], [0], [1], [0, 0, 1, 1], [], []>} : vector<64x64xbf16>, vector<64x8xbf16>, vector<64x8xf32> -> vector<64x8xf32>
    %49 = arith.truncf %48 : vector<64x8xf32> to vector<64x8xbf16>
    %c6_43 = arith.constant 6 : index
    %c0_44 = arith.constant 0 : index
    %c0_45 = arith.constant 0 : index
    %50 = vector.load %arg3[%c6_43, %c0_44, %c0_45] : memref<9x8x3xbf16, #tpu.memory_space<vmem>>, vector<1x8x3xbf16>
    %51 = vector.shape_cast %50 : vector<1x8x3xbf16> to vector<8x3xbf16>
    %cst_46 = arith.constant dense<0.000000e+00> : vector<64x3xf32>
    %52 = tpu.matmul %49, %51, %cst_46 {dimension_numbers = #tpu.dot_dimension_numbers<[1], [0], [0], [1], [0, 0, 1, 1], [], []>} : vector<64x8xbf16>, vector<8x3xbf16>, vector<64x3xf32> -> vector<64x3xf32>
    %53 = arith.addf %45, %52 : vector<64x3xf32>
    %c7 = arith.constant 7 : index
    %c0_47 = arith.constant 0 : index
    %c0_48 = arith.constant 0 : index
    %54 = vector.load %arg2[%c7, %c0_47, %c0_48] : memref<9x64x64xbf16, #tpu.memory_space<vmem>>, vector<1x64x64xbf16>
    %55 = vector.shape_cast %54 : vector<1x64x64xbf16> to vector<64x64xbf16>
    %cst_49 = arith.constant dense<0.000000e+00> : vector<64x8xf32>
    %56 = tpu.matmul %55, %2, %cst_49 {dimension_numbers = #tpu.dot_dimension_numbers<[1], [0], [0], [1], [0, 0, 1, 1], [], []>} : vector<64x64xbf16>, vector<64x8xbf16>, vector<64x8xf32> -> vector<64x8xf32>
    %57 = arith.truncf %56 : vector<64x8xf32> to vector<64x8xbf16>
    %c7_50 = arith.constant 7 : index
    %c0_51 = arith.constant 0 : index
    %c0_52 = arith.constant 0 : index
    %58 = vector.load %arg3[%c7_50, %c0_51, %c0_52] : memref<9x8x3xbf16, #tpu.memory_space<vmem>>, vector<1x8x3xbf16>
    %59 = vector.shape_cast %58 : vector<1x8x3xbf16> to vector<8x3xbf16>
    %cst_53 = arith.constant dense<0.000000e+00> : vector<64x3xf32>
    %60 = tpu.matmul %57, %59, %cst_53 {dimension_numbers = #tpu.dot_dimension_numbers<[1], [0], [0], [1], [0, 0, 1, 1], [], []>} : vector<64x8xbf16>, vector<8x3xbf16>, vector<64x3xf32> -> vector<64x3xf32>
    %61 = arith.addf %53, %60 : vector<64x3xf32>
    %c8 = arith.constant 8 : index
    %c0_54 = arith.constant 0 : index
    %c0_55 = arith.constant 0 : index
    %62 = vector.load %arg2[%c8, %c0_54, %c0_55] : memref<9x64x64xbf16, #tpu.memory_space<vmem>>, vector<1x64x64xbf16>
    %63 = vector.shape_cast %62 : vector<1x64x64xbf16> to vector<64x64xbf16>
    %cst_56 = arith.constant dense<0.000000e+00> : vector<64x8xf32>
    %64 = tpu.matmul %63, %2, %cst_56 {dimension_numbers = #tpu.dot_dimension_numbers<[1], [0], [0], [1], [0, 0, 1, 1], [], []>} : vector<64x64xbf16>, vector<64x8xbf16>, vector<64x8xf32> -> vector<64x8xf32>
    %65 = arith.truncf %64 : vector<64x8xf32> to vector<64x8xbf16>
    %c8_57 = arith.constant 8 : index
    %c0_58 = arith.constant 0 : index
    %c0_59 = arith.constant 0 : index
    %66 = vector.load %arg3[%c8_57, %c0_58, %c0_59] : memref<9x8x3xbf16, #tpu.memory_space<vmem>>, vector<1x8x3xbf16>
    %67 = vector.shape_cast %66 : vector<1x8x3xbf16> to vector<8x3xbf16>
    %cst_60 = arith.constant dense<0.000000e+00> : vector<64x3xf32>
    %68 = tpu.matmul %65, %67, %cst_60 {dimension_numbers = #tpu.dot_dimension_numbers<[1], [0], [0], [1], [0, 0, 1, 1], [], []>} : vector<64x8xbf16>, vector<8x3xbf16>, vector<64x3xf32> -> vector<64x3xf32>
    %69 = arith.addf %61, %68 : vector<64x3xf32>
    %c0_61 = arith.constant 0 : index
    %c0_62 = arith.constant 0 : index
    %70 = vector.load %arg4[%c0_61, %c0_62] : memref<1x3xf32, #tpu.memory_space<vmem>>, vector<1x3xf32>
    %71 = vector.broadcast %70 : vector<1x3xf32> to vector<64x3xf32>
    %72 = arith.addf %69, %71 : vector<64x3xf32>
    %73 = arith.negf %72 : vector<64x3xf32>
    %74 = math.exp %73 : vector<64x3xf32>
    %cst_63 = arith.constant 1.000000e+00 : f32
    %75 = vector.broadcast %cst_63 : f32 to vector<64x3xf32>
    %76 = arith.addf %75, %74 : vector<64x3xf32>
    %77 = arith.divf %75, %76 : vector<64x3xf32>
    %c0_64 = arith.constant 0 : index
    %c0_65 = arith.constant 0 : index
    %c0_66 = arith.constant 0 : index
    %78 = vector.load %arg5[%c0_64, %c0_65, %c0_66] : memref<1x64x3xf32, #tpu.memory_space<vmem>>, vector<1x64x3xf32>
    %79 = vector.shape_cast %78 : vector<1x64x3xf32> to vector<64x3xf32>
    %80 = vector.shape_cast %77 : vector<64x3xf32> to vector<1x64x3xf32>
    tpu.vector_store %arg5[%c0_64, %c0_65, %c0_66], %80 {strides = array<i32>} : memref<1x64x3xf32, #tpu.memory_space<vmem>>, vector<1x64x3xf32>,
    return
  }
  func.func @transform_0(%arg0: i32) -> (i32, i32, i32) {
    %c0_i32 = arith.constant 0 : i32
    %c0_i32_0 = arith.constant 0 : i32
    %c0_i32_1 = arith.constant 0 : i32
    return %arg0, %c0_i32, %c0_i32_0 : i32, i32, i32
  }
  func.func @transform_1(%arg0: i32) -> (i32, i32, i32) {
    %c0_i32 = arith.constant 0 : i32
    %c0_i32_0 = arith.constant 0 : i32
    %c0_i32_1 = arith.constant 0 : i32
    %c0_i32_2 = arith.constant 0 : i32
    return %c0_i32, %c0_i32_0, %c0_i32_1 : i32, i32, i32
  }
  func.func @transform_2(%arg0: i32) -> (i32, i32, i32) {
    %c0_i32 = arith.constant 0 : i32
    %c0_i32_0 = arith.constant 0 : i32
    %c0_i32_1 = arith.constant 0 : i32
    %c0_i32_2 = arith.constant 0 : i32
    return %c0_i32, %c0_i32_0, %c0_i32_1 : i32, i32, i32
  }
  func.func @transform_3(%arg0: i32) -> (i32, i32) {
    %c0_i32 = arith.constant 0 : i32
    %c0_i32_0 = arith.constant 0 : i32
    %c0_i32_1 = arith.constant 0 : i32
    return %c0_i32, %c0_i32_0 : i32, i32
  }
  func.func @transform_4(%arg0: i32) -> (i32, i32, i32) {
    %c0_i32 = arith.constant 0 : i32
    %c0_i32_0 = arith.constant 0 : i32
    %c0_i32_1 = arith.constant 0 : i32
    return %arg0, %c0_i32, %c0_i32_0 : i32, i32, i32
  }
}

module attributes {stable_mosaic.version = 11 : i64} {
  func.func @_resblock_kernel(%arg0: i32, %arg1: memref<1x64x8xf32, #tpu.memory_space<vmem>>, %arg2: memref<9x64x64xbf16, #tpu.memory_space<vmem>>, %arg3: memref<8x4xbf16, #tpu.memory_space<vmem>>, %arg4: memref<1x4xf32, #tpu.memory_space<vmem>>, %arg5: memref<9x4x4xbf16, #tpu.memory_space<vmem>>, %arg6: memref<1x4xf32, #tpu.memory_space<vmem>>, %arg7: memref<9x4x4xbf16, #tpu.memory_space<vmem>>, %arg8: memref<1x4xf32, #tpu.memory_space<vmem>>, %arg9: memref<4x8xbf16, #tpu.memory_space<vmem>>, %arg10: memref<1x8xf32, #tpu.memory_space<vmem>>, %arg11: memref<1x64x8xf32, #tpu.memory_space<vmem>>) attributes {dimension_semantics = [#tpu.dimension_semantics<parallel>], iteration_bounds = array<i64: 2>, scalar_prefetch = 0 : i64, scratch_operands = 0 : i64, tpu.core_type = #tpu.core_type<tc>, window_params = [{transform_indices = @transform_0, window_bounds = array<i64: 1, 64, 8>}, {pipeline_mode = #tpu.pipeline_mode<synchronous>, transform_indices = @transform_1, window_bounds = array<i64: 9, 64, 64>}, {pipeline_mode = #tpu.pipeline_mode<synchronous>, transform_indices = @transform_2, window_bounds = array<i64: 8, 4>}, {pipeline_mode = #tpu.pipeline_mode<synchronous>, transform_indices = @transform_3, window_bounds = array<i64: 1, 4>}, {pipeline_mode = #tpu.pipeline_mode<synchronous>, transform_indices = @transform_4, window_bounds = array<i64: 9, 4, 4>}, {pipeline_mode = #tpu.pipeline_mode<synchronous>, transform_indices = @transform_5, window_bounds = array<i64: 1, 4>}, {pipeline_mode = #tpu.pipeline_mode<synchronous>, transform_indices = @transform_6, window_bounds = array<i64: 9, 4, 4>}, {pipeline_mode = #tpu.pipeline_mode<synchronous>, transform_indices = @transform_7, window_bounds = array<i64: 1, 4>}, {pipeline_mode = #tpu.pipeline_mode<synchronous>, transform_indices = @transform_8, window_bounds = array<i64: 4, 8>}, {pipeline_mode = #tpu.pipeline_mode<synchronous>, transform_indices = @transform_9, window_bounds = array<i64: 1, 8>}, {transform_indices = @transform_10, window_bounds = array<i64: 1, 64, 8>}]} {
    %c0 = arith.constant 0 : index
    %c0_0 = arith.constant 0 : index
    %c0_1 = arith.constant 0 : index
    %0 = vector.load %arg1[%c0, %c0_0, %c0_1] : memref<1x64x8xf32, #tpu.memory_space<vmem>>, vector<1x64x8xf32>
    %1 = vector.shape_cast %0 : vector<1x64x8xf32> to vector<64x8xf32>
    %cst = arith.constant 5.000000e-01 : f32
    %2 = vector.broadcast %cst : f32 to vector<64x8xf32>
    %3 = arith.mulf %2, %1 : vector<64x8xf32>
    %cst_2 = arith.constant 0.707106769 : f32
    %4 = vector.broadcast %cst_2 : f32 to vector<64x8xf32>
    %5 = arith.mulf %1, %4 : vector<64x8xf32>
    %cst_3 = arith.constant 0.000000e+00 : f32
    %6 = vector.broadcast %cst_3 : f32 to vector<64x8xf32>
    %7 = arith.cmpf oge, %5, %6 : vector<64x8xf32>
    %cst_4 = arith.constant 1.000000e+00 : f32
    %cst_5 = arith.constant -1.000000e+00 : f32
    %8 = vector.broadcast %cst_4 : f32 to vector<64x8xf32>
    %9 = vector.broadcast %cst_5 : f32 to vector<64x8xf32>
    %10 = arith.select %7, %8, %9 : vector<64x8xi1>, vector<64x8xf32>
    %11 = math.absf %5 : vector<64x8xf32>
    %cst_6 = arith.constant 0.327591091 : f32
    %12 = vector.broadcast %cst_6 : f32 to vector<64x8xf32>
    %13 = arith.mulf %12, %11 : vector<64x8xf32>
    %cst_7 = arith.constant 1.000000e+00 : f32
    %14 = vector.broadcast %cst_7 : f32 to vector<64x8xf32>
    %15 = arith.addf %14, %13 : vector<64x8xf32>
    %cst_8 = arith.constant 1.000000e+00 : f32
    %16 = vector.broadcast %cst_8 : f32 to vector<64x8xf32>
    %17 = arith.divf %16, %15 : vector<64x8xf32>
    %cst_9 = arith.constant 1.06140542 : f32
    %18 = vector.broadcast %cst_9 : f32 to vector<64x8xf32>
    %19 = arith.mulf %18, %17 : vector<64x8xf32>
    %cst_10 = arith.constant -1.45315206 : f32
    %20 = vector.broadcast %cst_10 : f32 to vector<64x8xf32>
    %21 = arith.addf %19, %20 : vector<64x8xf32>
    %22 = arith.mulf %21, %17 : vector<64x8xf32>
    %cst_11 = arith.constant 1.42141378 : f32
    %23 = vector.broadcast %cst_11 : f32 to vector<64x8xf32>
    %24 = arith.addf %22, %23 : vector<64x8xf32>
    %25 = arith.mulf %24, %17 : vector<64x8xf32>
    %cst_12 = arith.constant -0.284496725 : f32
    %26 = vector.broadcast %cst_12 : f32 to vector<64x8xf32>
    %27 = arith.addf %25, %26 : vector<64x8xf32>
    %28 = arith.mulf %27, %17 : vector<64x8xf32>
    %cst_13 = arith.constant 0.254829586 : f32
    %29 = vector.broadcast %cst_13 : f32 to vector<64x8xf32>
    %30 = arith.addf %28, %29 : vector<64x8xf32>
    %31 = arith.mulf %30, %17 : vector<64x8xf32>
    %cst_14 = arith.constant 0.000000e+00 : f32
    %32 = vector.broadcast %cst_14 : f32 to vector<64x8xf32>
    %33 = arith.subf %32, %11 : vector<64x8xf32>
    %34 = arith.mulf %33, %11 : vector<64x8xf32>
    %35 = math.exp %34 : vector<64x8xf32>
    %36 = arith.mulf %31, %35 : vector<64x8xf32>
    %cst_15 = arith.constant 1.000000e+00 : f32
    %37 = vector.broadcast %cst_15 : f32 to vector<64x8xf32>
    %38 = arith.subf %37, %36 : vector<64x8xf32>
    %39 = arith.mulf %10, %38 : vector<64x8xf32>
    %cst_16 = arith.constant 1.000000e+00 : f32
    %40 = vector.broadcast %cst_16 : f32 to vector<64x8xf32>
    %41 = arith.addf %40, %39 : vector<64x8xf32>
    %42 = arith.mulf %3, %41 : vector<64x8xf32>
    %c0_17 = arith.constant 0 : index
    %c0_18 = arith.constant 0 : index
    %43 = vector.load %arg3[%c0_17, %c0_18] : memref<8x4xbf16, #tpu.memory_space<vmem>>, vector<8x4xbf16>
    %44 = arith.truncf %42 : vector<64x8xf32> to vector<64x8xbf16>
    %cst_19 = arith.constant dense<0.000000e+00> : vector<64x4xf32>
    %45 = tpu.matmul %44, %43, %cst_19 {dimension_numbers = #tpu.dot_dimension_numbers<[1], [0], [0], [1], [0, 0, 1, 1], [], []>} : vector<64x8xbf16>, vector<8x4xbf16>, vector<64x4xf32> -> vector<64x4xf32>
    %c0_20 = arith.constant 0 : index
    %c0_21 = arith.constant 0 : index
    %46 = vector.load %arg4[%c0_20, %c0_21] : memref<1x4xf32, #tpu.memory_space<vmem>>, vector<1x4xf32>
    %47 = vector.broadcast %46 : vector<1x4xf32> to vector<64x4xf32>
    %48 = arith.addf %45, %47 : vector<64x4xf32>
    %cst_22 = arith.constant 5.000000e-01 : f32
    %49 = vector.broadcast %cst_22 : f32 to vector<64x4xf32>
    %50 = arith.mulf %49, %48 : vector<64x4xf32>
    %cst_23 = arith.constant 0.707106769 : f32
    %51 = vector.broadcast %cst_23 : f32 to vector<64x4xf32>
    %52 = arith.mulf %48, %51 : vector<64x4xf32>
    %cst_24 = arith.constant 0.000000e+00 : f32
    %53 = vector.broadcast %cst_24 : f32 to vector<64x4xf32>
    %54 = arith.cmpf oge, %52, %53 : vector<64x4xf32>
    %cst_25 = arith.constant 1.000000e+00 : f32
    %cst_26 = arith.constant -1.000000e+00 : f32
    %55 = vector.broadcast %cst_25 : f32 to vector<64x4xf32>
    %56 = vector.broadcast %cst_26 : f32 to vector<64x4xf32>
    %57 = arith.select %54, %55, %56 : vector<64x4xi1>, vector<64x4xf32>
    %58 = math.absf %52 : vector<64x4xf32>
    %cst_27 = arith.constant 0.327591091 : f32
    %59 = vector.broadcast %cst_27 : f32 to vector<64x4xf32>
    %60 = arith.mulf %59, %58 : vector<64x4xf32>
    %cst_28 = arith.constant 1.000000e+00 : f32
    %61 = vector.broadcast %cst_28 : f32 to vector<64x4xf32>
    %62 = arith.addf %61, %60 : vector<64x4xf32>
    %cst_29 = arith.constant 1.000000e+00 : f32
    %63 = vector.broadcast %cst_29 : f32 to vector<64x4xf32>
    %64 = arith.divf %63, %62 : vector<64x4xf32>
    %cst_30 = arith.constant 1.06140542 : f32
    %65 = vector.broadcast %cst_30 : f32 to vector<64x4xf32>
    %66 = arith.mulf %65, %64 : vector<64x4xf32>
    %cst_31 = arith.constant -1.45315206 : f32
    %67 = vector.broadcast %cst_31 : f32 to vector<64x4xf32>
    %68 = arith.addf %66, %67 : vector<64x4xf32>
    %69 = arith.mulf %68, %64 : vector<64x4xf32>
    %cst_32 = arith.constant 1.42141378 : f32
    %70 = vector.broadcast %cst_32 : f32 to vector<64x4xf32>
    %71 = arith.addf %69, %70 : vector<64x4xf32>
    %72 = arith.mulf %71, %64 : vector<64x4xf32>
    %cst_33 = arith.constant -0.284496725 : f32
    %73 = vector.broadcast %cst_33 : f32 to vector<64x4xf32>
    %74 = arith.addf %72, %73 : vector<64x4xf32>
    %75 = arith.mulf %74, %64 : vector<64x4xf32>
    %cst_34 = arith.constant 0.254829586 : f32
    %76 = vector.broadcast %cst_34 : f32 to vector<64x4xf32>
    %77 = arith.addf %75, %76 : vector<64x4xf32>
    %78 = arith.mulf %77, %64 : vector<64x4xf32>
    %cst_35 = arith.constant 0.000000e+00 : f32
    %79 = vector.broadcast %cst_35 : f32 to vector<64x4xf32>
    %80 = arith.subf %79, %58 : vector<64x4xf32>
    %81 = arith.mulf %80, %58 : vector<64x4xf32>
    %82 = math.exp %81 : vector<64x4xf32>
    %83 = arith.mulf %78, %82 : vector<64x4xf32>
    %cst_36 = arith.constant 1.000000e+00 : f32
    %84 = vector.broadcast %cst_36 : f32 to vector<64x4xf32>
    %85 = arith.subf %84, %83 : vector<64x4xf32>
    %86 = arith.mulf %57, %85 : vector<64x4xf32>
    %cst_37 = arith.constant 1.000000e+00 : f32
    %87 = vector.broadcast %cst_37 : f32 to vector<64x4xf32>
    %88 = arith.addf %87, %86 : vector<64x4xf32>
    %89 = arith.mulf %50, %88 : vector<64x4xf32>
    %90 = arith.truncf %89 : vector<64x4xf32> to vector<64x4xbf16>
    %c0_38 = arith.constant 0 : index
    %c0_39 = arith.constant 0 : index
    %c0_40 = arith.constant 0 : index
    %91 = vector.load %arg2[%c0_38, %c0_39, %c0_40] : memref<9x64x64xbf16, #tpu.memory_space<vmem>>, vector<1x64x64xbf16>
    %92 = vector.shape_cast %91 : vector<1x64x64xbf16> to vector<64x64xbf16>
    %cst_41 = arith.constant dense<0.000000e+00> : vector<64x4xf32>
    %93 = tpu.matmul %92, %90, %cst_41 {dimension_numbers = #tpu.dot_dimension_numbers<[1], [0], [0], [1], [0, 0, 1, 1], [], []>} : vector<64x64xbf16>, vector<64x4xbf16>, vector<64x4xf32> -> vector<64x4xf32>
    %94 = arith.truncf %93 : vector<64x4xf32> to vector<64x4xbf16>
    %c0_42 = arith.constant 0 : index
    %c0_43 = arith.constant 0 : index
    %c0_44 = arith.constant 0 : index
    %95 = vector.load %arg5[%c0_42, %c0_43, %c0_44] : memref<9x4x4xbf16, #tpu.memory_space<vmem>>, vector<1x4x4xbf16>
    %96 = vector.shape_cast %95 : vector<1x4x4xbf16> to vector<4x4xbf16>
    %cst_45 = arith.constant dense<0.000000e+00> : vector<64x4xf32>
    %97 = tpu.matmul %94, %96, %cst_45 {dimension_numbers = #tpu.dot_dimension_numbers<[1], [0], [0], [1], [0, 0, 1, 1], [], []>} : vector<64x4xbf16>, vector<4x4xbf16>, vector<64x4xf32> -> vector<64x4xf32>
    %c1 = arith.constant 1 : index
    %c0_46 = arith.constant 0 : index
    %c0_47 = arith.constant 0 : index
    %98 = vector.load %arg2[%c1, %c0_46, %c0_47] : memref<9x64x64xbf16, #tpu.memory_space<vmem>>, vector<1x64x64xbf16>
    %99 = vector.shape_cast %98 : vector<1x64x64xbf16> to vector<64x64xbf16>
    %cst_48 = arith.constant dense<0.000000e+00> : vector<64x4xf32>
    %100 = tpu.matmul %99, %90, %cst_48 {dimension_numbers = #tpu.dot_dimension_numbers<[1], [0], [0], [1], [0, 0, 1, 1], [], []>} : vector<64x64xbf16>, vector<64x4xbf16>, vector<64x4xf32> -> vector<64x4xf32>
    %101 = arith.truncf %100 : vector<64x4xf32> to vector<64x4xbf16>
    %c1_49 = arith.constant 1 : index
    %c0_50 = arith.constant 0 : index
    %c0_51 = arith.constant 0 : index
    %102 = vector.load %arg5[%c1_49, %c0_50, %c0_51] : memref<9x4x4xbf16, #tpu.memory_space<vmem>>, vector<1x4x4xbf16>
    %103 = vector.shape_cast %102 : vector<1x4x4xbf16> to vector<4x4xbf16>
    %cst_52 = arith.constant dense<0.000000e+00> : vector<64x4xf32>
    %104 = tpu.matmul %101, %103, %cst_52 {dimension_numbers = #tpu.dot_dimension_numbers<[1], [0], [0], [1], [0, 0, 1, 1], [], []>} : vector<64x4xbf16>, vector<4x4xbf16>, vector<64x4xf32> -> vector<64x4xf32>
    %105 = arith.addf %97, %104 : vector<64x4xf32>
    %c2 = arith.constant 2 : index
    %c0_53 = arith.constant 0 : index
    %c0_54 = arith.constant 0 : index
    %106 = vector.load %arg2[%c2, %c0_53, %c0_54] : memref<9x64x64xbf16, #tpu.memory_space<vmem>>, vector<1x64x64xbf16>
    %107 = vector.shape_cast %106 : vector<1x64x64xbf16> to vector<64x64xbf16>
    %cst_55 = arith.constant dense<0.000000e+00> : vector<64x4xf32>
    %108 = tpu.matmul %107, %90, %cst_55 {dimension_numbers = #tpu.dot_dimension_numbers<[1], [0], [0], [1], [0, 0, 1, 1], [], []>} : vector<64x64xbf16>, vector<64x4xbf16>, vector<64x4xf32> -> vector<64x4xf32>
    %109 = arith.truncf %108 : vector<64x4xf32> to vector<64x4xbf16>
    %c2_56 = arith.constant 2 : index
    %c0_57 = arith.constant 0 : index
    %c0_58 = arith.constant 0 : index
    %110 = vector.load %arg5[%c2_56, %c0_57, %c0_58] : memref<9x4x4xbf16, #tpu.memory_space<vmem>>, vector<1x4x4xbf16>
    %111 = vector.shape_cast %110 : vector<1x4x4xbf16> to vector<4x4xbf16>
    %cst_59 = arith.constant dense<0.000000e+00> : vector<64x4xf32>
    %112 = tpu.matmul %109, %111, %cst_59 {dimension_numbers = #tpu.dot_dimension_numbers<[1], [0], [0], [1], [0, 0, 1, 1], [], []>} : vector<64x4xbf16>, vector<4x4xbf16>, vector<64x4xf32> -> vector<64x4xf32>
    %113 = arith.addf %105, %112 : vector<64x4xf32>
    %c3 = arith.constant 3 : index
    %c0_60 = arith.constant 0 : index
    %c0_61 = arith.constant 0 : index
    %114 = vector.load %arg2[%c3, %c0_60, %c0_61] : memref<9x64x64xbf16, #tpu.memory_space<vmem>>, vector<1x64x64xbf16>
    %115 = vector.shape_cast %114 : vector<1x64x64xbf16> to vector<64x64xbf16>
    %cst_62 = arith.constant dense<0.000000e+00> : vector<64x4xf32>
    %116 = tpu.matmul %115, %90, %cst_62 {dimension_numbers = #tpu.dot_dimension_numbers<[1], [0], [0], [1], [0, 0, 1, 1], [], []>} : vector<64x64xbf16>, vector<64x4xbf16>, vector<64x4xf32> -> vector<64x4xf32>
    %117 = arith.truncf %116 : vector<64x4xf32> to vector<64x4xbf16>
    %c3_63 = arith.constant 3 : index
    %c0_64 = arith.constant 0 : index
    %c0_65 = arith.constant 0 : index
    %118 = vector.load %arg5[%c3_63, %c0_64, %c0_65] : memref<9x4x4xbf16, #tpu.memory_space<vmem>>, vector<1x4x4xbf16>
    %119 = vector.shape_cast %118 : vector<1x4x4xbf16> to vector<4x4xbf16>
    %cst_66 = arith.constant dense<0.000000e+00> : vector<64x4xf32>
    %120 = tpu.matmul %117, %119, %cst_66 {dimension_numbers = #tpu.dot_dimension_numbers<[1], [0], [0], [1], [0, 0, 1, 1], [], []>} : vector<64x4xbf16>, vector<4x4xbf16>, vector<64x4xf32> -> vector<64x4xf32>
    %121 = arith.addf %113, %120 : vector<64x4xf32>
    %c4 = arith.constant 4 : index
    %c0_67 = arith.constant 0 : index
    %c0_68 = arith.constant 0 : index
    %122 = vector.load %arg5[%c4, %c0_67, %c0_68] : memref<9x4x4xbf16, #tpu.memory_space<vmem>>, vector<1x4x4xbf16>
    %123 = vector.shape_cast %122 : vector<1x4x4xbf16> to vector<4x4xbf16>
    %cst_69 = arith.constant dense<0.000000e+00> : vector<64x4xf32>
    %124 = tpu.matmul %90, %123, %cst_69 {dimension_numbers = #tpu.dot_dimension_numbers<[1], [0], [0], [1], [0, 0, 1, 1], [], []>} : vector<64x4xbf16>, vector<4x4xbf16>, vector<64x4xf32> -> vector<64x4xf32>
    %125 = arith.addf %121, %124 : vector<64x4xf32>
    %c5 = arith.constant 5 : index
    %c0_70 = arith.constant 0 : index
    %c0_71 = arith.constant 0 : index
    %126 = vector.load %arg2[%c5, %c0_70, %c0_71] : memref<9x64x64xbf16, #tpu.memory_space<vmem>>, vector<1x64x64xbf16>
    %127 = vector.shape_cast %126 : vector<1x64x64xbf16> to vector<64x64xbf16>
    %cst_72 = arith.constant dense<0.000000e+00> : vector<64x4xf32>
    %128 = tpu.matmul %127, %90, %cst_72 {dimension_numbers = #tpu.dot_dimension_numbers<[1], [0], [0], [1], [0, 0, 1, 1], [], []>} : vector<64x64xbf16>, vector<64x4xbf16>, vector<64x4xf32> -> vector<64x4xf32>
    %129 = arith.truncf %128 : vector<64x4xf32> to vector<64x4xbf16>
    %c5_73 = arith.constant 5 : index
    %c0_74 = arith.constant 0 : index
    %c0_75 = arith.constant 0 : index
    %130 = vector.load %arg5[%c5_73, %c0_74, %c0_75] : memref<9x4x4xbf16, #tpu.memory_space<vmem>>, vector<1x4x4xbf16>
    %131 = vector.shape_cast %130 : vector<1x4x4xbf16> to vector<4x4xbf16>
    %cst_76 = arith.constant dense<0.000000e+00> : vector<64x4xf32>
    %132 = tpu.matmul %129, %131, %cst_76 {dimension_numbers = #tpu.dot_dimension_numbers<[1], [0], [0], [1], [0, 0, 1, 1], [], []>} : vector<64x4xbf16>, vector<4x4xbf16>, vector<64x4xf32> -> vector<64x4xf32>
    %133 = arith.addf %125, %132 : vector<64x4xf32>
    %c6 = arith.constant 6 : index
    %c0_77 = arith.constant 0 : index
    %c0_78 = arith.constant 0 : index
    %134 = vector.load %arg2[%c6, %c0_77, %c0_78] : memref<9x64x64xbf16, #tpu.memory_space<vmem>>, vector<1x64x64xbf16>
    %135 = vector.shape_cast %134 : vector<1x64x64xbf16> to vector<64x64xbf16>
    %cst_79 = arith.constant dense<0.000000e+00> : vector<64x4xf32>
    %136 = tpu.matmul %135, %90, %cst_79 {dimension_numbers = #tpu.dot_dimension_numbers<[1], [0], [0], [1], [0, 0, 1, 1], [], []>} : vector<64x64xbf16>, vector<64x4xbf16>, vector<64x4xf32> -> vector<64x4xf32>
    %137 = arith.truncf %136 : vector<64x4xf32> to vector<64x4xbf16>
    %c6_80 = arith.constant 6 : index
    %c0_81 = arith.constant 0 : index
    %c0_82 = arith.constant 0 : index
    %138 = vector.load %arg5[%c6_80, %c0_81, %c0_82] : memref<9x4x4xbf16, #tpu.memory_space<vmem>>, vector<1x4x4xbf16>
    %139 = vector.shape_cast %138 : vector<1x4x4xbf16> to vector<4x4xbf16>
    %cst_83 = arith.constant dense<0.000000e+00> : vector<64x4xf32>
    %140 = tpu.matmul %137, %139, %cst_83 {dimension_numbers = #tpu.dot_dimension_numbers<[1], [0], [0], [1], [0, 0, 1, 1], [], []>} : vector<64x4xbf16>, vector<4x4xbf16>, vector<64x4xf32> -> vector<64x4xf32>
    %141 = arith.addf %133, %140 : vector<64x4xf32>
    %c7 = arith.constant 7 : index
    %c0_84 = arith.constant 0 : index
    %c0_85 = arith.constant 0 : index
    %142 = vector.load %arg2[%c7, %c0_84, %c0_85] : memref<9x64x64xbf16, #tpu.memory_space<vmem>>, vector<1x64x64xbf16>
    %143 = vector.shape_cast %142 : vector<1x64x64xbf16> to vector<64x64xbf16>
    %cst_86 = arith.constant dense<0.000000e+00> : vector<64x4xf32>
    %144 = tpu.matmul %143, %90, %cst_86 {dimension_numbers = #tpu.dot_dimension_numbers<[1], [0], [0], [1], [0, 0, 1, 1], [], []>} : vector<64x64xbf16>, vector<64x4xbf16>, vector<64x4xf32> -> vector<64x4xf32>
    %145 = arith.truncf %144 : vector<64x4xf32> to vector<64x4xbf16>
    %c7_87 = arith.constant 7 : index
    %c0_88 = arith.constant 0 : index
    %c0_89 = arith.constant 0 : index
    %146 = vector.load %arg5[%c7_87, %c0_88, %c0_89] : memref<9x4x4xbf16, #tpu.memory_space<vmem>>, vector<1x4x4xbf16>
    %147 = vector.shape_cast %146 : vector<1x4x4xbf16> to vector<4x4xbf16>
    %cst_90 = arith.constant dense<0.000000e+00> : vector<64x4xf32>
    %148 = tpu.matmul %145, %147, %cst_90 {dimension_numbers = #tpu.dot_dimension_numbers<[1], [0], [0], [1], [0, 0, 1, 1], [], []>} : vector<64x4xbf16>, vector<4x4xbf16>, vector<64x4xf32> -> vector<64x4xf32>
    %149 = arith.addf %141, %148 : vector<64x4xf32>
    %c8 = arith.constant 8 : index
    %c0_91 = arith.constant 0 : index
    %c0_92 = arith.constant 0 : index
    %150 = vector.load %arg2[%c8, %c0_91, %c0_92] : memref<9x64x64xbf16, #tpu.memory_space<vmem>>, vector<1x64x64xbf16>
    %151 = vector.shape_cast %150 : vector<1x64x64xbf16> to vector<64x64xbf16>
    %cst_93 = arith.constant dense<0.000000e+00> : vector<64x4xf32>
    %152 = tpu.matmul %151, %90, %cst_93 {dimension_numbers = #tpu.dot_dimension_numbers<[1], [0], [0], [1], [0, 0, 1, 1], [], []>} : vector<64x64xbf16>, vector<64x4xbf16>, vector<64x4xf32> -> vector<64x4xf32>
    %153 = arith.truncf %152 : vector<64x4xf32> to vector<64x4xbf16>
    %c8_94 = arith.constant 8 : index
    %c0_95 = arith.constant 0 : index
    %c0_96 = arith.constant 0 : index
    %154 = vector.load %arg5[%c8_94, %c0_95, %c0_96] : memref<9x4x4xbf16, #tpu.memory_space<vmem>>, vector<1x4x4xbf16>
    %155 = vector.shape_cast %154 : vector<1x4x4xbf16> to vector<4x4xbf16>
    %cst_97 = arith.constant dense<0.000000e+00> : vector<64x4xf32>
    %156 = tpu.matmul %153, %155, %cst_97 {dimension_numbers = #tpu.dot_dimension_numbers<[1], [0], [0], [1], [0, 0, 1, 1], [], []>} : vector<64x4xbf16>, vector<4x4xbf16>, vector<64x4xf32> -> vector<64x4xf32>
    %157 = arith.addf %149, %156 : vector<64x4xf32>
    %c0_98 = arith.constant 0 : index
    %c0_99 = arith.constant 0 : index
    %158 = vector.load %arg6[%c0_98, %c0_99] : memref<1x4xf32, #tpu.memory_space<vmem>>, vector<1x4xf32>
    %159 = vector.broadcast %158 : vector<1x4xf32> to vector<64x4xf32>
    %160 = arith.addf %157, %159 : vector<64x4xf32>
    %cst_100 = arith.constant 5.000000e-01 : f32
    %161 = vector.broadcast %cst_100 : f32 to vector<64x4xf32>
    %162 = arith.mulf %161, %160 : vector<64x4xf32>
    %cst_101 = arith.constant 0.707106769 : f32
    %163 = vector.broadcast %cst_101 : f32 to vector<64x4xf32>
    %164 = arith.mulf %160, %163 : vector<64x4xf32>
    %cst_102 = arith.constant 0.000000e+00 : f32
    %165 = vector.broadcast %cst_102 : f32 to vector<64x4xf32>
    %166 = arith.cmpf oge, %164, %165 : vector<64x4xf32>
    %cst_103 = arith.constant 1.000000e+00 : f32
    %cst_104 = arith.constant -1.000000e+00 : f32
    %167 = vector.broadcast %cst_103 : f32 to vector<64x4xf32>
    %168 = vector.broadcast %cst_104 : f32 to vector<64x4xf32>
    %169 = arith.select %166, %167, %168 : vector<64x4xi1>, vector<64x4xf32>
    %170 = math.absf %164 : vector<64x4xf32>
    %cst_105 = arith.constant 0.327591091 : f32
    %171 = vector.broadcast %cst_105 : f32 to vector<64x4xf32>
    %172 = arith.mulf %171, %170 : vector<64x4xf32>
    %cst_106 = arith.constant 1.000000e+00 : f32
    %173 = vector.broadcast %cst_106 : f32 to vector<64x4xf32>
    %174 = arith.addf %173, %172 : vector<64x4xf32>
    %cst_107 = arith.constant 1.000000e+00 : f32
    %175 = vector.broadcast %cst_107 : f32 to vector<64x4xf32>
    %176 = arith.divf %175, %174 : vector<64x4xf32>
    %cst_108 = arith.constant 1.06140542 : f32
    %177 = vector.broadcast %cst_108 : f32 to vector<64x4xf32>
    %178 = arith.mulf %177, %176 : vector<64x4xf32>
    %cst_109 = arith.constant -1.45315206 : f32
    %179 = vector.broadcast %cst_109 : f32 to vector<64x4xf32>
    %180 = arith.addf %178, %179 : vector<64x4xf32>
    %181 = arith.mulf %180, %176 : vector<64x4xf32>
    %cst_110 = arith.constant 1.42141378 : f32
    %182 = vector.broadcast %cst_110 : f32 to vector<64x4xf32>
    %183 = arith.addf %181, %182 : vector<64x4xf32>
    %184 = arith.mulf %183, %176 : vector<64x4xf32>
    %cst_111 = arith.constant -0.284496725 : f32
    %185 = vector.broadcast %cst_111 : f32 to vector<64x4xf32>
    %186 = arith.addf %184, %185 : vector<64x4xf32>
    %187 = arith.mulf %186, %176 : vector<64x4xf32>
    %cst_112 = arith.constant 0.254829586 : f32
    %188 = vector.broadcast %cst_112 : f32 to vector<64x4xf32>
    %189 = arith.addf %187, %188 : vector<64x4xf32>
    %190 = arith.mulf %189, %176 : vector<64x4xf32>
    %cst_113 = arith.constant 0.000000e+00 : f32
    %191 = vector.broadcast %cst_113 : f32 to vector<64x4xf32>
    %192 = arith.subf %191, %170 : vector<64x4xf32>
    %193 = arith.mulf %192, %170 : vector<64x4xf32>
    %194 = math.exp %193 : vector<64x4xf32>
    %195 = arith.mulf %190, %194 : vector<64x4xf32>
    %cst_114 = arith.constant 1.000000e+00 : f32
    %196 = vector.broadcast %cst_114 : f32 to vector<64x4xf32>
    %197 = arith.subf %196, %195 : vector<64x4xf32>
    %198 = arith.mulf %169, %197 : vector<64x4xf32>
    %cst_115 = arith.constant 1.000000e+00 : f32
    %199 = vector.broadcast %cst_115 : f32 to vector<64x4xf32>
    %200 = arith.addf %199, %198 : vector<64x4xf32>
    %201 = arith.mulf %162, %200 : vector<64x4xf32>
    %202 = arith.truncf %201 : vector<64x4xf32> to vector<64x4xbf16>
    %c0_116 = arith.constant 0 : index
    %c0_117 = arith.constant 0 : index
    %c0_118 = arith.constant 0 : index
    %203 = vector.load %arg2[%c0_116, %c0_117, %c0_118] : memref<9x64x64xbf16, #tpu.memory_space<vmem>>, vector<1x64x64xbf16>
    %204 = vector.shape_cast %203 : vector<1x64x64xbf16> to vector<64x64xbf16>
    %cst_119 = arith.constant dense<0.000000e+00> : vector<64x4xf32>
    %205 = tpu.matmul %204, %202, %cst_119 {dimension_numbers = #tpu.dot_dimension_numbers<[1], [0], [0], [1], [0, 0, 1, 1], [], []>} : vector<64x64xbf16>, vector<64x4xbf16>, vector<64x4xf32> -> vector<64x4xf32>
    %206 = arith.truncf %205 : vector<64x4xf32> to vector<64x4xbf16>
    %c0_120 = arith.constant 0 : index
    %c0_121 = arith.constant 0 : index
    %c0_122 = arith.constant 0 : index
    %207 = vector.load %arg7[%c0_120, %c0_121, %c0_122] : memref<9x4x4xbf16, #tpu.memory_space<vmem>>, vector<1x4x4xbf16>
    %208 = vector.shape_cast %207 : vector<1x4x4xbf16> to vector<4x4xbf16>
    %cst_123 = arith.constant dense<0.000000e+00> : vector<64x4xf32>
    %209 = tpu.matmul %206, %208, %cst_123 {dimension_numbers = #tpu.dot_dimension_numbers<[1], [0], [0], [1], [0, 0, 1, 1], [], []>} : vector<64x4xbf16>, vector<4x4xbf16>, vector<64x4xf32> -> vector<64x4xf32>
    %c1_124 = arith.constant 1 : index
    %c0_125 = arith.constant 0 : index
    %c0_126 = arith.constant 0 : index
    %210 = vector.load %arg2[%c1_124, %c0_125, %c0_126] : memref<9x64x64xbf16, #tpu.memory_space<vmem>>, vector<1x64x64xbf16>
    %211 = vector.shape_cast %210 : vector<1x64x64xbf16> to vector<64x64xbf16>
    %cst_127 = arith.constant dense<0.000000e+00> : vector<64x4xf32>
    %212 = tpu.matmul %211, %202, %cst_127 {dimension_numbers = #tpu.dot_dimension_numbers<[1], [0], [0], [1], [0, 0, 1, 1], [], []>} : vector<64x64xbf16>, vector<64x4xbf16>, vector<64x4xf32> -> vector<64x4xf32>
    %213 = arith.truncf %212 : vector<64x4xf32> to vector<64x4xbf16>
    %c1_128 = arith.constant 1 : index
    %c0_129 = arith.constant 0 : index
    %c0_130 = arith.constant 0 : index
    %214 = vector.load %arg7[%c1_128, %c0_129, %c0_130] : memref<9x4x4xbf16, #tpu.memory_space<vmem>>, vector<1x4x4xbf16>
    %215 = vector.shape_cast %214 : vector<1x4x4xbf16> to vector<4x4xbf16>
    %cst_131 = arith.constant dense<0.000000e+00> : vector<64x4xf32>
    %216 = tpu.matmul %213, %215, %cst_131 {dimension_numbers = #tpu.dot_dimension_numbers<[1], [0], [0], [1], [0, 0, 1, 1], [], []>} : vector<64x4xbf16>, vector<4x4xbf16>, vector<64x4xf32> -> vector<64x4xf32>
    %217 = arith.addf %209, %216 : vector<64x4xf32>
    %c2_132 = arith.constant 2 : index
    %c0_133 = arith.constant 0 : index
    %c0_134 = arith.constant 0 : index
    %218 = vector.load %arg2[%c2_132, %c0_133, %c0_134] : memref<9x64x64xbf16, #tpu.memory_space<vmem>>, vector<1x64x64xbf16>
    %219 = vector.shape_cast %218 : vector<1x64x64xbf16> to vector<64x64xbf16>
    %cst_135 = arith.constant dense<0.000000e+00> : vector<64x4xf32>
    %220 = tpu.matmul %219, %202, %cst_135 {dimension_numbers = #tpu.dot_dimension_numbers<[1], [0], [0], [1], [0, 0, 1, 1], [], []>} : vector<64x64xbf16>, vector<64x4xbf16>, vector<64x4xf32> -> vector<64x4xf32>
    %221 = arith.truncf %220 : vector<64x4xf32> to vector<64x4xbf16>
    %c2_136 = arith.constant 2 : index
    %c0_137 = arith.constant 0 : index
    %c0_138 = arith.constant 0 : index
    %222 = vector.load %arg7[%c2_136, %c0_137, %c0_138] : memref<9x4x4xbf16, #tpu.memory_space<vmem>>, vector<1x4x4xbf16>
    %223 = vector.shape_cast %222 : vector<1x4x4xbf16> to vector<4x4xbf16>
    %cst_139 = arith.constant dense<0.000000e+00> : vector<64x4xf32>
    %224 = tpu.matmul %221, %223, %cst_139 {dimension_numbers = #tpu.dot_dimension_numbers<[1], [0], [0], [1], [0, 0, 1, 1], [], []>} : vector<64x4xbf16>, vector<4x4xbf16>, vector<64x4xf32> -> vector<64x4xf32>
    %225 = arith.addf %217, %224 : vector<64x4xf32>
    %c3_140 = arith.constant 3 : index
    %c0_141 = arith.constant 0 : index
    %c0_142 = arith.constant 0 : index
    %226 = vector.load %arg2[%c3_140, %c0_141, %c0_142] : memref<9x64x64xbf16, #tpu.memory_space<vmem>>, vector<1x64x64xbf16>
    %227 = vector.shape_cast %226 : vector<1x64x64xbf16> to vector<64x64xbf16>
    %cst_143 = arith.constant dense<0.000000e+00> : vector<64x4xf32>
    %228 = tpu.matmul %227, %202, %cst_143 {dimension_numbers = #tpu.dot_dimension_numbers<[1], [0], [0], [1], [0, 0, 1, 1], [], []>} : vector<64x64xbf16>, vector<64x4xbf16>, vector<64x4xf32> -> vector<64x4xf32>
    %229 = arith.truncf %228 : vector<64x4xf32> to vector<64x4xbf16>
    %c3_144 = arith.constant 3 : index
    %c0_145 = arith.constant 0 : index
    %c0_146 = arith.constant 0 : index
    %230 = vector.load %arg7[%c3_144, %c0_145, %c0_146] : memref<9x4x4xbf16, #tpu.memory_space<vmem>>, vector<1x4x4xbf16>
    %231 = vector.shape_cast %230 : vector<1x4x4xbf16> to vector<4x4xbf16>
    %cst_147 = arith.constant dense<0.000000e+00> : vector<64x4xf32>
    %232 = tpu.matmul %229, %231, %cst_147 {dimension_numbers = #tpu.dot_dimension_numbers<[1], [0], [0], [1], [0, 0, 1, 1], [], []>} : vector<64x4xbf16>, vector<4x4xbf16>, vector<64x4xf32> -> vector<64x4xf32>
    %233 = arith.addf %225, %232 : vector<64x4xf32>
    %c4_148 = arith.constant 4 : index
    %c0_149 = arith.constant 0 : index
    %c0_150 = arith.constant 0 : index
    %234 = vector.load %arg7[%c4_148, %c0_149, %c0_150] : memref<9x4x4xbf16, #tpu.memory_space<vmem>>, vector<1x4x4xbf16>
    %235 = vector.shape_cast %234 : vector<1x4x4xbf16> to vector<4x4xbf16>
    %cst_151 = arith.constant dense<0.000000e+00> : vector<64x4xf32>
    %236 = tpu.matmul %202, %235, %cst_151 {dimension_numbers = #tpu.dot_dimension_numbers<[1], [0], [0], [1], [0, 0, 1, 1], [], []>} : vector<64x4xbf16>, vector<4x4xbf16>, vector<64x4xf32> -> vector<64x4xf32>
    %237 = arith.addf %233, %236 : vector<64x4xf32>
    %c5_152 = arith.constant 5 : index
    %c0_153 = arith.constant 0 : index
    %c0_154 = arith.constant 0 : index
    %238 = vector.load %arg2[%c5_152, %c0_153, %c0_154] : memref<9x64x64xbf16, #tpu.memory_space<vmem>>, vector<1x64x64xbf16>
    %239 = vector.shape_cast %238 : vector<1x64x64xbf16> to vector<64x64xbf16>
    %cst_155 = arith.constant dense<0.000000e+00> : vector<64x4xf32>
    %240 = tpu.matmul %239, %202, %cst_155 {dimension_numbers = #tpu.dot_dimension_numbers<[1], [0], [0], [1], [0, 0, 1, 1], [], []>} : vector<64x64xbf16>, vector<64x4xbf16>, vector<64x4xf32> -> vector<64x4xf32>
    %241 = arith.truncf %240 : vector<64x4xf32> to vector<64x4xbf16>
    %c5_156 = arith.constant 5 : index
    %c0_157 = arith.constant 0 : index
    %c0_158 = arith.constant 0 : index
    %242 = vector.load %arg7[%c5_156, %c0_157, %c0_158] : memref<9x4x4xbf16, #tpu.memory_space<vmem>>, vector<1x4x4xbf16>
    %243 = vector.shape_cast %242 : vector<1x4x4xbf16> to vector<4x4xbf16>
    %cst_159 = arith.constant dense<0.000000e+00> : vector<64x4xf32>
    %244 = tpu.matmul %241, %243, %cst_159 {dimension_numbers = #tpu.dot_dimension_numbers<[1], [0], [0], [1], [0, 0, 1, 1], [], []>} : vector<64x4xbf16>, vector<4x4xbf16>, vector<64x4xf32> -> vector<64x4xf32>
    %245 = arith.addf %237, %244 : vector<64x4xf32>
    %c6_160 = arith.constant 6 : index
    %c0_161 = arith.constant 0 : index
    %c0_162 = arith.constant 0 : index
    %246 = vector.load %arg2[%c6_160, %c0_161, %c0_162] : memref<9x64x64xbf16, #tpu.memory_space<vmem>>, vector<1x64x64xbf16>
    %247 = vector.shape_cast %246 : vector<1x64x64xbf16> to vector<64x64xbf16>
    %cst_163 = arith.constant dense<0.000000e+00> : vector<64x4xf32>
    %248 = tpu.matmul %247, %202, %cst_163 {dimension_numbers = #tpu.dot_dimension_numbers<[1], [0], [0], [1], [0, 0, 1, 1], [], []>} : vector<64x64xbf16>, vector<64x4xbf16>, vector<64x4xf32> -> vector<64x4xf32>
    %249 = arith.truncf %248 : vector<64x4xf32> to vector<64x4xbf16>
    %c6_164 = arith.constant 6 : index
    %c0_165 = arith.constant 0 : index
    %c0_166 = arith.constant 0 : index
    %250 = vector.load %arg7[%c6_164, %c0_165, %c0_166] : memref<9x4x4xbf16, #tpu.memory_space<vmem>>, vector<1x4x4xbf16>
    %251 = vector.shape_cast %250 : vector<1x4x4xbf16> to vector<4x4xbf16>
    %cst_167 = arith.constant dense<0.000000e+00> : vector<64x4xf32>
    %252 = tpu.matmul %249, %251, %cst_167 {dimension_numbers = #tpu.dot_dimension_numbers<[1], [0], [0], [1], [0, 0, 1, 1], [], []>} : vector<64x4xbf16>, vector<4x4xbf16>, vector<64x4xf32> -> vector<64x4xf32>
    %253 = arith.addf %245, %252 : vector<64x4xf32>
    %c7_168 = arith.constant 7 : index
    %c0_169 = arith.constant 0 : index
    %c0_170 = arith.constant 0 : index
    %254 = vector.load %arg2[%c7_168, %c0_169, %c0_170] : memref<9x64x64xbf16, #tpu.memory_space<vmem>>, vector<1x64x64xbf16>
    %255 = vector.shape_cast %254 : vector<1x64x64xbf16> to vector<64x64xbf16>
    %cst_171 = arith.constant dense<0.000000e+00> : vector<64x4xf32>
    %256 = tpu.matmul %255, %202, %cst_171 {dimension_numbers = #tpu.dot_dimension_numbers<[1], [0], [0], [1], [0, 0, 1, 1], [], []>} : vector<64x64xbf16>, vector<64x4xbf16>, vector<64x4xf32> -> vector<64x4xf32>
    %257 = arith.truncf %256 : vector<64x4xf32> to vector<64x4xbf16>
    %c7_172 = arith.constant 7 : index
    %c0_173 = arith.constant 0 : index
    %c0_174 = arith.constant 0 : index
    %258 = vector.load %arg7[%c7_172, %c0_173, %c0_174] : memref<9x4x4xbf16, #tpu.memory_space<vmem>>, vector<1x4x4xbf16>
    %259 = vector.shape_cast %258 : vector<1x4x4xbf16> to vector<4x4xbf16>
    %cst_175 = arith.constant dense<0.000000e+00> : vector<64x4xf32>
    %260 = tpu.matmul %257, %259, %cst_175 {dimension_numbers = #tpu.dot_dimension_numbers<[1], [0], [0], [1], [0, 0, 1, 1], [], []>} : vector<64x4xbf16>, vector<4x4xbf16>, vector<64x4xf32> -> vector<64x4xf32>
    %261 = arith.addf %253, %260 : vector<64x4xf32>
    %c8_176 = arith.constant 8 : index
    %c0_177 = arith.constant 0 : index
    %c0_178 = arith.constant 0 : index
    %262 = vector.load %arg2[%c8_176, %c0_177, %c0_178] : memref<9x64x64xbf16, #tpu.memory_space<vmem>>, vector<1x64x64xbf16>
    %263 = vector.shape_cast %262 : vector<1x64x64xbf16> to vector<64x64xbf16>
    %cst_179 = arith.constant dense<0.000000e+00> : vector<64x4xf32>
    %264 = tpu.matmul %263, %202, %cst_179 {dimension_numbers = #tpu.dot_dimension_numbers<[1], [0], [0], [1], [0, 0, 1, 1], [], []>} : vector<64x64xbf16>, vector<64x4xbf16>, vector<64x4xf32> -> vector<64x4xf32>
    %265 = arith.truncf %264 : vector<64x4xf32> to vector<64x4xbf16>
    %c8_180 = arith.constant 8 : index
    %c0_181 = arith.constant 0 : index
    %c0_182 = arith.constant 0 : index
    %266 = vector.load %arg7[%c8_180, %c0_181, %c0_182] : memref<9x4x4xbf16, #tpu.memory_space<vmem>>, vector<1x4x4xbf16>
    %267 = vector.shape_cast %266 : vector<1x4x4xbf16> to vector<4x4xbf16>
    %cst_183 = arith.constant dense<0.000000e+00> : vector<64x4xf32>
    %268 = tpu.matmul %265, %267, %cst_183 {dimension_numbers = #tpu.dot_dimension_numbers<[1], [0], [0], [1], [0, 0, 1, 1], [], []>} : vector<64x4xbf16>, vector<4x4xbf16>, vector<64x4xf32> -> vector<64x4xf32>
    %269 = arith.addf %261, %268 : vector<64x4xf32>
    %c0_184 = arith.constant 0 : index
    %c0_185 = arith.constant 0 : index
    %270 = vector.load %arg8[%c0_184, %c0_185] : memref<1x4xf32, #tpu.memory_space<vmem>>, vector<1x4xf32>
    %271 = vector.broadcast %270 : vector<1x4xf32> to vector<64x4xf32>
    %272 = arith.addf %269, %271 : vector<64x4xf32>
    %cst_186 = arith.constant 5.000000e-01 : f32
    %273 = vector.broadcast %cst_186 : f32 to vector<64x4xf32>
    %274 = arith.mulf %273, %272 : vector<64x4xf32>
    %cst_187 = arith.constant 0.707106769 : f32
    %275 = vector.broadcast %cst_187 : f32 to vector<64x4xf32>
    %276 = arith.mulf %272, %275 : vector<64x4xf32>
    %cst_188 = arith.constant 0.000000e+00 : f32
    %277 = vector.broadcast %cst_188 : f32 to vector<64x4xf32>
    %278 = arith.cmpf oge, %276, %277 : vector<64x4xf32>
    %cst_189 = arith.constant 1.000000e+00 : f32
    %cst_190 = arith.constant -1.000000e+00 : f32
    %279 = vector.broadcast %cst_189 : f32 to vector<64x4xf32>
    %280 = vector.broadcast %cst_190 : f32 to vector<64x4xf32>
    %281 = arith.select %278, %279, %280 : vector<64x4xi1>, vector<64x4xf32>
    %282 = math.absf %276 : vector<64x4xf32>
    %cst_191 = arith.constant 0.327591091 : f32
    %283 = vector.broadcast %cst_191 : f32 to vector<64x4xf32>
    %284 = arith.mulf %283, %282 : vector<64x4xf32>
    %cst_192 = arith.constant 1.000000e+00 : f32
    %285 = vector.broadcast %cst_192 : f32 to vector<64x4xf32>
    %286 = arith.addf %285, %284 : vector<64x4xf32>
    %cst_193 = arith.constant 1.000000e+00 : f32
    %287 = vector.broadcast %cst_193 : f32 to vector<64x4xf32>
    %288 = arith.divf %287, %286 : vector<64x4xf32>
    %cst_194 = arith.constant 1.06140542 : f32
    %289 = vector.broadcast %cst_194 : f32 to vector<64x4xf32>
    %290 = arith.mulf %289, %288 : vector<64x4xf32>
    %cst_195 = arith.constant -1.45315206 : f32
    %291 = vector.broadcast %cst_195 : f32 to vector<64x4xf32>
    %292 = arith.addf %290, %291 : vector<64x4xf32>
    %293 = arith.mulf %292, %288 : vector<64x4xf32>
    %cst_196 = arith.constant 1.42141378 : f32
    %294 = vector.broadcast %cst_196 : f32 to vector<64x4xf32>
    %295 = arith.addf %293, %294 : vector<64x4xf32>
    %296 = arith.mulf %295, %288 : vector<64x4xf32>
    %cst_197 = arith.constant -0.284496725 : f32
    %297 = vector.broadcast %cst_197 : f32 to vector<64x4xf32>
    %298 = arith.addf %296, %297 : vector<64x4xf32>
    %299 = arith.mulf %298, %288 : vector<64x4xf32>
    %cst_198 = arith.constant 0.254829586 : f32
    %300 = vector.broadcast %cst_198 : f32 to vector<64x4xf32>
    %301 = arith.addf %299, %300 : vector<64x4xf32>
    %302 = arith.mulf %301, %288 : vector<64x4xf32>
    %cst_199 = arith.constant 0.000000e+00 : f32
    %303 = vector.broadcast %cst_199 : f32 to vector<64x4xf32>
    %304 = arith.subf %303, %282 : vector<64x4xf32>
    %305 = arith.mulf %304, %282 : vector<64x4xf32>
    %306 = math.exp %305 : vector<64x4xf32>
    %307 = arith.mulf %302, %306 : vector<64x4xf32>
    %cst_200 = arith.constant 1.000000e+00 : f32
    %308 = vector.broadcast %cst_200 : f32 to vector<64x4xf32>
    %309 = arith.subf %308, %307 : vector<64x4xf32>
    %310 = arith.mulf %281, %309 : vector<64x4xf32>
    %cst_201 = arith.constant 1.000000e+00 : f32
    %311 = vector.broadcast %cst_201 : f32 to vector<64x4xf32>
    %312 = arith.addf %311, %310 : vector<64x4xf32>
    %313 = arith.mulf %274, %312 : vector<64x4xf32>
    %c0_202 = arith.constant 0 : index
    %c0_203 = arith.constant 0 : index
    %314 = vector.load %arg9[%c0_202, %c0_203] : memref<4x8xbf16, #tpu.memory_space<vmem>>, vector<4x8xbf16>
    %315 = arith.truncf %313 : vector<64x4xf32> to vector<64x4xbf16>
    %cst_204 = arith.constant dense<0.000000e+00> : vector<64x8xf32>
    %316 = tpu.matmul %315, %314, %cst_204 {dimension_numbers = #tpu.dot_dimension_numbers<[1], [0], [0], [1], [0, 0, 1, 1], [], []>} : vector<64x4xbf16>, vector<4x8xbf16>, vector<64x8xf32> -> vector<64x8xf32>
    %c0_205 = arith.constant 0 : index
    %c0_206 = arith.constant 0 : index
    %317 = vector.load %arg10[%c0_205, %c0_206] : memref<1x8xf32, #tpu.memory_space<vmem>>, vector<1x8xf32>
    %318 = vector.broadcast %317 : vector<1x8xf32> to vector<64x8xf32>
    %319 = arith.addf %316, %318 : vector<64x8xf32>
    %320 = arith.addf %1, %319 : vector<64x8xf32>
    %c0_207 = arith.constant 0 : index
    %c0_208 = arith.constant 0 : index
    %c0_209 = arith.constant 0 : index
    %321 = vector.load %arg11[%c0_207, %c0_208, %c0_209] : memref<1x64x8xf32, #tpu.memory_space<vmem>>, vector<1x64x8xf32>
    %322 = vector.shape_cast %321 : vector<1x64x8xf32> to vector<64x8xf32>
    %323 = vector.shape_cast %320 : vector<64x8xf32> to vector<1x64x8xf32>
    tpu.vector_store %arg11[%c0_207, %c0_208, %c0_209], %323 {strides = array<i32>} : memref<1x64x8xf32, #tpu.memory_space<vmem>>, vector<1x64x8xf32>,
    return
  }
  func.func @transform_0(%arg0: i32) -> (i32, i32, i32) {
    %c0_i32 = arith.constant 0 : i32
    %c0_i32_0 = arith.constant 0 : i32
    %c0_i32_1 = arith.constant 0 : i32
    return %arg0, %c0_i32, %c0_i32_0 : i32, i32, i32
  }
  func.func @transform_1(%arg0: i32) -> (i32, i32, i32) {
    %c0_i32 = arith.constant 0 : i32
    %c0_i32_0 = arith.constant 0 : i32
    %c0_i32_1 = arith.constant 0 : i32
    %c0_i32_2 = arith.constant 0 : i32
    return %c0_i32, %c0_i32_0, %c0_i32_1 : i32, i32, i32
  }
  func.func @transform_2(%arg0: i32) -> (i32, i32) {
    %c0_i32 = arith.constant 0 : i32
    %c0_i32_0 = arith.constant 0 : i32
    %c0_i32_1 = arith.constant 0 : i32
    return %c0_i32, %c0_i32_0 : i32, i32
  }
  func.func @transform_3(%arg0: i32) -> (i32, i32) {
    %c0_i32 = arith.constant 0 : i32
    %c0_i32_0 = arith.constant 0 : i32
    %c0_i32_1 = arith.constant 0 : i32
    return %c0_i32, %c0_i32_0 : i32, i32
  }
  func.func @transform_4(%arg0: i32) -> (i32, i32, i32) {
    %c0_i32 = arith.constant 0 : i32
    %c0_i32_0 = arith.constant 0 : i32
    %c0_i32_1 = arith.constant 0 : i32
    %c0_i32_2 = arith.constant 0 : i32
    return %c0_i32, %c0_i32_0, %c0_i32_1 : i32, i32, i32
  }
  func.func @transform_5(%arg0: i32) -> (i32, i32) {
    %c0_i32 = arith.constant 0 : i32
    %c0_i32_0 = arith.constant 0 : i32
    %c0_i32_1 = arith.constant 0 : i32
    return %c0_i32, %c0_i32_0 : i32, i32
  }
  func.func @transform_6(%arg0: i32) -> (i32, i32, i32) {
    %c0_i32 = arith.constant 0 : i32
    %c0_i32_0 = arith.constant 0 : i32
    %c0_i32_1 = arith.constant 0 : i32
    %c0_i32_2 = arith.constant 0 : i32
    return %c0_i32, %c0_i32_0, %c0_i32_1 : i32, i32, i32
  }
  func.func @transform_7(%arg0: i32) -> (i32, i32) {
    %c0_i32 = arith.constant 0 : i32
    %c0_i32_0 = arith.constant 0 : i32
    %c0_i32_1 = arith.constant 0 : i32
    return %c0_i32, %c0_i32_0 : i32, i32
  }
  func.func @transform_8(%arg0: i32) -> (i32, i32) {
    %c0_i32 = arith.constant 0 : i32
    %c0_i32_0 = arith.constant 0 : i32
    %c0_i32_1 = arith.constant 0 : i32
    return %c0_i32, %c0_i32_0 : i32, i32
  }
  func.func @transform_9(%arg0: i32) -> (i32, i32) {
    %c0_i32 = arith.constant 0 : i32
    %c0_i32_0 = arith.constant 0 : i32
    %c0_i32_1 = arith.constant 0 : i32
    return %c0_i32, %c0_i32_0 : i32, i32
  }
  func.func @transform_10(%arg0: i32) -> (i32, i32, i32) {
    %c0_i32 = arith.constant 0 : i32
    %c0_i32_0 = arith.constant 0 : i32
    %c0_i32_1 = arith.constant 0 : i32
    return %arg0, %c0_i32, %c0_i32_0 : i32, i32, i32
  }
}

</mosaic_0001>

<llo_original>
// kernel: _lambda_.5
$region0: #{_lambda_.5}
  #allocation0 [shape = 'u32[]', space=smem, size = 0x4, offset = 0x4, fixed_abs, tag = 'smem constant byte address 0x4 - core index']
  #allocation1 [shape = 'u32[72,128]{1,0:T(1,128)}', space=vmem, size = 0x9000, scoped, tag = 'internal scratch']
  %s0 = inlined_call_operand.vmem [shape: f32[32,16], index: 0, kind: input, shape index: {}]
  %s1 = inlined_call_operand.hbm [shape: bf16[16,8], index: 1, kind: input, shape index: {}]
  %s2 = inlined_call_operand.vmem [shape: f32[1,8], index: 2, kind: input, shape index: {}]
  %s3 = inlined_call_operand.vmem [shape: f32[32,8], index: 3, kind: output, shape index: {}]
  %s4 = sld [smem:[#allocation0]]
  $region26: #{_lambda_.5} parent=0
    _
  %s6 = ssub.s32 1, %s4
  %s7 = scalar_select 0, %s6, %s4
  $region1: #{_lambda_.5} parent=0
    #allocation2 [shape = 'u8[4096]{0}', space=vmem, size = 0x1000, scoped, tag = 'input window, operand 1, single buffered']
    #allocation3 [shape = 's32[1]{0}', space=sflag, size = 0x4, scoped, tag = 'scoped memory for _lambda_.5']
    %8 = vsyncpa [#allocation3], 0
    // Predicated region
    $region2: #{_lambda_.5} parent=1 // pred_check
      _
    $region3: #{_lambda_.5} parent=1 // pred_check_branch
      %10 = sbr.rel (0) target = $region5
    $region4: #{_lambda_.5} parent=1 // pred_region
      _
    $region5: #{_lambda_.5} parent=1 // pred_fallthru
      _
    // Predicated region
    $region6: #{_lambda_.5} parent=1 // pred_check
      _
    $region7: #{_lambda_.5} parent=1 // pred_check_branch
      %12 = sbr.rel (0) target = $region9
    $region8: #{_lambda_.5} parent=1 // pred_region
      %14 = vsyncadd [#allocation3], 0
      %s15 = sshll.u32 %s1, 4
      %s16 = int_to_ptr.hbm [resolvable:$true] %s15
      %s17 = sshll.u32 [#allocation2], 4
      %s18 = int_to_ptr.vmem [resolvable:$true] %s17
      %23 = dma.hbm_to_vmem [thread:$0]  %s16, 128, %s18, [#allocation3], 64, 64, 4
    $region9: #{_lambda_.5} parent=1 // pred_fallthru
      _
    // Predicated region
    $region10: #{_lambda_.5} parent=1 // pred_check
      _
    $region11: #{_lambda_.5} parent=1 // pred_check_branch
      %25 = sbr.rel (0) target = $region13
    $region12: #{_lambda_.5} parent=1 // pred_region
      _
    $region13: #{_lambda_.5} parent=1 // pred_fallthru
      _
    // Predicated region
    $region14: #{_lambda_.5} parent=1 // pred_check
      _
    $region15: #{_lambda_.5} parent=1 // pred_check_branch
      %27 = sbr.rel (0) target = $region17
    $region16: #{_lambda_.5} parent=1 // pred_region
      %29 = dma.done [#allocation3], 128
    $region17: #{_lambda_.5} parent=1 // pred_fallthru
      _
    %v31 = vld [vmem:[%s0] sm:$0xff]
    %v32 = vld [vmem:[%s0 + $0x8] sm:$0xff]
    %v33 = vld [vmem:[%s0 + $0x10] sm:$0xff]
    %v34 = vld [vmem:[%s0 + $0x18] sm:$0xff]
    %v35 = vld [vmem:[#allocation2] sm:$0xf]
    %v36 = vld [vmem:[#allocation2 + $0x4] sm:$0xf]
    %v37 = vpack.c.bf16 %v32, %v31
    %v38 = vpack.c.bf16 %v34, %v33
    %v39 = vld [vmem:[%s2] sm:$0x1]
    %v41 = vperm.slane %v39, 0
    %v45 = vunpack.c.l.b16 %v35
    %v46 = vunpack.c.l.b16 %v36
    %v47 = vpack.c.b16 %v46, %v45
    %vm49 = vcmask 130048
    %v51 = vsel %vm49, %v37, 0
    %v54 = vsel %vm49, %v38, 0
    %56 = vmatpush.bf16.msra.mxu0 0
    %57 = vmatpush.bf16.msra.mxu0 0
    %58 = vmatpush.bf16.msra.mxu0 0
    %59 = vmatpush.bf16.msra.mxu0 0
    %60 = vmatpush.bf16.msra.mxu0 0
    %61 = vmatpush.bf16.msra.mxu0 0
    %62 = vmatpush.bf16.msra.mxu0 0
    %63 = vmatpush.bf16.msra.mxu0 %v47
    %64 = vmatmul.bf16.gmra.mxu0 %v51
    %v65 = vpop.f32.mrf.mxu0
    %v66 = vadd.f32 %v41, %v65
    %v67 = vpop.f32.mrf.mxu0
    %v68 = vadd.f32 %v41, %v67
    %69 = vmatmul.bf16.gmra.mxu0 %v54
    %v70 = vpop.f32.mrf.mxu0
    %v71 = vadd.f32 %v41, %v70
    %v72 = vpop.f32.mrf.mxu0
    %v73 = vadd.f32 %v41, %v72
    %74 = vdwg.mxu0
    %vm75 = vcmask 64512
    %76 = vst.msk [vmem:[%s3] sm:$0xff] %vm75, %v66
    %77 = vst.msk [vmem:[%s3 + $0x8] sm:$0xff] %vm75, %v68
    %78 = vst.msk [vmem:[%s3 + $0x10] sm:$0xff] %vm75, %v71
    %79 = vst.msk [vmem:[%s3 + $0x18] sm:$0xff] %vm75, %v73
    // Predicated region
    $region18: #{_lambda_.5} parent=1 // pred_check
      _
    $region19: #{_lambda_.5} parent=1 // pred_check_branch
      %81 = sbr.rel (0) target = $region21
    $region20: #{_lambda_.5} parent=1 // pred_region
      _
    $region21: #{_lambda_.5} parent=1 // pred_fallthru
      _
    // Predicated region
    $region22: #{_lambda_.5} parent=1 // pred_check
      _
    $region23: #{_lambda_.5} parent=1 // pred_check_branch
      %83 = sbr.rel (0) target = $region25
    $region24: #{_lambda_.5} parent=1 // pred_region
      _
    $region25: #{_lambda_.5} parent=1 // pred_fallthru
      _
    %84 = vsyncpa [#allocation3], 1

// kernel: _lambda_.4
$region0: #{_lambda_.4}
  #allocation0 [shape = 'u32[]', space=smem, size = 0x4, offset = 0x4, fixed_abs, tag = 'smem constant byte address 0x4 - core index']
  #allocation1 [shape = 'u32[72,128]{1,0:T(1,128)}', space=vmem, size = 0x9000, scoped, tag = 'internal scratch']
  %s0 = inlined_call_operand.hbm [shape: f32[2,16,16], index: 0, kind: input, shape index: {}]
  %s1 = inlined_call_operand.hbm [shape: bf16[9,16,16], index: 1, kind: input, shape index: {}]
  %s2 = inlined_call_operand.hbm [shape: bf16[16,8], index: 2, kind: input, shape index: {}]
  %s3 = inlined_call_operand.vmem [shape: f32[1,8], index: 3, kind: input, shape index: {}, may-alias: {3,5,7}]
  %s4 = inlined_call_operand.hbm [shape: bf16[9,8,8], index: 4, kind: input, shape index: {}]
  %s5 = inlined_call_operand.vmem [shape: f32[1,8], index: 5, kind: input, shape index: {}, may-alias: {3,5,7}]
  %s6 = inlined_call_operand.hbm [shape: bf16[9,8,8], index: 6, kind: input, shape index: {}]
  %s7 = inlined_call_operand.vmem [shape: f32[1,8], index: 7, kind: input, shape index: {}, may-alias: {3,5,7}]
  %s8 = inlined_call_operand.vmem [shape: bf16[8,16], index: 8, kind: input, shape index: {}]
  %s9 = inlined_call_operand.vmem [shape: f32[1,16], index: 9, kind: input, shape index: {}]
  %s10 = inlined_call_operand.vmem [shape: f32[2,16,16], index: 10, kind: output, shape index: {}]
  %s11 = sld [smem:[#allocation0]]
  $region93: #{_lambda_.4} parent=0
    _
  %s13 = ssub.s32 1, %s11
  %s14 = scalar_select 0, %s13, %s11
  $region1: #{_lambda_.4} parent=0
    #allocation2 [shape = 'u8[16384]{0}', space=vmem, size = 0x4000, scoped, tag = 'input window, operand 0']
    #allocation3 [shape = 's32[2]{0}', space=sflag, size = 0x8, scoped, tag = 'scoped memory for _lambda_.4']
    #allocation4 [shape = 'u8[36864]{0}', space=vmem, size = 0x9000, scoped, tag = 'input window, operand 1, single buffered']
    #allocation5 [shape = 's32[1]{0}', space=sflag, size = 0x4, scoped, tag = 'scoped memory for _lambda_.4']
    #allocation6 [shape = 'u8[4096]{0}', space=vmem, size = 0x1000, scoped, tag = 'input window, operand 2, single buffered']
    #allocation7 [shape = 'u8[18432]{0}', space=vmem, size = 0x4800, scoped, tag = 'input window, operand 4, single buffered']
    #allocation8 [shape = 's32[1]{0}', space=sflag, size = 0x4, scoped, tag = 'scoped memory for _lambda_.4']
    #allocation9 [shape = 'u8[18432]{0}', space=vmem, size = 0x4800, scoped, tag = 'input window, operand 6, single buffered']
    %15 = vsyncpa [#allocation3], 0
    %s16 = scalar_lea.sflag [#allocation3], 1
    %17 = vsyncpa %s16, 0
    %18 = vsyncpa [#allocation5], 0
    %19 = vsyncpa [#allocation8], 0
    loop: start=0, step=1, limit=4
    $region2: #{_lambda_.4} parent=1 // loop_pre_header
      _
    $region3: #{_lambda_.4} parent=1 // loop_header
      %s21 = sphi 0, %s25
      %p22 = scmp.ge.s32.totalorder %s21, 4
      %s31 = sphi 0, %s33
      %s34 = sphi 0, %s31
      %s35 = sphi 0, %s34
      %s51 = sphi 0, %s35
      %s55 = sphi 0, %s55
      %s57 = sphi 0, %s55
      %s58 = sphi 0, %s57
      %s72 = sphi 0, %s58
      %s76 = sphi 0, %s76
      %s78 = sphi 0, %s76
      %s79 = sphi 0, %s78
      %s93 = sphi 0, %s79
      %s97 = sphi 0, %s97
      %s99 = sphi 0, %s97
      %s100 = sphi 0, %s99
      %s114 = sphi 0, %s100
      %s118 = sphi 0, %s118
      %s120 = sphi 0, %s118
      %s121 = sphi 0, %s120
      %s135 = sphi 0, %s121
      %s139 = sphi 0, %s139
      %s141 = sphi 0, %s139
      %s142 = sphi 0, %s141
      %s156 = sphi 0, %s142
      %s160 = sphi 0, %s160
      %s162 = sphi 0, %s160
      %s163 = sphi 0, %s162
      %s177 = sphi 0, %s163
      %s181 = sphi 0, %s181
      %s183 = sphi 0, %s181
      %s184 = sphi 0, %s183
      %s198 = sphi 0, %s184
      %s202 = sphi 0, %s202
      %s204 = sphi 0, %s202
      %s205 = sphi 0, %s204
      %s219 = sphi 0, %s205
      %s223 = sphi 0, %s223
      %s225 = sphi 0, %s223
      %s226 = sphi 0, %s225
      %s240 = sphi 0, %s226
      %s246 = sphi 0, %s248
      %s249 = sphi 0, %s246
      %s250 = sphi 0, %s249
      %s266 = sphi 0, %s250
    $region4: #{_lambda_.4} parent=1 // loop_header_branch
      %24 = sbr.rel (%p22) target = $region8
    $region5: #{_lambda_.4} parent=1 // loop_body
      %s26 = ssub.s32 %s21, 1
      %s27 = ssub.s32 %s21, 2
      %s28 = sadd.s32 %s21, 1
      %s29 = ssub.s32 %s21, %s28
      %p30 = scmp.eq.s32.totalorder %s29, 0
      %s32 = sadd.s32 %s31, 1
      %s33 = scalar_select %p30, %s31, %s32
      %p36 = pneg %p30
      %p37 = scmp.eq.s32.totalorder %s21, 1
      %p38 = por %p36, %p37
      %p39 = scmp.ne.s32.totalorder %s31, %s34
      %p40 = scmp.eq.s32.totalorder %s21, 0
      %p41 = por %p39, %p40
      %p42 = scmp.ne.s32.totalorder %s31, %s34
      %p43 = scmp.eq.s32.totalorder %s26, 1
      %p44 = por %p42, %p43
      %p45 = scmp.ne.s32.totalorder %s34, %s35
      %p46 = scmp.eq.s32.totalorder %s26, 0
      %p47 = por %p45, %p46
      %p48 = scmp.ne.s32.totalorder %s34, %s35
      %p49 = scmp.eq.s32.totalorder %s27, 1
      %p50 = por %p48, %p49
      %p52 = scmp.ne.s32.totalorder %s35, %s51
      %p53 = scmp.eq.s32.totalorder %s27, 0
      %p54 = por %p52, %p53
      %s56 = sadd.s32 %s55, 1
      %p59 = scmp.eq.s32.totalorder %s21, 1
      %p60 = scmp.ne.s32.totalorder %s55, %s57
      %p61 = scmp.eq.s32.totalorder %s21, 0
      %p62 = por %p60, %p61
      %p63 = scmp.ne.s32.totalorder %s55, %s57
      %p64 = scmp.eq.s32.totalorder %s26, 1
      %p65 = por %p63, %p64
      %p66 = scmp.ne.s32.totalorder %s57, %s58
      %p67 = scmp.eq.s32.totalorder %s26, 0
      %p68 = por %p66, %p67
      %p69 = scmp.ne.s32.totalorder %s57, %s58
      %p70 = scmp.eq.s32.totalorder %s27, 1
      %p71 = por %p69, %p70
      %p73 = scmp.ne.s32.totalorder %s58, %s72
      %p74 = scmp.eq.s32.totalorder %s27, 0
      %p75 = por %p73, %p74
      %s77 = sadd.s32 %s76, 1
      %p80 = scmp.eq.s32.totalorder %s21, 1
      %p81 = scmp.ne.s32.totalorder %s76, %s78
      %p82 = scmp.eq.s32.totalorder %s21, 0
      %p83 = por %p81, %p82
      %p84 = scmp.ne.s32.totalorder %s76, %s78
      %p85 = scmp.eq.s32.totalorder %s26, 1
      %p86 = por %p84, %p85
      %p87 = scmp.ne.s32.totalorder %s78, %s79
      %p88 = scmp.eq.s32.totalorder %s26, 0
      %p89 = por %p87, %p88
      %p90 = scmp.ne.s32.totalorder %s78, %s79
      %p91 = scmp.eq.s32.totalorder %s27, 1
      %p92 = por %p90, %p91
      %p94 = scmp.ne.s32.totalorder %s79, %s93
      %p95 = scmp.eq.s32.totalorder %s27, 0
      %p96 = por %p94, %p95
      %s98 = sadd.s32 %s97, 1
      %p101 = scmp.eq.s32.totalorder %s21, 1
      %p102 = scmp.ne.s32.totalorder %s97, %s99
      %p103 = scmp.eq.s32.totalorder %s21, 0
      %p104 = por %p102, %p103
      %p105 = scmp.ne.s32.totalorder %s97, %s99
      %p106 = scmp.eq.s32.totalorder %s26, 1
      %p107 = por %p105, %p106
      %p108 = scmp.ne.s32.totalorder %s99, %s100
      %p109 = scmp.eq.s32.totalorder %s26, 0
      %p110 = por %p108, %p109
      %p111 = scmp.ne.s32.totalorder %s99, %s100
      %p112 = scmp.eq.s32.totalorder %s27, 1
      %p113 = por %p111, %p112
      %p115 = scmp.ne.s32.totalorder %s100, %s114
      %p116 = scmp.eq.s32.totalorder %s27, 0
      %p117 = por %p115, %p116
      %s119 = sadd.s32 %s118, 1
      %p122 = scmp.eq.s32.totalorder %s21, 1
      %p123 = scmp.ne.s32.totalorder %s118, %s120
      %p124 = scmp.eq.s32.totalorder %s21, 0
      %p125 = por %p123, %p124
      %p126 = scmp.ne.s32.totalorder %s118, %s120
      %p127 = scmp.eq.s32.totalorder %s26, 1
      %p128 = por %p126, %p127
      %p129 = scmp.ne.s32.totalorder %s120, %s121
      %p130 = scmp.eq.s32.totalorder %s26, 0
      %p131 = por %p129, %p130
      %p132 = scmp.ne.s32.totalorder %s120, %s121
      %p133 = scmp.eq.s32.totalorder %s27, 1
      %p134 = por %p132, %p133
      %p136 = scmp.ne.s32.totalorder %s121, %s135
      %p137 = scmp.eq.s32.totalorder %s27, 0
      %p138 = por %p136, %p137
      %s140 = sadd.s32 %s139, 1
      %p143 = scmp.eq.s32.totalorder %s21, 1
      %p144 = scmp.ne.s32.totalorder %s139, %s141
      %p145 = scmp.eq.s32.totalorder %s21, 0
      %p146 = por %p144, %p145
      %p147 = scmp.ne.s32.totalorder %s139, %s141
      %p148 = scmp.eq.s32.totalorder %s26, 1
      %p149 = por %p147, %p148
      %p150 = scmp.ne.s32.totalorder %s141, %s142
      %p151 = scmp.eq.s32.totalorder %s26, 0
      %p152 = por %p150, %p151
      %p153 = scmp.ne.s32.totalorder %s141, %s142
      %p154 = scmp.eq.s32.totalorder %s27, 1
      %p155 = por %p153, %p154
      %p157 = scmp.ne.s32.totalorder %s142, %s156
      %p158 = scmp.eq.s32.totalorder %s27, 0
      %p159 = por %p157, %p158
      %s161 = sadd.s32 %s160, 1
      %p164 = scmp.eq.s32.totalorder %s21, 1
      %p165 = scmp.ne.s32.totalorder %s160, %s162
      %p166 = scmp.eq.s32.totalorder %s21, 0
      %p167 = por %p165, %p166
      %p168 = scmp.ne.s32.totalorder %s160, %s162
      %p169 = scmp.eq.s32.totalorder %s26, 1
      %p170 = por %p168, %p169
      %p171 = scmp.ne.s32.totalorder %s162, %s163
      %p172 = scmp.eq.s32.totalorder %s26, 0
      %p173 = por %p171, %p172
      %p174 = scmp.ne.s32.totalorder %s162, %s163
      %p175 = scmp.eq.s32.totalorder %s27, 1
      %p176 = por %p174, %p175
      %p178 = scmp.ne.s32.totalorder %s163, %s177
      %p179 = scmp.eq.s32.totalorder %s27, 0
      %p180 = por %p178, %p179
      %s182 = sadd.s32 %s181, 1
      %p185 = scmp.eq.s32.totalorder %s21, 1
      %p186 = scmp.ne.s32.totalorder %s181, %s183
      %p187 = scmp.eq.s32.totalorder %s21, 0
      %p188 = por %p186, %p187
      %p189 = scmp.ne.s32.totalorder %s181, %s183
      %p190 = scmp.eq.s32.totalorder %s26, 1
      %p191 = por %p189, %p190
      %p192 = scmp.ne.s32.totalorder %s183, %s184
      %p193 = scmp.eq.s32.totalorder %s26, 0
      %p194 = por %p192, %p193
      %p195 = scmp.ne.s32.totalorder %s183, %s184
      %p196 = scmp.eq.s32.totalorder %s27, 1
      %p197 = por %p195, %p196
      %p199 = scmp.ne.s32.totalorder %s184, %s198
      %p200 = scmp.eq.s32.totalorder %s27, 0
      %p201 = por %p199, %p200
      %s203 = sadd.s32 %s202, 1
      %p206 = scmp.eq.s32.totalorder %s21, 1
      %p207 = scmp.ne.s32.totalorder %s202, %s204
      %p208 = scmp.eq.s32.totalorder %s21, 0
      %p209 = por %p207, %p208
      %p210 = scmp.ne.s32.totalorder %s202, %s204
      %p211 = scmp.eq.s32.totalorder %s26, 1
      %p212 = por %p210, %p211
      %p213 = scmp.ne.s32.totalorder %s204, %s205
      %p214 = scmp.eq.s32.totalorder %s26, 0
      %p215 = por %p213, %p214
      %p216 = scmp.ne.s32.totalorder %s204, %s205
      %p217 = scmp.eq.s32.totalorder %s27, 1
      %p218 = por %p216, %p217
      %p220 = scmp.ne.s32.totalorder %s205, %s219
      %p221 = scmp.eq.s32.totalorder %s27, 0
      %p222 = por %p220, %p221
      %s224 = sadd.s32 %s223, 1
      %p227 = scmp.eq.s32.totalorder %s21, 1
      %p228 = scmp.ne.s32.totalorder %s223, %s225
      %p229 = scmp.eq.s32.totalorder %s21, 0
      %p230 = por %p228, %p229
      %p231 = scmp.ne.s32.totalorder %s223, %s225
      %p232 = scmp.eq.s32.totalorder %s26, 1
      %p233 = por %p231, %p232
      %p234 = scmp.ne.s32.totalorder %s225, %s226
      %p235 = scmp.eq.s32.totalorder %s26, 0
      %p236 = por %p234, %p235
      %p237 = scmp.ne.s32.totalorder %s225, %s226
      %p238 = scmp.eq.s32.totalorder %s27, 1
      %p239 = por %p237, %p238
      %p241 = scmp.ne.s32.totalorder %s226, %s240
      %p242 = scmp.eq.s32.totalorder %s27, 0
      %p243 = por %p241, %p242
      %s244 = ssub.s32 %s21, %s28
      %p245 = scmp.eq.s32.totalorder %s244, 0
      %s247 = sadd.s32 %s246, 1
      %s248 = scalar_select %p245, %s246, %s247
      %p251 = pneg %p245
      %p252 = scmp.eq.s32.totalorder %s21, 1
      %p253 = por %p251, %p252
      %p254 = scmp.ne.s32.totalorder %s246, %s249
      %p255 = scmp.eq.s32.totalorder %s21, 0
      %p256 = por %p254, %p255
      %p257 = scmp.ne.s32.totalorder %s246, %s249
      %p258 = scmp.eq.s32.totalorder %s26, 1
      %p259 = por %p257, %p258
      %p260 = scmp.ne.s32.totalorder %s249, %s250
      %p261 = scmp.eq.s32.totalorder %s26, 0
      %p262 = por %p260, %p261
      %p263 = scmp.ne.s32.totalorder %s249, %s250
      %p264 = scmp.eq.s32.totalorder %s27, 1
      %p265 = por %p263, %p264
      %p267 = scmp.ne.s32.totalorder %s250, %s266
      %p268 = scmp.eq.s32.totalorder %s27, 0
      %p269 = por %p267, %p268
      %p270 = scmp.le.s32.totalorder 1, %s21
      %p271 = scmp.lt.s32.totalorder %s21, 3
      %p272 = pnand %p270, %p271
      %p273 = pneg %p272
      // Predicated region
      $region9: #{_lambda_.4} parent=5 // pred_check
        _
      $region10: #{_lambda_.4} parent=5 // pred_check_branch
        %275 = sbr.rel (%p272) target = $region12
      $region11: #{_lambda_.4} parent=5 // pred_region
        %s276 = ssub.s32 %s21, 1
        // Predicated region
        $region13: #{_lambda_.4} parent=11 // pred_check
          %p277 = pneg %p68
        $region14: #{_lambda_.4} parent=11 // pred_check_branch
          %279 = sbr.rel (%p277) target = $region16
        $region15: #{_lambda_.4} parent=11 // pred_region
          %281 = vsyncadd [#allocation5], 0
          %s282 = sshll.u32 %s1, 4
          %s283 = int_to_ptr.hbm [resolvable:$true] %s282
          %s284 = sshll.u32 [#allocation4], 4
          %s285 = int_to_ptr.vmem [resolvable:$true] %s284
          %290 = dma.hbm_to_vmem [thread:$0]  %s283, 1152, %s285, [#allocation5], 64, 64, 4
        $region16: #{_lambda_.4} parent=11 // pred_fallthru
          _
        // Predicated region
        $region17: #{_lambda_.4} parent=11 // pred_check
          %p291 = pneg %p89
        $region18: #{_lambda_.4} parent=11 // pred_check_branch
          %293 = sbr.rel (%p291) target = $region20
        $region19: #{_lambda_.4} parent=11 // pred_region
          %295 = vsyncadd [#allocation5], 0
          %s296 = sshll.u32 %s2, 4
          %s297 = int_to_ptr.hbm [resolvable:$true] %s296
          %s298 = sshll.u32 [#allocation6], 4
          %s299 = int_to_ptr.vmem [resolvable:$true] %s298
          %304 = dma.hbm_to_vmem [thread:$0]  %s297, 128, %s299, [#allocation5], 64, 64, 4
        $region20: #{_lambda_.4} parent=11 // pred_fallthru
          _
        // Predicated region
        $region21: #{_lambda_.4} parent=11 // pred_check
          %p305 = pneg %p110
        $region22: #{_lambda_.4} parent=11 // pred_check_branch
          %307 = sbr.rel (%p305) target = $region24
        $region23: #{_lambda_.4} parent=11 // pred_region
          _
        $region24: #{_lambda_.4} parent=11 // pred_fallthru
          _
        // Predicated region
        $region25: #{_lambda_.4} parent=11 // pred_check
          %p308 = pneg %p131
        $region26: #{_lambda_.4} parent=11 // pred_check_branch
          %310 = sbr.rel (%p308) target = $region28
        $region27: #{_lambda_.4} parent=11 // pred_region
          %312 = vsyncadd [#allocation8], 0
          %s313 = sshll.u32 %s4, 4
          %s314 = int_to_ptr.hbm [resolvable:$true] %s313
          %s315 = sshll.u32 [#allocation7], 4
          %s316 = int_to_ptr.vmem [resolvable:$true] %s315
          %321 = dma.hbm_to_vmem [thread:$0]  %s314, 576, %s316, [#allocation8], 64, 64, 4
        $region28: #{_lambda_.4} parent=11 // pred_fallthru
          _
        // Predicated region
        $region29: #{_lambda_.4} parent=11 // pred_check
          %p322 = pneg %p152
        $region30: #{_lambda_.4} parent=11 // pred_check_branch
          %324 = sbr.rel (%p322) target = $region32
        $region31: #{_lambda_.4} parent=11 // pred_region
          _
        $region32: #{_lambda_.4} parent=11 // pred_fallthru
          _
        // Predicated region
        $region33: #{_lambda_.4} parent=11 // pred_check
          %p325 = pneg %p173
        $region34: #{_lambda_.4} parent=11 // pred_check_branch
          %327 = sbr.rel (%p325) target = $region36
        $region35: #{_lambda_.4} parent=11 // pred_region
          %329 = vsyncadd [#allocation8], 0
          %s330 = sshll.u32 %s6, 4
          %s331 = int_to_ptr.hbm [resolvable:$true] %s330
          %s332 = sshll.u32 [#allocation9], 4
          %s333 = int_to_ptr.vmem [resolvable:$true] %s332
          %338 = dma.hbm_to_vmem [thread:$0]  %s331, 576, %s333, [#allocation8], 64, 64, 4
        $region36: #{_lambda_.4} parent=11 // pred_fallthru
          _
        // Predicated region
        $region37: #{_lambda_.4} parent=11 // pred_check
          %p339 = pneg %p194
        $region38: #{_lambda_.4} parent=11 // pred_check_branch
          %341 = sbr.rel (%p339) target = $region40
        $region39: #{_lambda_.4} parent=11 // pred_region
          _
        $region40: #{_lambda_.4} parent=11 // pred_fallthru
          _
        // Predicated region
        $region41: #{_lambda_.4} parent=11 // pred_check
          %p342 = pneg %p215
        $region42: #{_lambda_.4} parent=11 // pred_check_branch
          %344 = sbr.rel (%p342) target = $region44
        $region43: #{_lambda_.4} parent=11 // pred_region
          _
        $region44: #{_lambda_.4} parent=11 // pred_fallthru
          _
        // Predicated region
        $region45: #{_lambda_.4} parent=11 // pred_check
          %p345 = pneg %p236
        $region46: #{_lambda_.4} parent=11 // pred_check_branch
          %347 = sbr.rel (%p345) target = $region48
        $region47: #{_lambda_.4} parent=11 // pred_region
          _
        $region48: #{_lambda_.4} parent=11 // pred_fallthru
          _
      $region12: #{_lambda_.4} parent=5 // pred_fallthru
        _
      %p348 = scmp.lt.s32.totalorder %s21, 2
      // Predicated region
      $region49: #{_lambda_.4} parent=5 // pred_check
        %p349 = pneg %p348
      $region50: #{_lambda_.4} parent=5 // pred_check_branch
        %351 = sbr.rel (%p349) target = $region52
      $region51: #{_lambda_.4} parent=5 // pred_region
        // Predicated region
        $region53: #{_lambda_.4} parent=51 // pred_check
          %p352 = pneg %p41
        $region54: #{_lambda_.4} parent=51 // pred_check_branch
          %354 = sbr.rel (%p352) target = $region56
        $region55: #{_lambda_.4} parent=51 // pred_region
          %s355 = sand.u32 %s31, 1
          %s356 = scalar_lea.sflag [#allocation3], %s355
          %s357 = sand.u32 %s31, 1
          %s358 = smul.addr %s357, 16
          %s359 = scalar_lea.vmem [#allocation2], %s358
          %361 = vsyncadd %s356, 0
          %s362 = smul.addr %s21, 2
          %s363 = smul.addr %s362, 8
          %s364 = scalar_lea.hbm %s0, %s363
          %s365 = sshll.u32 %s364, 4
          %s366 = int_to_ptr.hbm [resolvable:$true] %s365
          %s367 = sshll.u32 %s359, 4
          %s368 = int_to_ptr.vmem [resolvable:$true] %s367
          %373 = dma.hbm_to_vmem [thread:$0]  %s366, 256, %s368, %s356, 128, 128, 8
        $region56: #{_lambda_.4} parent=51 // pred_fallthru
          _
      $region52: #{_lambda_.4} parent=5 // pred_fallthru
        _
      %p374 = scmp.le.s32.totalorder 1, %s21
      %p375 = scmp.lt.s32.totalorder %s21, 3
      %p376 = pnand %p374, %p375
      %p377 = pneg %p376
      // Predicated region
      $region57: #{_lambda_.4} parent=5 // pred_check
        _
      $region58: #{_lambda_.4} parent=5 // pred_check_branch
        %379 = sbr.rel (%p376) target = $region60
      $region59: #{_lambda_.4} parent=5 // pred_region
        %s380 = ssub.s32 %s21, 1
        %s381 = sand.u32 %s34, 1
        %s382 = scalar_lea.sflag [#allocation3], %s381
        %s383 = sand.u32 %s34, 1
        %s384 = smul.addr %s383, 16
        %s385 = scalar_lea.vmem [#allocation2], %s384
        // Predicated region
        $region61: #{_lambda_.4} parent=59 // pred_check
          %p386 = pneg %p47
        $region62: #{_lambda_.4} parent=59 // pred_check_branch
          %388 = sbr.rel (%p386) target = $region64
        $region63: #{_lambda_.4} parent=59 // pred_region
          %390 = dma.done %s382, 256
        $region64: #{_lambda_.4} parent=59 // pred_fallthru
          _
        // Predicated region
        $region65: #{_lambda_.4} parent=59 // pred_check
          %p391 = pneg %p68
        $region66: #{_lambda_.4} parent=59 // pred_check_branch
          %393 = sbr.rel (%p391) target = $region68
        $region67: #{_lambda_.4} parent=59 // pred_region
          %395 = dma.done [#allocation5], 1152
        $region68: #{_lambda_.4} parent=59 // pred_fallthru
          _
        // Predicated region
        $region69: #{_lambda_.4} parent=59 // pred_check
          %p396 = pneg %p89
        $region70: #{_lambda_.4} parent=59 // pred_check_branch
          %398 = sbr.rel (%p396) target = $region72
        $region71: #{_lambda_.4} parent=59 // pred_region
          %400 = dma.done [#allocation5], 128
        $region72: #{_lambda_.4} parent=59 // pred_fallthru
          _
        // Predicated region
        $region73: #{_lambda_.4} parent=59 // pred_check
          %p401 = pneg %p131
        $region74: #{_lambda_.4} parent=59 // pred_check_branch
          %403 = sbr.rel (%p401) target = $region76
        $region75: #{_lambda_.4} parent=59 // pred_region
          %405 = dma.done [#allocation8], 576
        $region76: #{_lambda_.4} parent=59 // pred_fallthru
          _
        // Predicated region
        $region77: #{_lambda_.4} parent=59 // pred_check
          %p406 = pneg %p173
        $region78: #{_lambda_.4} parent=59 // pred_check_branch
          %408 = sbr.rel (%p406) target = $region80
        $region79: #{_lambda_.4} parent=59 // pred_region
          %410 = dma.done [#allocation8], 576
        $region80: #{_lambda_.4} parent=59 // pred_fallthru
          _
        %s411 = sand.u32 %s34, 1
        %s412 = scalar_lea.sflag [#allocation3], %s411
        %s413 = sand.u32 %s34, 1
        %s414 = smul.addr %s413, 16
        %s415 = scalar_lea.vmem [#allocation2], %s414
        %p416 = pneg %p47
        %p417 = pneg %p44
        %p418 = pneg %p68
        %p419 = pneg %p65
        %p420 = pneg %p89
        %p421 = pneg %p86
        %p422 = pneg %p110
        %p423 = pneg %p107
        %p424 = pneg %p131
        %p425 = pneg %p128
        %p426 = pneg %p152
        %p427 = pneg %p149
        %p428 = pneg %p173
        %p429 = pneg %p170
        %p430 = pneg %p194
        %p431 = pneg %p191
        %p432 = pneg %p215
        %p433 = pneg %p212
        %p434 = pneg %p236
        %p435 = pneg %p233
        %p436 = pneg %p262
        %p437 = pneg %p259
        %p438 = scmp.lt.s32.totalorder %s26, 1
        %s439 = scalar_select %p438, %s26, 1
        %s440 = smul.addr %s439, 2
        %s441 = smul.addr %s440, 8
        %s442 = scalar_lea.vmem %s10, %s441
        %p443 = scmp.lt.s32.totalorder %s26, 1
        %s444 = scalar_select %p443, %s26, 1
        %s445 = smul.addr %s444, 2
        %s446 = smul.addr %s445, 8
        %s447 = scalar_lea.vmem %s10, %s446
        %v449 = vld [vmem:[%s385] sm:$0xff]
        %v450 = vld [vmem:[%s385 + $0x8] sm:$0xff]
        %v451 = vmul.f32 %v449, 0.5
        %v452 = vmul.f32 %v450, 0.5
        %v453 = vmul.f32 %v449, 0.70710677
        %v454 = vmul.f32 %v450, 0.70710677
        %vm455 = vcmp.ge.f32.partialorder %v453, 0.0
        %vm456 = vcmp.ge.f32.partialorder %v454, 0.0
        %v457 = vsel %vm455, 1.0, -1.0
        %v458 = vsel %vm456, 1.0, -1.0
        %v459 = vand.u32 2147483647, %v453
        %v460 = vand.u32 2147483647, %v454
        %v461 = vmul.f32 %v459, 0.3275911
        %v462 = vmul.f32 %v460, 0.3275911
        %v463 = vadd.f32 %v461, 1.0
        %v464 = vadd.f32 %v462, 1.0
        %v465 = vrcp.pop %v463
        %v466 = vmul.f32 %v463, %v465
        %v467 = vsub.f32 1.0, %v466
        %v468 = vmul.f32 %v465, %v467
        %v469 = vadd.f32 %v465, %v468
        %vm470 = vweird.f32 %v463
        %vm471 = vweird.f32 %v465
        %vm472 = vmor %vm470, %vm471
        %v473 = vsel %vm472, %v465, %v469
        %v474 = vand.u32 2147483647, %v463
        %vm475 = vcmp.eq.f32.partialorder %v474, 8.507059e+37
        %v476 = vand.u32 %v463, 2147483648
        %v477 = vor.u32 1.1754944e-38, %v476
        %v478 = vsel %vm475, %v477, %v473
        %v479 = vmul.f32 1.0, %v478
        %v480 = vrcp.pop %v464
        %v481 = vmul.f32 %v464, %v480
        %v482 = vsub.f32 1.0, %v481
        %v483 = vmul.f32 %v480, %v482
        %v484 = vadd.f32 %v480, %v483
        %vm485 = vweird.f32 %v464
        %vm486 = vweird.f32 %v480
        %vm487 = vmor %vm485, %vm486
        %v488 = vsel %vm487, %v480, %v484
        %v489 = vand.u32 2147483647, %v464
        %vm490 = vcmp.eq.f32.partialorder %v489, 8.507059e+37
        %v491 = vand.u32 %v464, 2147483648
        %v492 = vor.u32 1.1754944e-38, %v491
        %v493 = vsel %vm490, %v492, %v488
        %v494 = vmul.f32 1.0, %v493
        %v495 = vmul.f32 %v479, 1.0614054
        %v496 = vmul.f32 %v494, 1.0614054
        %v497 = vadd.f32 %v495, -1.4531521
        %v498 = vadd.f32 %v496, -1.4531521
        %v499 = vmul.f32 %v497, %v479
        %v500 = vmul.f32 %v498, %v494
        %v501 = vadd.f32 %v499, 1.4214138
        %v502 = vadd.f32 %v500, 1.4214138
        %v503 = vmul.f32 %v501, %v479
        %v504 = vmul.f32 %v502, %v494
        %v505 = vadd.f32 %v503, -0.28449672
        %v506 = vadd.f32 %v504, -0.28449672
        %v507 = vmul.f32 %v505, %v479
        %v508 = vmul.f32 %v506, %v494
        %v509 = vadd.f32 %v507, 0.2548296
        %v510 = vadd.f32 %v508, 0.2548296
        %v511 = vmul.f32 %v509, %v479
        %v512 = vmul.f32 %v510, %v494
        %v513 = vsub.f32 0.0, %v459
        %v514 = vsub.f32 0.0, %v460
        %v515 = vmul.f32 %v513, %v459
        %v516 = vmul.f32 %v514, %v460
        %v517 = vmul.f32 %v515, 1.442695
        %v518 = vpow.pop %v517
        %v519 = vmul.f32 %v516, 1.442695
        %v520 = vpow.pop %v519
        %v521 = vmul.f32 %v511, %v518
        %v522 = vmul.f32 %v512, %v520
        %v523 = vsub.f32 1.0, %v521
        %v524 = vsub.f32 1.0, %v522
        %v525 = vmul.f32 %v457, %v523
        %v526 = vmul.f32 %v458, %v524
        %v527 = vadd.f32 %v525, 1.0
        %v528 = vadd.f32 %v526, 1.0
        %v529 = vmul.f32 %v451, %v527
        %v530 = vmul.f32 %v452, %v528
        %v531 = vld [vmem:[#allocation6] sm:$0xf]
        %v532 = vld [vmem:[#allocation6 + $0x4] sm:$0xf]
        %v533 = vpack.c.bf16 %v530, %v529
        %v534 = vld [vmem:[%s3] sm:$0x1]
        %v536 = vperm.slane %v534, 0
        %v540 = vunpack.c.l.b16 %v531
        %v541 = vunpack.c.l.b16 %v532
        %v542 = vpack.c.b16 %v541, %v540
        %vm544 = vcmask 130048
        %v546 = vsel %vm544, %v533, 0
        %548 = vmatpush.bf16.msra.mxu0 0
        %549 = vmatpush.bf16.msra.mxu0 0
        %550 = vmatpush.bf16.msra.mxu0 0
        %551 = vmatpush.bf16.msra.mxu0 0
        %552 = vmatpush.bf16.msra.mxu0 0
        %553 = vmatpush.bf16.msra.mxu0 0
        %554 = vmatpush.bf16.msra.mxu0 0
        %555 = vmatpush.bf16.msra.mxu0 %v542
        %556 = vmatmul.bf16.gmra.mxu0 %v546
        %v557 = vpop.f32.mrf.mxu0
        %v558 = vadd.f32 %v536, %v557
        %v559 = vpop.f32.mrf.mxu0
        %v560 = vadd.f32 %v536, %v559
        %561 = vdwg.mxu0
        %v562 = vmul.f32 %v558, 0.5
        %v563 = vmul.f32 %v560, 0.5
        %v564 = vmul.f32 %v558, 0.70710677
        %v565 = vmul.f32 %v560, 0.70710677
        %vm566 = vcmp.ge.f32.partialorder %v564, 0.0
        %vm567 = vcmp.ge.f32.partialorder %v565, 0.0
        %v568 = vsel %vm566, 1.0, -1.0
        %v569 = vsel %vm567, 1.0, -1.0
        %v570 = vand.u32 2147483647, %v564
        %v571 = vand.u32 2147483647, %v565
        %v572 = vmul.f32 %v570, 0.3275911
        %v573 = vmul.f32 %v571, 0.3275911
        %v574 = vadd.f32 %v572, 1.0
        %v575 = vadd.f32 %v573, 1.0
        %v576 = vrcp.pop %v574
        %v577 = vmul.f32 %v574, %v576
        %v578 = vsub.f32 1.0, %v577
        %v579 = vmul.f32 %v576, %v578
        %v580 = vadd.f32 %v576, %v579
        %vm581 = vweird.f32 %v574
        %vm582 = vweird.f32 %v576
        %vm583 = vmor %vm581, %vm582
        %v584 = vsel %vm583, %v576, %v580
        %v585 = vand.u32 2147483647, %v574
        %vm586 = vcmp.eq.f32.partialorder %v585, 8.507059e+37
        %v587 = vand.u32 %v574, 2147483648
        %v588 = vor.u32 1.1754944e-38, %v587
        %v589 = vsel %vm586, %v588, %v584
        %v590 = vmul.f32 1.0, %v589
        %v591 = vrcp.pop %v575
        %v592 = vmul.f32 %v575, %v591
        %v593 = vsub.f32 1.0, %v592
        %v594 = vmul.f32 %v591, %v593
        %v595 = vadd.f32 %v591, %v594
        %vm596 = vweird.f32 %v575
        %vm597 = vweird.f32 %v591
        %vm598 = vmor %vm596, %vm597
        %v599 = vsel %vm598, %v591, %v595
        %v600 = vand.u32 2147483647, %v575
        %vm601 = vcmp.eq.f32.partialorder %v600, 8.507059e+37
        %v602 = vand.u32 %v575, 2147483648
        %v603 = vor.u32 1.1754944e-38, %v602
        %v604 = vsel %vm601, %v603, %v599
        %v605 = vmul.f32 1.0, %v604
        %v606 = vmul.f32 %v590, 1.0614054
        %v607 = vmul.f32 %v605, 1.0614054
        %v608 = vadd.f32 %v606, -1.4531521
        %v609 = vadd.f32 %v607, -1.4531521
        %v610 = vmul.f32 %v608, %v590
        %v611 = vmul.f32 %v609, %v605
        %v612 = vadd.f32 %v610, 1.4214138
        %v613 = vadd.f32 %v611, 1.4214138
        %v614 = vmul.f32 %v612, %v590
        %v615 = vmul.f32 %v613, %v605
        %v616 = vadd.f32 %v614, -0.28449672
        %v617 = vadd.f32 %v615, -0.28449672
        %v618 = vmul.f32 %v616, %v590
        %v619 = vmul.f32 %v617, %v605
        %v620 = vadd.f32 %v618, 0.2548296
        %v621 = vadd.f32 %v619, 0.2548296
        %v622 = vmul.f32 %v620, %v590
        %v623 = vmul.f32 %v621, %v605
        %v624 = vsub.f32 0.0, %v570
        %v625 = vsub.f32 0.0, %v571
        %v626 = vmul.f32 %v624, %v570
        %v627 = vmul.f32 %v625, %v571
        %v628 = vmul.f32 %v626, 1.442695
        %v629 = vpow.pop %v628
        %v630 = vmul.f32 %v627, 1.442695
        %v631 = vpow.pop %v630
        %v632 = vmul.f32 %v622, %v629
        %v633 = vmul.f32 %v623, %v631
        %v634 = vsub.f32 1.0, %v632
        %v635 = vsub.f32 1.0, %v633
        %v636 = vmul.f32 %v568, %v634
        %v637 = vmul.f32 %v569, %v635
        %v638 = vadd.f32 %v636, 1.0
        %v639 = vadd.f32 %v637, 1.0
        %v640 = vmul.f32 %v562, %v638
        %v641 = vmul.f32 %v563, %v639
        %v642 = vpack.c.bf16 %v641, %v640
        %v643 = vld [vmem:[#allocation4] sm:$0xf]
        %v644 = vld [vmem:[#allocation4 + $0x4] sm:$0xf]
        %v647 = vunpack.c.l.b16 %v643
        %v648 = vunpack.c.l.b16 %v644
        %v649 = vpack.c.b16 %v648, %v647
        %v651 = vsel %vm544, %v649, 0
        %653 = vmatpush.bf16.msra.mxu0 0
        %654 = vmatpush.bf16.msra.mxu0 0
        %655 = vmatpush.bf16.msra.mxu0 0
        %656 = vmatpush.bf16.msra.mxu0 0
        %657 = vmatpush.bf16.msra.mxu0 0
        %658 = vmatpush.bf16.msra.mxu0 0
        %659 = vmatpush.bf16.msra.mxu0 0
        %660 = vmatpush.bf16.msra.mxu0 %v642
        %661 = vmatmul.bf16.gmra.mxu0 %v651
        %v662 = vpop.f32.mrf.mxu0
        %v663 = vadd.f32 0.0, %v662
        %v664 = vpop.f32.mrf.mxu0
        %v665 = vadd.f32 0.0, %v664
        %666 = vdwg.mxu0
        %v667 = vpack.c.bf16 %v665, %v663
        %v668 = vld [vmem:[#allocation7] sm:$0xf]
        %s669 = scalar_lea.vmem [#allocation4], 8
        %v670 = vld [vmem:[%s669] sm:$0xf]
        %v671 = vld [vmem:[%s669 + $0x4] sm:$0xf]
        %v674 = vunpack.c.l.b16 %v670
        %v675 = vunpack.c.l.b16 %v671
        %v676 = vpack.c.b16 %v675, %v674
        %v678 = vsel %vm544, %v676, 0
        %680 = vmatpush.bf16.msra.mxu0 0
        %681 = vmatpush.bf16.msra.mxu0 0
        %682 = vmatpush.bf16.msra.mxu0 0
        %683 = vmatpush.bf16.msra.mxu0 0
        %684 = vmatpush.bf16.msra.mxu0 0
        %685 = vmatpush.bf16.msra.mxu0 0
        %686 = vmatpush.bf16.msra.mxu0 0
        %687 = vmatpush.bf16.msra.mxu0 %v642
        %688 = vmatmul.bf16.gmra.mxu0 %v678
        %v689 = vpop.f32.mrf.mxu0
        %v690 = vadd.f32 0.0, %v689
        %v691 = vpop.f32.mrf.mxu0
        %v692 = vadd.f32 0.0, %v691
        %693 = vdwg.mxu0
        %v694 = vpack.c.bf16 %v692, %v690
        %s695 = scalar_lea.vmem [#allocation7], 4
        %v696 = vld [vmem:[%s695] sm:$0xf]
        %vm697 = vcmask 64512
        %v699 = vsel %vm697, %v694, 0
        %vm701 = vcmask 1043456
        %v703 = vsel %vm701, %v696, 0
        %705 = vmatpush.bf16.msra.mxu0 0
        %706 = vmatpush.bf16.msra.mxu0 0
        %707 = vmatpush.bf16.msra.mxu0 0
        %708 = vmatpush.bf16.msra.mxu0 0
        %709 = vmatpush.bf16.msra.mxu0 0
        %710 = vmatpush.bf16.msra.mxu0 0
        %711 = vmatpush.bf16.msra.mxu0 0
        %712 = vmatpush.bf16.msra.mxu0 %v703
        %713 = vmatmul.bf16.gmra.mxu0 %v699
        %v714 = vpop.f32.mrf.mxu0
        %v715 = vadd.f32 0.0, %v714
        %v716 = vpop.f32.mrf.mxu0
        %v717 = vadd.f32 0.0, %v716
        %718 = vdwg.mxu0
        %v720 = vsel %vm697, %v667, 0
        %v723 = vsel %vm701, %v668, 0
        %725 = vmatpush.bf16.msra.mxu0 0
        %726 = vmatpush.bf16.msra.mxu0 0
        %727 = vmatpush.bf16.msra.mxu0 0
        %728 = vmatpush.bf16.msra.mxu0 0
        %729 = vmatpush.bf16.msra.mxu0 0
        %730 = vmatpush.bf16.msra.mxu0 0
        %731 = vmatpush.bf16.msra.mxu0 0
        %732 = vmatpush.bf16.msra.mxu0 %v723
        %733 = vmatmul.bf16.gmra.mxu0 %v720
        %v734 = vpop.f32.mrf.mxu0
        %v735 = vadd.f32 %v715, %v734
        %v736 = vpop.f32.mrf.mxu0
        %v737 = vadd.f32 %v717, %v736
        %738 = vdwg.mxu0
        %s739 = scalar_lea.vmem [#allocation4], 16
        %v740 = vld [vmem:[%s739] sm:$0xf]
        %v741 = vld [vmem:[%s739 + $0x4] sm:$0xf]
        %v744 = vunpack.c.l.b16 %v740
        %v745 = vunpack.c.l.b16 %v741
        %v746 = vpack.c.b16 %v745, %v744
        %v748 = vsel %vm544, %v746, 0
        %750 = vmatpush.bf16.msra.mxu0 0
        %751 = vmatpush.bf16.msra.mxu0 0
        %752 = vmatpush.bf16.msra.mxu0 0
        %753 = vmatpush.bf16.msra.mxu0 0
        %754 = vmatpush.bf16.msra.mxu0 0
        %755 = vmatpush.bf16.msra.mxu0 0
        %756 = vmatpush.bf16.msra.mxu0 0
        %757 = vmatpush.bf16.msra.mxu0 %v642
        %758 = vmatmul.bf16.gmra.mxu0 %v748
        %v759 = vpop.f32.mrf.mxu0
        %v760 = vadd.f32 0.0, %v759
        %v761 = vpop.f32.mrf.mxu0
        %v762 = vadd.f32 0.0, %v761
        %763 = vdwg.mxu0
        %v764 = vpack.c.bf16 %v762, %v760
        %s765 = scalar_lea.vmem [#allocation7], 8
        %v766 = vld [vmem:[%s765] sm:$0xf]
        %v768 = vsel %vm697, %v764, 0
        %v771 = vsel %vm701, %v766, 0
        %773 = vmatpush.bf16.msra.mxu0 0
        %774 = vmatpush.bf16.msra.mxu0 0
        %775 = vmatpush.bf16.msra.mxu0 0
        %776 = vmatpush.bf16.msra.mxu0 0
        %777 = vmatpush.bf16.msra.mxu0 0
        %778 = vmatpush.bf16.msra.mxu0 0
        %779 = vmatpush.bf16.msra.mxu0 0
        %780 = vmatpush.bf16.msra.mxu0 %v771
        %781 = vmatmul.bf16.gmra.mxu0 %v768
        %v782 = vpop.f32.mrf.mxu0
        %v783 = vadd.f32 0.0, %v782
        %v784 = vpop.f32.mrf.mxu0
        %v785 = vadd.f32 0.0, %v784
        %786 = vdwg.mxu0
        %v787 = vadd.f32 %v735, %v783
        %v788 = vadd.f32 %v737, %v785
        %s789 = scalar_lea.vmem [#allocation4], 24
        %v790 = vld [vmem:[%s789] sm:$0xf]
        %v791 = vld [vmem:[%s789 + $0x4] sm:$0xf]
        %v794 = vunpack.c.l.b16 %v790
        %v795 = vunpack.c.l.b16 %v791
        %v796 = vpack.c.b16 %v795, %v794
        %v798 = vsel %vm544, %v796, 0
        %800 = vmatpush.bf16.msra.mxu0 0
        %801 = vmatpush.bf16.msra.mxu0 0
        %802 = vmatpush.bf16.msra.mxu0 0
        %803 = vmatpush.bf16.msra.mxu0 0
        %804 = vmatpush.bf16.msra.mxu0 0
        %805 = vmatpush.bf16.msra.mxu0 0
        %806 = vmatpush.bf16.msra.mxu0 0
        %807 = vmatpush.bf16.msra.mxu0 %v642
        %808 = vmatmul.bf16.gmra.mxu0 %v798
        %v809 = vpop.f32.mrf.mxu0
        %v810 = vadd.f32 0.0, %v809
        %v811 = vpop.f32.mrf.mxu0
        %v812 = vadd.f32 0.0, %v811
        %813 = vdwg.mxu0
        %v814 = vpack.c.bf16 %v812, %v810
        %s815 = scalar_lea.vmem [#allocation7], 12
        %v816 = vld [vmem:[%s815] sm:$0xf]
        %v818 = vsel %vm697, %v814, 0
        %v821 = vsel %vm701, %v816, 0
        %823 = vmatpush.bf16.msra.mxu0 0
        %824 = vmatpush.bf16.msra.mxu0 0
        %825 = vmatpush.bf16.msra.mxu0 0
        %826 = vmatpush.bf16.msra.mxu0 0
        %827 = vmatpush.bf16.msra.mxu0 0
        %828 = vmatpush.bf16.msra.mxu0 0
        %829 = vmatpush.bf16.msra.mxu0 0
        %830 = vmatpush.bf16.msra.mxu0 %v821
        %831 = vmatmul.bf16.gmra.mxu0 %v818
        %v832 = vpop.f32.mrf.mxu0
        %v833 = vadd.f32 0.0, %v832
        %v834 = vpop.f32.mrf.mxu0
        %v835 = vadd.f32 0.0, %v834
        %836 = vdwg.mxu0
        %v837 = vadd.f32 %v787, %v833
        %v838 = vadd.f32 %v788, %v835
        %s839 = scalar_lea.vmem [#allocation7], 16
        %v840 = vld [vmem:[%s839] sm:$0xf]
        %v842 = vsel %vm697, %v642, 0
        %v845 = vsel %vm701, %v840, 0
        %847 = vmatpush.bf16.msra.mxu0 0
        %848 = vmatpush.bf16.msra.mxu0 0
        %849 = vmatpush.bf16.msra.mxu0 0
        %850 = vmatpush.bf16.msra.mxu0 0
        %851 = vmatpush.bf16.msra.mxu0 0
        %852 = vmatpush.bf16.msra.mxu0 0
        %853 = vmatpush.bf16.msra.mxu0 0
        %854 = vmatpush.bf16.msra.mxu0 %v845
        %855 = vmatmul.bf16.gmra.mxu0 %v842
        %v856 = vpop.f32.mrf.mxu0
        %v857 = vadd.f32 0.0, %v856
        %v858 = vpop.f32.mrf.mxu0
        %v859 = vadd.f32 0.0, %v858
        %860 = vdwg.mxu0
        %v861 = vadd.f32 %v837, %v857
        %v862 = vadd.f32 %v838, %v859
        %s863 = scalar_lea.vmem [#allocation4], 40
        %v864 = vld [vmem:[%s863] sm:$0xf]
        %v865 = vld [vmem:[%s863 + $0x4] sm:$0xf]
        %v868 = vunpack.c.l.b16 %v864
        %v869 = vunpack.c.l.b16 %v865
        %v870 = vpack.c.b16 %v869, %v868
        %v872 = vsel %vm544, %v870, 0
        %874 = vmatpush.bf16.msra.mxu0 0
        %875 = vmatpush.bf16.msra.mxu0 0
        %876 = vmatpush.bf16.msra.mxu0 0
        %877 = vmatpush.bf16.msra.mxu0 0
        %878 = vmatpush.bf16.msra.mxu0 0
        %879 = vmatpush.bf16.msra.mxu0 0
        %880 = vmatpush.bf16.msra.mxu0 0
        %881 = vmatpush.bf16.msra.mxu0 %v642
        %882 = vmatmul.bf16.gmra.mxu0 %v872
        %v883 = vpop.f32.mrf.mxu0
        %v884 = vadd.f32 0.0, %v883
        %v885 = vpop.f32.mrf.mxu0
        %v886 = vadd.f32 0.0, %v885
        %887 = vdwg.mxu0
        %v888 = vpack.c.bf16 %v886, %v884
        %s889 = scalar_lea.vmem [#allocation7], 20
        %v890 = vld [vmem:[%s889] sm:$0xf]
        %v892 = vsel %vm697, %v888, 0
        %v895 = vsel %vm701, %v890, 0
        %897 = vmatpush.bf16.msra.mxu0 0
        %898 = vmatpush.bf16.msra.mxu0 0
        %899 = vmatpush.bf16.msra.mxu0 0
        %900 = vmatpush.bf16.msra.mxu0 0
        %901 = vmatpush.bf16.msra.mxu0 0
        %902 = vmatpush.bf16.msra.mxu0 0
        %903 = vmatpush.bf16.msra.mxu0 0
        %904 = vmatpush.bf16.msra.mxu0 %v895
        %905 = vmatmul.bf16.gmra.mxu0 %v892
        %v906 = vpop.f32.mrf.mxu0
        %v907 = vadd.f32 0.0, %v906
        %v908 = vpop.f32.mrf.mxu0
        %v909 = vadd.f32 0.0, %v908
        %910 = vdwg.mxu0
        %v911 = vadd.f32 %v861, %v907
        %v912 = vadd.f32 %v862, %v909
        %s913 = scalar_lea.vmem [#allocation4], 48
        %v914 = vld [vmem:[%s913] sm:$0xf]
        %v915 = vld [vmem:[%s913 + $0x4] sm:$0xf]
        %v918 = vunpack.c.l.b16 %v914
        %v919 = vunpack.c.l.b16 %v915
        %v920 = vpack.c.b16 %v919, %v918
        %v922 = vsel %vm544, %v920, 0
        %924 = vmatpush.bf16.msra.mxu0 0
        %925 = vmatpush.bf16.msra.mxu0 0
        %926 = vmatpush.bf16.msra.mxu0 0
        %927 = vmatpush.bf16.msra.mxu0 0
        %928 = vmatpush.bf16.msra.mxu0 0
        %929 = vmatpush.bf16.msra.mxu0 0
        %930 = vmatpush.bf16.msra.mxu0 0
        %931 = vmatpush.bf16.msra.mxu0 %v642
        %932 = vmatmul.bf16.gmra.mxu0 %v922
        %v933 = vpop.f32.mrf.mxu0
        %v934 = vadd.f32 0.0, %v933
        %v935 = vpop.f32.mrf.mxu0
        %v936 = vadd.f32 0.0, %v935
        %937 = vdwg.mxu0
        %v938 = vpack.c.bf16 %v936, %v934
        %s939 = scalar_lea.vmem [#allocation7], 24
        %v940 = vld [vmem:[%s939] sm:$0xf]
        %v942 = vsel %vm697, %v938, 0
        %v945 = vsel %vm701, %v940, 0
        %947 = vmatpush.bf16.msra.mxu0 0
        %948 = vmatpush.bf16.msra.mxu0 0
        %949 = vmatpush.bf16.msra.mxu0 0
        %950 = vmatpush.bf16.msra.mxu0 0
        %951 = vmatpush.bf16.msra.mxu0 0
        %952 = vmatpush.bf16.msra.mxu0 0
        %953 = vmatpush.bf16.msra.mxu0 0
        %954 = vmatpush.bf16.msra.mxu0 %v945
        %955 = vmatmul.bf16.gmra.mxu0 %v942
        %v956 = vpop.f32.mrf.mxu0
        %v957 = vadd.f32 0.0, %v956
        %v958 = vpop.f32.mrf.mxu0
        %v959 = vadd.f32 0.0, %v958
        %960 = vdwg.mxu0
        %v961 = vadd.f32 %v911, %v957
        %v962 = vadd.f32 %v912, %v959
        %s963 = scalar_lea.vmem [#allocation4], 56
        %v964 = vld [vmem:[%s963] sm:$0xf]
        %v965 = vld [vmem:[%s963 + $0x4] sm:$0xf]
        %v968 = vunpack.c.l.b16 %v964
        %v969 = vunpack.c.l.b16 %v965
        %v970 = vpack.c.b16 %v969, %v968
        %v972 = vsel %vm544, %v970, 0
        %974 = vmatpush.bf16.msra.mxu0 0
        %975 = vmatpush.bf16.msra.mxu0 0
        %976 = vmatpush.bf16.msra.mxu0 0
        %977 = vmatpush.bf16.msra.mxu0 0
        %978 = vmatpush.bf16.msra.mxu0 0
        %979 = vmatpush.bf16.msra.mxu0 0
        %980 = vmatpush.bf16.msra.mxu0 0
        %981 = vmatpush.bf16.msra.mxu0 %v642
        %982 = vmatmul.bf16.gmra.mxu0 %v972
        %v983 = vpop.f32.mrf.mxu0
        %v984 = vadd.f32 0.0, %v983
        %v985 = vpop.f32.mrf.mxu0
        %v986 = vadd.f32 0.0, %v985
        %987 = vdwg.mxu0
        %v988 = vpack.c.bf16 %v986, %v984
        %s989 = scalar_lea.vmem [#allocation7], 28
        %v990 = vld [vmem:[%s989] sm:$0xf]
        %v992 = vsel %vm697, %v988, 0
        %v995 = vsel %vm701, %v990, 0
        %997 = vmatpush.bf16.msra.mxu0 0
        %998 = vmatpush.bf16.msra.mxu0 0
        %999 = vmatpush.bf16.msra.mxu0 0
        %1000 = vmatpush.bf16.msra.mxu0 0
        %1001 = vmatpush.bf16.msra.mxu0 0
        %1002 = vmatpush.bf16.msra.mxu0 0
        %1003 = vmatpush.bf16.msra.mxu0 0
        %1004 = vmatpush.bf16.msra.mxu0 %v995
        %1005 = vmatmul.bf16.gmra.mxu0 %v992
        %v1006 = vpop.f32.mrf.mxu0
        %v1007 = vadd.f32 0.0, %v1006
        %v1008 = vpop.f32.mrf.mxu0
        %v1009 = vadd.f32 0.0, %v1008
        %1010 = vdwg.mxu0
        %v1011 = vadd.f32 %v961, %v1007
        %v1012 = vadd.f32 %v962, %v1009
        %s1013 = scalar_lea.vmem [#allocation4], 64
        %v1014 = vld [vmem:[%s1013] sm:$0xf]
        %v1015 = vld [vmem:[%s1013 + $0x4] sm:$0xf]
        %v1018 = vunpack.c.l.b16 %v1014
        %v1019 = vunpack.c.l.b16 %v1015
        %v1020 = vpack.c.b16 %v1019, %v1018
        %v1022 = vsel %vm544, %v1020, 0
        %1024 = vmatpush.bf16.msra.mxu0 0
        %1025 = vmatpush.bf16.msra.mxu0 0
        %1026 = vmatpush.bf16.msra.mxu0 0
        %1027 = vmatpush.bf16.msra.mxu0 0
        %1028 = vmatpush.bf16.msra.mxu0 0
        %1029 = vmatpush.bf16.msra.mxu0 0
        %1030 = vmatpush.bf16.msra.mxu0 0
        %1031 = vmatpush.bf16.msra.mxu0 %v642
        %1032 = vmatmul.bf16.gmra.mxu0 %v1022
        %v1033 = vpop.f32.mrf.mxu0
        %v1034 = vadd.f32 0.0, %v1033
        %v1035 = vpop.f32.mrf.mxu0
        %v1036 = vadd.f32 0.0, %v1035
        %1037 = vdwg.mxu0
        %v1038 = vpack.c.bf16 %v1036, %v1034
        %s1039 = scalar_lea.vmem [#allocation7], 32
        %v1040 = vld [vmem:[%s1039] sm:$0xf]
        %v1042 = vsel %vm697, %v1038, 0
        %v1045 = vsel %vm701, %v1040, 0
        %1047 = vmatpush.bf16.msra.mxu0 0
        %1048 = vmatpush.bf16.msra.mxu0 0
        %1049 = vmatpush.bf16.msra.mxu0 0
        %1050 = vmatpush.bf16.msra.mxu0 0
        %1051 = vmatpush.bf16.msra.mxu0 0
        %1052 = vmatpush.bf16.msra.mxu0 0
        %1053 = vmatpush.bf16.msra.mxu0 0
        %1054 = vmatpush.bf16.msra.mxu0 %v1045
        %1055 = vmatmul.bf16.gmra.mxu0 %v1042
        %v1056 = vpop.f32.mrf.mxu0
        %v1057 = vadd.f32 0.0, %v1056
        %v1058 = vpop.f32.mrf.mxu0
        %v1059 = vadd.f32 0.0, %v1058
        %1060 = vdwg.mxu0
        %v1061 = vadd.f32 %v1011, %v1057
        %v1062 = vadd.f32 %v1012, %v1059
        %v1063 = vld [vmem:[%s5] sm:$0x1]
        %v1065 = vperm.slane %v1063, 0
        %v1067 = vadd.f32 %v1061, %v1065
        %v1068 = vadd.f32 %v1062, %v1065
        %v1069 = vmul.f32 %v1067, 0.5
        %v1070 = vmul.f32 %v1068, 0.5
        %v1071 = vmul.f32 %v1067, 0.70710677
        %v1072 = vmul.f32 %v1068, 0.70710677
        %vm1073 = vcmp.ge.f32.partialorder %v1071, 0.0
        %vm1074 = vcmp.ge.f32.partialorder %v1072, 0.0
        %v1075 = vsel %vm1073, 1.0, -1.0
        %v1076 = vsel %vm1074, 1.0, -1.0
        %v1077 = vand.u32 2147483647, %v1071
        %v1078 = vand.u32 2147483647, %v1072
        %v1079 = vmul.f32 %v1077, 0.3275911
        %v1080 = vmul.f32 %v1078, 0.3275911
        %v1081 = vadd.f32 %v1079, 1.0
        %v1082 = vadd.f32 %v1080, 1.0
        %v1083 = vrcp.pop %v1081
        %v1084 = vmul.f32 %v1081, %v1083
        %v1085 = vsub.f32 1.0, %v1084
        %v1086 = vmul.f32 %v1083, %v1085
        %v1087 = vadd.f32 %v1083, %v1086
        %vm1088 = vweird.f32 %v1081
        %vm1089 = vweird.f32 %v1083
        %vm1090 = vmor %vm1088, %vm1089
        %v1091 = vsel %vm1090, %v1083, %v1087
        %v1092 = vand.u32 2147483647, %v1081
        %vm1093 = vcmp.eq.f32.partialorder %v1092, 8.507059e+37
        %v1094 = vand.u32 %v1081, 2147483648
        %v1095 = vor.u32 1.1754944e-38, %v1094
        %v1096 = vsel %vm1093, %v1095, %v1091
        %v1097 = vmul.f32 1.0, %v1096
        %v1098 = vrcp.pop %v1082
        %v1099 = vmul.f32 %v1082, %v1098
        %v1100 = vsub.f32 1.0, %v1099
        %v1101 = vmul.f32 %v1098, %v1100
        %v1102 = vadd.f32 %v1098, %v1101
        %vm1103 = vweird.f32 %v1082
        %vm1104 = vweird.f32 %v1098
        %vm1105 = vmor %vm1103, %vm1104
        %v1106 = vsel %vm1105, %v1098, %v1102
        %v1107 = vand.u32 2147483647, %v1082
        %vm1108 = vcmp.eq.f32.partialorder %v1107, 8.507059e+37
        %v1109 = vand.u32 %v1082, 2147483648
        %v1110 = vor.u32 1.1754944e-38, %v1109
        %v1111 = vsel %vm1108, %v1110, %v1106
        %v1112 = vmul.f32 1.0, %v1111
        %v1113 = vmul.f32 %v1097, 1.0614054
        %v1114 = vmul.f32 %v1112, 1.0614054
        %v1115 = vadd.f32 %v1113, -1.4531521
        %v1116 = vadd.f32 %v1114, -1.4531521
        %v1117 = vmul.f32 %v1115, %v1097
        %v1118 = vmul.f32 %v1116, %v1112
        %v1119 = vadd.f32 %v1117, 1.4214138
        %v1120 = vadd.f32 %v1118, 1.4214138
        %v1121 = vmul.f32 %v1119, %v1097
        %v1122 = vmul.f32 %v1120, %v1112
        %v1123 = vadd.f32 %v1121, -0.28449672
        %v1124 = vadd.f32 %v1122, -0.28449672
        %v1125 = vmul.f32 %v1123, %v1097
        %v1126 = vmul.f32 %v1124, %v1112
        %v1127 = vadd.f32 %v1125, 0.2548296
        %v1128 = vadd.f32 %v1126, 0.2548296
        %v1129 = vmul.f32 %v1127, %v1097
        %v1130 = vmul.f32 %v1128, %v1112
        %v1131 = vsub.f32 0.0, %v1077
        %v1132 = vsub.f32 0.0, %v1078
        %v1133 = vmul.f32 %v1131, %v1077
        %v1134 = vmul.f32 %v1132, %v1078
        %v1135 = vmul.f32 %v1133, 1.442695
        %v1136 = vpow.pop %v1135
        %v1137 = vmul.f32 %v1134, 1.442695
        %v1138 = vpow.pop %v1137
        %v1139 = vmul.f32 %v1129, %v1136
        %v1140 = vmul.f32 %v1130, %v1138
        %v1141 = vsub.f32 1.0, %v1139
        %v1142 = vsub.f32 1.0, %v1140
        %v1143 = vmul.f32 %v1075, %v1141
        %v1144 = vmul.f32 %v1076, %v1142
        %v1145 = vadd.f32 %v1143, 1.0
        %v1146 = vadd.f32 %v1144, 1.0
        %v1147 = vmul.f32 %v1069, %v1145
        %v1148 = vmul.f32 %v1070, %v1146
        %v1149 = vpack.c.bf16 %v1148, %v1147
        %1150 = vmatpush.bf16.msra.mxu0 0
        %1151 = vmatpush.bf16.msra.mxu0 0
        %1152 = vmatpush.bf16.msra.mxu0 0
        %1153 = vmatpush.bf16.msra.mxu0 0
        %1154 = vmatpush.bf16.msra.mxu0 0
        %1155 = vmatpush.bf16.msra.mxu0 0
        %1156 = vmatpush.bf16.msra.mxu0 0
        %1157 = vmatpush.bf16.msra.mxu0 %v1149
        %1158 = vmatmul.bf16.gmra.mxu0 %v651
        %v1159 = vpop.f32.mrf.mxu0
        %v1160 = vadd.f32 0.0, %v1159
        %v1161 = vpop.f32.mrf.mxu0
        %v1162 = vadd.f32 0.0, %v1161
        %1163 = vdwg.mxu0
        %v1164 = vpack.c.bf16 %v1162, %v1160
        %v1165 = vld [vmem:[#allocation9] sm:$0xf]
        %1166 = vmatpush.bf16.msra.mxu0 0
        %1167 = vmatpush.bf16.msra.mxu0 0
        %1168 = vmatpush.bf16.msra.mxu0 0
        %1169 = vmatpush.bf16.msra.mxu0 0
        %1170 = vmatpush.bf16.msra.mxu0 0
        %1171 = vmatpush.bf16.msra.mxu0 0
        %1172 = vmatpush.bf16.msra.mxu0 0
        %1173 = vmatpush.bf16.msra.mxu0 %v1149
        %1174 = vmatmul.bf16.gmra.mxu0 %v678
        %v1175 = vpop.f32.mrf.mxu0
        %v1176 = vadd.f32 0.0, %v1175
        %v1177 = vpop.f32.mrf.mxu0
        %v1178 = vadd.f32 0.0, %v1177
        %1179 = vdwg.mxu0
        %v1180 = vpack.c.bf16 %v1178, %v1176
        %s1181 = scalar_lea.vmem [#allocation9], 4
        %v1182 = vld [vmem:[%s1181] sm:$0xf]
        %v1184 = vsel %vm697, %v1180, 0
        %v1187 = vsel %vm701, %v1182, 0
        %1189 = vmatpush.bf16.msra.mxu0 0
        %1190 = vmatpush.bf16.msra.mxu0 0
        %1191 = vmatpush.bf16.msra.mxu0 0
        %1192 = vmatpush.bf16.msra.mxu0 0
        %1193 = vmatpush.bf16.msra.mxu0 0
        %1194 = vmatpush.bf16.msra.mxu0 0
        %1195 = vmatpush.bf16.msra.mxu0 0
        %1196 = vmatpush.bf16.msra.mxu0 %v1187
        %1197 = vmatmul.bf16.gmra.mxu0 %v1184
        %v1198 = vpop.f32.mrf.mxu0
        %v1199 = vadd.f32 0.0, %v1198
        %v1200 = vpop.f32.mrf.mxu0
        %v1201 = vadd.f32 0.0, %v1200
        %1202 = vdwg.mxu0
        %v1204 = vsel %vm697, %v1164, 0
        %v1207 = vsel %vm701, %v1165, 0
        %1209 = vmatpush.bf16.msra.mxu0 0
        %1210 = vmatpush.bf16.msra.mxu0 0
        %1211 = vmatpush.bf16.msra.mxu0 0
        %1212 = vmatpush.bf16.msra.mxu0 0
        %1213 = vmatpush.bf16.msra.mxu0 0
        %1214 = vmatpush.bf16.msra.mxu0 0
        %1215 = vmatpush.bf16.msra.mxu0 0
        %1216 = vmatpush.bf16.msra.mxu0 %v1207
        %1217 = vmatmul.bf16.gmra.mxu0 %v1204
        %v1218 = vpop.f32.mrf.mxu0
        %v1219 = vadd.f32 %v1199, %v1218
        %v1220 = vpop.f32.mrf.mxu0
        %v1221 = vadd.f32 %v1201, %v1220
        %1222 = vdwg.mxu0
        %1223 = vmatpush.bf16.msra.mxu0 0
        %1224 = vmatpush.bf16.msra.mxu0 0
        %1225 = vmatpush.bf16.msra.mxu0 0
        %1226 = vmatpush.bf16.msra.mxu0 0
        %1227 = vmatpush.bf16.msra.mxu0 0
        %1228 = vmatpush.bf16.msra.mxu0 0
        %1229 = vmatpush.bf16.msra.mxu0 0
        %1230 = vmatpush.bf16.msra.mxu0 %v1149
        %1231 = vmatmul.bf16.gmra.mxu0 %v748
        %v1232 = vpop.f32.mrf.mxu0
        %v1233 = vadd.f32 0.0, %v1232
        %v1234 = vpop.f32.mrf.mxu0
        %v1235 = vadd.f32 0.0, %v1234
        %1236 = vdwg.mxu0
        %v1237 = vpack.c.bf16 %v1235, %v1233
        %s1238 = scalar_lea.vmem [#allocation9], 8
        %v1239 = vld [vmem:[%s1238] sm:$0xf]
        %v1241 = vsel %vm697, %v1237, 0
        %v1244 = vsel %vm701, %v1239, 0
        %1246 = vmatpush.bf16.msra.mxu0 0
        %1247 = vmatpush.bf16.msra.mxu0 0
        %1248 = vmatpush.bf16.msra.mxu0 0
        %1249 = vmatpush.bf16.msra.mxu0 0
        %1250 = vmatpush.bf16.msra.mxu0 0
        %1251 = vmatpush.bf16.msra.mxu0 0
        %1252 = vmatpush.bf16.msra.mxu0 0
        %1253 = vmatpush.bf16.msra.mxu0 %v1244
        %1254 = vmatmul.bf16.gmra.mxu0 %v1241
        %v1255 = vpop.f32.mrf.mxu0
        %v1256 = vadd.f32 0.0, %v1255
        %v1257 = vpop.f32.mrf.mxu0
        %v1258 = vadd.f32 0.0, %v1257
        %1259 = vdwg.mxu0
        %v1260 = vadd.f32 %v1219, %v1256
        %v1261 = vadd.f32 %v1221, %v1258
        %1262 = vmatpush.bf16.msra.mxu0 0
        %1263 = vmatpush.bf16.msra.mxu0 0
        %1264 = vmatpush.bf16.msra.mxu0 0
        %1265 = vmatpush.bf16.msra.mxu0 0
        %1266 = vmatpush.bf16.msra.mxu0 0
        %1267 = vmatpush.bf16.msra.mxu0 0
        %1268 = vmatpush.bf16.msra.mxu0 0
        %1269 = vmatpush.bf16.msra.mxu0 %v1149
        %1270 = vmatmul.bf16.gmra.mxu0 %v798
        %v1271 = vpop.f32.mrf.mxu0
        %v1272 = vadd.f32 0.0, %v1271
        %v1273 = vpop.f32.mrf.mxu0
        %v1274 = vadd.f32 0.0, %v1273
        %1275 = vdwg.mxu0
        %v1276 = vpack.c.bf16 %v1274, %v1272
        %s1277 = scalar_lea.vmem [#allocation9], 12
        %v1278 = vld [vmem:[%s1277] sm:$0xf]
        %v1280 = vsel %vm697, %v1276, 0
        %v1283 = vsel %vm701, %v1278, 0
        %1285 = vmatpush.bf16.msra.mxu0 0
        %1286 = vmatpush.bf16.msra.mxu0 0
        %1287 = vmatpush.bf16.msra.mxu0 0
        %1288 = vmatpush.bf16.msra.mxu0 0
        %1289 = vmatpush.bf16.msra.mxu0 0
        %1290 = vmatpush.bf16.msra.mxu0 0
        %1291 = vmatpush.bf16.msra.mxu0 0
        %1292 = vmatpush.bf16.msra.mxu0 %v1283
        %1293 = vmatmul.bf16.gmra.mxu0 %v1280
        %v1294 = vpop.f32.mrf.mxu0
        %v1295 = vadd.f32 0.0, %v1294
        %v1296 = vpop.f32.mrf.mxu0
        %v1297 = vadd.f32 0.0, %v1296
        %1298 = vdwg.mxu0
        %v1299 = vadd.f32 %v1260, %v1295
        %v1300 = vadd.f32 %v1261, %v1297
        %s1301 = scalar_lea.vmem [#allocation9], 16
        %v1302 = vld [vmem:[%s1301] sm:$0xf]
        %v1304 = vsel %vm697, %v1149, 0
        %v1307 = vsel %vm701, %v1302, 0
        %1309 = vmatpush.bf16.msra.mxu0 0
        %1310 = vmatpush.bf16.msra.mxu0 0
        %1311 = vmatpush.bf16.msra.mxu0 0
        %1312 = vmatpush.bf16.msra.mxu0 0
        %1313 = vmatpush.bf16.msra.mxu0 0
        %1314 = vmatpush.bf16.msra.mxu0 0
        %1315 = vmatpush.bf16.msra.mxu0 0
        %1316 = vmatpush.bf16.msra.mxu0 %v1307
        %1317 = vmatmul.bf16.gmra.mxu0 %v1304
        %v1318 = vpop.f32.mrf.mxu0
        %v1319 = vadd.f32 0.0, %v1318
        %v1320 = vpop.f32.mrf.mxu0
        %v1321 = vadd.f32 0.0, %v1320
        %1322 = vdwg.mxu0
        %v1323 = vadd.f32 %v1299, %v1319
        %v1324 = vadd.f32 %v1300, %v1321
        %1325 = vmatpush.bf16.msra.mxu0 0
        %1326 = vmatpush.bf16.msra.mxu0 0
        %1327 = vmatpush.bf16.msra.mxu0 0
        %1328 = vmatpush.bf16.msra.mxu0 0
        %1329 = vmatpush.bf16.msra.mxu0 0
        %1330 = vmatpush.bf16.msra.mxu0 0
        %1331 = vmatpush.bf16.msra.mxu0 0
        %1332 = vmatpush.bf16.msra.mxu0 %v1149
        %1333 = vmatmul.bf16.gmra.mxu0 %v872
        %v1334 = vpop.f32.mrf.mxu0
        %v1335 = vadd.f32 0.0, %v1334
        %v1336 = vpop.f32.mrf.mxu0
        %v1337 = vadd.f32 0.0, %v1336
        %1338 = vdwg.mxu0
        %v1339 = vpack.c.bf16 %v1337, %v1335
        %s1340 = scalar_lea.vmem [#allocation9], 20
        %v1341 = vld [vmem:[%s1340] sm:$0xf]
        %v1343 = vsel %vm697, %v1339, 0
        %v1346 = vsel %vm701, %v1341, 0
        %1348 = vmatpush.bf16.msra.mxu0 0
        %1349 = vmatpush.bf16.msra.mxu0 0
        %1350 = vmatpush.bf16.msra.mxu0 0
        %1351 = vmatpush.bf16.msra.mxu0 0
        %1352 = vmatpush.bf16.msra.mxu0 0
        %1353 = vmatpush.bf16.msra.mxu0 0
        %1354 = vmatpush.bf16.msra.mxu0 0
        %1355 = vmatpush.bf16.msra.mxu0 %v1346
        %1356 = vmatmul.bf16.gmra.mxu0 %v1343
        %v1357 = vpop.f32.mrf.mxu0
        %v1358 = vadd.f32 0.0, %v1357
        %v1359 = vpop.f32.mrf.mxu0
        %v1360 = vadd.f32 0.0, %v1359
        %1361 = vdwg.mxu0
        %v1362 = vadd.f32 %v1323, %v1358
        %v1363 = vadd.f32 %v1324, %v1360
        %1364 = vmatpush.bf16.msra.mxu0 0
        %1365 = vmatpush.bf16.msra.mxu0 0
        %1366 = vmatpush.bf16.msra.mxu0 0
        %1367 = vmatpush.bf16.msra.mxu0 0
        %1368 = vmatpush.bf16.msra.mxu0 0
        %1369 = vmatpush.bf16.msra.mxu0 0
        %1370 = vmatpush.bf16.msra.mxu0 0
        %1371 = vmatpush.bf16.msra.mxu0 %v1149
        %1372 = vmatmul.bf16.gmra.mxu0 %v922
        %v1373 = vpop.f32.mrf.mxu0
        %v1374 = vadd.f32 0.0, %v1373
        %v1375 = vpop.f32.mrf.mxu0
        %v1376 = vadd.f32 0.0, %v1375
        %1377 = vdwg.mxu0
        %v1378 = vpack.c.bf16 %v1376, %v1374
        %s1379 = scalar_lea.vmem [#allocation9], 24
        %v1380 = vld [vmem:[%s1379] sm:$0xf]
        %v1382 = vsel %vm697, %v1378, 0
        %v1385 = vsel %vm701, %v1380, 0
        %1387 = vmatpush.bf16.msra.mxu0 0
        %1388 = vmatpush.bf16.msra.mxu0 0
        %1389 = vmatpush.bf16.msra.mxu0 0
        %1390 = vmatpush.bf16.msra.mxu0 0
        %1391 = vmatpush.bf16.msra.mxu0 0
        %1392 = vmatpush.bf16.msra.mxu0 0
        %1393 = vmatpush.bf16.msra.mxu0 0
        %1394 = vmatpush.bf16.msra.mxu0 %v1385
        %1395 = vmatmul.bf16.gmra.mxu0 %v1382
        %v1396 = vpop.f32.mrf.mxu0
        %v1397 = vadd.f32 0.0, %v1396
        %v1398 = vpop.f32.mrf.mxu0
        %v1399 = vadd.f32 0.0, %v1398
        %1400 = vdwg.mxu0
        %v1401 = vadd.f32 %v1362, %v1397
        %v1402 = vadd.f32 %v1363, %v1399
        %1403 = vmatpush.bf16.msra.mxu0 0
        %1404 = vmatpush.bf16.msra.mxu0 0
        %1405 = vmatpush.bf16.msra.mxu0 0
        %1406 = vmatpush.bf16.msra.mxu0 0
        %1407 = vmatpush.bf16.msra.mxu0 0
        %1408 = vmatpush.bf16.msra.mxu0 0
        %1409 = vmatpush.bf16.msra.mxu0 0
        %1410 = vmatpush.bf16.msra.mxu0 %v1149
        %1411 = vmatmul.bf16.gmra.mxu0 %v972
        %v1412 = vpop.f32.mrf.mxu0
        %v1413 = vadd.f32 0.0, %v1412
        %v1414 = vpop.f32.mrf.mxu0
        %v1415 = vadd.f32 0.0, %v1414
        %1416 = vdwg.mxu0
        %v1417 = vpack.c.bf16 %v1415, %v1413
        %s1418 = scalar_lea.vmem [#allocation9], 28
        %v1419 = vld [vmem:[%s1418] sm:$0xf]
        %v1421 = vsel %vm697, %v1417, 0
        %v1424 = vsel %vm701, %v1419, 0
        %1426 = vmatpush.bf16.msra.mxu0 0
        %1427 = vmatpush.bf16.msra.mxu0 0
        %1428 = vmatpush.bf16.msra.mxu0 0
        %1429 = vmatpush.bf16.msra.mxu0 0
        %1430 = vmatpush.bf16.msra.mxu0 0
        %1431 = vmatpush.bf16.msra.mxu0 0
        %1432 = vmatpush.bf16.msra.mxu0 0
        %1433 = vmatpush.bf16.msra.mxu0 %v1424
        %1434 = vmatmul.bf16.gmra.mxu0 %v1421
        %v1435 = vpop.f32.mrf.mxu0
        %v1436 = vadd.f32 0.0, %v1435
        %v1437 = vpop.f32.mrf.mxu0
        %v1438 = vadd.f32 0.0, %v1437
        %1439 = vdwg.mxu0
        %v1440 = vadd.f32 %v1401, %v1436
        %v1441 = vadd.f32 %v1402, %v1438
        %1442 = vmatpush.bf16.msra.mxu0 0
        %1443 = vmatpush.bf16.msra.mxu0 0
        %1444 = vmatpush.bf16.msra.mxu0 0
        %1445 = vmatpush.bf16.msra.mxu0 0
        %1446 = vmatpush.bf16.msra.mxu0 0
        %1447 = vmatpush.bf16.msra.mxu0 0
        %1448 = vmatpush.bf16.msra.mxu0 0
        %1449 = vmatpush.bf16.msra.mxu0 %v1149
        %1450 = vmatmul.bf16.gmra.mxu0 %v1022
        %v1451 = vpop.f32.mrf.mxu0
        %v1452 = vadd.f32 0.0, %v1451
        %v1453 = vpop.f32.mrf.mxu0
        %v1454 = vadd.f32 0.0, %v1453
        %1455 = vdwg.mxu0
        %v1456 = vpack.c.bf16 %v1454, %v1452
        %s1457 = scalar_lea.vmem [#allocation9], 32
        %v1458 = vld [vmem:[%s1457] sm:$0xf]
        %v1460 = vsel %vm697, %v1456, 0
        %v1463 = vsel %vm701, %v1458, 0
        %1465 = vmatpush.bf16.msra.mxu0 0
        %1466 = vmatpush.bf16.msra.mxu0 0
        %1467 = vmatpush.bf16.msra.mxu0 0
        %1468 = vmatpush.bf16.msra.mxu0 0
        %1469 = vmatpush.bf16.msra.mxu0 0
        %1470 = vmatpush.bf16.msra.mxu0 0
        %1471 = vmatpush.bf16.msra.mxu0 0
        %1472 = vmatpush.bf16.msra.mxu0 %v1463
        %1473 = vmatmul.bf16.gmra.mxu0 %v1460
        %v1474 = vpop.f32.mrf.mxu0
        %v1475 = vadd.f32 0.0, %v1474
        %v1476 = vpop.f32.mrf.mxu0
        %v1477 = vadd.f32 0.0, %v1476
        %1478 = vdwg.mxu0
        %v1479 = vadd.f32 %v1440, %v1475
        %v1480 = vadd.f32 %v1441, %v1477
        %v1481 = vld [vmem:[%s7] sm:$0x1]
        %v1483 = vperm.slane %v1481, 0
        %v1485 = vadd.f32 %v1479, %v1483
        %v1486 = vadd.f32 %v1480, %v1483
        %v1487 = vmul.f32 %v1485, 0.5
        %v1488 = vmul.f32 %v1486, 0.5
        %v1489 = vmul.f32 %v1485, 0.70710677
        %v1490 = vmul.f32 %v1486, 0.70710677
        %vm1491 = vcmp.ge.f32.partialorder %v1489, 0.0
        %vm1492 = vcmp.ge.f32.partialorder %v1490, 0.0
        %v1493 = vsel %vm1491, 1.0, -1.0
        %v1494 = vsel %vm1492, 1.0, -1.0
        %v1495 = vand.u32 2147483647, %v1489
        %v1496 = vand.u32 2147483647, %v1490
        %v1497 = vmul.f32 %v1495, 0.3275911
        %v1498 = vmul.f32 %v1496, 0.3275911
        %v1499 = vadd.f32 %v1497, 1.0
        %v1500 = vadd.f32 %v1498, 1.0
        %v1501 = vrcp.pop %v1499
        %v1502 = vmul.f32 %v1499, %v1501
        %v1503 = vsub.f32 1.0, %v1502
        %v1504 = vmul.f32 %v1501, %v1503
        %v1505 = vadd.f32 %v1501, %v1504
        %vm1506 = vweird.f32 %v1499
        %vm1507 = vweird.f32 %v1501
        %vm1508 = vmor %vm1506, %vm1507
        %v1509 = vsel %vm1508, %v1501, %v1505
        %v1510 = vand.u32 2147483647, %v1499
        %vm1511 = vcmp.eq.f32.partialorder %v1510, 8.507059e+37
        %v1512 = vand.u32 %v1499, 2147483648
        %v1513 = vor.u32 1.1754944e-38, %v1512
        %v1514 = vsel %vm1511, %v1513, %v1509
        %v1515 = vmul.f32 1.0, %v1514
        %v1516 = vrcp.pop %v1500
        %v1517 = vmul.f32 %v1500, %v1516
        %v1518 = vsub.f32 1.0, %v1517
        %v1519 = vmul.f32 %v1516, %v1518
        %v1520 = vadd.f32 %v1516, %v1519
        %vm1521 = vweird.f32 %v1500
        %vm1522 = vweird.f32 %v1516
        %vm1523 = vmor %vm1521, %vm1522
        %v1524 = vsel %vm1523, %v1516, %v1520
        %v1525 = vand.u32 2147483647, %v1500
        %vm1526 = vcmp.eq.f32.partialorder %v1525, 8.507059e+37
        %v1527 = vand.u32 %v1500, 2147483648
        %v1528 = vor.u32 1.1754944e-38, %v1527
        %v1529 = vsel %vm1526, %v1528, %v1524
        %v1530 = vmul.f32 1.0, %v1529
        %v1531 = vmul.f32 %v1515, 1.0614054
        %v1532 = vmul.f32 %v1530, 1.0614054
        %v1533 = vadd.f32 %v1531, -1.4531521
        %v1534 = vadd.f32 %v1532, -1.4531521
        %v1535 = vmul.f32 %v1533, %v1515
        %v1536 = vmul.f32 %v1534, %v1530
        %v1537 = vadd.f32 %v1535, 1.4214138
        %v1538 = vadd.f32 %v1536, 1.4214138
        %v1539 = vmul.f32 %v1537, %v1515
        %v1540 = vmul.f32 %v1538, %v1530
        %v1541 = vadd.f32 %v1539, -0.28449672
        %v1542 = vadd.f32 %v1540, -0.28449672
        %v1543 = vmul.f32 %v1541, %v1515
        %v1544 = vmul.f32 %v1542, %v1530
        %v1545 = vadd.f32 %v1543, 0.2548296
        %v1546 = vadd.f32 %v1544, 0.2548296
        %v1547 = vmul.f32 %v1545, %v1515
        %v1548 = vmul.f32 %v1546, %v1530
        %v1549 = vsub.f32 0.0, %v1495
        %v1550 = vsub.f32 0.0, %v1496
        %v1551 = vmul.f32 %v1549, %v1495
        %v1552 = vmul.f32 %v1550, %v1496
        %v1553 = vmul.f32 %v1551, 1.442695
        %v1554 = vpow.pop %v1553
        %v1555 = vmul.f32 %v1552, 1.442695
        %v1556 = vpow.pop %v1555
        %v1557 = vmul.f32 %v1547, %v1554
        %v1558 = vmul.f32 %v1548, %v1556
        %v1559 = vsub.f32 1.0, %v1557
        %v1560 = vsub.f32 1.0, %v1558
        %v1561 = vmul.f32 %v1493, %v1559
        %v1562 = vmul.f32 %v1494, %v1560
        %v1563 = vadd.f32 %v1561, 1.0
        %v1564 = vadd.f32 %v1562, 1.0
        %v1565 = vmul.f32 %v1487, %v1563
        %v1566 = vmul.f32 %v1488, %v1564
        %v1567 = vld [vmem:[%s8] sm:$0xf]
        %v1568 = vpack.c.bf16 %v1566, %v1565
        %v1569 = vld [vmem:[%s9] sm:$0x1]
        %v1571 = vperm.slane %v1569, 0
        %v1574 = vsel %vm697, %v1568, 0
        %v1577 = vsel %vm701, %v1567, 0
        %1579 = vmatpush.bf16.msra.mxu0 0
        %1580 = vmatpush.bf16.msra.mxu0 0
        %1581 = vmatpush.bf16.msra.mxu0 0
        %1582 = vmatpush.bf16.msra.mxu0 0
        %1583 = vmatpush.bf16.msra.mxu0 0
        %1584 = vmatpush.bf16.msra.mxu0 0
        %1585 = vmatpush.bf16.msra.mxu0 0
        %1586 = vmatpush.bf16.msra.mxu0 %v1577
        %1587 = vmatmul.bf16.gmra.mxu0 %v1574
        %v1588 = vpop.f32.mrf.mxu0
        %v1589 = vadd.f32 %v1571, %v1588
        %v1590 = vpop.f32.mrf.mxu0
        %v1591 = vadd.f32 %v1571, %v1590
        %1592 = vdwg.mxu0
        %v1593 = vadd.f32 %v449, %v1589
        %v1594 = vadd.f32 %v450, %v1591
        %1595 = vst.msk [vmem:[%s447] sm:$0xff] %vm544, %v1593
        %1596 = vst.msk [vmem:[%s447 + $0x8] sm:$0xff] %vm544, %v1594
        %p1597 = scmp.lt.s32.totalorder %s26, 1
        %s1598 = scalar_select %p1597, %s26, 1
        %s1599 = smul.addr %s1598, 2
        %s1600 = smul.addr %s1599, 8
        %s1601 = scalar_lea.vmem %s10, %s1600
        // Predicated region
        $region81: #{_lambda_.4} parent=59 // pred_check
          %p1602 = pneg %p259
        $region82: #{_lambda_.4} parent=59 // pred_check_branch
          %1604 = sbr.rel (%p1602) target = $region84
        $region83: #{_lambda_.4} parent=59 // pred_region
          _
        $region84: #{_lambda_.4} parent=59 // pred_fallthru
          _
      $region60: #{_lambda_.4} parent=5 // pred_fallthru
        _
      %p1605 = scmp.le.s32.totalorder 2, %s21
      // Predicated region
      $region85: #{_lambda_.4} parent=5 // pred_check
        %p1606 = pneg %p1605
      $region86: #{_lambda_.4} parent=5 // pred_check_branch
        %1608 = sbr.rel (%p1606) target = $region88
      $region87: #{_lambda_.4} parent=5 // pred_region
        %s1609 = ssub.s32 %s21, 2
        // Predicated region
        $region89: #{_lambda_.4} parent=87 // pred_check
          %p1610 = pneg %p265
        $region90: #{_lambda_.4} parent=87 // pred_check_branch
          %1612 = sbr.rel (%p1610) target = $region92
        $region91: #{_lambda_.4} parent=87 // pred_region
          %p1613 = scmp.lt.s32.totalorder %s27, 1
          %s1614 = scalar_select %p1613, %s27, 1
          %s1615 = smul.addr %s1614, 2
          %s1616 = smul.addr %s1615, 8
          %s1617 = scalar_lea.vmem %s10, %s1616
        $region92: #{_lambda_.4} parent=87 // pred_fallthru
          _
      $region88: #{_lambda_.4} parent=5 // pred_fallthru
        _
    $region6: #{_lambda_.4} parent=1 // loop_footer
      %s25 = sadd.s32 1, %s21
    $region7: #{_lambda_.4} parent=1 // loop_footer_branch
      %20 = sbr.rel target = $region3
    $region8: #{_lambda_.4} parent=1 // loop_exit
      _
    %1618 = vsyncpa [#allocation3], 1
    %s1619 = scalar_lea.sflag [#allocation3], 1
    %1620 = vsyncpa %s1619, 1
    %1621 = vsyncpa [#allocation5], 1
    %1622 = vsyncpa [#allocation8], 1

// kernel: _lambda_.7
$region0: #{_lambda_.7}
  #allocation0 [shape = 'u32[]', space=smem, size = 0x4, offset = 0x4, fixed_abs, tag = 'smem constant byte address 0x4 - core index']
  #allocation1 [shape = 'u32[72,128]{1,0:T(1,128)}', space=vmem, size = 0x9000, scoped, tag = 'internal scratch']
  %s0 = inlined_call_operand.vmem [shape: f32[2,64,8], index: 0, kind: input, shape index: {}]
  %s1 = inlined_call_operand.vmem [shape: bf16[9,64,64], index: 1, kind: input, shape index: {}]
  %s2 = inlined_call_operand.hbm [shape: bf16[9,8,3], index: 2, kind: input, shape index: {}]
  %s3 = inlined_call_operand.vmem [shape: f32[1,3], index: 3, kind: input, shape index: {}]
  %s4 = inlined_call_operand.vmem [shape: f32[2,64,3], index: 4, kind: output, shape index: {}]
  %s5 = sld [smem:[#allocation0]]
  $region53: #{_lambda_.7} parent=0
    _
  %s7 = ssub.s32 1, %s5
  %s8 = scalar_select 0, %s7, %s5
  $region1: #{_lambda_.7} parent=0
    #allocation2 [shape = 'u8[18432]{0}', space=vmem, size = 0x4800, scoped, tag = 'input window, operand 2, single buffered']
    #allocation3 [shape = 's32[2]{0}', space=sflag, size = 0x8, scoped, tag = 'scoped memory for _lambda_.7']
    %9 = vsyncpa [#allocation3], 0
    loop: start=0, step=1, limit=4
    $region2: #{_lambda_.7} parent=1 // loop_pre_header
      _
    $region3: #{_lambda_.7} parent=1 // loop_header
      %s11 = sphi 0, %s15
      %p12 = scmp.ge.s32.totalorder %s11, 4
      %s21 = sphi 0, %s23
      %s24 = sphi 0, %s21
      %s25 = sphi 0, %s24
      %s41 = sphi 0, %s25
      %s45 = sphi 0, %s45
      %s47 = sphi 0, %s45
      %s48 = sphi 0, %s47
      %s62 = sphi 0, %s48
      %s66 = sphi 0, %s66
      %s68 = sphi 0, %s66
      %s69 = sphi 0, %s68
      %s83 = sphi 0, %s69
      %s87 = sphi 0, %s87
      %s89 = sphi 0, %s87
      %s90 = sphi 0, %s89
      %s104 = sphi 0, %s90
      %s110 = sphi 0, %s112
      %s113 = sphi 0, %s110
      %s114 = sphi 0, %s113
      %s130 = sphi 0, %s114
    $region4: #{_lambda_.7} parent=1 // loop_header_branch
      %14 = sbr.rel (%p12) target = $region8
    $region5: #{_lambda_.7} parent=1 // loop_body
      %s16 = ssub.s32 %s11, 1
      %s17 = ssub.s32 %s11, 2
      %s18 = sadd.s32 %s11, 1
      %s19 = ssub.s32 %s11, %s18
      %p20 = scmp.eq.s32.totalorder %s19, 0
      %s22 = sadd.s32 %s21, 1
      %s23 = scalar_select %p20, %s21, %s22
      %p26 = pneg %p20
      %p27 = scmp.eq.s32.totalorder %s11, 1
      %p28 = por %p26, %p27
      %p29 = scmp.ne.s32.totalorder %s21, %s24
      %p30 = scmp.eq.s32.totalorder %s11, 0
      %p31 = por %p29, %p30
      %p32 = scmp.ne.s32.totalorder %s21, %s24
      %p33 = scmp.eq.s32.totalorder %s16, 1
      %p34 = por %p32, %p33
      %p35 = scmp.ne.s32.totalorder %s24, %s25
      %p36 = scmp.eq.s32.totalorder %s16, 0
      %p37 = por %p35, %p36
      %p38 = scmp.ne.s32.totalorder %s24, %s25
      %p39 = scmp.eq.s32.totalorder %s17, 1
      %p40 = por %p38, %p39
      %p42 = scmp.ne.s32.totalorder %s25, %s41
      %p43 = scmp.eq.s32.totalorder %s17, 0
      %p44 = por %p42, %p43
      %s46 = sadd.s32 %s45, 1
      %p49 = scmp.eq.s32.totalorder %s11, 1
      %p50 = scmp.ne.s32.totalorder %s45, %s47
      %p51 = scmp.eq.s32.totalorder %s11, 0
      %p52 = por %p50, %p51
      %p53 = scmp.ne.s32.totalorder %s45, %s47
      %p54 = scmp.eq.s32.totalorder %s16, 1
      %p55 = por %p53, %p54
      %p56 = scmp.ne.s32.totalorder %s47, %s48
      %p57 = scmp.eq.s32.totalorder %s16, 0
      %p58 = por %p56, %p57
      %p59 = scmp.ne.s32.totalorder %s47, %s48
      %p60 = scmp.eq.s32.totalorder %s17, 1
      %p61 = por %p59, %p60
      %p63 = scmp.ne.s32.totalorder %s48, %s62
      %p64 = scmp.eq.s32.totalorder %s17, 0
      %p65 = por %p63, %p64
      %s67 = sadd.s32 %s66, 1
      %p70 = scmp.eq.s32.totalorder %s11, 1
      %p71 = scmp.ne.s32.totalorder %s66, %s68
      %p72 = scmp.eq.s32.totalorder %s11, 0
      %p73 = por %p71, %p72
      %p74 = scmp.ne.s32.totalorder %s66, %s68
      %p75 = scmp.eq.s32.totalorder %s16, 1
      %p76 = por %p74, %p75
      %p77 = scmp.ne.s32.totalorder %s68, %s69
      %p78 = scmp.eq.s32.totalorder %s16, 0
      %p79 = por %p77, %p78
      %p80 = scmp.ne.s32.totalorder %s68, %s69
      %p81 = scmp.eq.s32.totalorder %s17, 1
      %p82 = por %p80, %p81
      %p84 = scmp.ne.s32.totalorder %s69, %s83
      %p85 = scmp.eq.s32.totalorder %s17, 0
      %p86 = por %p84, %p85
      %s88 = sadd.s32 %s87, 1
      %p91 = scmp.eq.s32.totalorder %s11, 1
      %p92 = scmp.ne.s32.totalorder %s87, %s89
      %p93 = scmp.eq.s32.totalorder %s11, 0
      %p94 = por %p92, %p93
      %p95 = scmp.ne.s32.totalorder %s87, %s89
      %p96 = scmp.eq.s32.totalorder %s16, 1
      %p97 = por %p95, %p96
      %p98 = scmp.ne.s32.totalorder %s89, %s90
      %p99 = scmp.eq.s32.totalorder %s16, 0
      %p100 = por %p98, %p99
      %p101 = scmp.ne.s32.totalorder %s89, %s90
      %p102 = scmp.eq.s32.totalorder %s17, 1
      %p103 = por %p101, %p102
      %p105 = scmp.ne.s32.totalorder %s90, %s104
      %p106 = scmp.eq.s32.totalorder %s17, 0
      %p107 = por %p105, %p106
      %s108 = ssub.s32 %s11, %s18
      %p109 = scmp.eq.s32.totalorder %s108, 0
      %s111 = sadd.s32 %s110, 1
      %s112 = scalar_select %p109, %s110, %s111
      %p115 = pneg %p109
      %p116 = scmp.eq.s32.totalorder %s11, 1
      %p117 = por %p115, %p116
      %p118 = scmp.ne.s32.totalorder %s110, %s113
      %p119 = scmp.eq.s32.totalorder %s11, 0
      %p120 = por %p118, %p119
      %p121 = scmp.ne.s32.totalorder %s110, %s113
      %p122 = scmp.eq.s32.totalorder %s16, 1
      %p123 = por %p121, %p122
      %p124 = scmp.ne.s32.totalorder %s113, %s114
      %p125 = scmp.eq.s32.totalorder %s16, 0
      %p126 = por %p124, %p125
      %p127 = scmp.ne.s32.totalorder %s113, %s114
      %p128 = scmp.eq.s32.totalorder %s17, 1
      %p129 = por %p127, %p128
      %p131 = scmp.ne.s32.totalorder %s114, %s130
      %p132 = scmp.eq.s32.totalorder %s17, 0
      %p133 = por %p131, %p132
      %p134 = scmp.le.s32.totalorder 1, %s11
      %p135 = scmp.lt.s32.totalorder %s11, 3
      %p136 = pnand %p134, %p135
      %p137 = pneg %p136
      // Predicated region
      $region9: #{_lambda_.7} parent=5 // pred_check
        _
      $region10: #{_lambda_.7} parent=5 // pred_check_branch
        %139 = sbr.rel (%p136) target = $region12
      $region11: #{_lambda_.7} parent=5 // pred_region
        %s140 = ssub.s32 %s11, 1
        // Predicated region
        $region13: #{_lambda_.7} parent=11 // pred_check
          %p141 = pneg %p58
        $region14: #{_lambda_.7} parent=11 // pred_check_branch
          %143 = sbr.rel (%p141) target = $region16
        $region15: #{_lambda_.7} parent=11 // pred_region
          _
        $region16: #{_lambda_.7} parent=11 // pred_fallthru
          _
        // Predicated region
        $region17: #{_lambda_.7} parent=11 // pred_check
          %p144 = pneg %p79
        $region18: #{_lambda_.7} parent=11 // pred_check_branch
          %146 = sbr.rel (%p144) target = $region20
        $region19: #{_lambda_.7} parent=11 // pred_region
          %148 = vsyncadd [#allocation3], 0
          %s149 = sshll.u32 %s2, 4
          %s150 = int_to_ptr.hbm [resolvable:$true] %s149
          %s151 = sshll.u32 [#allocation2], 4
          %s152 = int_to_ptr.vmem [resolvable:$true] %s151
          %157 = dma.hbm_to_vmem [thread:$0]  %s150, 576, %s152, [#allocation3], 64, 64, 4
        $region20: #{_lambda_.7} parent=11 // pred_fallthru
          _
        // Predicated region
        $region21: #{_lambda_.7} parent=11 // pred_check
          %p158 = pneg %p100
        $region22: #{_lambda_.7} parent=11 // pred_check_branch
          %160 = sbr.rel (%p158) target = $region24
        $region23: #{_lambda_.7} parent=11 // pred_region
          _
        $region24: #{_lambda_.7} parent=11 // pred_fallthru
          _
      $region12: #{_lambda_.7} parent=5 // pred_fallthru
        _
      %p161 = scmp.lt.s32.totalorder %s11, 2
      // Predicated region
      $region25: #{_lambda_.7} parent=5 // pred_check
        %p162 = pneg %p161
      $region26: #{_lambda_.7} parent=5 // pred_check_branch
        %164 = sbr.rel (%p162) target = $region28
      $region27: #{_lambda_.7} parent=5 // pred_region
        // Predicated region
        $region29: #{_lambda_.7} parent=27 // pred_check
          %p165 = pneg %p31
        $region30: #{_lambda_.7} parent=27 // pred_check_branch
          %167 = sbr.rel (%p165) target = $region32
        $region31: #{_lambda_.7} parent=27 // pred_region
          %p168 = scmp.lt.s32.totalorder %s11, 1
          %s169 = scalar_select %p168, %s11, 1
          %s170 = smul.addr %s169, 8
          %s171 = smul.addr %s170, 8
          %s172 = scalar_lea.vmem %s0, %s171
        $region32: #{_lambda_.7} parent=27 // pred_fallthru
          _
      $region28: #{_lambda_.7} parent=5 // pred_fallthru
        _
      %p173 = scmp.le.s32.totalorder 1, %s11
      %p174 = scmp.lt.s32.totalorder %s11, 3
      %p175 = pnand %p173, %p174
      %p176 = pneg %p175
      // Predicated region
      $region33: #{_lambda_.7} parent=5 // pred_check
        _
      $region34: #{_lambda_.7} parent=5 // pred_check_branch
        %178 = sbr.rel (%p175) target = $region36
      $region35: #{_lambda_.7} parent=5 // pred_region
        %s179 = ssub.s32 %s11, 1
        // Predicated region
        $region37: #{_lambda_.7} parent=35 // pred_check
          %p180 = pneg %p79
        $region38: #{_lambda_.7} parent=35 // pred_check_branch
          %182 = sbr.rel (%p180) target = $region40
        $region39: #{_lambda_.7} parent=35 // pred_region
          %184 = dma.done [#allocation3], 576
        $region40: #{_lambda_.7} parent=35 // pred_fallthru
          _
        %p185 = scmp.lt.s32.totalorder %s16, 1
        %s186 = scalar_select %p185, %s16, 1
        %s187 = smul.addr %s186, 8
        %s188 = smul.addr %s187, 8
        %s189 = scalar_lea.vmem %s0, %s188
        %p190 = pneg %p37
        %p191 = pneg %p34
        %p192 = pneg %p58
        %p193 = pneg %p55
        %p194 = pneg %p79
        %p195 = pneg %p76
        %p196 = pneg %p100
        %p197 = pneg %p97
        %p198 = pneg %p126
        %p199 = pneg %p123
        %p200 = scmp.lt.s32.totalorder %s16, 1
        %s201 = scalar_select %p200, %s16, 1
        %s202 = smul.addr %s201, 8
        %s203 = smul.addr %s202, 8
        %s204 = scalar_lea.vmem %s4, %s203
        %p205 = scmp.lt.s32.totalorder %s16, 1
        %s206 = scalar_select %p205, %s16, 1
        %s207 = smul.addr %s206, 8
        %s208 = smul.addr %s207, 8
        %s209 = scalar_lea.vmem %s0, %s208
        %p210 = scmp.lt.s32.totalorder %s16, 1
        %s211 = scalar_select %p210, %s16, 1
        %s212 = smul.addr %s211, 8
        %s213 = smul.addr %s212, 8
        %s214 = scalar_lea.vmem %s4, %s213
        %v216 = vld [vmem:[%s209] sm:$0xff]
        %v217 = vld [vmem:[%s209 + $0x8] sm:$0xff]
        %v218 = vld [vmem:[%s209 + $0x10] sm:$0xff]
        %v219 = vld [vmem:[%s209 + $0x18] sm:$0xff]
        %v220 = vld [vmem:[%s209 + $0x20] sm:$0xff]
        %v221 = vld [vmem:[%s209 + $0x28] sm:$0xff]
        %v222 = vld [vmem:[%s209 + $0x30] sm:$0xff]
        %v223 = vld [vmem:[%s209 + $0x38] sm:$0xff]
        %v224 = vpack.c.bf16 %v217, %v216
        %v225 = vpack.c.bf16 %v219, %v218
        %v226 = vpack.c.bf16 %v221, %v220
        %v227 = vpack.c.bf16 %v223, %v222
        %v228 = vld [vmem:[%s1] sm:$0xf]
        %v229 = vld [vmem:[%s1 + $0x4] sm:$0xf]
        %v230 = vld [vmem:[%s1 + $0x8] sm:$0xf]
        %v231 = vld [vmem:[%s1 + $0xc] sm:$0xf]
        %v232 = vld [vmem:[%s1 + $0x10] sm:$0xf]
        %v233 = vld [vmem:[%s1 + $0x14] sm:$0xf]
        %v234 = vld [vmem:[%s1 + $0x18] sm:$0xf]
        %v235 = vld [vmem:[%s1 + $0x1c] sm:$0xf]
        %v244 = vunpack.c.l.b16 %v228
        %v245 = vunpack.c.l.b16 %v229
        %v246 = vunpack.c.l.b16 %v230
        %v247 = vunpack.c.l.b16 %v231
        %v248 = vunpack.c.l.b16 %v232
        %v249 = vunpack.c.l.b16 %v233
        %v250 = vunpack.c.l.b16 %v234
        %v251 = vunpack.c.l.b16 %v235
        %v252 = vpack.c.b16 %v245, %v244
        %v253 = vpack.c.b16 %v247, %v246
        %v254 = vpack.c.b16 %v249, %v248
        %v255 = vpack.c.b16 %v251, %v250
        %vm256 = vcmask 523264
        %v258 = vsel %vm256, %v252, 0
        %v261 = vsel %vm256, %v253, 0
        %v264 = vsel %vm256, %v254, 0
        %v267 = vsel %vm256, %v255, 0
        %269 = vmatpush.bf16.msra.mxu0 0
        %270 = vmatpush.bf16.msra.mxu0 0
        %271 = vmatpush.bf16.msra.mxu0 0
        %272 = vmatpush.bf16.msra.mxu0 0
        %273 = vmatpush.bf16.msra.mxu0 %v227
        %274 = vmatpush.bf16.msra.mxu0 %v226
        %275 = vmatpush.bf16.msra.mxu0 %v225
        %276 = vmatpush.bf16.msra.mxu0 %v224
        %277 = vmatmul.bf16.gmra.mxu0 %v258
        %v278 = vpop.f32.mrf.mxu0
        %v279 = vadd.f32 0.0, %v278
        %v280 = vpop.f32.mrf.mxu0
        %v281 = vadd.f32 0.0, %v280
        %282 = vmatmul.bf16.gmra.mxu0 %v261
        %v283 = vpop.f32.mrf.mxu0
        %v284 = vadd.f32 0.0, %v283
        %v285 = vpop.f32.mrf.mxu0
        %v286 = vadd.f32 0.0, %v285
        %287 = vmatmul.bf16.gmra.mxu0 %v264
        %v288 = vpop.f32.mrf.mxu0
        %v289 = vadd.f32 0.0, %v288
        %v290 = vpop.f32.mrf.mxu0
        %v291 = vadd.f32 0.0, %v290
        %292 = vmatmul.bf16.gmra.mxu0 %v267
        %v293 = vpop.f32.mrf.mxu0
        %v294 = vadd.f32 0.0, %v293
        %v295 = vpop.f32.mrf.mxu0
        %v296 = vadd.f32 0.0, %v295
        %297 = vdwg.mxu0
        %v298 = vpack.c.bf16 %v281, %v279
        %v299 = vpack.c.bf16 %v286, %v284
        %v300 = vpack.c.bf16 %v291, %v289
        %v301 = vpack.c.bf16 %v296, %v294
        %v302 = vld [vmem:[#allocation2] sm:$0xf]
        %s303 = scalar_lea.vmem %s1, 32
        %v304 = vld [vmem:[%s303] sm:$0xf]
        %v305 = vld [vmem:[%s303 + $0x4] sm:$0xf]
        %v306 = vld [vmem:[%s303 + $0x8] sm:$0xf]
        %v307 = vld [vmem:[%s303 + $0xc] sm:$0xf]
        %v308 = vld [vmem:[%s303 + $0x10] sm:$0xf]
        %v309 = vld [vmem:[%s303 + $0x14] sm:$0xf]
        %v310 = vld [vmem:[%s303 + $0x18] sm:$0xf]
        %v311 = vld [vmem:[%s303 + $0x1c] sm:$0xf]
        %v320 = vunpack.c.l.b16 %v304
        %v321 = vunpack.c.l.b16 %v305
        %v322 = vunpack.c.l.b16 %v306
        %v323 = vunpack.c.l.b16 %v307
        %v324 = vunpack.c.l.b16 %v308
        %v325 = vunpack.c.l.b16 %v309
        %v326 = vunpack.c.l.b16 %v310
        %v327 = vunpack.c.l.b16 %v311
        %v328 = vpack.c.b16 %v321, %v320
        %v329 = vpack.c.b16 %v323, %v322
        %v330 = vpack.c.b16 %v325, %v324
        %v331 = vpack.c.b16 %v327, %v326
        %v333 = vsel %vm256, %v328, 0
        %v336 = vsel %vm256, %v329, 0
        %v339 = vsel %vm256, %v330, 0
        %v342 = vsel %vm256, %v331, 0
        %344 = vmatpush.bf16.msra.mxu0 0
        %345 = vmatpush.bf16.msra.mxu0 0
        %346 = vmatpush.bf16.msra.mxu0 0
        %347 = vmatpush.bf16.msra.mxu0 0
        %348 = vmatpush.bf16.msra.mxu0 %v227
        %349 = vmatpush.bf16.msra.mxu0 %v226
        %350 = vmatpush.bf16.msra.mxu0 %v225
        %351 = vmatpush.bf16.msra.mxu0 %v224
        %352 = vmatmul.bf16.gmra.mxu0 %v333
        %v353 = vpop.f32.mrf.mxu0
        %v354 = vadd.f32 0.0, %v353
        %v355 = vpop.f32.mrf.mxu0
        %v356 = vadd.f32 0.0, %v355
        %357 = vmatmul.bf16.gmra.mxu0 %v336
        %v358 = vpop.f32.mrf.mxu0
        %v359 = vadd.f32 0.0, %v358
        %v360 = vpop.f32.mrf.mxu0
        %v361 = vadd.f32 0.0, %v360
        %362 = vmatmul.bf16.gmra.mxu0 %v339
        %v363 = vpop.f32.mrf.mxu0
        %v364 = vadd.f32 0.0, %v363
        %v365 = vpop.f32.mrf.mxu0
        %v366 = vadd.f32 0.0, %v365
        %367 = vmatmul.bf16.gmra.mxu0 %v342
        %v368 = vpop.f32.mrf.mxu0
        %v369 = vadd.f32 0.0, %v368
        %v370 = vpop.f32.mrf.mxu0
        %v371 = vadd.f32 0.0, %v370
        %372 = vdwg.mxu0
        %v373 = vpack.c.bf16 %v356, %v354
        %v374 = vpack.c.bf16 %v361, %v359
        %v375 = vpack.c.bf16 %v366, %v364
        %v376 = vpack.c.bf16 %v371, %v369
        %s377 = scalar_lea.vmem [#allocation2], 4
        %v378 = vld [vmem:[%s377] sm:$0xf]
        %vm379 = vcmask 64512
        %v381 = vsel %vm379, %v373, 0
        %v384 = vsel %vm379, %v374, 0
        %v387 = vsel %vm379, %v375, 0
        %v390 = vsel %vm379, %v376, 0
        %vm392 = vcmask 1043456
        %v394 = vsel %vm392, %v378, 0
        %396 = vmatpush.bf16.msra.mxu0 0
        %397 = vmatpush.bf16.msra.mxu0 0
        %398 = vmatpush.bf16.msra.mxu0 0
        %399 = vmatpush.bf16.msra.mxu0 0
        %400 = vmatpush.bf16.msra.mxu0 0
        %401 = vmatpush.bf16.msra.mxu0 0
        %402 = vmatpush.bf16.msra.mxu0 0
        %403 = vmatpush.bf16.msra.mxu0 %v394
        %404 = vmatmul.bf16.gmra.mxu0 %v381
        %v405 = vpop.f32.mrf.mxu0
        %v406 = vadd.f32 0.0, %v405
        %v407 = vpop.f32.mrf.mxu0
        %v408 = vadd.f32 0.0, %v407
        %409 = vmatmul.bf16.gmra.mxu0 %v384
        %v410 = vpop.f32.mrf.mxu0
        %v411 = vadd.f32 0.0, %v410
        %v412 = vpop.f32.mrf.mxu0
        %v413 = vadd.f32 0.0, %v412
        %414 = vmatmul.bf16.gmra.mxu0 %v387
        %v415 = vpop.f32.mrf.mxu0
        %v416 = vadd.f32 0.0, %v415
        %v417 = vpop.f32.mrf.mxu0
        %v418 = vadd.f32 0.0, %v417
        %419 = vmatmul.bf16.gmra.mxu0 %v390
        %v420 = vpop.f32.mrf.mxu0
        %v421 = vadd.f32 0.0, %v420
        %v422 = vpop.f32.mrf.mxu0
        %v423 = vadd.f32 0.0, %v422
        %424 = vdwg.mxu0
        %v426 = vsel %vm379, %v298, 0
        %v429 = vsel %vm379, %v299, 0
        %v432 = vsel %vm379, %v300, 0
        %v435 = vsel %vm379, %v301, 0
        %v438 = vsel %vm392, %v302, 0
        %440 = vmatpush.bf16.msra.mxu0 0
        %441 = vmatpush.bf16.msra.mxu0 0
        %442 = vmatpush.bf16.msra.mxu0 0
        %443 = vmatpush.bf16.msra.mxu0 0
        %444 = vmatpush.bf16.msra.mxu0 0
        %445 = vmatpush.bf16.msra.mxu0 0
        %446 = vmatpush.bf16.msra.mxu0 0
        %447 = vmatpush.bf16.msra.mxu0 %v438
        %448 = vmatmul.bf16.gmra.mxu0 %v426
        %v449 = vpop.f32.mrf.mxu0
        %v450 = vadd.f32 %v406, %v449
        %v451 = vpop.f32.mrf.mxu0
        %v452 = vadd.f32 %v408, %v451
        %453 = vmatmul.bf16.gmra.mxu0 %v429
        %v454 = vpop.f32.mrf.mxu0
        %v455 = vadd.f32 %v411, %v454
        %v456 = vpop.f32.mrf.mxu0
        %v457 = vadd.f32 %v413, %v456
        %458 = vmatmul.bf16.gmra.mxu0 %v432
        %v459 = vpop.f32.mrf.mxu0
        %v460 = vadd.f32 %v416, %v459
        %v461 = vpop.f32.mrf.mxu0
        %v462 = vadd.f32 %v418, %v461
        %463 = vmatmul.bf16.gmra.mxu0 %v435
        %v464 = vpop.f32.mrf.mxu0
        %v465 = vadd.f32 %v421, %v464
        %v466 = vpop.f32.mrf.mxu0
        %v467 = vadd.f32 %v423, %v466
        %468 = vdwg.mxu0
        %s469 = scalar_lea.vmem %s1, 64
        %v470 = vld [vmem:[%s469] sm:$0xf]
        %v471 = vld [vmem:[%s469 + $0x4] sm:$0xf]
        %v472 = vld [vmem:[%s469 + $0x8] sm:$0xf]
        %v473 = vld [vmem:[%s469 + $0xc] sm:$0xf]
        %v474 = vld [vmem:[%s469 + $0x10] sm:$0xf]
        %v475 = vld [vmem:[%s469 + $0x14] sm:$0xf]
        %v476 = vld [vmem:[%s469 + $0x18] sm:$0xf]
        %v477 = vld [vmem:[%s469 + $0x1c] sm:$0xf]
        %v486 = vunpack.c.l.b16 %v470
        %v487 = vunpack.c.l.b16 %v471
        %v488 = vunpack.c.l.b16 %v472
        %v489 = vunpack.c.l.b16 %v473
        %v490 = vunpack.c.l.b16 %v474
        %v491 = vunpack.c.l.b16 %v475
        %v492 = vunpack.c.l.b16 %v476
        %v493 = vunpack.c.l.b16 %v477
        %v494 = vpack.c.b16 %v487, %v486
        %v495 = vpack.c.b16 %v489, %v488
        %v496 = vpack.c.b16 %v491, %v490
        %v497 = vpack.c.b16 %v493, %v492
        %v499 = vsel %vm256, %v494, 0
        %v502 = vsel %vm256, %v495, 0
        %v505 = vsel %vm256, %v496, 0
        %v508 = vsel %vm256, %v497, 0
        %510 = vmatpush.bf16.msra.mxu0 0
        %511 = vmatpush.bf16.msra.mxu0 0
        %512 = vmatpush.bf16.msra.mxu0 0
        %513 = vmatpush.bf16.msra.mxu0 0
        %514 = vmatpush.bf16.msra.mxu0 %v227
        %515 = vmatpush.bf16.msra.mxu0 %v226
        %516 = vmatpush.bf16.msra.mxu0 %v225
        %517 = vmatpush.bf16.msra.mxu0 %v224
        %518 = vmatmul.bf16.gmra.mxu0 %v499
        %v519 = vpop.f32.mrf.mxu0
        %v520 = vadd.f32 0.0, %v519
        %v521 = vpop.f32.mrf.mxu0
        %v522 = vadd.f32 0.0, %v521
        %523 = vmatmul.bf16.gmra.mxu0 %v502
        %v524 = vpop.f32.mrf.mxu0
        %v525 = vadd.f32 0.0, %v524
        %v526 = vpop.f32.mrf.mxu0
        %v527 = vadd.f32 0.0, %v526
        %528 = vmatmul.bf16.gmra.mxu0 %v505
        %v529 = vpop.f32.mrf.mxu0
        %v530 = vadd.f32 0.0, %v529
        %v531 = vpop.f32.mrf.mxu0
        %v532 = vadd.f32 0.0, %v531
        %533 = vmatmul.bf16.gmra.mxu0 %v508
        %v534 = vpop.f32.mrf.mxu0
        %v535 = vadd.f32 0.0, %v534
        %v536 = vpop.f32.mrf.mxu0
        %v537 = vadd.f32 0.0, %v536
        %538 = vdwg.mxu0
        %v539 = vpack.c.bf16 %v522, %v520
        %v540 = vpack.c.bf16 %v527, %v525
        %v541 = vpack.c.bf16 %v532, %v530
        %v542 = vpack.c.bf16 %v537, %v535
        %s543 = scalar_lea.vmem [#allocation2], 8
        %v544 = vld [vmem:[%s543] sm:$0xf]
        %v546 = vsel %vm379, %v539, 0
        %v549 = vsel %vm379, %v540, 0
        %v552 = vsel %vm379, %v541, 0
        %v555 = vsel %vm379, %v542, 0
        %v558 = vsel %vm392, %v544, 0
        %560 = vmatpush.bf16.msra.mxu0 0
        %561 = vmatpush.bf16.msra.mxu0 0
        %562 = vmatpush.bf16.msra.mxu0 0
        %563 = vmatpush.bf16.msra.mxu0 0
        %564 = vmatpush.bf16.msra.mxu0 0
        %565 = vmatpush.bf16.msra.mxu0 0
        %566 = vmatpush.bf16.msra.mxu0 0
        %567 = vmatpush.bf16.msra.mxu0 %v558
        %568 = vmatmul.bf16.gmra.mxu0 %v546
        %v569 = vpop.f32.mrf.mxu0
        %v570 = vadd.f32 0.0, %v569
        %v571 = vpop.f32.mrf.mxu0
        %v572 = vadd.f32 0.0, %v571
        %573 = vmatmul.bf16.gmra.mxu0 %v549
        %v574 = vpop.f32.mrf.mxu0
        %v575 = vadd.f32 0.0, %v574
        %v576 = vpop.f32.mrf.mxu0
        %v577 = vadd.f32 0.0, %v576
        %578 = vmatmul.bf16.gmra.mxu0 %v552
        %v579 = vpop.f32.mrf.mxu0
        %v580 = vadd.f32 0.0, %v579
        %v581 = vpop.f32.mrf.mxu0
        %v582 = vadd.f32 0.0, %v581
        %583 = vmatmul.bf16.gmra.mxu0 %v555
        %v584 = vpop.f32.mrf.mxu0
        %v585 = vadd.f32 0.0, %v584
        %v586 = vpop.f32.mrf.mxu0
        %v587 = vadd.f32 0.0, %v586
        %588 = vdwg.mxu0
        %v589 = vadd.f32 %v450, %v570
        %v590 = vadd.f32 %v452, %v572
        %v591 = vadd.f32 %v455, %v575
        %v592 = vadd.f32 %v457, %v577
        %v593 = vadd.f32 %v460, %v580
        %v594 = vadd.f32 %v462, %v582
        %v595 = vadd.f32 %v465, %v585
        %v596 = vadd.f32 %v467, %v587
        %s597 = scalar_lea.vmem %s1, 96
        %v598 = vld [vmem:[%s597] sm:$0xf]
        %v599 = vld [vmem:[%s597 + $0x4] sm:$0xf]
        %v600 = vld [vmem:[%s597 + $0x8] sm:$0xf]
        %v601 = vld [vmem:[%s597 + $0xc] sm:$0xf]
        %v602 = vld [vmem:[%s597 + $0x10] sm:$0xf]
        %v603 = vld [vmem:[%s597 + $0x14] sm:$0xf]
        %v604 = vld [vmem:[%s597 + $0x18] sm:$0xf]
        %v605 = vld [vmem:[%s597 + $0x1c] sm:$0xf]
        %v614 = vunpack.c.l.b16 %v598
        %v615 = vunpack.c.l.b16 %v599
        %v616 = vunpack.c.l.b16 %v600
        %v617 = vunpack.c.l.b16 %v601
        %v618 = vunpack.c.l.b16 %v602
        %v619 = vunpack.c.l.b16 %v603
        %v620 = vunpack.c.l.b16 %v604
        %v621 = vunpack.c.l.b16 %v605
        %v622 = vpack.c.b16 %v615, %v614
        %v623 = vpack.c.b16 %v617, %v616
        %v624 = vpack.c.b16 %v619, %v618
        %v625 = vpack.c.b16 %v621, %v620
        %v627 = vsel %vm256, %v622, 0
        %v630 = vsel %vm256, %v623, 0
        %v633 = vsel %vm256, %v624, 0
        %v636 = vsel %vm256, %v625, 0
        %638 = vmatpush.bf16.msra.mxu0 0
        %639 = vmatpush.bf16.msra.mxu0 0
        %640 = vmatpush.bf16.msra.mxu0 0
        %641 = vmatpush.bf16.msra.mxu0 0
        %642 = vmatpush.bf16.msra.mxu0 %v227
        %643 = vmatpush.bf16.msra.mxu0 %v226
        %644 = vmatpush.bf16.msra.mxu0 %v225
        %645 = vmatpush.bf16.msra.mxu0 %v224
        %646 = vmatmul.bf16.gmra.mxu0 %v627
        %v647 = vpop.f32.mrf.mxu0
        %v648 = vadd.f32 0.0, %v647
        %v649 = vpop.f32.mrf.mxu0
        %v650 = vadd.f32 0.0, %v649
        %651 = vmatmul.bf16.gmra.mxu0 %v630
        %v652 = vpop.f32.mrf.mxu0
        %v653 = vadd.f32 0.0, %v652
        %v654 = vpop.f32.mrf.mxu0
        %v655 = vadd.f32 0.0, %v654
        %656 = vmatmul.bf16.gmra.mxu0 %v633
        %v657 = vpop.f32.mrf.mxu0
        %v658 = vadd.f32 0.0, %v657
        %v659 = vpop.f32.mrf.mxu0
        %v660 = vadd.f32 0.0, %v659
        %661 = vmatmul.bf16.gmra.mxu0 %v636
        %v662 = vpop.f32.mrf.mxu0
        %v663 = vadd.f32 0.0, %v662
        %v664 = vpop.f32.mrf.mxu0
        %v665 = vadd.f32 0.0, %v664
        %666 = vdwg.mxu0
        %v667 = vpack.c.bf16 %v650, %v648
        %v668 = vpack.c.bf16 %v655, %v653
        %v669 = vpack.c.bf16 %v660, %v658
        %v670 = vpack.c.bf16 %v665, %v663
        %s671 = scalar_lea.vmem [#allocation2], 12
        %v672 = vld [vmem:[%s671] sm:$0xf]
        %v674 = vsel %vm379, %v667, 0
        %v677 = vsel %vm379, %v668, 0
        %v680 = vsel %vm379, %v669, 0
        %v683 = vsel %vm379, %v670, 0
        %v686 = vsel %vm392, %v672, 0
        %688 = vmatpush.bf16.msra.mxu0 0
        %689 = vmatpush.bf16.msra.mxu0 0
        %690 = vmatpush.bf16.msra.mxu0 0
        %691 = vmatpush.bf16.msra.mxu0 0
        %692 = vmatpush.bf16.msra.mxu0 0
        %693 = vmatpush.bf16.msra.mxu0 0
        %694 = vmatpush.bf16.msra.mxu0 0
        %695 = vmatpush.bf16.msra.mxu0 %v686
        %696 = vmatmul.bf16.gmra.mxu0 %v674
        %v697 = vpop.f32.mrf.mxu0
        %v698 = vadd.f32 0.0, %v697
        %v699 = vpop.f32.mrf.mxu0
        %v700 = vadd.f32 0.0, %v699
        %701 = vmatmul.bf16.gmra.mxu0 %v677
        %v702 = vpop.f32.mrf.mxu0
        %v703 = vadd.f32 0.0, %v702
        %v704 = vpop.f32.mrf.mxu0
        %v705 = vadd.f32 0.0, %v704
        %706 = vmatmul.bf16.gmra.mxu0 %v680
        %v707 = vpop.f32.mrf.mxu0
        %v708 = vadd.f32 0.0, %v707
        %v709 = vpop.f32.mrf.mxu0
        %v710 = vadd.f32 0.0, %v709
        %711 = vmatmul.bf16.gmra.mxu0 %v683
        %v712 = vpop.f32.mrf.mxu0
        %v713 = vadd.f32 0.0, %v712
        %v714 = vpop.f32.mrf.mxu0
        %v715 = vadd.f32 0.0, %v714
        %716 = vdwg.mxu0
        %v717 = vadd.f32 %v589, %v698
        %v718 = vadd.f32 %v590, %v700
        %v719 = vadd.f32 %v591, %v703
        %v720 = vadd.f32 %v592, %v705
        %v721 = vadd.f32 %v593, %v708
        %v722 = vadd.f32 %v594, %v710
        %v723 = vadd.f32 %v595, %v713
        %v724 = vadd.f32 %v596, %v715
        %s725 = scalar_lea.vmem [#allocation2], 16
        %v726 = vld [vmem:[%s725] sm:$0xf]
        %v728 = vsel %vm379, %v224, 0
        %v731 = vsel %vm379, %v225, 0
        %v734 = vsel %vm379, %v226, 0
        %v737 = vsel %vm379, %v227, 0
        %v740 = vsel %vm392, %v726, 0
        %742 = vmatpush.bf16.msra.mxu0 0
        %743 = vmatpush.bf16.msra.mxu0 0
        %744 = vmatpush.bf16.msra.mxu0 0
        %745 = vmatpush.bf16.msra.mxu0 0
        %746 = vmatpush.bf16.msra.mxu0 0
        %747 = vmatpush.bf16.msra.mxu0 0
        %748 = vmatpush.bf16.msra.mxu0 0
        %749 = vmatpush.bf16.msra.mxu0 %v740
        %750 = vmatmul.bf16.gmra.mxu0 %v728
        %v751 = vpop.f32.mrf.mxu0
        %v752 = vadd.f32 0.0, %v751
        %v753 = vpop.f32.mrf.mxu0
        %v754 = vadd.f32 0.0, %v753
        %755 = vmatmul.bf16.gmra.mxu0 %v731
        %v756 = vpop.f32.mrf.mxu0
        %v757 = vadd.f32 0.0, %v756
        %v758 = vpop.f32.mrf.mxu0
        %v759 = vadd.f32 0.0, %v758
        %760 = vmatmul.bf16.gmra.mxu0 %v734
        %v761 = vpop.f32.mrf.mxu0
        %v762 = vadd.f32 0.0, %v761
        %v763 = vpop.f32.mrf.mxu0
        %v764 = vadd.f32 0.0, %v763
        %765 = vmatmul.bf16.gmra.mxu0 %v737
        %v766 = vpop.f32.mrf.mxu0
        %v767 = vadd.f32 0.0, %v766
        %v768 = vpop.f32.mrf.mxu0
        %v769 = vadd.f32 0.0, %v768
        %770 = vdwg.mxu0
        %v771 = vadd.f32 %v717, %v752
        %v772 = vadd.f32 %v718, %v754
        %v773 = vadd.f32 %v719, %v757
        %v774 = vadd.f32 %v720, %v759
        %v775 = vadd.f32 %v721, %v762
        %v776 = vadd.f32 %v722, %v764
        %v777 = vadd.f32 %v723, %v767
        %v778 = vadd.f32 %v724, %v769
        %s779 = scalar_lea.vmem %s1, 160
        %v780 = vld [vmem:[%s779] sm:$0xf]
        %v781 = vld [vmem:[%s779 + $0x4] sm:$0xf]
        %v782 = vld [vmem:[%s779 + $0x8] sm:$0xf]
        %v783 = vld [vmem:[%s779 + $0xc] sm:$0xf]
        %v784 = vld [vmem:[%s779 + $0x10] sm:$0xf]
        %v785 = vld [vmem:[%s779 + $0x14] sm:$0xf]
        %v786 = vld [vmem:[%s779 + $0x18] sm:$0xf]
        %v787 = vld [vmem:[%s779 + $0x1c] sm:$0xf]
        %v796 = vunpack.c.l.b16 %v780
        %v797 = vunpack.c.l.b16 %v781
        %v798 = vunpack.c.l.b16 %v782
        %v799 = vunpack.c.l.b16 %v783
        %v800 = vunpack.c.l.b16 %v784
        %v801 = vunpack.c.l.b16 %v785
        %v802 = vunpack.c.l.b16 %v786
        %v803 = vunpack.c.l.b16 %v787
        %v804 = vpack.c.b16 %v797, %v796
        %v805 = vpack.c.b16 %v799, %v798
        %v806 = vpack.c.b16 %v801, %v800
        %v807 = vpack.c.b16 %v803, %v802
        %v809 = vsel %vm256, %v804, 0
        %v812 = vsel %vm256, %v805, 0
        %v815 = vsel %vm256, %v806, 0
        %v818 = vsel %vm256, %v807, 0
        %820 = vmatpush.bf16.msra.mxu0 0
        %821 = vmatpush.bf16.msra.mxu0 0
        %822 = vmatpush.bf16.msra.mxu0 0
        %823 = vmatpush.bf16.msra.mxu0 0
        %824 = vmatpush.bf16.msra.mxu0 %v227
        %825 = vmatpush.bf16.msra.mxu0 %v226
        %826 = vmatpush.bf16.msra.mxu0 %v225
        %827 = vmatpush.bf16.msra.mxu0 %v224
        %828 = vmatmul.bf16.gmra.mxu0 %v809
        %v829 = vpop.f32.mrf.mxu0
        %v830 = vadd.f32 0.0, %v829
        %v831 = vpop.f32.mrf.mxu0
        %v832 = vadd.f32 0.0, %v831
        %833 = vmatmul.bf16.gmra.mxu0 %v812
        %v834 = vpop.f32.mrf.mxu0
        %v835 = vadd.f32 0.0, %v834
        %v836 = vpop.f32.mrf.mxu0
        %v837 = vadd.f32 0.0, %v836
        %838 = vmatmul.bf16.gmra.mxu0 %v815
        %v839 = vpop.f32.mrf.mxu0
        %v840 = vadd.f32 0.0, %v839
        %v841 = vpop.f32.mrf.mxu0
        %v842 = vadd.f32 0.0, %v841
        %843 = vmatmul.bf16.gmra.mxu0 %v818
        %v844 = vpop.f32.mrf.mxu0
        %v845 = vadd.f32 0.0, %v844
        %v846 = vpop.f32.mrf.mxu0
        %v847 = vadd.f32 0.0, %v846
        %848 = vdwg.mxu0
        %v849 = vpack.c.bf16 %v832, %v830
        %v850 = vpack.c.bf16 %v837, %v835
        %v851 = vpack.c.bf16 %v842, %v840
        %v852 = vpack.c.bf16 %v847, %v845
        %s853 = scalar_lea.vmem [#allocation2], 20
        %v854 = vld [vmem:[%s853] sm:$0xf]
        %v856 = vsel %vm379, %v849, 0
        %v859 = vsel %vm379, %v850, 0
        %v862 = vsel %vm379, %v851, 0
        %v865 = vsel %vm379, %v852, 0
        %v868 = vsel %vm392, %v854, 0
        %870 = vmatpush.bf16.msra.mxu0 0
        %871 = vmatpush.bf16.msra.mxu0 0
        %872 = vmatpush.bf16.msra.mxu0 0
        %873 = vmatpush.bf16.msra.mxu0 0
        %874 = vmatpush.bf16.msra.mxu0 0
        %875 = vmatpush.bf16.msra.mxu0 0
        %876 = vmatpush.bf16.msra.mxu0 0
        %877 = vmatpush.bf16.msra.mxu0 %v868
        %878 = vmatmul.bf16.gmra.mxu0 %v856
        %v879 = vpop.f32.mrf.mxu0
        %v880 = vadd.f32 0.0, %v879
        %v881 = vpop.f32.mrf.mxu0
        %v882 = vadd.f32 0.0, %v881
        %883 = vmatmul.bf16.gmra.mxu0 %v859
        %v884 = vpop.f32.mrf.mxu0
        %v885 = vadd.f32 0.0, %v884
        %v886 = vpop.f32.mrf.mxu0
        %v887 = vadd.f32 0.0, %v886
        %888 = vmatmul.bf16.gmra.mxu0 %v862
        %v889 = vpop.f32.mrf.mxu0
        %v890 = vadd.f32 0.0, %v889
        %v891 = vpop.f32.mrf.mxu0
        %v892 = vadd.f32 0.0, %v891
        %893 = vmatmul.bf16.gmra.mxu0 %v865
        %v894 = vpop.f32.mrf.mxu0
        %v895 = vadd.f32 0.0, %v894
        %v896 = vpop.f32.mrf.mxu0
        %v897 = vadd.f32 0.0, %v896
        %898 = vdwg.mxu0
        %v899 = vadd.f32 %v771, %v880
        %v900 = vadd.f32 %v772, %v882
        %v901 = vadd.f32 %v773, %v885
        %v902 = vadd.f32 %v774, %v887
        %v903 = vadd.f32 %v775, %v890
        %v904 = vadd.f32 %v776, %v892
        %v905 = vadd.f32 %v777, %v895
        %v906 = vadd.f32 %v778, %v897
        %s907 = scalar_lea.vmem %s1, 192
        %v908 = vld [vmem:[%s907] sm:$0xf]
        %v909 = vld [vmem:[%s907 + $0x4] sm:$0xf]
        %v910 = vld [vmem:[%s907 + $0x8] sm:$0xf]
        %v911 = vld [vmem:[%s907 + $0xc] sm:$0xf]
        %v912 = vld [vmem:[%s907 + $0x10] sm:$0xf]
        %v913 = vld [vmem:[%s907 + $0x14] sm:$0xf]
        %v914 = vld [vmem:[%s907 + $0x18] sm:$0xf]
        %v915 = vld [vmem:[%s907 + $0x1c] sm:$0xf]
        %v924 = vunpack.c.l.b16 %v908
        %v925 = vunpack.c.l.b16 %v909
        %v926 = vunpack.c.l.b16 %v910
        %v927 = vunpack.c.l.b16 %v911
        %v928 = vunpack.c.l.b16 %v912
        %v929 = vunpack.c.l.b16 %v913
        %v930 = vunpack.c.l.b16 %v914
        %v931 = vunpack.c.l.b16 %v915
        %v932 = vpack.c.b16 %v925, %v924
        %v933 = vpack.c.b16 %v927, %v926
        %v934 = vpack.c.b16 %v929, %v928
        %v935 = vpack.c.b16 %v931, %v930
        %v937 = vsel %vm256, %v932, 0
        %v940 = vsel %vm256, %v933, 0
        %v943 = vsel %vm256, %v934, 0
        %v946 = vsel %vm256, %v935, 0
        %948 = vmatpush.bf16.msra.mxu0 0
        %949 = vmatpush.bf16.msra.mxu0 0
        %950 = vmatpush.bf16.msra.mxu0 0
        %951 = vmatpush.bf16.msra.mxu0 0
        %952 = vmatpush.bf16.msra.mxu0 %v227
        %953 = vmatpush.bf16.msra.mxu0 %v226
        %954 = vmatpush.bf16.msra.mxu0 %v225
        %955 = vmatpush.bf16.msra.mxu0 %v224
        %956 = vmatmul.bf16.gmra.mxu0 %v937
        %v957 = vpop.f32.mrf.mxu0
        %v958 = vadd.f32 0.0, %v957
        %v959 = vpop.f32.mrf.mxu0
        %v960 = vadd.f32 0.0, %v959
        %961 = vmatmul.bf16.gmra.mxu0 %v940
        %v962 = vpop.f32.mrf.mxu0
        %v963 = vadd.f32 0.0, %v962
        %v964 = vpop.f32.mrf.mxu0
        %v965 = vadd.f32 0.0, %v964
        %966 = vmatmul.bf16.gmra.mxu0 %v943
        %v967 = vpop.f32.mrf.mxu0
        %v968 = vadd.f32 0.0, %v967
        %v969 = vpop.f32.mrf.mxu0
        %v970 = vadd.f32 0.0, %v969
        %971 = vmatmul.bf16.gmra.mxu0 %v946
        %v972 = vpop.f32.mrf.mxu0
        %v973 = vadd.f32 0.0, %v972
        %v974 = vpop.f32.mrf.mxu0
        %v975 = vadd.f32 0.0, %v974
        %976 = vdwg.mxu0
        %v977 = vpack.c.bf16 %v960, %v958
        %v978 = vpack.c.bf16 %v965, %v963
        %v979 = vpack.c.bf16 %v970, %v968
        %v980 = vpack.c.bf16 %v975, %v973
        %s981 = scalar_lea.vmem [#allocation2], 24
        %v982 = vld [vmem:[%s981] sm:$0xf]
        %v984 = vsel %vm379, %v977, 0
        %v987 = vsel %vm379, %v978, 0
        %v990 = vsel %vm379, %v979, 0
        %v993 = vsel %vm379, %v980, 0
        %v996 = vsel %vm392, %v982, 0
        %998 = vmatpush.bf16.msra.mxu0 0
        %999 = vmatpush.bf16.msra.mxu0 0
        %1000 = vmatpush.bf16.msra.mxu0 0
        %1001 = vmatpush.bf16.msra.mxu0 0
        %1002 = vmatpush.bf16.msra.mxu0 0
        %1003 = vmatpush.bf16.msra.mxu0 0
        %1004 = vmatpush.bf16.msra.mxu0 0
        %1005 = vmatpush.bf16.msra.mxu0 %v996
        %1006 = vmatmul.bf16.gmra.mxu0 %v984
        %v1007 = vpop.f32.mrf.mxu0
        %v1008 = vadd.f32 0.0, %v1007
        %v1009 = vpop.f32.mrf.mxu0
        %v1010 = vadd.f32 0.0, %v1009
        %1011 = vmatmul.bf16.gmra.mxu0 %v987
        %v1012 = vpop.f32.mrf.mxu0
        %v1013 = vadd.f32 0.0, %v1012
        %v1014 = vpop.f32.mrf.mxu0
        %v1015 = vadd.f32 0.0, %v1014
        %1016 = vmatmul.bf16.gmra.mxu0 %v990
        %v1017 = vpop.f32.mrf.mxu0
        %v1018 = vadd.f32 0.0, %v1017
        %v1019 = vpop.f32.mrf.mxu0
        %v1020 = vadd.f32 0.0, %v1019
        %1021 = vmatmul.bf16.gmra.mxu0 %v993
        %v1022 = vpop.f32.mrf.mxu0
        %v1023 = vadd.f32 0.0, %v1022
        %v1024 = vpop.f32.mrf.mxu0
        %v1025 = vadd.f32 0.0, %v1024
        %1026 = vdwg.mxu0
        %v1027 = vadd.f32 %v899, %v1008
        %v1028 = vadd.f32 %v900, %v1010
        %v1029 = vadd.f32 %v901, %v1013
        %v1030 = vadd.f32 %v902, %v1015
        %v1031 = vadd.f32 %v903, %v1018
        %v1032 = vadd.f32 %v904, %v1020
        %v1033 = vadd.f32 %v905, %v1023
        %v1034 = vadd.f32 %v906, %v1025
        %s1035 = scalar_lea.vmem %s1, 224
        %v1036 = vld [vmem:[%s1035] sm:$0xf]
        %v1037 = vld [vmem:[%s1035 + $0x4] sm:$0xf]
        %v1038 = vld [vmem:[%s1035 + $0x8] sm:$0xf]
        %v1039 = vld [vmem:[%s1035 + $0xc] sm:$0xf]
        %v1040 = vld [vmem:[%s1035 + $0x10] sm:$0xf]
        %v1041 = vld [vmem:[%s1035 + $0x14] sm:$0xf]
        %v1042 = vld [vmem:[%s1035 + $0x18] sm:$0xf]
        %v1043 = vld [vmem:[%s1035 + $0x1c] sm:$0xf]
        %v1052 = vunpack.c.l.b16 %v1036
        %v1053 = vunpack.c.l.b16 %v1037
        %v1054 = vunpack.c.l.b16 %v1038
        %v1055 = vunpack.c.l.b16 %v1039
        %v1056 = vunpack.c.l.b16 %v1040
        %v1057 = vunpack.c.l.b16 %v1041
        %v1058 = vunpack.c.l.b16 %v1042
        %v1059 = vunpack.c.l.b16 %v1043
        %v1060 = vpack.c.b16 %v1053, %v1052
        %v1061 = vpack.c.b16 %v1055, %v1054
        %v1062 = vpack.c.b16 %v1057, %v1056
        %v1063 = vpack.c.b16 %v1059, %v1058
        %v1065 = vsel %vm256, %v1060, 0
        %v1068 = vsel %vm256, %v1061, 0
        %v1071 = vsel %vm256, %v1062, 0
        %v1074 = vsel %vm256, %v1063, 0
        %1076 = vmatpush.bf16.msra.mxu0 0
        %1077 = vmatpush.bf16.msra.mxu0 0
        %1078 = vmatpush.bf16.msra.mxu0 0
        %1079 = vmatpush.bf16.msra.mxu0 0
        %1080 = vmatpush.bf16.msra.mxu0 %v227
        %1081 = vmatpush.bf16.msra.mxu0 %v226
        %1082 = vmatpush.bf16.msra.mxu0 %v225
        %1083 = vmatpush.bf16.msra.mxu0 %v224
        %1084 = vmatmul.bf16.gmra.mxu0 %v1065
        %v1085 = vpop.f32.mrf.mxu0
        %v1086 = vadd.f32 0.0, %v1085
        %v1087 = vpop.f32.mrf.mxu0
        %v1088 = vadd.f32 0.0, %v1087
        %1089 = vmatmul.bf16.gmra.mxu0 %v1068
        %v1090 = vpop.f32.mrf.mxu0
        %v1091 = vadd.f32 0.0, %v1090
        %v1092 = vpop.f32.mrf.mxu0
        %v1093 = vadd.f32 0.0, %v1092
        %1094 = vmatmul.bf16.gmra.mxu0 %v1071
        %v1095 = vpop.f32.mrf.mxu0
        %v1096 = vadd.f32 0.0, %v1095
        %v1097 = vpop.f32.mrf.mxu0
        %v1098 = vadd.f32 0.0, %v1097
        %1099 = vmatmul.bf16.gmra.mxu0 %v1074
        %v1100 = vpop.f32.mrf.mxu0
        %v1101 = vadd.f32 0.0, %v1100
        %v1102 = vpop.f32.mrf.mxu0
        %v1103 = vadd.f32 0.0, %v1102
        %1104 = vdwg.mxu0
        %v1105 = vpack.c.bf16 %v1088, %v1086
        %v1106 = vpack.c.bf16 %v1093, %v1091
        %v1107 = vpack.c.bf16 %v1098, %v1096
        %v1108 = vpack.c.bf16 %v1103, %v1101
        %s1109 = scalar_lea.vmem [#allocation2], 28
        %v1110 = vld [vmem:[%s1109] sm:$0xf]
        %v1112 = vsel %vm379, %v1105, 0
        %v1115 = vsel %vm379, %v1106, 0
        %v1118 = vsel %vm379, %v1107, 0
        %v1121 = vsel %vm379, %v1108, 0
        %v1124 = vsel %vm392, %v1110, 0
        %1126 = vmatpush.bf16.msra.mxu0 0
        %1127 = vmatpush.bf16.msra.mxu0 0
        %1128 = vmatpush.bf16.msra.mxu0 0
        %1129 = vmatpush.bf16.msra.mxu0 0
        %1130 = vmatpush.bf16.msra.mxu0 0
        %1131 = vmatpush.bf16.msra.mxu0 0
        %1132 = vmatpush.bf16.msra.mxu0 0
        %1133 = vmatpush.bf16.msra.mxu0 %v1124
        %1134 = vmatmul.bf16.gmra.mxu0 %v1112
        %v1135 = vpop.f32.mrf.mxu0
        %v1136 = vadd.f32 0.0, %v1135
        %v1137 = vpop.f32.mrf.mxu0
        %v1138 = vadd.f32 0.0, %v1137
        %1139 = vmatmul.bf16.gmra.mxu0 %v1115
        %v1140 = vpop.f32.mrf.mxu0
        %v1141 = vadd.f32 0.0, %v1140
        %v1142 = vpop.f32.mrf.mxu0
        %v1143 = vadd.f32 0.0, %v1142
        %1144 = vmatmul.bf16.gmra.mxu0 %v1118
        %v1145 = vpop.f32.mrf.mxu0
        %v1146 = vadd.f32 0.0, %v1145
        %v1147 = vpop.f32.mrf.mxu0
        %v1148 = vadd.f32 0.0, %v1147
        %1149 = vmatmul.bf16.gmra.mxu0 %v1121
        %v1150 = vpop.f32.mrf.mxu0
        %v1151 = vadd.f32 0.0, %v1150
        %v1152 = vpop.f32.mrf.mxu0
        %v1153 = vadd.f32 0.0, %v1152
        %1154 = vdwg.mxu0
        %v1155 = vadd.f32 %v1027, %v1136
        %v1156 = vadd.f32 %v1028, %v1138
        %v1157 = vadd.f32 %v1029, %v1141
        %v1158 = vadd.f32 %v1030, %v1143
        %v1159 = vadd.f32 %v1031, %v1146
        %v1160 = vadd.f32 %v1032, %v1148
        %v1161 = vadd.f32 %v1033, %v1151
        %v1162 = vadd.f32 %v1034, %v1153
        %s1163 = scalar_lea.vmem %s1, 256
        %v1164 = vld [vmem:[%s1163] sm:$0xf]
        %v1165 = vld [vmem:[%s1163 + $0x4] sm:$0xf]
        %v1166 = vld [vmem:[%s1163 + $0x8] sm:$0xf]
        %v1167 = vld [vmem:[%s1163 + $0xc] sm:$0xf]
        %v1168 = vld [vmem:[%s1163 + $0x10] sm:$0xf]
        %v1169 = vld [vmem:[%s1163 + $0x14] sm:$0xf]
        %v1170 = vld [vmem:[%s1163 + $0x18] sm:$0xf]
        %v1171 = vld [vmem:[%s1163 + $0x1c] sm:$0xf]
        %v1180 = vunpack.c.l.b16 %v1164
        %v1181 = vunpack.c.l.b16 %v1165
        %v1182 = vunpack.c.l.b16 %v1166
        %v1183 = vunpack.c.l.b16 %v1167
        %v1184 = vunpack.c.l.b16 %v1168
        %v1185 = vunpack.c.l.b16 %v1169
        %v1186 = vunpack.c.l.b16 %v1170
        %v1187 = vunpack.c.l.b16 %v1171
        %v1188 = vpack.c.b16 %v1181, %v1180
        %v1189 = vpack.c.b16 %v1183, %v1182
        %v1190 = vpack.c.b16 %v1185, %v1184
        %v1191 = vpack.c.b16 %v1187, %v1186
        %v1193 = vsel %vm256, %v1188, 0
        %v1196 = vsel %vm256, %v1189, 0
        %v1199 = vsel %vm256, %v1190, 0
        %v1202 = vsel %vm256, %v1191, 0
        %1204 = vmatpush.bf16.msra.mxu0 0
        %1205 = vmatpush.bf16.msra.mxu0 0
        %1206 = vmatpush.bf16.msra.mxu0 0
        %1207 = vmatpush.bf16.msra.mxu0 0
        %1208 = vmatpush.bf16.msra.mxu0 %v227
        %1209 = vmatpush.bf16.msra.mxu0 %v226
        %1210 = vmatpush.bf16.msra.mxu0 %v225
        %1211 = vmatpush.bf16.msra.mxu0 %v224
        %1212 = vmatmul.bf16.gmra.mxu0 %v1193
        %v1213 = vpop.f32.mrf.mxu0
        %v1214 = vadd.f32 0.0, %v1213
        %v1215 = vpop.f32.mrf.mxu0
        %v1216 = vadd.f32 0.0, %v1215
        %1217 = vmatmul.bf16.gmra.mxu0 %v1196
        %v1218 = vpop.f32.mrf.mxu0
        %v1219 = vadd.f32 0.0, %v1218
        %v1220 = vpop.f32.mrf.mxu0
        %v1221 = vadd.f32 0.0, %v1220
        %1222 = vmatmul.bf16.gmra.mxu0 %v1199
        %v1223 = vpop.f32.mrf.mxu0
        %v1224 = vadd.f32 0.0, %v1223
        %v1225 = vpop.f32.mrf.mxu0
        %v1226 = vadd.f32 0.0, %v1225
        %1227 = vmatmul.bf16.gmra.mxu0 %v1202
        %v1228 = vpop.f32.mrf.mxu0
        %v1229 = vadd.f32 0.0, %v1228
        %v1230 = vpop.f32.mrf.mxu0
        %v1231 = vadd.f32 0.0, %v1230
        %1232 = vdwg.mxu0
        %v1233 = vpack.c.bf16 %v1216, %v1214
        %v1234 = vpack.c.bf16 %v1221, %v1219
        %v1235 = vpack.c.bf16 %v1226, %v1224
        %v1236 = vpack.c.bf16 %v1231, %v1229
        %s1237 = scalar_lea.vmem [#allocation2], 32
        %v1238 = vld [vmem:[%s1237] sm:$0xf]
        %v1240 = vsel %vm379, %v1233, 0
        %v1243 = vsel %vm379, %v1234, 0
        %v1246 = vsel %vm379, %v1235, 0
        %v1249 = vsel %vm379, %v1236, 0
        %v1252 = vsel %vm392, %v1238, 0
        %1254 = vmatpush.bf16.msra.mxu0 0
        %1255 = vmatpush.bf16.msra.mxu0 0
        %1256 = vmatpush.bf16.msra.mxu0 0
        %1257 = vmatpush.bf16.msra.mxu0 0
        %1258 = vmatpush.bf16.msra.mxu0 0
        %1259 = vmatpush.bf16.msra.mxu0 0
        %1260 = vmatpush.bf16.msra.mxu0 0
        %1261 = vmatpush.bf16.msra.mxu0 %v1252
        %1262 = vmatmul.bf16.gmra.mxu0 %v1240
        %v1263 = vpop.f32.mrf.mxu0
        %v1264 = vadd.f32 0.0, %v1263
        %v1265 = vpop.f32.mrf.mxu0
        %v1266 = vadd.f32 0.0, %v1265
        %1267 = vmatmul.bf16.gmra.mxu0 %v1243
        %v1268 = vpop.f32.mrf.mxu0
        %v1269 = vadd.f32 0.0, %v1268
        %v1270 = vpop.f32.mrf.mxu0
        %v1271 = vadd.f32 0.0, %v1270
        %1272 = vmatmul.bf16.gmra.mxu0 %v1246
        %v1273 = vpop.f32.mrf.mxu0
        %v1274 = vadd.f32 0.0, %v1273
        %v1275 = vpop.f32.mrf.mxu0
        %v1276 = vadd.f32 0.0, %v1275
        %1277 = vmatmul.bf16.gmra.mxu0 %v1249
        %v1278 = vpop.f32.mrf.mxu0
        %v1279 = vadd.f32 0.0, %v1278
        %v1280 = vpop.f32.mrf.mxu0
        %v1281 = vadd.f32 0.0, %v1280
        %1282 = vdwg.mxu0
        %v1283 = vadd.f32 %v1155, %v1264
        %v1284 = vadd.f32 %v1156, %v1266
        %v1285 = vadd.f32 %v1157, %v1269
        %v1286 = vadd.f32 %v1158, %v1271
        %v1287 = vadd.f32 %v1159, %v1274
        %v1288 = vadd.f32 %v1160, %v1276
        %v1289 = vadd.f32 %v1161, %v1279
        %v1290 = vadd.f32 %v1162, %v1281
        %v1291 = vld [vmem:[%s3] sm:$0x1]
        %v1293 = vperm.slane %v1291, 0
        %v1295 = vadd.f32 %v1283, %v1293
        %v1296 = vadd.f32 %v1284, %v1293
        %v1297 = vadd.f32 %v1285, %v1293
        %v1298 = vadd.f32 %v1286, %v1293
        %v1299 = vadd.f32 %v1287, %v1293
        %v1300 = vadd.f32 %v1288, %v1293
        %v1301 = vadd.f32 %v1289, %v1293
        %v1302 = vadd.f32 %v1290, %v1293
        %v1303 = vxor.u32 %v1295, 2147483648
        %v1304 = vxor.u32 %v1296, 2147483648
        %v1305 = vxor.u32 %v1297, 2147483648
        %v1306 = vxor.u32 %v1298, 2147483648
        %v1307 = vxor.u32 %v1299, 2147483648
        %v1308 = vxor.u32 %v1300, 2147483648
        %v1309 = vxor.u32 %v1301, 2147483648
        %v1310 = vxor.u32 %v1302, 2147483648
        %v1311 = vmul.f32 %v1303, 1.442695
        %v1312 = vpow.pop %v1311
        %v1313 = vmul.f32 %v1304, 1.442695
        %v1314 = vpow.pop %v1313
        %v1315 = vmul.f32 %v1305, 1.442695
        %v1316 = vpow.pop %v1315
        %v1317 = vmul.f32 %v1306, 1.442695
        %v1318 = vpow.pop %v1317
        %v1319 = vmul.f32 %v1307, 1.442695
        %v1320 = vpow.pop %v1319
        %v1321 = vmul.f32 %v1308, 1.442695
        %v1322 = vpow.pop %v1321
        %v1323 = vmul.f32 %v1309, 1.442695
        %v1324 = vpow.pop %v1323
        %v1325 = vmul.f32 %v1310, 1.442695
        %v1326 = vpow.pop %v1325
        %v1327 = vadd.f32 %v1312, 1.0
        %v1328 = vadd.f32 %v1314, 1.0
        %v1329 = vadd.f32 %v1316, 1.0
        %v1330 = vadd.f32 %v1318, 1.0
        %v1331 = vadd.f32 %v1320, 1.0
        %v1332 = vadd.f32 %v1322, 1.0
        %v1333 = vadd.f32 %v1324, 1.0
        %v1334 = vadd.f32 %v1326, 1.0
        %v1335 = vrcp.pop %v1327
        %v1336 = vmul.f32 %v1327, %v1335
        %v1337 = vsub.f32 1.0, %v1336
        %v1338 = vmul.f32 %v1335, %v1337
        %v1339 = vadd.f32 %v1335, %v1338
        %vm1340 = vweird.f32 %v1327
        %vm1341 = vweird.f32 %v1335
        %vm1342 = vmor %vm1340, %vm1341
        %v1343 = vsel %vm1342, %v1335, %v1339
        %v1344 = vand.u32 2147483647, %v1327
        %vm1345 = vcmp.eq.f32.partialorder %v1344, 8.507059e+37
        %v1346 = vand.u32 %v1327, 2147483648
        %v1347 = vor.u32 1.1754944e-38, %v1346
        %v1348 = vsel %vm1345, %v1347, %v1343
        %v1349 = vmul.f32 1.0, %v1348
        %v1350 = vrcp.pop %v1328
        %v1351 = vmul.f32 %v1328, %v1350
        %v1352 = vsub.f32 1.0, %v1351
        %v1353 = vmul.f32 %v1350, %v1352
        %v1354 = vadd.f32 %v1350, %v1353
        %vm1355 = vweird.f32 %v1328
        %vm1356 = vweird.f32 %v1350
        %vm1357 = vmor %vm1355, %vm1356
        %v1358 = vsel %vm1357, %v1350, %v1354
        %v1359 = vand.u32 2147483647, %v1328
        %vm1360 = vcmp.eq.f32.partialorder %v1359, 8.507059e+37
        %v1361 = vand.u32 %v1328, 2147483648
        %v1362 = vor.u32 1.1754944e-38, %v1361
        %v1363 = vsel %vm1360, %v1362, %v1358
        %v1364 = vmul.f32 1.0, %v1363
        %v1365 = vrcp.pop %v1329
        %v1366 = vmul.f32 %v1329, %v1365
        %v1367 = vsub.f32 1.0, %v1366
        %v1368 = vmul.f32 %v1365, %v1367
        %v1369 = vadd.f32 %v1365, %v1368
        %vm1370 = vweird.f32 %v1329
        %vm1371 = vweird.f32 %v1365
        %vm1372 = vmor %vm1370, %vm1371
        %v1373 = vsel %vm1372, %v1365, %v1369
        %v1374 = vand.u32 2147483647, %v1329
        %vm1375 = vcmp.eq.f32.partialorder %v1374, 8.507059e+37
        %v1376 = vand.u32 %v1329, 2147483648
        %v1377 = vor.u32 1.1754944e-38, %v1376
        %v1378 = vsel %vm1375, %v1377, %v1373
        %v1379 = vmul.f32 1.0, %v1378
        %v1380 = vrcp.pop %v1330
        %v1381 = vmul.f32 %v1330, %v1380
        %v1382 = vsub.f32 1.0, %v1381
        %v1383 = vmul.f32 %v1380, %v1382
        %v1384 = vadd.f32 %v1380, %v1383
        %vm1385 = vweird.f32 %v1330
        %vm1386 = vweird.f32 %v1380
        %vm1387 = vmor %vm1385, %vm1386
        %v1388 = vsel %vm1387, %v1380, %v1384
        %v1389 = vand.u32 2147483647, %v1330
        %vm1390 = vcmp.eq.f32.partialorder %v1389, 8.507059e+37
        %v1391 = vand.u32 %v1330, 2147483648
        %v1392 = vor.u32 1.1754944e-38, %v1391
        %v1393 = vsel %vm1390, %v1392, %v1388
        %v1394 = vmul.f32 1.0, %v1393
        %v1395 = vrcp.pop %v1331
        %v1396 = vmul.f32 %v1331, %v1395
        %v1397 = vsub.f32 1.0, %v1396
        %v1398 = vmul.f32 %v1395, %v1397
        %v1399 = vadd.f32 %v1395, %v1398
        %vm1400 = vweird.f32 %v1331
        %vm1401 = vweird.f32 %v1395
        %vm1402 = vmor %vm1400, %vm1401
        %v1403 = vsel %vm1402, %v1395, %v1399
        %v1404 = vand.u32 2147483647, %v1331
        %vm1405 = vcmp.eq.f32.partialorder %v1404, 8.507059e+37
        %v1406 = vand.u32 %v1331, 2147483648
        %v1407 = vor.u32 1.1754944e-38, %v1406
        %v1408 = vsel %vm1405, %v1407, %v1403
        %v1409 = vmul.f32 1.0, %v1408
        %v1410 = vrcp.pop %v1332
        %v1411 = vmul.f32 %v1332, %v1410
        %v1412 = vsub.f32 1.0, %v1411
        %v1413 = vmul.f32 %v1410, %v1412
        %v1414 = vadd.f32 %v1410, %v1413
        %vm1415 = vweird.f32 %v1332
        %vm1416 = vweird.f32 %v1410
        %vm1417 = vmor %vm1415, %vm1416
        %v1418 = vsel %vm1417, %v1410, %v1414
        %v1419 = vand.u32 2147483647, %v1332
        %vm1420 = vcmp.eq.f32.partialorder %v1419, 8.507059e+37
        %v1421 = vand.u32 %v1332, 2147483648
        %v1422 = vor.u32 1.1754944e-38, %v1421
        %v1423 = vsel %vm1420, %v1422, %v1418
        %v1424 = vmul.f32 1.0, %v1423
        %v1425 = vrcp.pop %v1333
        %v1426 = vmul.f32 %v1333, %v1425
        %v1427 = vsub.f32 1.0, %v1426
        %v1428 = vmul.f32 %v1425, %v1427
        %v1429 = vadd.f32 %v1425, %v1428
        %vm1430 = vweird.f32 %v1333
        %vm1431 = vweird.f32 %v1425
        %vm1432 = vmor %vm1430, %vm1431
        %v1433 = vsel %vm1432, %v1425, %v1429
        %v1434 = vand.u32 2147483647, %v1333
        %vm1435 = vcmp.eq.f32.partialorder %v1434, 8.507059e+37
        %v1436 = vand.u32 %v1333, 2147483648
        %v1437 = vor.u32 1.1754944e-38, %v1436
        %v1438 = vsel %vm1435, %v1437, %v1433
        %v1439 = vmul.f32 1.0, %v1438
        %v1440 = vrcp.pop %v1334
        %v1441 = vmul.f32 %v1334, %v1440
        %v1442 = vsub.f32 1.0, %v1441
        %v1443 = vmul.f32 %v1440, %v1442
        %v1444 = vadd.f32 %v1440, %v1443
        %vm1445 = vweird.f32 %v1334
        %vm1446 = vweird.f32 %v1440
        %vm1447 = vmor %vm1445, %vm1446
        %v1448 = vsel %vm1447, %v1440, %v1444
        %v1449 = vand.u32 2147483647, %v1334
        %vm1450 = vcmp.eq.f32.partialorder %v1449, 8.507059e+37
        %v1451 = vand.u32 %v1334, 2147483648
        %v1452 = vor.u32 1.1754944e-38, %v1451
        %v1453 = vsel %vm1450, %v1452, %v1448
        %v1454 = vmul.f32 1.0, %v1453
        %vm1455 = vcmask 23552
        %1456 = vst.msk [vmem:[%s214] sm:$0xff] %vm1455, %v1349
        %1457 = vst.msk [vmem:[%s214 + $0x8] sm:$0xff] %vm1455, %v1364
        %1458 = vst.msk [vmem:[%s214 + $0x10] sm:$0xff] %vm1455, %v1379
        %1459 = vst.msk [vmem:[%s214 + $0x18] sm:$0xff] %vm1455, %v1394
        %1460 = vst.msk [vmem:[%s214 + $0x20] sm:$0xff] %vm1455, %v1409
        %1461 = vst.msk [vmem:[%s214 + $0x28] sm:$0xff] %vm1455, %v1424
        %1462 = vst.msk [vmem:[%s214 + $0x30] sm:$0xff] %vm1455, %v1439
        %1463 = vst.msk [vmem:[%s214 + $0x38] sm:$0xff] %vm1455, %v1454
        %p1464 = scmp.lt.s32.totalorder %s16, 1
        %s1465 = scalar_select %p1464, %s16, 1
        %s1466 = smul.addr %s1465, 8
        %s1467 = smul.addr %s1466, 8
        %s1468 = scalar_lea.vmem %s4, %s1467
        // Predicated region
        $region41: #{_lambda_.7} parent=35 // pred_check
          %p1469 = pneg %p123
        $region42: #{_lambda_.7} parent=35 // pred_check_branch
          %1471 = sbr.rel (%p1469) target = $region44
        $region43: #{_lambda_.7} parent=35 // pred_region
          _
        $region44: #{_lambda_.7} parent=35 // pred_fallthru
          _
      $region36: #{_lambda_.7} parent=5 // pred_fallthru
        _
      %p1472 = scmp.le.s32.totalorder 2, %s11
      // Predicated region
      $region45: #{_lambda_.7} parent=5 // pred_check
        %p1473 = pneg %p1472
      $region46: #{_lambda_.7} parent=5 // pred_check_branch
        %1475 = sbr.rel (%p1473) target = $region48
      $region47: #{_lambda_.7} parent=5 // pred_region
        %s1476 = ssub.s32 %s11, 2
        // Predicated region
        $region49: #{_lambda_.7} parent=47 // pred_check
          %p1477 = pneg %p129
        $region50: #{_lambda_.7} parent=47 // pred_check_branch
          %1479 = sbr.rel (%p1477) target = $region52
        $region51: #{_lambda_.7} parent=47 // pred_region
          %p1480 = scmp.lt.s32.totalorder %s17, 1
          %s1481 = scalar_select %p1480, %s17, 1
          %s1482 = smul.addr %s1481, 8
          %s1483 = smul.addr %s1482, 8
          %s1484 = scalar_lea.vmem %s4, %s1483
        $region52: #{_lambda_.7} parent=47 // pred_fallthru
          _
      $region48: #{_lambda_.7} parent=5 // pred_fallthru
        _
    $region6: #{_lambda_.7} parent=1 // loop_footer
      %s15 = sadd.s32 1, %s11
    $region7: #{_lambda_.7} parent=1 // loop_footer_branch
      %10 = sbr.rel target = $region3
    $region8: #{_lambda_.7} parent=1 // loop_exit
      _
    %1485 = vsyncpa [#allocation3], 1
    %s1486 = scalar_lea.sflag [#allocation3], 1
    %1487 = vsyncpa %s1486, 1

// kernel: _lambda_.6
$region0: #{_lambda_.6}
  #allocation0 [shape = 'u32[]', space=smem, size = 0x4, offset = 0x4, fixed_abs, tag = 'smem constant byte address 0x4 - core index']
  #allocation1 [shape = 'u32[72,128]{1,0:T(1,128)}', space=vmem, size = 0x9000, scoped, tag = 'internal scratch']
  %s0 = inlined_call_operand.vmem [shape: f32[2,64,8], index: 0, kind: input, shape index: {}]
  %s1 = inlined_call_operand.vmem [shape: bf16[9,64,64], index: 1, kind: input, shape index: {}]
  %s2 = inlined_call_operand.hbm [shape: bf16[8,4], index: 2, kind: input, shape index: {}]
  %s3 = inlined_call_operand.vmem [shape: f32[1,4], index: 3, kind: input, shape index: {}, may-alias: {3,5,7}]
  %s4 = inlined_call_operand.vmem [shape: bf16[9,4,4], index: 4, kind: input, shape index: {}]
  %s5 = inlined_call_operand.vmem [shape: f32[1,4], index: 5, kind: input, shape index: {}, may-alias: {3,5,7}]
  %s6 = inlined_call_operand.hbm [shape: bf16[9,4,4], index: 6, kind: input, shape index: {}]
  %s7 = inlined_call_operand.vmem [shape: f32[1,4], index: 7, kind: input, shape index: {}, may-alias: {3,5,7}]
  %s8 = inlined_call_operand.hbm [shape: bf16[4,8], index: 8, kind: input, shape index: {}]
  %s9 = inlined_call_operand.vmem [shape: f32[1,8], index: 9, kind: input, shape index: {}]
  %s10 = inlined_call_operand.vmem [shape: f32[2,64,8], index: 10, kind: output, shape index: {}]
  %s11 = sld [smem:[#allocation0]]
  $region85: #{_lambda_.6} parent=0
    _
  %s13 = ssub.s32 1, %s11
  %s14 = scalar_select 0, %s13, %s11
  $region1: #{_lambda_.6} parent=0
    #allocation2 [shape = 'u8[2048]{0}', space=vmem, size = 0x800, scoped, tag = 'input window, operand 2, single buffered']
    #allocation3 [shape = 's32[2]{0}', space=sflag, size = 0x8, scoped, tag = 'scoped memory for _lambda_.6']
    #allocation4 [shape = 'u8[9216]{0}', space=vmem, size = 0x2400, scoped, tag = 'input window, operand 6, single buffered']
    #allocation5 [shape = 's32[1]{0}', space=sflag, size = 0x4, scoped, tag = 'scoped memory for _lambda_.6']
    #allocation6 [shape = 'u8[1024]{0}', space=vmem, size = 0x400, scoped, tag = 'input window, operand 8, single buffered']
    %15 = vsyncpa [#allocation3], 0
    %16 = vsyncpa [#allocation5], 0
    loop: start=0, step=1, limit=4
    $region2: #{_lambda_.6} parent=1 // loop_pre_header
      _
    $region3: #{_lambda_.6} parent=1 // loop_header
      %s18 = sphi 0, %s22
      %p19 = scmp.ge.s32.totalorder %s18, 4
      %s28 = sphi 0, %s30
      %s31 = sphi 0, %s28
      %s32 = sphi 0, %s31
      %s48 = sphi 0, %s32
      %s52 = sphi 0, %s52
      %s54 = sphi 0, %s52
      %s55 = sphi 0, %s54
      %s69 = sphi 0, %s55
      %s73 = sphi 0, %s73
      %s75 = sphi 0, %s73
      %s76 = sphi 0, %s75
      %s90 = sphi 0, %s76
      %s94 = sphi 0, %s94
      %s96 = sphi 0, %s94
      %s97 = sphi 0, %s96
      %s111 = sphi 0, %s97
      %s115 = sphi 0, %s115
      %s117 = sphi 0, %s115
      %s118 = sphi 0, %s117
      %s132 = sphi 0, %s118
      %s136 = sphi 0, %s136
      %s138 = sphi 0, %s136
      %s139 = sphi 0, %s138
      %s153 = sphi 0, %s139
      %s157 = sphi 0, %s157
      %s159 = sphi 0, %s157
      %s160 = sphi 0, %s159
      %s174 = sphi 0, %s160
      %s178 = sphi 0, %s178
      %s180 = sphi 0, %s178
      %s181 = sphi 0, %s180
      %s195 = sphi 0, %s181
      %s199 = sphi 0, %s199
      %s201 = sphi 0, %s199
      %s202 = sphi 0, %s201
      %s216 = sphi 0, %s202
      %s220 = sphi 0, %s220
      %s222 = sphi 0, %s220
      %s223 = sphi 0, %s222
      %s237 = sphi 0, %s223
      %s243 = sphi 0, %s245
      %s246 = sphi 0, %s243
      %s247 = sphi 0, %s246
      %s263 = sphi 0, %s247
    $region4: #{_lambda_.6} parent=1 // loop_header_branch
      %21 = sbr.rel (%p19) target = $region8
    $region5: #{_lambda_.6} parent=1 // loop_body
      %s23 = ssub.s32 %s18, 1
      %s24 = ssub.s32 %s18, 2
      %s25 = sadd.s32 %s18, 1
      %s26 = ssub.s32 %s18, %s25
      %p27 = scmp.eq.s32.totalorder %s26, 0
      %s29 = sadd.s32 %s28, 1
      %s30 = scalar_select %p27, %s28, %s29
      %p33 = pneg %p27
      %p34 = scmp.eq.s32.totalorder %s18, 1
      %p35 = por %p33, %p34
      %p36 = scmp.ne.s32.totalorder %s28, %s31
      %p37 = scmp.eq.s32.totalorder %s18, 0
      %p38 = por %p36, %p37
      %p39 = scmp.ne.s32.totalorder %s28, %s31
      %p40 = scmp.eq.s32.totalorder %s23, 1
      %p41 = por %p39, %p40
      %p42 = scmp.ne.s32.totalorder %s31, %s32
      %p43 = scmp.eq.s32.totalorder %s23, 0
      %p44 = por %p42, %p43
      %p45 = scmp.ne.s32.totalorder %s31, %s32
      %p46 = scmp.eq.s32.totalorder %s24, 1
      %p47 = por %p45, %p46
      %p49 = scmp.ne.s32.totalorder %s32, %s48
      %p50 = scmp.eq.s32.totalorder %s24, 0
      %p51 = por %p49, %p50
      %s53 = sadd.s32 %s52, 1
      %p56 = scmp.eq.s32.totalorder %s18, 1
      %p57 = scmp.ne.s32.totalorder %s52, %s54
      %p58 = scmp.eq.s32.totalorder %s18, 0
      %p59 = por %p57, %p58
      %p60 = scmp.ne.s32.totalorder %s52, %s54
      %p61 = scmp.eq.s32.totalorder %s23, 1
      %p62 = por %p60, %p61
      %p63 = scmp.ne.s32.totalorder %s54, %s55
      %p64 = scmp.eq.s32.totalorder %s23, 0
      %p65 = por %p63, %p64
      %p66 = scmp.ne.s32.totalorder %s54, %s55
      %p67 = scmp.eq.s32.totalorder %s24, 1
      %p68 = por %p66, %p67
      %p70 = scmp.ne.s32.totalorder %s55, %s69
      %p71 = scmp.eq.s32.totalorder %s24, 0
      %p72 = por %p70, %p71
      %s74 = sadd.s32 %s73, 1
      %p77 = scmp.eq.s32.totalorder %s18, 1
      %p78 = scmp.ne.s32.totalorder %s73, %s75
      %p79 = scmp.eq.s32.totalorder %s18, 0
      %p80 = por %p78, %p79
      %p81 = scmp.ne.s32.totalorder %s73, %s75
      %p82 = scmp.eq.s32.totalorder %s23, 1
      %p83 = por %p81, %p82
      %p84 = scmp.ne.s32.totalorder %s75, %s76
      %p85 = scmp.eq.s32.totalorder %s23, 0
      %p86 = por %p84, %p85
      %p87 = scmp.ne.s32.totalorder %s75, %s76
      %p88 = scmp.eq.s32.totalorder %s24, 1
      %p89 = por %p87, %p88
      %p91 = scmp.ne.s32.totalorder %s76, %s90
      %p92 = scmp.eq.s32.totalorder %s24, 0
      %p93 = por %p91, %p92
      %s95 = sadd.s32 %s94, 1
      %p98 = scmp.eq.s32.totalorder %s18, 1
      %p99 = scmp.ne.s32.totalorder %s94, %s96
      %p100 = scmp.eq.s32.totalorder %s18, 0
      %p101 = por %p99, %p100
      %p102 = scmp.ne.s32.totalorder %s94, %s96
      %p103 = scmp.eq.s32.totalorder %s23, 1
      %p104 = por %p102, %p103
      %p105 = scmp.ne.s32.totalorder %s96, %s97
      %p106 = scmp.eq.s32.totalorder %s23, 0
      %p107 = por %p105, %p106
      %p108 = scmp.ne.s32.totalorder %s96, %s97
      %p109 = scmp.eq.s32.totalorder %s24, 1
      %p110 = por %p108, %p109
      %p112 = scmp.ne.s32.totalorder %s97, %s111
      %p113 = scmp.eq.s32.totalorder %s24, 0
      %p114 = por %p112, %p113
      %s116 = sadd.s32 %s115, 1
      %p119 = scmp.eq.s32.totalorder %s18, 1
      %p120 = scmp.ne.s32.totalorder %s115, %s117
      %p121 = scmp.eq.s32.totalorder %s18, 0
      %p122 = por %p120, %p121
      %p123 = scmp.ne.s32.totalorder %s115, %s117
      %p124 = scmp.eq.s32.totalorder %s23, 1
      %p125 = por %p123, %p124
      %p126 = scmp.ne.s32.totalorder %s117, %s118
      %p127 = scmp.eq.s32.totalorder %s23, 0
      %p128 = por %p126, %p127
      %p129 = scmp.ne.s32.totalorder %s117, %s118
      %p130 = scmp.eq.s32.totalorder %s24, 1
      %p131 = por %p129, %p130
      %p133 = scmp.ne.s32.totalorder %s118, %s132
      %p134 = scmp.eq.s32.totalorder %s24, 0
      %p135 = por %p133, %p134
      %s137 = sadd.s32 %s136, 1
      %p140 = scmp.eq.s32.totalorder %s18, 1
      %p141 = scmp.ne.s32.totalorder %s136, %s138
      %p142 = scmp.eq.s32.totalorder %s18, 0
      %p143 = por %p141, %p142
      %p144 = scmp.ne.s32.totalorder %s136, %s138
      %p145 = scmp.eq.s32.totalorder %s23, 1
      %p146 = por %p144, %p145
      %p147 = scmp.ne.s32.totalorder %s138, %s139
      %p148 = scmp.eq.s32.totalorder %s23, 0
      %p149 = por %p147, %p148
      %p150 = scmp.ne.s32.totalorder %s138, %s139
      %p151 = scmp.eq.s32.totalorder %s24, 1
      %p152 = por %p150, %p151
      %p154 = scmp.ne.s32.totalorder %s139, %s153
      %p155 = scmp.eq.s32.totalorder %s24, 0
      %p156 = por %p154, %p155
      %s158 = sadd.s32 %s157, 1
      %p161 = scmp.eq.s32.totalorder %s18, 1
      %p162 = scmp.ne.s32.totalorder %s157, %s159
      %p163 = scmp.eq.s32.totalorder %s18, 0
      %p164 = por %p162, %p163
      %p165 = scmp.ne.s32.totalorder %s157, %s159
      %p166 = scmp.eq.s32.totalorder %s23, 1
      %p167 = por %p165, %p166
      %p168 = scmp.ne.s32.totalorder %s159, %s160
      %p169 = scmp.eq.s32.totalorder %s23, 0
      %p170 = por %p168, %p169
      %p171 = scmp.ne.s32.totalorder %s159, %s160
      %p172 = scmp.eq.s32.totalorder %s24, 1
      %p173 = por %p171, %p172
      %p175 = scmp.ne.s32.totalorder %s160, %s174
      %p176 = scmp.eq.s32.totalorder %s24, 0
      %p177 = por %p175, %p176
      %s179 = sadd.s32 %s178, 1
      %p182 = scmp.eq.s32.totalorder %s18, 1
      %p183 = scmp.ne.s32.totalorder %s178, %s180
      %p184 = scmp.eq.s32.totalorder %s18, 0
      %p185 = por %p183, %p184
      %p186 = scmp.ne.s32.totalorder %s178, %s180
      %p187 = scmp.eq.s32.totalorder %s23, 1
      %p188 = por %p186, %p187
      %p189 = scmp.ne.s32.totalorder %s180, %s181
      %p190 = scmp.eq.s32.totalorder %s23, 0
      %p191 = por %p189, %p190
      %p192 = scmp.ne.s32.totalorder %s180, %s181
      %p193 = scmp.eq.s32.totalorder %s24, 1
      %p194 = por %p192, %p193
      %p196 = scmp.ne.s32.totalorder %s181, %s195
      %p197 = scmp.eq.s32.totalorder %s24, 0
      %p198 = por %p196, %p197
      %s200 = sadd.s32 %s199, 1
      %p203 = scmp.eq.s32.totalorder %s18, 1
      %p204 = scmp.ne.s32.totalorder %s199, %s201
      %p205 = scmp.eq.s32.totalorder %s18, 0
      %p206 = por %p204, %p205
      %p207 = scmp.ne.s32.totalorder %s199, %s201
      %p208 = scmp.eq.s32.totalorder %s23, 1
      %p209 = por %p207, %p208
      %p210 = scmp.ne.s32.totalorder %s201, %s202
      %p211 = scmp.eq.s32.totalorder %s23, 0
      %p212 = por %p210, %p211
      %p213 = scmp.ne.s32.totalorder %s201, %s202
      %p214 = scmp.eq.s32.totalorder %s24, 1
      %p215 = por %p213, %p214
      %p217 = scmp.ne.s32.totalorder %s202, %s216
      %p218 = scmp.eq.s32.totalorder %s24, 0
      %p219 = por %p217, %p218
      %s221 = sadd.s32 %s220, 1
      %p224 = scmp.eq.s32.totalorder %s18, 1
      %p225 = scmp.ne.s32.totalorder %s220, %s222
      %p226 = scmp.eq.s32.totalorder %s18, 0
      %p227 = por %p225, %p226
      %p228 = scmp.ne.s32.totalorder %s220, %s222
      %p229 = scmp.eq.s32.totalorder %s23, 1
      %p230 = por %p228, %p229
      %p231 = scmp.ne.s32.totalorder %s222, %s223
      %p232 = scmp.eq.s32.totalorder %s23, 0
      %p233 = por %p231, %p232
      %p234 = scmp.ne.s32.totalorder %s222, %s223
      %p235 = scmp.eq.s32.totalorder %s24, 1
      %p236 = por %p234, %p235
      %p238 = scmp.ne.s32.totalorder %s223, %s237
      %p239 = scmp.eq.s32.totalorder %s24, 0
      %p240 = por %p238, %p239
      %s241 = ssub.s32 %s18, %s25
      %p242 = scmp.eq.s32.totalorder %s241, 0
      %s244 = sadd.s32 %s243, 1
      %s245 = scalar_select %p242, %s243, %s244
      %p248 = pneg %p242
      %p249 = scmp.eq.s32.totalorder %s18, 1
      %p250 = por %p248, %p249
      %p251 = scmp.ne.s32.totalorder %s243, %s246
      %p252 = scmp.eq.s32.totalorder %s18, 0
      %p253 = por %p251, %p252
      %p254 = scmp.ne.s32.totalorder %s243, %s246
      %p255 = scmp.eq.s32.totalorder %s23, 1
      %p256 = por %p254, %p255
      %p257 = scmp.ne.s32.totalorder %s246, %s247
      %p258 = scmp.eq.s32.totalorder %s23, 0
      %p259 = por %p257, %p258
      %p260 = scmp.ne.s32.totalorder %s246, %s247
      %p261 = scmp.eq.s32.totalorder %s24, 1
      %p262 = por %p260, %p261
      %p264 = scmp.ne.s32.totalorder %s247, %s263
      %p265 = scmp.eq.s32.totalorder %s24, 0
      %p266 = por %p264, %p265
      %p267 = scmp.le.s32.totalorder 1, %s18
      %p268 = scmp.lt.s32.totalorder %s18, 3
      %p269 = pnand %p267, %p268
      %p270 = pneg %p269
      // Predicated region
      $region9: #{_lambda_.6} parent=5 // pred_check
        _
      $region10: #{_lambda_.6} parent=5 // pred_check_branch
        %272 = sbr.rel (%p269) target = $region12
      $region11: #{_lambda_.6} parent=5 // pred_region
        %s273 = ssub.s32 %s18, 1
        // Predicated region
        $region13: #{_lambda_.6} parent=11 // pred_check
          %p274 = pneg %p65
        $region14: #{_lambda_.6} parent=11 // pred_check_branch
          %276 = sbr.rel (%p274) target = $region16
        $region15: #{_lambda_.6} parent=11 // pred_region
          _
        $region16: #{_lambda_.6} parent=11 // pred_fallthru
          _
        // Predicated region
        $region17: #{_lambda_.6} parent=11 // pred_check
          %p277 = pneg %p86
        $region18: #{_lambda_.6} parent=11 // pred_check_branch
          %279 = sbr.rel (%p277) target = $region20
        $region19: #{_lambda_.6} parent=11 // pred_region
          %281 = vsyncadd [#allocation3], 0
          %s283 = sshll.u32 %s2, 4
          %s284 = int_to_ptr.hbm [resolvable:$true] %s283
          %s285 = sshll.u32 [#allocation2], 4
          %s286 = int_to_ptr.vmem [resolvable:$true] %s285
          %288 = dma.hbm_to_vmem [thread:$0]  %s284, 64, %s286, [#allocation3]
        $region20: #{_lambda_.6} parent=11 // pred_fallthru
          _
        // Predicated region
        $region21: #{_lambda_.6} parent=11 // pred_check
          %p289 = pneg %p107
        $region22: #{_lambda_.6} parent=11 // pred_check_branch
          %291 = sbr.rel (%p289) target = $region24
        $region23: #{_lambda_.6} parent=11 // pred_region
          _
        $region24: #{_lambda_.6} parent=11 // pred_fallthru
          _
        // Predicated region
        $region25: #{_lambda_.6} parent=11 // pred_check
          %p292 = pneg %p128
        $region26: #{_lambda_.6} parent=11 // pred_check_branch
          %294 = sbr.rel (%p292) target = $region28
        $region27: #{_lambda_.6} parent=11 // pred_region
          _
        $region28: #{_lambda_.6} parent=11 // pred_fallthru
          _
        // Predicated region
        $region29: #{_lambda_.6} parent=11 // pred_check
          %p295 = pneg %p149
        $region30: #{_lambda_.6} parent=11 // pred_check_branch
          %297 = sbr.rel (%p295) target = $region32
        $region31: #{_lambda_.6} parent=11 // pred_region
          _
        $region32: #{_lambda_.6} parent=11 // pred_fallthru
          _
        // Predicated region
        $region33: #{_lambda_.6} parent=11 // pred_check
          %p298 = pneg %p170
        $region34: #{_lambda_.6} parent=11 // pred_check_branch
          %300 = sbr.rel (%p298) target = $region36
        $region35: #{_lambda_.6} parent=11 // pred_region
          %302 = vsyncadd [#allocation5], 0
          %s303 = sshll.u32 %s6, 4
          %s304 = int_to_ptr.hbm [resolvable:$true] %s303
          %s305 = sshll.u32 [#allocation4], 4
          %s306 = int_to_ptr.vmem [resolvable:$true] %s305
          %311 = dma.hbm_to_vmem [thread:$0]  %s304, 288, %s306, [#allocation5], 32, 32, 2
        $region36: #{_lambda_.6} parent=11 // pred_fallthru
          _
        // Predicated region
        $region37: #{_lambda_.6} parent=11 // pred_check
          %p312 = pneg %p191
        $region38: #{_lambda_.6} parent=11 // pred_check_branch
          %314 = sbr.rel (%p312) target = $region40
        $region39: #{_lambda_.6} parent=11 // pred_region
          _
        $region40: #{_lambda_.6} parent=11 // pred_fallthru
          _
        // Predicated region
        $region41: #{_lambda_.6} parent=11 // pred_check
          %p315 = pneg %p212
        $region42: #{_lambda_.6} parent=11 // pred_check_branch
          %317 = sbr.rel (%p315) target = $region44
        $region43: #{_lambda_.6} parent=11 // pred_region
          %319 = vsyncadd [#allocation5], 0
          %s321 = sshll.u32 %s8, 4
          %s322 = int_to_ptr.hbm [resolvable:$true] %s321
          %s323 = sshll.u32 [#allocation6], 4
          %s324 = int_to_ptr.vmem [resolvable:$true] %s323
          %326 = dma.hbm_to_vmem [thread:$0]  %s322, 32, %s324, [#allocation5]
        $region44: #{_lambda_.6} parent=11 // pred_fallthru
          _
        // Predicated region
        $region45: #{_lambda_.6} parent=11 // pred_check
          %p327 = pneg %p233
        $region46: #{_lambda_.6} parent=11 // pred_check_branch
          %329 = sbr.rel (%p327) target = $region48
        $region47: #{_lambda_.6} parent=11 // pred_region
          _
        $region48: #{_lambda_.6} parent=11 // pred_fallthru
          _
      $region12: #{_lambda_.6} parent=5 // pred_fallthru
        _
      %p330 = scmp.lt.s32.totalorder %s18, 2
      // Predicated region
      $region49: #{_lambda_.6} parent=5 // pred_check
        %p331 = pneg %p330
      $region50: #{_lambda_.6} parent=5 // pred_check_branch
        %333 = sbr.rel (%p331) target = $region52
      $region51: #{_lambda_.6} parent=5 // pred_region
        // Predicated region
        $region53: #{_lambda_.6} parent=51 // pred_check
          %p334 = pneg %p38
        $region54: #{_lambda_.6} parent=51 // pred_check_branch
          %336 = sbr.rel (%p334) target = $region56
        $region55: #{_lambda_.6} parent=51 // pred_region
          %p337 = scmp.lt.s32.totalorder %s18, 1
          %s338 = scalar_select %p337, %s18, 1
          %s339 = smul.addr %s338, 8
          %s340 = smul.addr %s339, 8
          %s341 = scalar_lea.vmem %s0, %s340
        $region56: #{_lambda_.6} parent=51 // pred_fallthru
          _
      $region52: #{_lambda_.6} parent=5 // pred_fallthru
        _
      %p342 = scmp.le.s32.totalorder 1, %s18
      %p343 = scmp.lt.s32.totalorder %s18, 3
      %p344 = pnand %p342, %p343
      %p345 = pneg %p344
      // Predicated region
      $region57: #{_lambda_.6} parent=5 // pred_check
        _
      $region58: #{_lambda_.6} parent=5 // pred_check_branch
        %347 = sbr.rel (%p344) target = $region60
      $region59: #{_lambda_.6} parent=5 // pred_region
        %s348 = ssub.s32 %s18, 1
        // Predicated region
        $region61: #{_lambda_.6} parent=59 // pred_check
          %p349 = pneg %p86
        $region62: #{_lambda_.6} parent=59 // pred_check_branch
          %351 = sbr.rel (%p349) target = $region64
        $region63: #{_lambda_.6} parent=59 // pred_region
          %353 = dma.done [#allocation3], 64
        $region64: #{_lambda_.6} parent=59 // pred_fallthru
          _
        // Predicated region
        $region65: #{_lambda_.6} parent=59 // pred_check
          %p354 = pneg %p170
        $region66: #{_lambda_.6} parent=59 // pred_check_branch
          %356 = sbr.rel (%p354) target = $region68
        $region67: #{_lambda_.6} parent=59 // pred_region
          %358 = dma.done [#allocation5], 288
        $region68: #{_lambda_.6} parent=59 // pred_fallthru
          _
        // Predicated region
        $region69: #{_lambda_.6} parent=59 // pred_check
          %p359 = pneg %p212
        $region70: #{_lambda_.6} parent=59 // pred_check_branch
          %361 = sbr.rel (%p359) target = $region72
        $region71: #{_lambda_.6} parent=59 // pred_region
          %363 = dma.done [#allocation5], 32
        $region72: #{_lambda_.6} parent=59 // pred_fallthru
          _
        %p364 = scmp.lt.s32.totalorder %s23, 1
        %s365 = scalar_select %p364, %s23, 1
        %s366 = smul.addr %s365, 8
        %s367 = smul.addr %s366, 8
        %s368 = scalar_lea.vmem %s0, %s367
        %p369 = pneg %p44
        %p370 = pneg %p41
        %p371 = pneg %p65
        %p372 = pneg %p62
        %p373 = pneg %p86
        %p374 = pneg %p83
        %p375 = pneg %p107
        %p376 = pneg %p104
        %p377 = pneg %p128
        %p378 = pneg %p125
        %p379 = pneg %p149
        %p380 = pneg %p146
        %p381 = pneg %p170
        %p382 = pneg %p167
        %p383 = pneg %p191
        %p384 = pneg %p188
        %p385 = pneg %p212
        %p386 = pneg %p209
        %p387 = pneg %p233
        %p388 = pneg %p230
        %p389 = pneg %p259
        %p390 = pneg %p256
        %p391 = scmp.lt.s32.totalorder %s23, 1
        %s392 = scalar_select %p391, %s23, 1
        %s393 = smul.addr %s392, 8
        %s394 = smul.addr %s393, 8
        %s395 = scalar_lea.vmem %s10, %s394
        %p396 = scmp.lt.s32.totalorder %s23, 1
        %s397 = scalar_select %p396, %s23, 1
        %s398 = smul.addr %s397, 8
        %s399 = smul.addr %s398, 8
        %s400 = scalar_lea.vmem %s0, %s399
        %p401 = scmp.lt.s32.totalorder %s23, 1
        %s402 = scalar_select %p401, %s23, 1
        %s403 = smul.addr %s402, 8
        %s404 = smul.addr %s403, 8
        %s405 = scalar_lea.vmem %s10, %s404
        %v407 = vld [vmem:[%s400] sm:$0xff]
        %v408 = vld [vmem:[%s400 + $0x8] sm:$0xff]
        %v409 = vld [vmem:[%s400 + $0x10] sm:$0xff]
        %v410 = vld [vmem:[%s400 + $0x18] sm:$0xff]
        %v411 = vld [vmem:[%s400 + $0x20] sm:$0xff]
        %v412 = vld [vmem:[%s400 + $0x28] sm:$0xff]
        %v413 = vld [vmem:[%s400 + $0x30] sm:$0xff]
        %v414 = vld [vmem:[%s400 + $0x38] sm:$0xff]
        %v415 = vmul.f32 %v407, 0.5
        %v416 = vmul.f32 %v408, 0.5
        %v417 = vmul.f32 %v409, 0.5
        %v418 = vmul.f32 %v410, 0.5
        %v419 = vmul.f32 %v411, 0.5
        %v420 = vmul.f32 %v412, 0.5
        %v421 = vmul.f32 %v413, 0.5
        %v422 = vmul.f32 %v414, 0.5
        %v423 = vmul.f32 %v407, 0.70710677
        %v424 = vmul.f32 %v408, 0.70710677
        %v425 = vmul.f32 %v409, 0.70710677
        %v426 = vmul.f32 %v410, 0.70710677
        %v427 = vmul.f32 %v411, 0.70710677
        %v428 = vmul.f32 %v412, 0.70710677
        %v429 = vmul.f32 %v413, 0.70710677
        %v430 = vmul.f32 %v414, 0.70710677
        %vm431 = vcmp.ge.f32.partialorder %v423, 0.0
        %vm432 = vcmp.ge.f32.partialorder %v424, 0.0
        %vm433 = vcmp.ge.f32.partialorder %v425, 0.0
        %vm434 = vcmp.ge.f32.partialorder %v426, 0.0
        %vm435 = vcmp.ge.f32.partialorder %v427, 0.0
        %vm436 = vcmp.ge.f32.partialorder %v428, 0.0
        %vm437 = vcmp.ge.f32.partialorder %v429, 0.0
        %vm438 = vcmp.ge.f32.partialorder %v430, 0.0
        %v439 = vsel %vm431, 1.0, -1.0
        %v440 = vsel %vm432, 1.0, -1.0
        %v441 = vsel %vm433, 1.0, -1.0
        %v442 = vsel %vm434, 1.0, -1.0
        %v443 = vsel %vm435, 1.0, -1.0
        %v444 = vsel %vm436, 1.0, -1.0
        %v445 = vsel %vm437, 1.0, -1.0
        %v446 = vsel %vm438, 1.0, -1.0
        %v447 = vand.u32 2147483647, %v423
        %v448 = vand.u32 2147483647, %v424
        %v449 = vand.u32 2147483647, %v425
        %v450 = vand.u32 2147483647, %v426
        %v451 = vand.u32 2147483647, %v427
        %v452 = vand.u32 2147483647, %v428
        %v453 = vand.u32 2147483647, %v429
        %v454 = vand.u32 2147483647, %v430
        %v455 = vmul.f32 %v447, 0.3275911
        %v456 = vmul.f32 %v448, 0.3275911
        %v457 = vmul.f32 %v449, 0.3275911
        %v458 = vmul.f32 %v450, 0.3275911
        %v459 = vmul.f32 %v451, 0.3275911
        %v460 = vmul.f32 %v452, 0.3275911
        %v461 = vmul.f32 %v453, 0.3275911
        %v462 = vmul.f32 %v454, 0.3275911
        %v463 = vadd.f32 %v455, 1.0
        %v464 = vadd.f32 %v456, 1.0
        %v465 = vadd.f32 %v457, 1.0
        %v466 = vadd.f32 %v458, 1.0
        %v467 = vadd.f32 %v459, 1.0
        %v468 = vadd.f32 %v460, 1.0
        %v469 = vadd.f32 %v461, 1.0
        %v470 = vadd.f32 %v462, 1.0
        %v471 = vrcp.pop %v463
        %v472 = vmul.f32 %v463, %v471
        %v473 = vsub.f32 1.0, %v472
        %v474 = vmul.f32 %v471, %v473
        %v475 = vadd.f32 %v471, %v474
        %vm476 = vweird.f32 %v463
        %vm477 = vweird.f32 %v471
        %vm478 = vmor %vm476, %vm477
        %v479 = vsel %vm478, %v471, %v475
        %v480 = vand.u32 2147483647, %v463
        %vm481 = vcmp.eq.f32.partialorder %v480, 8.507059e+37
        %v482 = vand.u32 %v463, 2147483648
        %v483 = vor.u32 1.1754944e-38, %v482
        %v484 = vsel %vm481, %v483, %v479
        %v485 = vmul.f32 1.0, %v484
        %v486 = vrcp.pop %v464
        %v487 = vmul.f32 %v464, %v486
        %v488 = vsub.f32 1.0, %v487
        %v489 = vmul.f32 %v486, %v488
        %v490 = vadd.f32 %v486, %v489
        %vm491 = vweird.f32 %v464
        %vm492 = vweird.f32 %v486
        %vm493 = vmor %vm491, %vm492
        %v494 = vsel %vm493, %v486, %v490
        %v495 = vand.u32 2147483647, %v464
        %vm496 = vcmp.eq.f32.partialorder %v495, 8.507059e+37
        %v497 = vand.u32 %v464, 2147483648
        %v498 = vor.u32 1.1754944e-38, %v497
        %v499 = vsel %vm496, %v498, %v494
        %v500 = vmul.f32 1.0, %v499
        %v501 = vrcp.pop %v465
        %v502 = vmul.f32 %v465, %v501
        %v503 = vsub.f32 1.0, %v502
        %v504 = vmul.f32 %v501, %v503
        %v505 = vadd.f32 %v501, %v504
        %vm506 = vweird.f32 %v465
        %vm507 = vweird.f32 %v501
        %vm508 = vmor %vm506, %vm507
        %v509 = vsel %vm508, %v501, %v505
        %v510 = vand.u32 2147483647, %v465
        %vm511 = vcmp.eq.f32.partialorder %v510, 8.507059e+37
        %v512 = vand.u32 %v465, 2147483648
        %v513 = vor.u32 1.1754944e-38, %v512
        %v514 = vsel %vm511, %v513, %v509
        %v515 = vmul.f32 1.0, %v514
        %v516 = vrcp.pop %v466
        %v517 = vmul.f32 %v466, %v516
        %v518 = vsub.f32 1.0, %v517
        %v519 = vmul.f32 %v516, %v518
        %v520 = vadd.f32 %v516, %v519
        %vm521 = vweird.f32 %v466
        %vm522 = vweird.f32 %v516
        %vm523 = vmor %vm521, %vm522
        %v524 = vsel %vm523, %v516, %v520
        %v525 = vand.u32 2147483647, %v466
        %vm526 = vcmp.eq.f32.partialorder %v525, 8.507059e+37
        %v527 = vand.u32 %v466, 2147483648
        %v528 = vor.u32 1.1754944e-38, %v527
        %v529 = vsel %vm526, %v528, %v524
        %v530 = vmul.f32 1.0, %v529
        %v531 = vrcp.pop %v467
        %v532 = vmul.f32 %v467, %v531
        %v533 = vsub.f32 1.0, %v532
        %v534 = vmul.f32 %v531, %v533
        %v535 = vadd.f32 %v531, %v534
        %vm536 = vweird.f32 %v467
        %vm537 = vweird.f32 %v531
        %vm538 = vmor %vm536, %vm537
        %v539 = vsel %vm538, %v531, %v535
        %v540 = vand.u32 2147483647, %v467
        %vm541 = vcmp.eq.f32.partialorder %v540, 8.507059e+37
        %v542 = vand.u32 %v467, 2147483648
        %v543 = vor.u32 1.1754944e-38, %v542
        %v544 = vsel %vm541, %v543, %v539
        %v545 = vmul.f32 1.0, %v544
        %v546 = vrcp.pop %v468
        %v547 = vmul.f32 %v468, %v546
        %v548 = vsub.f32 1.0, %v547
        %v549 = vmul.f32 %v546, %v548
        %v550 = vadd.f32 %v546, %v549
        %vm551 = vweird.f32 %v468
        %vm552 = vweird.f32 %v546
        %vm553 = vmor %vm551, %vm552
        %v554 = vsel %vm553, %v546, %v550
        %v555 = vand.u32 2147483647, %v468
        %vm556 = vcmp.eq.f32.partialorder %v555, 8.507059e+37
        %v557 = vand.u32 %v468, 2147483648
        %v558 = vor.u32 1.1754944e-38, %v557
        %v559 = vsel %vm556, %v558, %v554
        %v560 = vmul.f32 1.0, %v559
        %v561 = vrcp.pop %v469
        %v562 = vmul.f32 %v469, %v561
        %v563 = vsub.f32 1.0, %v562
        %v564 = vmul.f32 %v561, %v563
        %v565 = vadd.f32 %v561, %v564
        %vm566 = vweird.f32 %v469
        %vm567 = vweird.f32 %v561
        %vm568 = vmor %vm566, %vm567
        %v569 = vsel %vm568, %v561, %v565
        %v570 = vand.u32 2147483647, %v469
        %vm571 = vcmp.eq.f32.partialorder %v570, 8.507059e+37
        %v572 = vand.u32 %v469, 2147483648
        %v573 = vor.u32 1.1754944e-38, %v572
        %v574 = vsel %vm571, %v573, %v569
        %v575 = vmul.f32 1.0, %v574
        %v576 = vrcp.pop %v470
        %v577 = vmul.f32 %v470, %v576
        %v578 = vsub.f32 1.0, %v577
        %v579 = vmul.f32 %v576, %v578
        %v580 = vadd.f32 %v576, %v579
        %vm581 = vweird.f32 %v470
        %vm582 = vweird.f32 %v576
        %vm583 = vmor %vm581, %vm582
        %v584 = vsel %vm583, %v576, %v580
        %v585 = vand.u32 2147483647, %v470
        %vm586 = vcmp.eq.f32.partialorder %v585, 8.507059e+37
        %v587 = vand.u32 %v470, 2147483648
        %v588 = vor.u32 1.1754944e-38, %v587
        %v589 = vsel %vm586, %v588, %v584
        %v590 = vmul.f32 1.0, %v589
        %v591 = vmul.f32 %v485, 1.0614054
        %v592 = vmul.f32 %v500, 1.0614054
        %v593 = vmul.f32 %v515, 1.0614054
        %v594 = vmul.f32 %v530, 1.0614054
        %v595 = vmul.f32 %v545, 1.0614054
        %v596 = vmul.f32 %v560, 1.0614054
        %v597 = vmul.f32 %v575, 1.0614054
        %v598 = vmul.f32 %v590, 1.0614054
        %v599 = vadd.f32 %v591, -1.4531521
        %v600 = vadd.f32 %v592, -1.4531521
        %v601 = vadd.f32 %v593, -1.4531521
        %v602 = vadd.f32 %v594, -1.4531521
        %v603 = vadd.f32 %v595, -1.4531521
        %v604 = vadd.f32 %v596, -1.4531521
        %v605 = vadd.f32 %v597, -1.4531521
        %v606 = vadd.f32 %v598, -1.4531521
        %v607 = vmul.f32 %v599, %v485
        %v608 = vmul.f32 %v600, %v500
        %v609 = vmul.f32 %v601, %v515
        %v610 = vmul.f32 %v602, %v530
        %v611 = vmul.f32 %v603, %v545
        %v612 = vmul.f32 %v604, %v560
        %v613 = vmul.f32 %v605, %v575
        %v614 = vmul.f32 %v606, %v590
        %v615 = vadd.f32 %v607, 1.4214138
        %v616 = vadd.f32 %v608, 1.4214138
        %v617 = vadd.f32 %v609, 1.4214138
        %v618 = vadd.f32 %v610, 1.4214138
        %v619 = vadd.f32 %v611, 1.4214138
        %v620 = vadd.f32 %v612, 1.4214138
        %v621 = vadd.f32 %v613, 1.4214138
        %v622 = vadd.f32 %v614, 1.4214138
        %v623 = vmul.f32 %v615, %v485
        %v624 = vmul.f32 %v616, %v500
        %v625 = vmul.f32 %v617, %v515
        %v626 = vmul.f32 %v618, %v530
        %v627 = vmul.f32 %v619, %v545
        %v628 = vmul.f32 %v620, %v560
        %v629 = vmul.f32 %v621, %v575
        %v630 = vmul.f32 %v622, %v590
        %v631 = vadd.f32 %v623, -0.28449672
        %v632 = vadd.f32 %v624, -0.28449672
        %v633 = vadd.f32 %v625, -0.28449672
        %v634 = vadd.f32 %v626, -0.28449672
        %v635 = vadd.f32 %v627, -0.28449672
        %v636 = vadd.f32 %v628, -0.28449672
        %v637 = vadd.f32 %v629, -0.28449672
        %v638 = vadd.f32 %v630, -0.28449672
        %v639 = vmul.f32 %v631, %v485
        %v640 = vmul.f32 %v632, %v500
        %v641 = vmul.f32 %v633, %v515
        %v642 = vmul.f32 %v634, %v530
        %v643 = vmul.f32 %v635, %v545
        %v644 = vmul.f32 %v636, %v560
        %v645 = vmul.f32 %v637, %v575
        %v646 = vmul.f32 %v638, %v590
        %v647 = vadd.f32 %v639, 0.2548296
        %v648 = vadd.f32 %v640, 0.2548296
        %v649 = vadd.f32 %v641, 0.2548296
        %v650 = vadd.f32 %v642, 0.2548296
        %v651 = vadd.f32 %v643, 0.2548296
        %v652 = vadd.f32 %v644, 0.2548296
        %v653 = vadd.f32 %v645, 0.2548296
        %v654 = vadd.f32 %v646, 0.2548296
        %v655 = vmul.f32 %v647, %v485
        %v656 = vmul.f32 %v648, %v500
        %v657 = vmul.f32 %v649, %v515
        %v658 = vmul.f32 %v650, %v530
        %v659 = vmul.f32 %v651, %v545
        %v660 = vmul.f32 %v652, %v560
        %v661 = vmul.f32 %v653, %v575
        %v662 = vmul.f32 %v654, %v590
        %v663 = vsub.f32 0.0, %v447
        %v664 = vsub.f32 0.0, %v448
        %v665 = vsub.f32 0.0, %v449
        %v666 = vsub.f32 0.0, %v450
        %v667 = vsub.f32 0.0, %v451
        %v668 = vsub.f32 0.0, %v452
        %v669 = vsub.f32 0.0, %v453
        %v670 = vsub.f32 0.0, %v454
        %v671 = vmul.f32 %v663, %v447
        %v672 = vmul.f32 %v664, %v448
        %v673 = vmul.f32 %v665, %v449
        %v674 = vmul.f32 %v666, %v450
        %v675 = vmul.f32 %v667, %v451
        %v676 = vmul.f32 %v668, %v452
        %v677 = vmul.f32 %v669, %v453
        %v678 = vmul.f32 %v670, %v454
        %v679 = vmul.f32 %v671, 1.442695
        %v680 = vpow.pop %v679
        %v681 = vmul.f32 %v672, 1.442695
        %v682 = vpow.pop %v681
        %v683 = vmul.f32 %v673, 1.442695
        %v684 = vpow.pop %v683
        %v685 = vmul.f32 %v674, 1.442695
        %v686 = vpow.pop %v685
        %v687 = vmul.f32 %v675, 1.442695
        %v688 = vpow.pop %v687
        %v689 = vmul.f32 %v676, 1.442695
        %v690 = vpow.pop %v689
        %v691 = vmul.f32 %v677, 1.442695
        %v692 = vpow.pop %v691
        %v693 = vmul.f32 %v678, 1.442695
        %v694 = vpow.pop %v693
        %v695 = vmul.f32 %v655, %v680
        %v696 = vmul.f32 %v656, %v682
        %v697 = vmul.f32 %v657, %v684
        %v698 = vmul.f32 %v658, %v686
        %v699 = vmul.f32 %v659, %v688
        %v700 = vmul.f32 %v660, %v690
        %v701 = vmul.f32 %v661, %v692
        %v702 = vmul.f32 %v662, %v694
        %v703 = vsub.f32 1.0, %v695
        %v704 = vsub.f32 1.0, %v696
        %v705 = vsub.f32 1.0, %v697
        %v706 = vsub.f32 1.0, %v698
        %v707 = vsub.f32 1.0, %v699
        %v708 = vsub.f32 1.0, %v700
        %v709 = vsub.f32 1.0, %v701
        %v710 = vsub.f32 1.0, %v702
        %v711 = vmul.f32 %v439, %v703
        %v712 = vmul.f32 %v440, %v704
        %v713 = vmul.f32 %v441, %v705
        %v714 = vmul.f32 %v442, %v706
        %v715 = vmul.f32 %v443, %v707
        %v716 = vmul.f32 %v444, %v708
        %v717 = vmul.f32 %v445, %v709
        %v718 = vmul.f32 %v446, %v710
        %v719 = vadd.f32 %v711, 1.0
        %v720 = vadd.f32 %v712, 1.0
        %v721 = vadd.f32 %v713, 1.0
        %v722 = vadd.f32 %v714, 1.0
        %v723 = vadd.f32 %v715, 1.0
        %v724 = vadd.f32 %v716, 1.0
        %v725 = vadd.f32 %v717, 1.0
        %v726 = vadd.f32 %v718, 1.0
        %v727 = vmul.f32 %v415, %v719
        %v728 = vmul.f32 %v416, %v720
        %v729 = vmul.f32 %v417, %v721
        %v730 = vmul.f32 %v418, %v722
        %v731 = vmul.f32 %v419, %v723
        %v732 = vmul.f32 %v420, %v724
        %v733 = vmul.f32 %v421, %v725
        %v734 = vmul.f32 %v422, %v726
        %v735 = vld [vmem:[#allocation2] sm:$0xf]
        %v736 = vpack.c.bf16 %v728, %v727
        %v737 = vpack.c.bf16 %v730, %v729
        %v738 = vpack.c.bf16 %v732, %v731
        %v739 = vpack.c.bf16 %v734, %v733
        %v740 = vld [vmem:[%s3] sm:$0x1]
        %v742 = vperm.slane %v740, 0
        %vm744 = vcmask 64512
        %v746 = vsel %vm744, %v736, 0
        %v749 = vsel %vm744, %v737, 0
        %v752 = vsel %vm744, %v738, 0
        %v755 = vsel %vm744, %v739, 0
        %vm757 = vcmask 1043456
        %v759 = vsel %vm757, %v735, 0
        %761 = vmatpush.bf16.msra.mxu0 0
        %762 = vmatpush.bf16.msra.mxu0 0
        %763 = vmatpush.bf16.msra.mxu0 0
        %764 = vmatpush.bf16.msra.mxu0 0
        %765 = vmatpush.bf16.msra.mxu0 0
        %766 = vmatpush.bf16.msra.mxu0 0
        %767 = vmatpush.bf16.msra.mxu0 0
        %768 = vmatpush.bf16.msra.mxu0 %v759
        %769 = vmatmul.bf16.gmra.mxu0 %v746
        %v770 = vpop.f32.mrf.mxu0
        %v771 = vadd.f32 %v742, %v770
        %v772 = vpop.f32.mrf.mxu0
        %v773 = vadd.f32 %v742, %v772
        %774 = vmatmul.bf16.gmra.mxu0 %v749
        %v775 = vpop.f32.mrf.mxu0
        %v776 = vadd.f32 %v742, %v775
        %v777 = vpop.f32.mrf.mxu0
        %v778 = vadd.f32 %v742, %v777
        %779 = vmatmul.bf16.gmra.mxu0 %v752
        %v780 = vpop.f32.mrf.mxu0
        %v781 = vadd.f32 %v742, %v780
        %v782 = vpop.f32.mrf.mxu0
        %v783 = vadd.f32 %v742, %v782
        %784 = vmatmul.bf16.gmra.mxu0 %v755
        %v785 = vpop.f32.mrf.mxu0
        %v786 = vadd.f32 %v742, %v785
        %v787 = vpop.f32.mrf.mxu0
        %v788 = vadd.f32 %v742, %v787
        %789 = vdwg.mxu0
        %v790 = vmul.f32 %v771, 0.5
        %v791 = vmul.f32 %v773, 0.5
        %v792 = vmul.f32 %v776, 0.5
        %v793 = vmul.f32 %v778, 0.5
        %v794 = vmul.f32 %v781, 0.5
        %v795 = vmul.f32 %v783, 0.5
        %v796 = vmul.f32 %v786, 0.5
        %v797 = vmul.f32 %v788, 0.5
        %v798 = vmul.f32 %v771, 0.70710677
        %v799 = vmul.f32 %v773, 0.70710677
        %v800 = vmul.f32 %v776, 0.70710677
        %v801 = vmul.f32 %v778, 0.70710677
        %v802 = vmul.f32 %v781, 0.70710677
        %v803 = vmul.f32 %v783, 0.70710677
        %v804 = vmul.f32 %v786, 0.70710677
        %v805 = vmul.f32 %v788, 0.70710677
        %vm806 = vcmp.ge.f32.partialorder %v798, 0.0
        %vm807 = vcmp.ge.f32.partialorder %v799, 0.0
        %vm808 = vcmp.ge.f32.partialorder %v800, 0.0
        %vm809 = vcmp.ge.f32.partialorder %v801, 0.0
        %vm810 = vcmp.ge.f32.partialorder %v802, 0.0
        %vm811 = vcmp.ge.f32.partialorder %v803, 0.0
        %vm812 = vcmp.ge.f32.partialorder %v804, 0.0
        %vm813 = vcmp.ge.f32.partialorder %v805, 0.0
        %v814 = vsel %vm806, 1.0, -1.0
        %v815 = vsel %vm807, 1.0, -1.0
        %v816 = vsel %vm808, 1.0, -1.0
        %v817 = vsel %vm809, 1.0, -1.0
        %v818 = vsel %vm810, 1.0, -1.0
        %v819 = vsel %vm811, 1.0, -1.0
        %v820 = vsel %vm812, 1.0, -1.0
        %v821 = vsel %vm813, 1.0, -1.0
        %v822 = vand.u32 2147483647, %v798
        %v823 = vand.u32 2147483647, %v799
        %v824 = vand.u32 2147483647, %v800
        %v825 = vand.u32 2147483647, %v801
        %v826 = vand.u32 2147483647, %v802
        %v827 = vand.u32 2147483647, %v803
        %v828 = vand.u32 2147483647, %v804
        %v829 = vand.u32 2147483647, %v805
        %v830 = vmul.f32 %v822, 0.3275911
        %v831 = vmul.f32 %v823, 0.3275911
        %v832 = vmul.f32 %v824, 0.3275911
        %v833 = vmul.f32 %v825, 0.3275911
        %v834 = vmul.f32 %v826, 0.3275911
        %v835 = vmul.f32 %v827, 0.3275911
        %v836 = vmul.f32 %v828, 0.3275911
        %v837 = vmul.f32 %v829, 0.3275911
        %v838 = vadd.f32 %v830, 1.0
        %v839 = vadd.f32 %v831, 1.0
        %v840 = vadd.f32 %v832, 1.0
        %v841 = vadd.f32 %v833, 1.0
        %v842 = vadd.f32 %v834, 1.0
        %v843 = vadd.f32 %v835, 1.0
        %v844 = vadd.f32 %v836, 1.0
        %v845 = vadd.f32 %v837, 1.0
        %v846 = vrcp.pop %v838
        %v847 = vmul.f32 %v838, %v846
        %v848 = vsub.f32 1.0, %v847
        %v849 = vmul.f32 %v846, %v848
        %v850 = vadd.f32 %v846, %v849
        %vm851 = vweird.f32 %v838
        %vm852 = vweird.f32 %v846
        %vm853 = vmor %vm851, %vm852
        %v854 = vsel %vm853, %v846, %v850
        %v855 = vand.u32 2147483647, %v838
        %vm856 = vcmp.eq.f32.partialorder %v855, 8.507059e+37
        %v857 = vand.u32 %v838, 2147483648
        %v858 = vor.u32 1.1754944e-38, %v857
        %v859 = vsel %vm856, %v858, %v854
        %v860 = vmul.f32 1.0, %v859
        %v861 = vrcp.pop %v839
        %v862 = vmul.f32 %v839, %v861
        %v863 = vsub.f32 1.0, %v862
        %v864 = vmul.f32 %v861, %v863
        %v865 = vadd.f32 %v861, %v864
        %vm866 = vweird.f32 %v839
        %vm867 = vweird.f32 %v861
        %vm868 = vmor %vm866, %vm867
        %v869 = vsel %vm868, %v861, %v865
        %v870 = vand.u32 2147483647, %v839
        %vm871 = vcmp.eq.f32.partialorder %v870, 8.507059e+37
        %v872 = vand.u32 %v839, 2147483648
        %v873 = vor.u32 1.1754944e-38, %v872
        %v874 = vsel %vm871, %v873, %v869
        %v875 = vmul.f32 1.0, %v874
        %v876 = vrcp.pop %v840
        %v877 = vmul.f32 %v840, %v876
        %v878 = vsub.f32 1.0, %v877
        %v879 = vmul.f32 %v876, %v878
        %v880 = vadd.f32 %v876, %v879
        %vm881 = vweird.f32 %v840
        %vm882 = vweird.f32 %v876
        %vm883 = vmor %vm881, %vm882
        %v884 = vsel %vm883, %v876, %v880
        %v885 = vand.u32 2147483647, %v840
        %vm886 = vcmp.eq.f32.partialorder %v885, 8.507059e+37
        %v887 = vand.u32 %v840, 2147483648
        %v888 = vor.u32 1.1754944e-38, %v887
        %v889 = vsel %vm886, %v888, %v884
        %v890 = vmul.f32 1.0, %v889
        %v891 = vrcp.pop %v841
        %v892 = vmul.f32 %v841, %v891
        %v893 = vsub.f32 1.0, %v892
        %v894 = vmul.f32 %v891, %v893
        %v895 = vadd.f32 %v891, %v894
        %vm896 = vweird.f32 %v841
        %vm897 = vweird.f32 %v891
        %vm898 = vmor %vm896, %vm897
        %v899 = vsel %vm898, %v891, %v895
        %v900 = vand.u32 2147483647, %v841
        %vm901 = vcmp.eq.f32.partialorder %v900, 8.507059e+37
        %v902 = vand.u32 %v841, 2147483648
        %v903 = vor.u32 1.1754944e-38, %v902
        %v904 = vsel %vm901, %v903, %v899
        %v905 = vmul.f32 1.0, %v904
        %v906 = vrcp.pop %v842
        %v907 = vmul.f32 %v842, %v906
        %v908 = vsub.f32 1.0, %v907
        %v909 = vmul.f32 %v906, %v908
        %v910 = vadd.f32 %v906, %v909
        %vm911 = vweird.f32 %v842
        %vm912 = vweird.f32 %v906
        %vm913 = vmor %vm911, %vm912
        %v914 = vsel %vm913, %v906, %v910
        %v915 = vand.u32 2147483647, %v842
        %vm916 = vcmp.eq.f32.partialorder %v915, 8.507059e+37
        %v917 = vand.u32 %v842, 2147483648
        %v918 = vor.u32 1.1754944e-38, %v917
        %v919 = vsel %vm916, %v918, %v914
        %v920 = vmul.f32 1.0, %v919
        %v921 = vrcp.pop %v843
        %v922 = vmul.f32 %v843, %v921
        %v923 = vsub.f32 1.0, %v922
        %v924 = vmul.f32 %v921, %v923
        %v925 = vadd.f32 %v921, %v924
        %vm926 = vweird.f32 %v843
        %vm927 = vweird.f32 %v921
        %vm928 = vmor %vm926, %vm927
        %v929 = vsel %vm928, %v921, %v925
        %v930 = vand.u32 2147483647, %v843
        %vm931 = vcmp.eq.f32.partialorder %v930, 8.507059e+37
        %v932 = vand.u32 %v843, 2147483648
        %v933 = vor.u32 1.1754944e-38, %v932
        %v934 = vsel %vm931, %v933, %v929
        %v935 = vmul.f32 1.0, %v934
        %v936 = vrcp.pop %v844
        %v937 = vmul.f32 %v844, %v936
        %v938 = vsub.f32 1.0, %v937
        %v939 = vmul.f32 %v936, %v938
        %v940 = vadd.f32 %v936, %v939
        %vm941 = vweird.f32 %v844
        %vm942 = vweird.f32 %v936
        %vm943 = vmor %vm941, %vm942
        %v944 = vsel %vm943, %v936, %v940
        %v945 = vand.u32 2147483647, %v844
        %vm946 = vcmp.eq.f32.partialorder %v945, 8.507059e+37
        %v947 = vand.u32 %v844, 2147483648
        %v948 = vor.u32 1.1754944e-38, %v947
        %v949 = vsel %vm946, %v948, %v944
        %v950 = vmul.f32 1.0, %v949
        %v951 = vrcp.pop %v845
        %v952 = vmul.f32 %v845, %v951
        %v953 = vsub.f32 1.0, %v952
        %v954 = vmul.f32 %v951, %v953
        %v955 = vadd.f32 %v951, %v954
        %vm956 = vweird.f32 %v845
        %vm957 = vweird.f32 %v951
        %vm958 = vmor %vm956, %vm957
        %v959 = vsel %vm958, %v951, %v955
        %v960 = vand.u32 2147483647, %v845
        %vm961 = vcmp.eq.f32.partialorder %v960, 8.507059e+37
        %v962 = vand.u32 %v845, 2147483648
        %v963 = vor.u32 1.1754944e-38, %v962
        %v964 = vsel %vm961, %v963, %v959
        %v965 = vmul.f32 1.0, %v964
        %v966 = vmul.f32 %v860, 1.0614054
        %v967 = vmul.f32 %v875, 1.0614054
        %v968 = vmul.f32 %v890, 1.0614054
        %v969 = vmul.f32 %v905, 1.0614054
        %v970 = vmul.f32 %v920, 1.0614054
        %v971 = vmul.f32 %v935, 1.0614054
        %v972 = vmul.f32 %v950, 1.0614054
        %v973 = vmul.f32 %v965, 1.0614054
        %v974 = vadd.f32 %v966, -1.4531521
        %v975 = vadd.f32 %v967, -1.4531521
        %v976 = vadd.f32 %v968, -1.4531521
        %v977 = vadd.f32 %v969, -1.4531521
        %v978 = vadd.f32 %v970, -1.4531521
        %v979 = vadd.f32 %v971, -1.4531521
        %v980 = vadd.f32 %v972, -1.4531521
        %v981 = vadd.f32 %v973, -1.4531521
        %v982 = vmul.f32 %v974, %v860
        %v983 = vmul.f32 %v975, %v875
        %v984 = vmul.f32 %v976, %v890
        %v985 = vmul.f32 %v977, %v905
        %v986 = vmul.f32 %v978, %v920
        %v987 = vmul.f32 %v979, %v935
        %v988 = vmul.f32 %v980, %v950
        %v989 = vmul.f32 %v981, %v965
        %v990 = vadd.f32 %v982, 1.4214138
        %v991 = vadd.f32 %v983, 1.4214138
        %v992 = vadd.f32 %v984, 1.4214138
        %v993 = vadd.f32 %v985, 1.4214138
        %v994 = vadd.f32 %v986, 1.4214138
        %v995 = vadd.f32 %v987, 1.4214138
        %v996 = vadd.f32 %v988, 1.4214138
        %v997 = vadd.f32 %v989, 1.4214138
        %v998 = vmul.f32 %v990, %v860
        %v999 = vmul.f32 %v991, %v875
        %v1000 = vmul.f32 %v992, %v890
        %v1001 = vmul.f32 %v993, %v905
        %v1002 = vmul.f32 %v994, %v920
        %v1003 = vmul.f32 %v995, %v935
        %v1004 = vmul.f32 %v996, %v950
        %v1005 = vmul.f32 %v997, %v965
        %v1006 = vadd.f32 %v998, -0.28449672
        %v1007 = vadd.f32 %v999, -0.28449672
        %v1008 = vadd.f32 %v1000, -0.28449672
        %v1009 = vadd.f32 %v1001, -0.28449672
        %v1010 = vadd.f32 %v1002, -0.28449672
        %v1011 = vadd.f32 %v1003, -0.28449672
        %v1012 = vadd.f32 %v1004, -0.28449672
        %v1013 = vadd.f32 %v1005, -0.28449672
        %v1014 = vmul.f32 %v1006, %v860
        %v1015 = vmul.f32 %v1007, %v875
        %v1016 = vmul.f32 %v1008, %v890
        %v1017 = vmul.f32 %v1009, %v905
        %v1018 = vmul.f32 %v1010, %v920
        %v1019 = vmul.f32 %v1011, %v935
        %v1020 = vmul.f32 %v1012, %v950
        %v1021 = vmul.f32 %v1013, %v965
        %v1022 = vadd.f32 %v1014, 0.2548296
        %v1023 = vadd.f32 %v1015, 0.2548296
        %v1024 = vadd.f32 %v1016, 0.2548296
        %v1025 = vadd.f32 %v1017, 0.2548296
        %v1026 = vadd.f32 %v1018, 0.2548296
        %v1027 = vadd.f32 %v1019, 0.2548296
        %v1028 = vadd.f32 %v1020, 0.2548296
        %v1029 = vadd.f32 %v1021, 0.2548296
        %v1030 = vmul.f32 %v1022, %v860
        %v1031 = vmul.f32 %v1023, %v875
        %v1032 = vmul.f32 %v1024, %v890
        %v1033 = vmul.f32 %v1025, %v905
        %v1034 = vmul.f32 %v1026, %v920
        %v1035 = vmul.f32 %v1027, %v935
        %v1036 = vmul.f32 %v1028, %v950
        %v1037 = vmul.f32 %v1029, %v965
        %v1038 = vsub.f32 0.0, %v822
        %v1039 = vsub.f32 0.0, %v823
        %v1040 = vsub.f32 0.0, %v824
        %v1041 = vsub.f32 0.0, %v825
        %v1042 = vsub.f32 0.0, %v826
        %v1043 = vsub.f32 0.0, %v827
        %v1044 = vsub.f32 0.0, %v828
        %v1045 = vsub.f32 0.0, %v829
        %v1046 = vmul.f32 %v1038, %v822
        %v1047 = vmul.f32 %v1039, %v823
        %v1048 = vmul.f32 %v1040, %v824
        %v1049 = vmul.f32 %v1041, %v825
        %v1050 = vmul.f32 %v1042, %v826
        %v1051 = vmul.f32 %v1043, %v827
        %v1052 = vmul.f32 %v1044, %v828
        %v1053 = vmul.f32 %v1045, %v829
        %v1054 = vmul.f32 %v1046, 1.442695
        %v1055 = vpow.pop %v1054
        %v1056 = vmul.f32 %v1047, 1.442695
        %v1057 = vpow.pop %v1056
        %v1058 = vmul.f32 %v1048, 1.442695
        %v1059 = vpow.pop %v1058
        %v1060 = vmul.f32 %v1049, 1.442695
        %v1061 = vpow.pop %v1060
        %v1062 = vmul.f32 %v1050, 1.442695
        %v1063 = vpow.pop %v1062
        %v1064 = vmul.f32 %v1051, 1.442695
        %v1065 = vpow.pop %v1064
        %v1066 = vmul.f32 %v1052, 1.442695
        %v1067 = vpow.pop %v1066
        %v1068 = vmul.f32 %v1053, 1.442695
        %v1069 = vpow.pop %v1068
        %v1070 = vmul.f32 %v1030, %v1055
        %v1071 = vmul.f32 %v1031, %v1057
        %v1072 = vmul.f32 %v1032, %v1059
        %v1073 = vmul.f32 %v1033, %v1061
        %v1074 = vmul.f32 %v1034, %v1063
        %v1075 = vmul.f32 %v1035, %v1065
        %v1076 = vmul.f32 %v1036, %v1067
        %v1077 = vmul.f32 %v1037, %v1069
        %v1078 = vsub.f32 1.0, %v1070
        %v1079 = vsub.f32 1.0, %v1071
        %v1080 = vsub.f32 1.0, %v1072
        %v1081 = vsub.f32 1.0, %v1073
        %v1082 = vsub.f32 1.0, %v1074
        %v1083 = vsub.f32 1.0, %v1075
        %v1084 = vsub.f32 1.0, %v1076
        %v1085 = vsub.f32 1.0, %v1077
        %v1086 = vmul.f32 %v814, %v1078
        %v1087 = vmul.f32 %v815, %v1079
        %v1088 = vmul.f32 %v816, %v1080
        %v1089 = vmul.f32 %v817, %v1081
        %v1090 = vmul.f32 %v818, %v1082
        %v1091 = vmul.f32 %v819, %v1083
        %v1092 = vmul.f32 %v820, %v1084
        %v1093 = vmul.f32 %v821, %v1085
        %v1094 = vadd.f32 %v1086, 1.0
        %v1095 = vadd.f32 %v1087, 1.0
        %v1096 = vadd.f32 %v1088, 1.0
        %v1097 = vadd.f32 %v1089, 1.0
        %v1098 = vadd.f32 %v1090, 1.0
        %v1099 = vadd.f32 %v1091, 1.0
        %v1100 = vadd.f32 %v1092, 1.0
        %v1101 = vadd.f32 %v1093, 1.0
        %v1102 = vmul.f32 %v790, %v1094
        %v1103 = vmul.f32 %v791, %v1095
        %v1104 = vmul.f32 %v792, %v1096
        %v1105 = vmul.f32 %v793, %v1097
        %v1106 = vmul.f32 %v794, %v1098
        %v1107 = vmul.f32 %v795, %v1099
        %v1108 = vmul.f32 %v796, %v1100
        %v1109 = vmul.f32 %v797, %v1101
        %v1110 = vpack.c.bf16 %v1103, %v1102
        %v1111 = vpack.c.bf16 %v1105, %v1104
        %v1112 = vpack.c.bf16 %v1107, %v1106
        %v1113 = vpack.c.bf16 %v1109, %v1108
        %v1114 = vld [vmem:[%s1] sm:$0xf]
        %v1115 = vld [vmem:[%s1 + $0x4] sm:$0xf]
        %v1116 = vld [vmem:[%s1 + $0x8] sm:$0xf]
        %v1117 = vld [vmem:[%s1 + $0xc] sm:$0xf]
        %v1118 = vld [vmem:[%s1 + $0x10] sm:$0xf]
        %v1119 = vld [vmem:[%s1 + $0x14] sm:$0xf]
        %v1120 = vld [vmem:[%s1 + $0x18] sm:$0xf]
        %v1121 = vld [vmem:[%s1 + $0x1c] sm:$0xf]
        %v1130 = vunpack.c.l.b16 %v1114
        %v1131 = vunpack.c.l.b16 %v1115
        %v1132 = vunpack.c.l.b16 %v1116
        %v1133 = vunpack.c.l.b16 %v1117
        %v1134 = vunpack.c.l.b16 %v1118
        %v1135 = vunpack.c.l.b16 %v1119
        %v1136 = vunpack.c.l.b16 %v1120
        %v1137 = vunpack.c.l.b16 %v1121
        %v1138 = vpack.c.b16 %v1131, %v1130
        %v1139 = vpack.c.b16 %v1133, %v1132
        %v1140 = vpack.c.b16 %v1135, %v1134
        %v1141 = vpack.c.b16 %v1137, %v1136
        %vm1142 = vcmask 523264
        %v1144 = vsel %vm1142, %v1138, 0
        %v1147 = vsel %vm1142, %v1139, 0
        %v1150 = vsel %vm1142, %v1140, 0
        %v1153 = vsel %vm1142, %v1141, 0
        %1155 = vmatpush.bf16.msra.mxu0 0
        %1156 = vmatpush.bf16.msra.mxu0 0
        %1157 = vmatpush.bf16.msra.mxu0 0
        %1158 = vmatpush.bf16.msra.mxu0 0
        %1159 = vmatpush.bf16.msra.mxu0 %v1113
        %1160 = vmatpush.bf16.msra.mxu0 %v1112
        %1161 = vmatpush.bf16.msra.mxu0 %v1111
        %1162 = vmatpush.bf16.msra.mxu0 %v1110
        %1163 = vmatmul.bf16.gmra.mxu0 %v1144
        %v1164 = vpop.f32.mrf.mxu0
        %v1165 = vadd.f32 0.0, %v1164
        %v1166 = vpop.f32.mrf.mxu0
        %v1167 = vadd.f32 0.0, %v1166
        %1168 = vmatmul.bf16.gmra.mxu0 %v1147
        %v1169 = vpop.f32.mrf.mxu0
        %v1170 = vadd.f32 0.0, %v1169
        %v1171 = vpop.f32.mrf.mxu0
        %v1172 = vadd.f32 0.0, %v1171
        %1173 = vmatmul.bf16.gmra.mxu0 %v1150
        %v1174 = vpop.f32.mrf.mxu0
        %v1175 = vadd.f32 0.0, %v1174
        %v1176 = vpop.f32.mrf.mxu0
        %v1177 = vadd.f32 0.0, %v1176
        %1178 = vmatmul.bf16.gmra.mxu0 %v1153
        %v1179 = vpop.f32.mrf.mxu0
        %v1180 = vadd.f32 0.0, %v1179
        %v1181 = vpop.f32.mrf.mxu0
        %v1182 = vadd.f32 0.0, %v1181
        %1183 = vdwg.mxu0
        %v1184 = vpack.c.bf16 %v1167, %v1165
        %v1185 = vpack.c.bf16 %v1172, %v1170
        %v1186 = vpack.c.bf16 %v1177, %v1175
        %v1187 = vpack.c.bf16 %v1182, %v1180
        %v1188 = vld [vmem:[%s4] sm:$0x3]
        %s1189 = scalar_lea.vmem %s1, 32
        %v1190 = vld [vmem:[%s1189] sm:$0xf]
        %v1191 = vld [vmem:[%s1189 + $0x4] sm:$0xf]
        %v1192 = vld [vmem:[%s1189 + $0x8] sm:$0xf]
        %v1193 = vld [vmem:[%s1189 + $0xc] sm:$0xf]
        %v1194 = vld [vmem:[%s1189 + $0x10] sm:$0xf]
        %v1195 = vld [vmem:[%s1189 + $0x14] sm:$0xf]
        %v1196 = vld [vmem:[%s1189 + $0x18] sm:$0xf]
        %v1197 = vld [vmem:[%s1189 + $0x1c] sm:$0xf]
        %v1206 = vunpack.c.l.b16 %v1190
        %v1207 = vunpack.c.l.b16 %v1191
        %v1208 = vunpack.c.l.b16 %v1192
        %v1209 = vunpack.c.l.b16 %v1193
        %v1210 = vunpack.c.l.b16 %v1194
        %v1211 = vunpack.c.l.b16 %v1195
        %v1212 = vunpack.c.l.b16 %v1196
        %v1213 = vunpack.c.l.b16 %v1197
        %v1214 = vpack.c.b16 %v1207, %v1206
        %v1215 = vpack.c.b16 %v1209, %v1208
        %v1216 = vpack.c.b16 %v1211, %v1210
        %v1217 = vpack.c.b16 %v1213, %v1212
        %v1219 = vsel %vm1142, %v1214, 0
        %v1222 = vsel %vm1142, %v1215, 0
        %v1225 = vsel %vm1142, %v1216, 0
        %v1228 = vsel %vm1142, %v1217, 0
        %1230 = vmatpush.bf16.msra.mxu0 0
        %1231 = vmatpush.bf16.msra.mxu0 0
        %1232 = vmatpush.bf16.msra.mxu0 0
        %1233 = vmatpush.bf16.msra.mxu0 0
        %1234 = vmatpush.bf16.msra.mxu0 %v1113
        %1235 = vmatpush.bf16.msra.mxu0 %v1112
        %1236 = vmatpush.bf16.msra.mxu0 %v1111
        %1237 = vmatpush.bf16.msra.mxu0 %v1110
        %1238 = vmatmul.bf16.gmra.mxu0 %v1219
        %v1239 = vpop.f32.mrf.mxu0
        %v1240 = vadd.f32 0.0, %v1239
        %v1241 = vpop.f32.mrf.mxu0
        %v1242 = vadd.f32 0.0, %v1241
        %1243 = vmatmul.bf16.gmra.mxu0 %v1222
        %v1244 = vpop.f32.mrf.mxu0
        %v1245 = vadd.f32 0.0, %v1244
        %v1246 = vpop.f32.mrf.mxu0
        %v1247 = vadd.f32 0.0, %v1246
        %1248 = vmatmul.bf16.gmra.mxu0 %v1225
        %v1249 = vpop.f32.mrf.mxu0
        %v1250 = vadd.f32 0.0, %v1249
        %v1251 = vpop.f32.mrf.mxu0
        %v1252 = vadd.f32 0.0, %v1251
        %1253 = vmatmul.bf16.gmra.mxu0 %v1228
        %v1254 = vpop.f32.mrf.mxu0
        %v1255 = vadd.f32 0.0, %v1254
        %v1256 = vpop.f32.mrf.mxu0
        %v1257 = vadd.f32 0.0, %v1256
        %1258 = vdwg.mxu0
        %v1259 = vpack.c.bf16 %v1242, %v1240
        %v1260 = vpack.c.bf16 %v1247, %v1245
        %v1261 = vpack.c.bf16 %v1252, %v1250
        %v1262 = vpack.c.bf16 %v1257, %v1255
        %s1263 = scalar_lea.vmem %s4, 2
        %v1264 = vld [vmem:[%s1263] sm:$0x3]
        %vm1265 = vcmask 31744
        %v1267 = vsel %vm1265, %v1259, 0
        %v1270 = vsel %vm1265, %v1260, 0
        %v1273 = vsel %vm1265, %v1261, 0
        %v1276 = vsel %vm1265, %v1262, 0
        %vm1278 = vcmask 1041408
        %v1280 = vsel %vm1278, %v1264, 0
        %1282 = vmatpush.bf16.msra.mxu0 0
        %1283 = vmatpush.bf16.msra.mxu0 0
        %1284 = vmatpush.bf16.msra.mxu0 0
        %1285 = vmatpush.bf16.msra.mxu0 0
        %1286 = vmatpush.bf16.msra.mxu0 0
        %1287 = vmatpush.bf16.msra.mxu0 0
        %1288 = vmatpush.bf16.msra.mxu0 0
        %1289 = vmatpush.bf16.msra.mxu0 %v1280
        %1290 = vmatmul.bf16.gmra.mxu0 %v1267
        %v1291 = vpop.f32.mrf.mxu0
        %v1292 = vadd.f32 0.0, %v1291
        %v1293 = vpop.f32.mrf.mxu0
        %v1294 = vadd.f32 0.0, %v1293
        %1295 = vmatmul.bf16.gmra.mxu0 %v1270
        %v1296 = vpop.f32.mrf.mxu0
        %v1297 = vadd.f32 0.0, %v1296
        %v1298 = vpop.f32.mrf.mxu0
        %v1299 = vadd.f32 0.0, %v1298
        %1300 = vmatmul.bf16.gmra.mxu0 %v1273
        %v1301 = vpop.f32.mrf.mxu0
        %v1302 = vadd.f32 0.0, %v1301
        %v1303 = vpop.f32.mrf.mxu0
        %v1304 = vadd.f32 0.0, %v1303
        %1305 = vmatmul.bf16.gmra.mxu0 %v1276
        %v1306 = vpop.f32.mrf.mxu0
        %v1307 = vadd.f32 0.0, %v1306
        %v1308 = vpop.f32.mrf.mxu0
        %v1309 = vadd.f32 0.0, %v1308
        %1310 = vdwg.mxu0
        %v1312 = vsel %vm1265, %v1184, 0
        %v1315 = vsel %vm1265, %v1185, 0
        %v1318 = vsel %vm1265, %v1186, 0
        %v1321 = vsel %vm1265, %v1187, 0
        %v1324 = vsel %vm1278, %v1188, 0
        %1326 = vmatpush.bf16.msra.mxu0 0
        %1327 = vmatpush.bf16.msra.mxu0 0
        %1328 = vmatpush.bf16.msra.mxu0 0
        %1329 = vmatpush.bf16.msra.mxu0 0
        %1330 = vmatpush.bf16.msra.mxu0 0
        %1331 = vmatpush.bf16.msra.mxu0 0
        %1332 = vmatpush.bf16.msra.mxu0 0
        %1333 = vmatpush.bf16.msra.mxu0 %v1324
        %1334 = vmatmul.bf16.gmra.mxu0 %v1312
        %v1335 = vpop.f32.mrf.mxu0
        %v1336 = vadd.f32 %v1292, %v1335
        %v1337 = vpop.f32.mrf.mxu0
        %v1338 = vadd.f32 %v1294, %v1337
        %1339 = vmatmul.bf16.gmra.mxu0 %v1315
        %v1340 = vpop.f32.mrf.mxu0
        %v1341 = vadd.f32 %v1297, %v1340
        %v1342 = vpop.f32.mrf.mxu0
        %v1343 = vadd.f32 %v1299, %v1342
        %1344 = vmatmul.bf16.gmra.mxu0 %v1318
        %v1345 = vpop.f32.mrf.mxu0
        %v1346 = vadd.f32 %v1302, %v1345
        %v1347 = vpop.f32.mrf.mxu0
        %v1348 = vadd.f32 %v1304, %v1347
        %1349 = vmatmul.bf16.gmra.mxu0 %v1321
        %v1350 = vpop.f32.mrf.mxu0
        %v1351 = vadd.f32 %v1307, %v1350
        %v1352 = vpop.f32.mrf.mxu0
        %v1353 = vadd.f32 %v1309, %v1352
        %1354 = vdwg.mxu0
        %s1355 = scalar_lea.vmem %s1, 64
        %v1356 = vld [vmem:[%s1355] sm:$0xf]
        %v1357 = vld [vmem:[%s1355 + $0x4] sm:$0xf]
        %v1358 = vld [vmem:[%s1355 + $0x8] sm:$0xf]
        %v1359 = vld [vmem:[%s1355 + $0xc] sm:$0xf]
        %v1360 = vld [vmem:[%s1355 + $0x10] sm:$0xf]
        %v1361 = vld [vmem:[%s1355 + $0x14] sm:$0xf]
        %v1362 = vld [vmem:[%s1355 + $0x18] sm:$0xf]
        %v1363 = vld [vmem:[%s1355 + $0x1c] sm:$0xf]
        %v1372 = vunpack.c.l.b16 %v1356
        %v1373 = vunpack.c.l.b16 %v1357
        %v1374 = vunpack.c.l.b16 %v1358
        %v1375 = vunpack.c.l.b16 %v1359
        %v1376 = vunpack.c.l.b16 %v1360
        %v1377 = vunpack.c.l.b16 %v1361
        %v1378 = vunpack.c.l.b16 %v1362
        %v1379 = vunpack.c.l.b16 %v1363
        %v1380 = vpack.c.b16 %v1373, %v1372
        %v1381 = vpack.c.b16 %v1375, %v1374
        %v1382 = vpack.c.b16 %v1377, %v1376
        %v1383 = vpack.c.b16 %v1379, %v1378
        %v1385 = vsel %vm1142, %v1380, 0
        %v1388 = vsel %vm1142, %v1381, 0
        %v1391 = vsel %vm1142, %v1382, 0
        %v1394 = vsel %vm1142, %v1383, 0
        %1396 = vmatpush.bf16.msra.mxu0 0
        %1397 = vmatpush.bf16.msra.mxu0 0
        %1398 = vmatpush.bf16.msra.mxu0 0
        %1399 = vmatpush.bf16.msra.mxu0 0
        %1400 = vmatpush.bf16.msra.mxu0 %v1113
        %1401 = vmatpush.bf16.msra.mxu0 %v1112
        %1402 = vmatpush.bf16.msra.mxu0 %v1111
        %1403 = vmatpush.bf16.msra.mxu0 %v1110
        %1404 = vmatmul.bf16.gmra.mxu0 %v1385
        %v1405 = vpop.f32.mrf.mxu0
        %v1406 = vadd.f32 0.0, %v1405
        %v1407 = vpop.f32.mrf.mxu0
        %v1408 = vadd.f32 0.0, %v1407
        %1409 = vmatmul.bf16.gmra.mxu0 %v1388
        %v1410 = vpop.f32.mrf.mxu0
        %v1411 = vadd.f32 0.0, %v1410
        %v1412 = vpop.f32.mrf.mxu0
        %v1413 = vadd.f32 0.0, %v1412
        %1414 = vmatmul.bf16.gmra.mxu0 %v1391
        %v1415 = vpop.f32.mrf.mxu0
        %v1416 = vadd.f32 0.0, %v1415
        %v1417 = vpop.f32.mrf.mxu0
        %v1418 = vadd.f32 0.0, %v1417
        %1419 = vmatmul.bf16.gmra.mxu0 %v1394
        %v1420 = vpop.f32.mrf.mxu0
        %v1421 = vadd.f32 0.0, %v1420
        %v1422 = vpop.f32.mrf.mxu0
        %v1423 = vadd.f32 0.0, %v1422
        %1424 = vdwg.mxu0
        %v1425 = vpack.c.bf16 %v1408, %v1406
        %v1426 = vpack.c.bf16 %v1413, %v1411
        %v1427 = vpack.c.bf16 %v1418, %v1416
        %v1428 = vpack.c.bf16 %v1423, %v1421
        %s1429 = scalar_lea.vmem %s4, 4
        %v1430 = vld [vmem:[%s1429] sm:$0x3]
        %v1432 = vsel %vm1265, %v1425, 0
        %v1435 = vsel %vm1265, %v1426, 0
        %v1438 = vsel %vm1265, %v1427, 0
        %v1441 = vsel %vm1265, %v1428, 0
        %v1444 = vsel %vm1278, %v1430, 0
        %1446 = vmatpush.bf16.msra.mxu0 0
        %1447 = vmatpush.bf16.msra.mxu0 0
        %1448 = vmatpush.bf16.msra.mxu0 0
        %1449 = vmatpush.bf16.msra.mxu0 0
        %1450 = vmatpush.bf16.msra.mxu0 0
        %1451 = vmatpush.bf16.msra.mxu0 0
        %1452 = vmatpush.bf16.msra.mxu0 0
        %1453 = vmatpush.bf16.msra.mxu0 %v1444
        %1454 = vmatmul.bf16.gmra.mxu0 %v1432
        %v1455 = vpop.f32.mrf.mxu0
        %v1456 = vadd.f32 0.0, %v1455
        %v1457 = vpop.f32.mrf.mxu0
        %v1458 = vadd.f32 0.0, %v1457
        %1459 = vmatmul.bf16.gmra.mxu0 %v1435
        %v1460 = vpop.f32.mrf.mxu0
        %v1461 = vadd.f32 0.0, %v1460
        %v1462 = vpop.f32.mrf.mxu0
        %v1463 = vadd.f32 0.0, %v1462
        %1464 = vmatmul.bf16.gmra.mxu0 %v1438
        %v1465 = vpop.f32.mrf.mxu0
        %v1466 = vadd.f32 0.0, %v1465
        %v1467 = vpop.f32.mrf.mxu0
        %v1468 = vadd.f32 0.0, %v1467
        %1469 = vmatmul.bf16.gmra.mxu0 %v1441
        %v1470 = vpop.f32.mrf.mxu0
        %v1471 = vadd.f32 0.0, %v1470
        %v1472 = vpop.f32.mrf.mxu0
        %v1473 = vadd.f32 0.0, %v1472
        %1474 = vdwg.mxu0
        %v1475 = vadd.f32 %v1336, %v1456
        %v1476 = vadd.f32 %v1338, %v1458
        %v1477 = vadd.f32 %v1341, %v1461
        %v1478 = vadd.f32 %v1343, %v1463
        %v1479 = vadd.f32 %v1346, %v1466
        %v1480 = vadd.f32 %v1348, %v1468
        %v1481 = vadd.f32 %v1351, %v1471
        %v1482 = vadd.f32 %v1353, %v1473
        %s1483 = scalar_lea.vmem %s1, 96
        %v1484 = vld [vmem:[%s1483] sm:$0xf]
        %v1485 = vld [vmem:[%s1483 + $0x4] sm:$0xf]
        %v1486 = vld [vmem:[%s1483 + $0x8] sm:$0xf]
        %v1487 = vld [vmem:[%s1483 + $0xc] sm:$0xf]
        %v1488 = vld [vmem:[%s1483 + $0x10] sm:$0xf]
        %v1489 = vld [vmem:[%s1483 + $0x14] sm:$0xf]
        %v1490 = vld [vmem:[%s1483 + $0x18] sm:$0xf]
        %v1491 = vld [vmem:[%s1483 + $0x1c] sm:$0xf]
        %v1500 = vunpack.c.l.b16 %v1484
        %v1501 = vunpack.c.l.b16 %v1485
        %v1502 = vunpack.c.l.b16 %v1486
        %v1503 = vunpack.c.l.b16 %v1487
        %v1504 = vunpack.c.l.b16 %v1488
        %v1505 = vunpack.c.l.b16 %v1489
        %v1506 = vunpack.c.l.b16 %v1490
        %v1507 = vunpack.c.l.b16 %v1491
        %v1508 = vpack.c.b16 %v1501, %v1500
        %v1509 = vpack.c.b16 %v1503, %v1502
        %v1510 = vpack.c.b16 %v1505, %v1504
        %v1511 = vpack.c.b16 %v1507, %v1506
        %v1513 = vsel %vm1142, %v1508, 0
        %v1516 = vsel %vm1142, %v1509, 0
        %v1519 = vsel %vm1142, %v1510, 0
        %v1522 = vsel %vm1142, %v1511, 0
        %1524 = vmatpush.bf16.msra.mxu0 0
        %1525 = vmatpush.bf16.msra.mxu0 0
        %1526 = vmatpush.bf16.msra.mxu0 0
        %1527 = vmatpush.bf16.msra.mxu0 0
        %1528 = vmatpush.bf16.msra.mxu0 %v1113
        %1529 = vmatpush.bf16.msra.mxu0 %v1112
        %1530 = vmatpush.bf16.msra.mxu0 %v1111
        %1531 = vmatpush.bf16.msra.mxu0 %v1110
        %1532 = vmatmul.bf16.gmra.mxu0 %v1513
        %v1533 = vpop.f32.mrf.mxu0
        %v1534 = vadd.f32 0.0, %v1533
        %v1535 = vpop.f32.mrf.mxu0
        %v1536 = vadd.f32 0.0, %v1535
        %1537 = vmatmul.bf16.gmra.mxu0 %v1516
        %v1538 = vpop.f32.mrf.mxu0
        %v1539 = vadd.f32 0.0, %v1538
        %v1540 = vpop.f32.mrf.mxu0
        %v1541 = vadd.f32 0.0, %v1540
        %1542 = vmatmul.bf16.gmra.mxu0 %v1519
        %v1543 = vpop.f32.mrf.mxu0
        %v1544 = vadd.f32 0.0, %v1543
        %v1545 = vpop.f32.mrf.mxu0
        %v1546 = vadd.f32 0.0, %v1545
        %1547 = vmatmul.bf16.gmra.mxu0 %v1522
        %v1548 = vpop.f32.mrf.mxu0
        %v1549 = vadd.f32 0.0, %v1548
        %v1550 = vpop.f32.mrf.mxu0
        %v1551 = vadd.f32 0.0, %v1550
        %1552 = vdwg.mxu0
        %v1553 = vpack.c.bf16 %v1536, %v1534
        %v1554 = vpack.c.bf16 %v1541, %v1539
        %v1555 = vpack.c.bf16 %v1546, %v1544
        %v1556 = vpack.c.bf16 %v1551, %v1549
        %s1557 = scalar_lea.vmem %s4, 6
        %v1558 = vld [vmem:[%s1557] sm:$0x3]
        %v1560 = vsel %vm1265, %v1553, 0
        %v1563 = vsel %vm1265, %v1554, 0
        %v1566 = vsel %vm1265, %v1555, 0
        %v1569 = vsel %vm1265, %v1556, 0
        %v1572 = vsel %vm1278, %v1558, 0
        %1574 = vmatpush.bf16.msra.mxu0 0
        %1575 = vmatpush.bf16.msra.mxu0 0
        %1576 = vmatpush.bf16.msra.mxu0 0
        %1577 = vmatpush.bf16.msra.mxu0 0
        %1578 = vmatpush.bf16.msra.mxu0 0
        %1579 = vmatpush.bf16.msra.mxu0 0
        %1580 = vmatpush.bf16.msra.mxu0 0
        %1581 = vmatpush.bf16.msra.mxu0 %v1572
        %1582 = vmatmul.bf16.gmra.mxu0 %v1560
        %v1583 = vpop.f32.mrf.mxu0
        %v1584 = vadd.f32 0.0, %v1583
        %v1585 = vpop.f32.mrf.mxu0
        %v1586 = vadd.f32 0.0, %v1585
        %1587 = vmatmul.bf16.gmra.mxu0 %v1563
        %v1588 = vpop.f32.mrf.mxu0
        %v1589 = vadd.f32 0.0, %v1588
        %v1590 = vpop.f32.mrf.mxu0
        %v1591 = vadd.f32 0.0, %v1590
        %1592 = vmatmul.bf16.gmra.mxu0 %v1566
        %v1593 = vpop.f32.mrf.mxu0
        %v1594 = vadd.f32 0.0, %v1593
        %v1595 = vpop.f32.mrf.mxu0
        %v1596 = vadd.f32 0.0, %v1595
        %1597 = vmatmul.bf16.gmra.mxu0 %v1569
        %v1598 = vpop.f32.mrf.mxu0
        %v1599 = vadd.f32 0.0, %v1598
        %v1600 = vpop.f32.mrf.mxu0
        %v1601 = vadd.f32 0.0, %v1600
        %1602 = vdwg.mxu0
        %v1603 = vadd.f32 %v1475, %v1584
        %v1604 = vadd.f32 %v1476, %v1586
        %v1605 = vadd.f32 %v1477, %v1589
        %v1606 = vadd.f32 %v1478, %v1591
        %v1607 = vadd.f32 %v1479, %v1594
        %v1608 = vadd.f32 %v1480, %v1596
        %v1609 = vadd.f32 %v1481, %v1599
        %v1610 = vadd.f32 %v1482, %v1601
        %s1611 = scalar_lea.vmem %s4, 8
        %v1612 = vld [vmem:[%s1611] sm:$0x3]
        %v1614 = vsel %vm1265, %v1110, 0
        %v1617 = vsel %vm1265, %v1111, 0
        %v1620 = vsel %vm1265, %v1112, 0
        %v1623 = vsel %vm1265, %v1113, 0
        %v1626 = vsel %vm1278, %v1612, 0
        %1628 = vmatpush.bf16.msra.mxu0 0
        %1629 = vmatpush.bf16.msra.mxu0 0
        %1630 = vmatpush.bf16.msra.mxu0 0
        %1631 = vmatpush.bf16.msra.mxu0 0
        %1632 = vmatpush.bf16.msra.mxu0 0
        %1633 = vmatpush.bf16.msra.mxu0 0
        %1634 = vmatpush.bf16.msra.mxu0 0
        %1635 = vmatpush.bf16.msra.mxu0 %v1626
        %1636 = vmatmul.bf16.gmra.mxu0 %v1614
        %v1637 = vpop.f32.mrf.mxu0
        %v1638 = vadd.f32 0.0, %v1637
        %v1639 = vpop.f32.mrf.mxu0
        %v1640 = vadd.f32 0.0, %v1639
        %1641 = vmatmul.bf16.gmra.mxu0 %v1617
        %v1642 = vpop.f32.mrf.mxu0
        %v1643 = vadd.f32 0.0, %v1642
        %v1644 = vpop.f32.mrf.mxu0
        %v1645 = vadd.f32 0.0, %v1644
        %1646 = vmatmul.bf16.gmra.mxu0 %v1620
        %v1647 = vpop.f32.mrf.mxu0
        %v1648 = vadd.f32 0.0, %v1647
        %v1649 = vpop.f32.mrf.mxu0
        %v1650 = vadd.f32 0.0, %v1649
        %1651 = vmatmul.bf16.gmra.mxu0 %v1623
        %v1652 = vpop.f32.mrf.mxu0
        %v1653 = vadd.f32 0.0, %v1652
        %v1654 = vpop.f32.mrf.mxu0
        %v1655 = vadd.f32 0.0, %v1654
        %1656 = vdwg.mxu0
        %v1657 = vadd.f32 %v1603, %v1638
        %v1658 = vadd.f32 %v1604, %v1640
        %v1659 = vadd.f32 %v1605, %v1643
        %v1660 = vadd.f32 %v1606, %v1645
        %v1661 = vadd.f32 %v1607, %v1648
        %v1662 = vadd.f32 %v1608, %v1650
        %v1663 = vadd.f32 %v1609, %v1653
        %v1664 = vadd.f32 %v1610, %v1655
        %s1665 = scalar_lea.vmem %s1, 160
        %v1666 = vld [vmem:[%s1665] sm:$0xf]
        %v1667 = vld [vmem:[%s1665 + $0x4] sm:$0xf]
        %v1668 = vld [vmem:[%s1665 + $0x8] sm:$0xf]
        %v1669 = vld [vmem:[%s1665 + $0xc] sm:$0xf]
        %v1670 = vld [vmem:[%s1665 + $0x10] sm:$0xf]
        %v1671 = vld [vmem:[%s1665 + $0x14] sm:$0xf]
        %v1672 = vld [vmem:[%s1665 + $0x18] sm:$0xf]
        %v1673 = vld [vmem:[%s1665 + $0x1c] sm:$0xf]
        %v1682 = vunpack.c.l.b16 %v1666
        %v1683 = vunpack.c.l.b16 %v1667
        %v1684 = vunpack.c.l.b16 %v1668
        %v1685 = vunpack.c.l.b16 %v1669
        %v1686 = vunpack.c.l.b16 %v1670
        %v1687 = vunpack.c.l.b16 %v1671
        %v1688 = vunpack.c.l.b16 %v1672
        %v1689 = vunpack.c.l.b16 %v1673
        %v1690 = vpack.c.b16 %v1683, %v1682
        %v1691 = vpack.c.b16 %v1685, %v1684
        %v1692 = vpack.c.b16 %v1687, %v1686
        %v1693 = vpack.c.b16 %v1689, %v1688
        %v1695 = vsel %vm1142, %v1690, 0
        %v1698 = vsel %vm1142, %v1691, 0
        %v1701 = vsel %vm1142, %v1692, 0
        %v1704 = vsel %vm1142, %v1693, 0
        %1706 = vmatpush.bf16.msra.mxu0 0
        %1707 = vmatpush.bf16.msra.mxu0 0
        %1708 = vmatpush.bf16.msra.mxu0 0
        %1709 = vmatpush.bf16.msra.mxu0 0
        %1710 = vmatpush.bf16.msra.mxu0 %v1113
        %1711 = vmatpush.bf16.msra.mxu0 %v1112
        %1712 = vmatpush.bf16.msra.mxu0 %v1111
        %1713 = vmatpush.bf16.msra.mxu0 %v1110
        %1714 = vmatmul.bf16.gmra.mxu0 %v1695
        %v1715 = vpop.f32.mrf.mxu0
        %v1716 = vadd.f32 0.0, %v1715
        %v1717 = vpop.f32.mrf.mxu0
        %v1718 = vadd.f32 0.0, %v1717
        %1719 = vmatmul.bf16.gmra.mxu0 %v1698
        %v1720 = vpop.f32.mrf.mxu0
        %v1721 = vadd.f32 0.0, %v1720
        %v1722 = vpop.f32.mrf.mxu0
        %v1723 = vadd.f32 0.0, %v1722
        %1724 = vmatmul.bf16.gmra.mxu0 %v1701
        %v1725 = vpop.f32.mrf.mxu0
        %v1726 = vadd.f32 0.0, %v1725
        %v1727 = vpop.f32.mrf.mxu0
        %v1728 = vadd.f32 0.0, %v1727
        %1729 = vmatmul.bf16.gmra.mxu0 %v1704
        %v1730 = vpop.f32.mrf.mxu0
        %v1731 = vadd.f32 0.0, %v1730
        %v1732 = vpop.f32.mrf.mxu0
        %v1733 = vadd.f32 0.0, %v1732
        %1734 = vdwg.mxu0
        %v1735 = vpack.c.bf16 %v1718, %v1716
        %v1736 = vpack.c.bf16 %v1723, %v1721
        %v1737 = vpack.c.bf16 %v1728, %v1726
        %v1738 = vpack.c.bf16 %v1733, %v1731
        %s1739 = scalar_lea.vmem %s4, 10
        %v1740 = vld [vmem:[%s1739] sm:$0x3]
        %v1742 = vsel %vm1265, %v1735, 0
        %v1745 = vsel %vm1265, %v1736, 0
        %v1748 = vsel %vm1265, %v1737, 0
        %v1751 = vsel %vm1265, %v1738, 0
        %v1754 = vsel %vm1278, %v1740, 0
        %1756 = vmatpush.bf16.msra.mxu0 0
        %1757 = vmatpush.bf16.msra.mxu0 0
        %1758 = vmatpush.bf16.msra.mxu0 0
        %1759 = vmatpush.bf16.msra.mxu0 0
        %1760 = vmatpush.bf16.msra.mxu0 0
        %1761 = vmatpush.bf16.msra.mxu0 0
        %1762 = vmatpush.bf16.msra.mxu0 0
        %1763 = vmatpush.bf16.msra.mxu0 %v1754
        %1764 = vmatmul.bf16.gmra.mxu0 %v1742
        %v1765 = vpop.f32.mrf.mxu0
        %v1766 = vadd.f32 0.0, %v1765
        %v1767 = vpop.f32.mrf.mxu0
        %v1768 = vadd.f32 0.0, %v1767
        %1769 = vmatmul.bf16.gmra.mxu0 %v1745
        %v1770 = vpop.f32.mrf.mxu0
        %v1771 = vadd.f32 0.0, %v1770
        %v1772 = vpop.f32.mrf.mxu0
        %v1773 = vadd.f32 0.0, %v1772
        %1774 = vmatmul.bf16.gmra.mxu0 %v1748
        %v1775 = vpop.f32.mrf.mxu0
        %v1776 = vadd.f32 0.0, %v1775
        %v1777 = vpop.f32.mrf.mxu0
        %v1778 = vadd.f32 0.0, %v1777
        %1779 = vmatmul.bf16.gmra.mxu0 %v1751
        %v1780 = vpop.f32.mrf.mxu0
        %v1781 = vadd.f32 0.0, %v1780
        %v1782 = vpop.f32.mrf.mxu0
        %v1783 = vadd.f32 0.0, %v1782
        %1784 = vdwg.mxu0
        %v1785 = vadd.f32 %v1657, %v1766
        %v1786 = vadd.f32 %v1658, %v1768
        %v1787 = vadd.f32 %v1659, %v1771
        %v1788 = vadd.f32 %v1660, %v1773
        %v1789 = vadd.f32 %v1661, %v1776
        %v1790 = vadd.f32 %v1662, %v1778
        %v1791 = vadd.f32 %v1663, %v1781
        %v1792 = vadd.f32 %v1664, %v1783
        %s1793 = scalar_lea.vmem %s1, 192
        %v1794 = vld [vmem:[%s1793] sm:$0xf]
        %v1795 = vld [vmem:[%s1793 + $0x4] sm:$0xf]
        %v1796 = vld [vmem:[%s1793 + $0x8] sm:$0xf]
        %v1797 = vld [vmem:[%s1793 + $0xc] sm:$0xf]
        %v1798 = vld [vmem:[%s1793 + $0x10] sm:$0xf]
        %v1799 = vld [vmem:[%s1793 + $0x14] sm:$0xf]
        %v1800 = vld [vmem:[%s1793 + $0x18] sm:$0xf]
        %v1801 = vld [vmem:[%s1793 + $0x1c] sm:$0xf]
        %v1810 = vunpack.c.l.b16 %v1794
        %v1811 = vunpack.c.l.b16 %v1795
        %v1812 = vunpack.c.l.b16 %v1796
        %v1813 = vunpack.c.l.b16 %v1797
        %v1814 = vunpack.c.l.b16 %v1798
        %v1815 = vunpack.c.l.b16 %v1799
        %v1816 = vunpack.c.l.b16 %v1800
        %v1817 = vunpack.c.l.b16 %v1801
        %v1818 = vpack.c.b16 %v1811, %v1810
        %v1819 = vpack.c.b16 %v1813, %v1812
        %v1820 = vpack.c.b16 %v1815, %v1814
        %v1821 = vpack.c.b16 %v1817, %v1816
        %v1823 = vsel %vm1142, %v1818, 0
        %v1826 = vsel %vm1142, %v1819, 0
        %v1829 = vsel %vm1142, %v1820, 0
        %v1832 = vsel %vm1142, %v1821, 0
        %1834 = vmatpush.bf16.msra.mxu0 0
        %1835 = vmatpush.bf16.msra.mxu0 0
        %1836 = vmatpush.bf16.msra.mxu0 0
        %1837 = vmatpush.bf16.msra.mxu0 0
        %1838 = vmatpush.bf16.msra.mxu0 %v1113
        %1839 = vmatpush.bf16.msra.mxu0 %v1112
        %1840 = vmatpush.bf16.msra.mxu0 %v1111
        %1841 = vmatpush.bf16.msra.mxu0 %v1110
        %1842 = vmatmul.bf16.gmra.mxu0 %v1823
        %v1843 = vpop.f32.mrf.mxu0
        %v1844 = vadd.f32 0.0, %v1843
        %v1845 = vpop.f32.mrf.mxu0
        %v1846 = vadd.f32 0.0, %v1845
        %1847 = vmatmul.bf16.gmra.mxu0 %v1826
        %v1848 = vpop.f32.mrf.mxu0
        %v1849 = vadd.f32 0.0, %v1848
        %v1850 = vpop.f32.mrf.mxu0
        %v1851 = vadd.f32 0.0, %v1850
        %1852 = vmatmul.bf16.gmra.mxu0 %v1829
        %v1853 = vpop.f32.mrf.mxu0
        %v1854 = vadd.f32 0.0, %v1853
        %v1855 = vpop.f32.mrf.mxu0
        %v1856 = vadd.f32 0.0, %v1855
        %1857 = vmatmul.bf16.gmra.mxu0 %v1832
        %v1858 = vpop.f32.mrf.mxu0
        %v1859 = vadd.f32 0.0, %v1858
        %v1860 = vpop.f32.mrf.mxu0
        %v1861 = vadd.f32 0.0, %v1860
        %1862 = vdwg.mxu0
        %v1863 = vpack.c.bf16 %v1846, %v1844
        %v1864 = vpack.c.bf16 %v1851, %v1849
        %v1865 = vpack.c.bf16 %v1856, %v1854
        %v1866 = vpack.c.bf16 %v1861, %v1859
        %s1867 = scalar_lea.vmem %s4, 12
        %v1868 = vld [vmem:[%s1867] sm:$0x3]
        %v1870 = vsel %vm1265, %v1863, 0
        %v1873 = vsel %vm1265, %v1864, 0
        %v1876 = vsel %vm1265, %v1865, 0
        %v1879 = vsel %vm1265, %v1866, 0
        %v1882 = vsel %vm1278, %v1868, 0
        %1884 = vmatpush.bf16.msra.mxu0 0
        %1885 = vmatpush.bf16.msra.mxu0 0
        %1886 = vmatpush.bf16.msra.mxu0 0
        %1887 = vmatpush.bf16.msra.mxu0 0
        %1888 = vmatpush.bf16.msra.mxu0 0
        %1889 = vmatpush.bf16.msra.mxu0 0
        %1890 = vmatpush.bf16.msra.mxu0 0
        %1891 = vmatpush.bf16.msra.mxu0 %v1882
        %1892 = vmatmul.bf16.gmra.mxu0 %v1870
        %v1893 = vpop.f32.mrf.mxu0
        %v1894 = vadd.f32 0.0, %v1893
        %v1895 = vpop.f32.mrf.mxu0
        %v1896 = vadd.f32 0.0, %v1895
        %1897 = vmatmul.bf16.gmra.mxu0 %v1873
        %v1898 = vpop.f32.mrf.mxu0
        %v1899 = vadd.f32 0.0, %v1898
        %v1900 = vpop.f32.mrf.mxu0
        %v1901 = vadd.f32 0.0, %v1900
        %1902 = vmatmul.bf16.gmra.mxu0 %v1876
        %v1903 = vpop.f32.mrf.mxu0
        %v1904 = vadd.f32 0.0, %v1903
        %v1905 = vpop.f32.mrf.mxu0
        %v1906 = vadd.f32 0.0, %v1905
        %1907 = vmatmul.bf16.gmra.mxu0 %v1879
        %v1908 = vpop.f32.mrf.mxu0
        %v1909 = vadd.f32 0.0, %v1908
        %v1910 = vpop.f32.mrf.mxu0
        %v1911 = vadd.f32 0.0, %v1910
        %1912 = vdwg.mxu0
        %v1913 = vadd.f32 %v1785, %v1894
        %v1914 = vadd.f32 %v1786, %v1896
        %v1915 = vadd.f32 %v1787, %v1899
        %v1916 = vadd.f32 %v1788, %v1901
        %v1917 = vadd.f32 %v1789, %v1904
        %v1918 = vadd.f32 %v1790, %v1906
        %v1919 = vadd.f32 %v1791, %v1909
        %v1920 = vadd.f32 %v1792, %v1911
        %s1921 = scalar_lea.vmem %s1, 224
        %v1922 = vld [vmem:[%s1921] sm:$0xf]
        %v1923 = vld [vmem:[%s1921 + $0x4] sm:$0xf]
        %v1924 = vld [vmem:[%s1921 + $0x8] sm:$0xf]
        %v1925 = vld [vmem:[%s1921 + $0xc] sm:$0xf]
        %v1926 = vld [vmem:[%s1921 + $0x10] sm:$0xf]
        %v1927 = vld [vmem:[%s1921 + $0x14] sm:$0xf]
        %v1928 = vld [vmem:[%s1921 + $0x18] sm:$0xf]
        %v1929 = vld [vmem:[%s1921 + $0x1c] sm:$0xf]
        %v1938 = vunpack.c.l.b16 %v1922
        %v1939 = vunpack.c.l.b16 %v1923
        %v1940 = vunpack.c.l.b16 %v1924
        %v1941 = vunpack.c.l.b16 %v1925
        %v1942 = vunpack.c.l.b16 %v1926
        %v1943 = vunpack.c.l.b16 %v1927
        %v1944 = vunpack.c.l.b16 %v1928
        %v1945 = vunpack.c.l.b16 %v1929
        %v1946 = vpack.c.b16 %v1939, %v1938
        %v1947 = vpack.c.b16 %v1941, %v1940
        %v1948 = vpack.c.b16 %v1943, %v1942
        %v1949 = vpack.c.b16 %v1945, %v1944
        %v1951 = vsel %vm1142, %v1946, 0
        %v1954 = vsel %vm1142, %v1947, 0
        %v1957 = vsel %vm1142, %v1948, 0
        %v1960 = vsel %vm1142, %v1949, 0
        %1962 = vmatpush.bf16.msra.mxu0 0
        %1963 = vmatpush.bf16.msra.mxu0 0
        %1964 = vmatpush.bf16.msra.mxu0 0
        %1965 = vmatpush.bf16.msra.mxu0 0
        %1966 = vmatpush.bf16.msra.mxu0 %v1113
        %1967 = vmatpush.bf16.msra.mxu0 %v1112
        %1968 = vmatpush.bf16.msra.mxu0 %v1111
        %1969 = vmatpush.bf16.msra.mxu0 %v1110
        %1970 = vmatmul.bf16.gmra.mxu0 %v1951
        %v1971 = vpop.f32.mrf.mxu0
        %v1972 = vadd.f32 0.0, %v1971
        %v1973 = vpop.f32.mrf.mxu0
        %v1974 = vadd.f32 0.0, %v1973
        %1975 = vmatmul.bf16.gmra.mxu0 %v1954
        %v1976 = vpop.f32.mrf.mxu0
        %v1977 = vadd.f32 0.0, %v1976
        %v1978 = vpop.f32.mrf.mxu0
        %v1979 = vadd.f32 0.0, %v1978
        %1980 = vmatmul.bf16.gmra.mxu0 %v1957
        %v1981 = vpop.f32.mrf.mxu0
        %v1982 = vadd.f32 0.0, %v1981
        %v1983 = vpop.f32.mrf.mxu0
        %v1984 = vadd.f32 0.0, %v1983
        %1985 = vmatmul.bf16.gmra.mxu0 %v1960
        %v1986 = vpop.f32.mrf.mxu0
        %v1987 = vadd.f32 0.0, %v1986
        %v1988 = vpop.f32.mrf.mxu0
        %v1989 = vadd.f32 0.0, %v1988
        %1990 = vdwg.mxu0
        %v1991 = vpack.c.bf16 %v1974, %v1972
        %v1992 = vpack.c.bf16 %v1979, %v1977
        %v1993 = vpack.c.bf16 %v1984, %v1982
        %v1994 = vpack.c.bf16 %v1989, %v1987
        %s1995 = scalar_lea.vmem %s4, 14
        %v1996 = vld [vmem:[%s1995] sm:$0x3]
        %v1998 = vsel %vm1265, %v1991, 0
        %v2001 = vsel %vm1265, %v1992, 0
        %v2004 = vsel %vm1265, %v1993, 0
        %v2007 = vsel %vm1265, %v1994, 0
        %v2010 = vsel %vm1278, %v1996, 0
        %2012 = vmatpush.bf16.msra.mxu0 0
        %2013 = vmatpush.bf16.msra.mxu0 0
        %2014 = vmatpush.bf16.msra.mxu0 0
        %2015 = vmatpush.bf16.msra.mxu0 0
        %2016 = vmatpush.bf16.msra.mxu0 0
        %2017 = vmatpush.bf16.msra.mxu0 0
        %2018 = vmatpush.bf16.msra.mxu0 0
        %2019 = vmatpush.bf16.msra.mxu0 %v2010
        %2020 = vmatmul.bf16.gmra.mxu0 %v1998
        %v2021 = vpop.f32.mrf.mxu0
        %v2022 = vadd.f32 0.0, %v2021
        %v2023 = vpop.f32.mrf.mxu0
        %v2024 = vadd.f32 0.0, %v2023
        %2025 = vmatmul.bf16.gmra.mxu0 %v2001
        %v2026 = vpop.f32.mrf.mxu0
        %v2027 = vadd.f32 0.0, %v2026
        %v2028 = vpop.f32.mrf.mxu0
        %v2029 = vadd.f32 0.0, %v2028
        %2030 = vmatmul.bf16.gmra.mxu0 %v2004
        %v2031 = vpop.f32.mrf.mxu0
        %v2032 = vadd.f32 0.0, %v2031
        %v2033 = vpop.f32.mrf.mxu0
        %v2034 = vadd.f32 0.0, %v2033
        %2035 = vmatmul.bf16.gmra.mxu0 %v2007
        %v2036 = vpop.f32.mrf.mxu0
        %v2037 = vadd.f32 0.0, %v2036
        %v2038 = vpop.f32.mrf.mxu0
        %v2039 = vadd.f32 0.0, %v2038
        %2040 = vdwg.mxu0
        %v2041 = vadd.f32 %v1913, %v2022
        %v2042 = vadd.f32 %v1914, %v2024
        %v2043 = vadd.f32 %v1915, %v2027
        %v2044 = vadd.f32 %v1916, %v2029
        %v2045 = vadd.f32 %v1917, %v2032
        %v2046 = vadd.f32 %v1918, %v2034
        %v2047 = vadd.f32 %v1919, %v2037
        %v2048 = vadd.f32 %v1920, %v2039
        %s2049 = scalar_lea.vmem %s1, 256
        %v2050 = vld [vmem:[%s2049] sm:$0xf]
        %v2051 = vld [vmem:[%s2049 + $0x4] sm:$0xf]
        %v2052 = vld [vmem:[%s2049 + $0x8] sm:$0xf]
        %v2053 = vld [vmem:[%s2049 + $0xc] sm:$0xf]
        %v2054 = vld [vmem:[%s2049 + $0x10] sm:$0xf]
        %v2055 = vld [vmem:[%s2049 + $0x14] sm:$0xf]
        %v2056 = vld [vmem:[%s2049 + $0x18] sm:$0xf]
        %v2057 = vld [vmem:[%s2049 + $0x1c] sm:$0xf]
        %v2066 = vunpack.c.l.b16 %v2050
        %v2067 = vunpack.c.l.b16 %v2051
        %v2068 = vunpack.c.l.b16 %v2052
        %v2069 = vunpack.c.l.b16 %v2053
        %v2070 = vunpack.c.l.b16 %v2054
        %v2071 = vunpack.c.l.b16 %v2055
        %v2072 = vunpack.c.l.b16 %v2056
        %v2073 = vunpack.c.l.b16 %v2057
        %v2074 = vpack.c.b16 %v2067, %v2066
        %v2075 = vpack.c.b16 %v2069, %v2068
        %v2076 = vpack.c.b16 %v2071, %v2070
        %v2077 = vpack.c.b16 %v2073, %v2072
        %v2079 = vsel %vm1142, %v2074, 0
        %v2082 = vsel %vm1142, %v2075, 0
        %v2085 = vsel %vm1142, %v2076, 0
        %v2088 = vsel %vm1142, %v2077, 0
        %2090 = vmatpush.bf16.msra.mxu0 0
        %2091 = vmatpush.bf16.msra.mxu0 0
        %2092 = vmatpush.bf16.msra.mxu0 0
        %2093 = vmatpush.bf16.msra.mxu0 0
        %2094 = vmatpush.bf16.msra.mxu0 %v1113
        %2095 = vmatpush.bf16.msra.mxu0 %v1112
        %2096 = vmatpush.bf16.msra.mxu0 %v1111
        %2097 = vmatpush.bf16.msra.mxu0 %v1110
        %2098 = vmatmul.bf16.gmra.mxu0 %v2079
        %v2099 = vpop.f32.mrf.mxu0
        %v2100 = vadd.f32 0.0, %v2099
        %v2101 = vpop.f32.mrf.mxu0
        %v2102 = vadd.f32 0.0, %v2101
        %2103 = vmatmul.bf16.gmra.mxu0 %v2082
        %v2104 = vpop.f32.mrf.mxu0
        %v2105 = vadd.f32 0.0, %v2104
        %v2106 = vpop.f32.mrf.mxu0
        %v2107 = vadd.f32 0.0, %v2106
        %2108 = vmatmul.bf16.gmra.mxu0 %v2085
        %v2109 = vpop.f32.mrf.mxu0
        %v2110 = vadd.f32 0.0, %v2109
        %v2111 = vpop.f32.mrf.mxu0
        %v2112 = vadd.f32 0.0, %v2111
        %2113 = vmatmul.bf16.gmra.mxu0 %v2088
        %v2114 = vpop.f32.mrf.mxu0
        %v2115 = vadd.f32 0.0, %v2114
        %v2116 = vpop.f32.mrf.mxu0
        %v2117 = vadd.f32 0.0, %v2116
        %2118 = vdwg.mxu0
        %v2119 = vpack.c.bf16 %v2102, %v2100
        %v2120 = vpack.c.bf16 %v2107, %v2105
        %v2121 = vpack.c.bf16 %v2112, %v2110
        %v2122 = vpack.c.bf16 %v2117, %v2115
        %s2123 = scalar_lea.vmem %s4, 16
        %v2124 = vld [vmem:[%s2123] sm:$0x3]
        %v2126 = vsel %vm1265, %v2119, 0
        %v2129 = vsel %vm1265, %v2120, 0
        %v2132 = vsel %vm1265, %v2121, 0
        %v2135 = vsel %vm1265, %v2122, 0
        %v2138 = vsel %vm1278, %v2124, 0
        %2140 = vmatpush.bf16.msra.mxu0 0
        %2141 = vmatpush.bf16.msra.mxu0 0
        %2142 = vmatpush.bf16.msra.mxu0 0
        %2143 = vmatpush.bf16.msra.mxu0 0
        %2144 = vmatpush.bf16.msra.mxu0 0
        %2145 = vmatpush.bf16.msra.mxu0 0
        %2146 = vmatpush.bf16.msra.mxu0 0
        %2147 = vmatpush.bf16.msra.mxu0 %v2138
        %2148 = vmatmul.bf16.gmra.mxu0 %v2126
        %v2149 = vpop.f32.mrf.mxu0
        %v2150 = vadd.f32 0.0, %v2149
        %v2151 = vpop.f32.mrf.mxu0
        %v2152 = vadd.f32 0.0, %v2151
        %2153 = vmatmul.bf16.gmra.mxu0 %v2129
        %v2154 = vpop.f32.mrf.mxu0
        %v2155 = vadd.f32 0.0, %v2154
        %v2156 = vpop.f32.mrf.mxu0
        %v2157 = vadd.f32 0.0, %v2156
        %2158 = vmatmul.bf16.gmra.mxu0 %v2132
        %v2159 = vpop.f32.mrf.mxu0
        %v2160 = vadd.f32 0.0, %v2159
        %v2161 = vpop.f32.mrf.mxu0
        %v2162 = vadd.f32 0.0, %v2161
        %2163 = vmatmul.bf16.gmra.mxu0 %v2135
        %v2164 = vpop.f32.mrf.mxu0
        %v2165 = vadd.f32 0.0, %v2164
        %v2166 = vpop.f32.mrf.mxu0
        %v2167 = vadd.f32 0.0, %v2166
        %2168 = vdwg.mxu0
        %v2169 = vadd.f32 %v2041, %v2150
        %v2170 = vadd.f32 %v2042, %v2152
        %v2171 = vadd.f32 %v2043, %v2155
        %v2172 = vadd.f32 %v2044, %v2157
        %v2173 = vadd.f32 %v2045, %v2160
        %v2174 = vadd.f32 %v2046, %v2162
        %v2175 = vadd.f32 %v2047, %v2165
        %v2176 = vadd.f32 %v2048, %v2167
        %v2177 = vld [vmem:[%s5] sm:$0x1]
        %v2179 = vperm.slane %v2177, 0
        %v2181 = vadd.f32 %v2169, %v2179
        %v2182 = vadd.f32 %v2170, %v2179
        %v2183 = vadd.f32 %v2171, %v2179
        %v2184 = vadd.f32 %v2172, %v2179
        %v2185 = vadd.f32 %v2173, %v2179
        %v2186 = vadd.f32 %v2174, %v2179
        %v2187 = vadd.f32 %v2175, %v2179
        %v2188 = vadd.f32 %v2176, %v2179
        %v2189 = vmul.f32 %v2181, 0.5
        %v2190 = vmul.f32 %v2182, 0.5
        %v2191 = vmul.f32 %v2183, 0.5
        %v2192 = vmul.f32 %v2184, 0.5
        %v2193 = vmul.f32 %v2185, 0.5
        %v2194 = vmul.f32 %v2186, 0.5
        %v2195 = vmul.f32 %v2187, 0.5
        %v2196 = vmul.f32 %v2188, 0.5
        %v2197 = vmul.f32 %v2181, 0.70710677
        %v2198 = vmul.f32 %v2182, 0.70710677
        %v2199 = vmul.f32 %v2183, 0.70710677
        %v2200 = vmul.f32 %v2184, 0.70710677
        %v2201 = vmul.f32 %v2185, 0.70710677
        %v2202 = vmul.f32 %v2186, 0.70710677
        %v2203 = vmul.f32 %v2187, 0.70710677
        %v2204 = vmul.f32 %v2188, 0.70710677
        %vm2205 = vcmp.ge.f32.partialorder %v2197, 0.0
        %vm2206 = vcmp.ge.f32.partialorder %v2198, 0.0
        %vm2207 = vcmp.ge.f32.partialorder %v2199, 0.0
        %vm2208 = vcmp.ge.f32.partialorder %v2200, 0.0
        %vm2209 = vcmp.ge.f32.partialorder %v2201, 0.0
        %vm2210 = vcmp.ge.f32.partialorder %v2202, 0.0
        %vm2211 = vcmp.ge.f32.partialorder %v2203, 0.0
        %vm2212 = vcmp.ge.f32.partialorder %v2204, 0.0
        %v2213 = vsel %vm2205, 1.0, -1.0
        %v2214 = vsel %vm2206, 1.0, -1.0
        %v2215 = vsel %vm2207, 1.0, -1.0
        %v2216 = vsel %vm2208, 1.0, -1.0
        %v2217 = vsel %vm2209, 1.0, -1.0
        %v2218 = vsel %vm2210, 1.0, -1.0
        %v2219 = vsel %vm2211, 1.0, -1.0
        %v2220 = vsel %vm2212, 1.0, -1.0
        %v2221 = vand.u32 2147483647, %v2197
        %v2222 = vand.u32 2147483647, %v2198
        %v2223 = vand.u32 2147483647, %v2199
        %v2224 = vand.u32 2147483647, %v2200
        %v2225 = vand.u32 2147483647, %v2201
        %v2226 = vand.u32 2147483647, %v2202
        %v2227 = vand.u32 2147483647, %v2203
        %v2228 = vand.u32 2147483647, %v2204
        %v2229 = vmul.f32 %v2221, 0.3275911
        %v2230 = vmul.f32 %v2222, 0.3275911
        %v2231 = vmul.f32 %v2223, 0.3275911
        %v2232 = vmul.f32 %v2224, 0.3275911
        %v2233 = vmul.f32 %v2225, 0.3275911
        %v2234 = vmul.f32 %v2226, 0.3275911
        %v2235 = vmul.f32 %v2227, 0.3275911
        %v2236 = vmul.f32 %v2228, 0.3275911
        %v2237 = vadd.f32 %v2229, 1.0
        %v2238 = vadd.f32 %v2230, 1.0
        %v2239 = vadd.f32 %v2231, 1.0
        %v2240 = vadd.f32 %v2232, 1.0
        %v2241 = vadd.f32 %v2233, 1.0
        %v2242 = vadd.f32 %v2234, 1.0
        %v2243 = vadd.f32 %v2235, 1.0
        %v2244 = vadd.f32 %v2236, 1.0
        %v2245 = vrcp.pop %v2237
        %v2246 = vmul.f32 %v2237, %v2245
        %v2247 = vsub.f32 1.0, %v2246
        %v2248 = vmul.f32 %v2245, %v2247
        %v2249 = vadd.f32 %v2245, %v2248
        %vm2250 = vweird.f32 %v2237
        %vm2251 = vweird.f32 %v2245
        %vm2252 = vmor %vm2250, %vm2251
        %v2253 = vsel %vm2252, %v2245, %v2249
        %v2254 = vand.u32 2147483647, %v2237
        %vm2255 = vcmp.eq.f32.partialorder %v2254, 8.507059e+37
        %v2256 = vand.u32 %v2237, 2147483648
        %v2257 = vor.u32 1.1754944e-38, %v2256
        %v2258 = vsel %vm2255, %v2257, %v2253
        %v2259 = vmul.f32 1.0, %v2258
        %v2260 = vrcp.pop %v2238
        %v2261 = vmul.f32 %v2238, %v2260
        %v2262 = vsub.f32 1.0, %v2261
        %v2263 = vmul.f32 %v2260, %v2262
        %v2264 = vadd.f32 %v2260, %v2263
        %vm2265 = vweird.f32 %v2238
        %vm2266 = vweird.f32 %v2260
        %vm2267 = vmor %vm2265, %vm2266
        %v2268 = vsel %vm2267, %v2260, %v2264
        %v2269 = vand.u32 2147483647, %v2238
        %vm2270 = vcmp.eq.f32.partialorder %v2269, 8.507059e+37
        %v2271 = vand.u32 %v2238, 2147483648
        %v2272 = vor.u32 1.1754944e-38, %v2271
        %v2273 = vsel %vm2270, %v2272, %v2268
        %v2274 = vmul.f32 1.0, %v2273
        %v2275 = vrcp.pop %v2239
        %v2276 = vmul.f32 %v2239, %v2275
        %v2277 = vsub.f32 1.0, %v2276
        %v2278 = vmul.f32 %v2275, %v2277
        %v2279 = vadd.f32 %v2275, %v2278
        %vm2280 = vweird.f32 %v2239
        %vm2281 = vweird.f32 %v2275
        %vm2282 = vmor %vm2280, %vm2281
        %v2283 = vsel %vm2282, %v2275, %v2279
        %v2284 = vand.u32 2147483647, %v2239
        %vm2285 = vcmp.eq.f32.partialorder %v2284, 8.507059e+37
        %v2286 = vand.u32 %v2239, 2147483648
        %v2287 = vor.u32 1.1754944e-38, %v2286
        %v2288 = vsel %vm2285, %v2287, %v2283
        %v2289 = vmul.f32 1.0, %v2288
        %v2290 = vrcp.pop %v2240
        %v2291 = vmul.f32 %v2240, %v2290
        %v2292 = vsub.f32 1.0, %v2291
        %v2293 = vmul.f32 %v2290, %v2292
        %v2294 = vadd.f32 %v2290, %v2293
        %vm2295 = vweird.f32 %v2240
        %vm2296 = vweird.f32 %v2290
        %vm2297 = vmor %vm2295, %vm2296
        %v2298 = vsel %vm2297, %v2290, %v2294
        %v2299 = vand.u32 2147483647, %v2240
        %vm2300 = vcmp.eq.f32.partialorder %v2299, 8.507059e+37
        %v2301 = vand.u32 %v2240, 2147483648
        %v2302 = vor.u32 1.1754944e-38, %v2301
        %v2303 = vsel %vm2300, %v2302, %v2298
        %v2304 = vmul.f32 1.0, %v2303
        %v2305 = vrcp.pop %v2241
        %v2306 = vmul.f32 %v2241, %v2305
        %v2307 = vsub.f32 1.0, %v2306
        %v2308 = vmul.f32 %v2305, %v2307
        %v2309 = vadd.f32 %v2305, %v2308
        %vm2310 = vweird.f32 %v2241
        %vm2311 = vweird.f32 %v2305
        %vm2312 = vmor %vm2310, %vm2311
        %v2313 = vsel %vm2312, %v2305, %v2309
        %v2314 = vand.u32 2147483647, %v2241
        %vm2315 = vcmp.eq.f32.partialorder %v2314, 8.507059e+37
        %v2316 = vand.u32 %v2241, 2147483648
        %v2317 = vor.u32 1.1754944e-38, %v2316
        %v2318 = vsel %vm2315, %v2317, %v2313
        %v2319 = vmul.f32 1.0, %v2318
        %v2320 = vrcp.pop %v2242
        %v2321 = vmul.f32 %v2242, %v2320
        %v2322 = vsub.f32 1.0, %v2321
        %v2323 = vmul.f32 %v2320, %v2322
        %v2324 = vadd.f32 %v2320, %v2323
        %vm2325 = vweird.f32 %v2242
        %vm2326 = vweird.f32 %v2320
        %vm2327 = vmor %vm2325, %vm2326
        %v2328 = vsel %vm2327, %v2320, %v2324
        %v2329 = vand.u32 2147483647, %v2242
        %vm2330 = vcmp.eq.f32.partialorder %v2329, 8.507059e+37
        %v2331 = vand.u32 %v2242, 2147483648
        %v2332 = vor.u32 1.1754944e-38, %v2331
        %v2333 = vsel %vm2330, %v2332, %v2328
        %v2334 = vmul.f32 1.0, %v2333
        %v2335 = vrcp.pop %v2243
        %v2336 = vmul.f32 %v2243, %v2335
        %v2337 = vsub.f32 1.0, %v2336
        %v2338 = vmul.f32 %v2335, %v2337
        %v2339 = vadd.f32 %v2335, %v2338
        %vm2340 = vweird.f32 %v2243
        %vm2341 = vweird.f32 %v2335
        %vm2342 = vmor %vm2340, %vm2341
        %v2343 = vsel %vm2342, %v2335, %v2339
        %v2344 = vand.u32 2147483647, %v2243
        %vm2345 = vcmp.eq.f32.partialorder %v2344, 8.507059e+37
        %v2346 = vand.u32 %v2243, 2147483648
        %v2347 = vor.u32 1.1754944e-38, %v2346
        %v2348 = vsel %vm2345, %v2347, %v2343
        %v2349 = vmul.f32 1.0, %v2348
        %v2350 = vrcp.pop %v2244
        %v2351 = vmul.f32 %v2244, %v2350
        %v2352 = vsub.f32 1.0, %v2351
        %v2353 = vmul.f32 %v2350, %v2352
        %v2354 = vadd.f32 %v2350, %v2353
        %vm2355 = vweird.f32 %v2244
        %vm2356 = vweird.f32 %v2350
        %vm2357 = vmor %vm2355, %vm2356
        %v2358 = vsel %vm2357, %v2350, %v2354
        %v2359 = vand.u32 2147483647, %v2244
        %vm2360 = vcmp.eq.f32.partialorder %v2359, 8.507059e+37
        %v2361 = vand.u32 %v2244, 2147483648
        %v2362 = vor.u32 1.1754944e-38, %v2361
        %v2363 = vsel %vm2360, %v2362, %v2358
        %v2364 = vmul.f32 1.0, %v2363
        %v2365 = vmul.f32 %v2259, 1.0614054
        %v2366 = vmul.f32 %v2274, 1.0614054
        %v2367 = vmul.f32 %v2289, 1.0614054
        %v2368 = vmul.f32 %v2304, 1.0614054
        %v2369 = vmul.f32 %v2319, 1.0614054
        %v2370 = vmul.f32 %v2334, 1.0614054
        %v2371 = vmul.f32 %v2349, 1.0614054
        %v2372 = vmul.f32 %v2364, 1.0614054
        %v2373 = vadd.f32 %v2365, -1.4531521
        %v2374 = vadd.f32 %v2366, -1.4531521
        %v2375 = vadd.f32 %v2367, -1.4531521
        %v2376 = vadd.f32 %v2368, -1.4531521
        %v2377 = vadd.f32 %v2369, -1.4531521
        %v2378 = vadd.f32 %v2370, -1.4531521
        %v2379 = vadd.f32 %v2371, -1.4531521
        %v2380 = vadd.f32 %v2372, -1.4531521
        %v2381 = vmul.f32 %v2373, %v2259
        %v2382 = vmul.f32 %v2374, %v2274
        %v2383 = vmul.f32 %v2375, %v2289
        %v2384 = vmul.f32 %v2376, %v2304
        %v2385 = vmul.f32 %v2377, %v2319
        %v2386 = vmul.f32 %v2378, %v2334
        %v2387 = vmul.f32 %v2379, %v2349
        %v2388 = vmul.f32 %v2380, %v2364
        %v2389 = vadd.f32 %v2381, 1.4214138
        %v2390 = vadd.f32 %v2382, 1.4214138
        %v2391 = vadd.f32 %v2383, 1.4214138
        %v2392 = vadd.f32 %v2384, 1.4214138
        %v2393 = vadd.f32 %v2385, 1.4214138
        %v2394 = vadd.f32 %v2386, 1.4214138
        %v2395 = vadd.f32 %v2387, 1.4214138
        %v2396 = vadd.f32 %v2388, 1.4214138
        %v2397 = vmul.f32 %v2389, %v2259
        %v2398 = vmul.f32 %v2390, %v2274
        %v2399 = vmul.f32 %v2391, %v2289
        %v2400 = vmul.f32 %v2392, %v2304
        %v2401 = vmul.f32 %v2393, %v2319
        %v2402 = vmul.f32 %v2394, %v2334
        %v2403 = vmul.f32 %v2395, %v2349
        %v2404 = vmul.f32 %v2396, %v2364
        %v2405 = vadd.f32 %v2397, -0.28449672
        %v2406 = vadd.f32 %v2398, -0.28449672
        %v2407 = vadd.f32 %v2399, -0.28449672
        %v2408 = vadd.f32 %v2400, -0.28449672
        %v2409 = vadd.f32 %v2401, -0.28449672
        %v2410 = vadd.f32 %v2402, -0.28449672
        %v2411 = vadd.f32 %v2403, -0.28449672
        %v2412 = vadd.f32 %v2404, -0.28449672
        %v2413 = vmul.f32 %v2405, %v2259
        %v2414 = vmul.f32 %v2406, %v2274
        %v2415 = vmul.f32 %v2407, %v2289
        %v2416 = vmul.f32 %v2408, %v2304
        %v2417 = vmul.f32 %v2409, %v2319
        %v2418 = vmul.f32 %v2410, %v2334
        %v2419 = vmul.f32 %v2411, %v2349
        %v2420 = vmul.f32 %v2412, %v2364
        %v2421 = vadd.f32 %v2413, 0.2548296
        %v2422 = vadd.f32 %v2414, 0.2548296
        %v2423 = vadd.f32 %v2415, 0.2548296
        %v2424 = vadd.f32 %v2416, 0.2548296
        %v2425 = vadd.f32 %v2417, 0.2548296
        %v2426 = vadd.f32 %v2418, 0.2548296
        %v2427 = vadd.f32 %v2419, 0.2548296
        %v2428 = vadd.f32 %v2420, 0.2548296
        %v2429 = vmul.f32 %v2421, %v2259
        %v2430 = vmul.f32 %v2422, %v2274
        %v2431 = vmul.f32 %v2423, %v2289
        %v2432 = vmul.f32 %v2424, %v2304
        %v2433 = vmul.f32 %v2425, %v2319
        %v2434 = vmul.f32 %v2426, %v2334
        %v2435 = vmul.f32 %v2427, %v2349
        %v2436 = vmul.f32 %v2428, %v2364
        %v2437 = vsub.f32 0.0, %v2221
        %v2438 = vsub.f32 0.0, %v2222
        %v2439 = vsub.f32 0.0, %v2223
        %v2440 = vsub.f32 0.0, %v2224
        %v2441 = vsub.f32 0.0, %v2225
        %v2442 = vsub.f32 0.0, %v2226
        %v2443 = vsub.f32 0.0, %v2227
        %v2444 = vsub.f32 0.0, %v2228
        %v2445 = vmul.f32 %v2437, %v2221
        %v2446 = vmul.f32 %v2438, %v2222
        %v2447 = vmul.f32 %v2439, %v2223
        %v2448 = vmul.f32 %v2440, %v2224
        %v2449 = vmul.f32 %v2441, %v2225
        %v2450 = vmul.f32 %v2442, %v2226
        %v2451 = vmul.f32 %v2443, %v2227
        %v2452 = vmul.f32 %v2444, %v2228
        %v2453 = vmul.f32 %v2445, 1.442695
        %v2454 = vpow.pop %v2453
        %v2455 = vmul.f32 %v2446, 1.442695
        %v2456 = vpow.pop %v2455
        %v2457 = vmul.f32 %v2447, 1.442695
        %v2458 = vpow.pop %v2457
        %v2459 = vmul.f32 %v2448, 1.442695
        %v2460 = vpow.pop %v2459
        %v2461 = vmul.f32 %v2449, 1.442695
        %v2462 = vpow.pop %v2461
        %v2463 = vmul.f32 %v2450, 1.442695
        %v2464 = vpow.pop %v2463
        %v2465 = vmul.f32 %v2451, 1.442695
        %v2466 = vpow.pop %v2465
        %v2467 = vmul.f32 %v2452, 1.442695
        %v2468 = vpow.pop %v2467
        %v2469 = vmul.f32 %v2429, %v2454
        %v2470 = vmul.f32 %v2430, %v2456
        %v2471 = vmul.f32 %v2431, %v2458
        %v2472 = vmul.f32 %v2432, %v2460
        %v2473 = vmul.f32 %v2433, %v2462
        %v2474 = vmul.f32 %v2434, %v2464
        %v2475 = vmul.f32 %v2435, %v2466
        %v2476 = vmul.f32 %v2436, %v2468
        %v2477 = vsub.f32 1.0, %v2469
        %v2478 = vsub.f32 1.0, %v2470
        %v2479 = vsub.f32 1.0, %v2471
        %v2480 = vsub.f32 1.0, %v2472
        %v2481 = vsub.f32 1.0, %v2473
        %v2482 = vsub.f32 1.0, %v2474
        %v2483 = vsub.f32 1.0, %v2475
        %v2484 = vsub.f32 1.0, %v2476
        %v2485 = vmul.f32 %v2213, %v2477
        %v2486 = vmul.f32 %v2214, %v2478
        %v2487 = vmul.f32 %v2215, %v2479
        %v2488 = vmul.f32 %v2216, %v2480
        %v2489 = vmul.f32 %v2217, %v2481
        %v2490 = vmul.f32 %v2218, %v2482
        %v2491 = vmul.f32 %v2219, %v2483
        %v2492 = vmul.f32 %v2220, %v2484
        %v2493 = vadd.f32 %v2485, 1.0
        %v2494 = vadd.f32 %v2486, 1.0
        %v2495 = vadd.f32 %v2487, 1.0
        %v2496 = vadd.f32 %v2488, 1.0
        %v2497 = vadd.f32 %v2489, 1.0
        %v2498 = vadd.f32 %v2490, 1.0
        %v2499 = vadd.f32 %v2491, 1.0
        %v2500 = vadd.f32 %v2492, 1.0
        %v2501 = vmul.f32 %v2189, %v2493
        %v2502 = vmul.f32 %v2190, %v2494
        %v2503 = vmul.f32 %v2191, %v2495
        %v2504 = vmul.f32 %v2192, %v2496
        %v2505 = vmul.f32 %v2193, %v2497
        %v2506 = vmul.f32 %v2194, %v2498
        %v2507 = vmul.f32 %v2195, %v2499
        %v2508 = vmul.f32 %v2196, %v2500
        %v2509 = vpack.c.bf16 %v2502, %v2501
        %v2510 = vpack.c.bf16 %v2504, %v2503
        %v2511 = vpack.c.bf16 %v2506, %v2505
        %v2512 = vpack.c.bf16 %v2508, %v2507
        %2513 = vmatpush.bf16.msra.mxu0 0
        %2514 = vmatpush.bf16.msra.mxu0 0
        %2515 = vmatpush.bf16.msra.mxu0 0
        %2516 = vmatpush.bf16.msra.mxu0 0
        %2517 = vmatpush.bf16.msra.mxu0 %v2512
        %2518 = vmatpush.bf16.msra.mxu0 %v2511
        %2519 = vmatpush.bf16.msra.mxu0 %v2510
        %2520 = vmatpush.bf16.msra.mxu0 %v2509
        %2521 = vmatmul.bf16.gmra.mxu0 %v1144
        %v2522 = vpop.f32.mrf.mxu0
        %v2523 = vadd.f32 0.0, %v2522
        %v2524 = vpop.f32.mrf.mxu0
        %v2525 = vadd.f32 0.0, %v2524
        %2526 = vmatmul.bf16.gmra.mxu0 %v1147
        %v2527 = vpop.f32.mrf.mxu0
        %v2528 = vadd.f32 0.0, %v2527
        %v2529 = vpop.f32.mrf.mxu0
        %v2530 = vadd.f32 0.0, %v2529
        %2531 = vmatmul.bf16.gmra.mxu0 %v1150
        %v2532 = vpop.f32.mrf.mxu0
        %v2533 = vadd.f32 0.0, %v2532
        %v2534 = vpop.f32.mrf.mxu0
        %v2535 = vadd.f32 0.0, %v2534
        %2536 = vmatmul.bf16.gmra.mxu0 %v1153
        %v2537 = vpop.f32.mrf.mxu0
        %v2538 = vadd.f32 0.0, %v2537
        %v2539 = vpop.f32.mrf.mxu0
        %v2540 = vadd.f32 0.0, %v2539
        %2541 = vdwg.mxu0
        %v2542 = vpack.c.bf16 %v2525, %v2523
        %v2543 = vpack.c.bf16 %v2530, %v2528
        %v2544 = vpack.c.bf16 %v2535, %v2533
        %v2545 = vpack.c.bf16 %v2540, %v2538
        %v2546 = vld [vmem:[#allocation4] sm:$0x3]
        %2547 = vmatpush.bf16.msra.mxu0 0
        %2548 = vmatpush.bf16.msra.mxu0 0
        %2549 = vmatpush.bf16.msra.mxu0 0
        %2550 = vmatpush.bf16.msra.mxu0 0
        %2551 = vmatpush.bf16.msra.mxu0 %v2512
        %2552 = vmatpush.bf16.msra.mxu0 %v2511
        %2553 = vmatpush.bf16.msra.mxu0 %v2510
        %2554 = vmatpush.bf16.msra.mxu0 %v2509
        %2555 = vmatmul.bf16.gmra.mxu0 %v1219
        %v2556 = vpop.f32.mrf.mxu0
        %v2557 = vadd.f32 0.0, %v2556
        %v2558 = vpop.f32.mrf.mxu0
        %v2559 = vadd.f32 0.0, %v2558
        %2560 = vmatmul.bf16.gmra.mxu0 %v1222
        %v2561 = vpop.f32.mrf.mxu0
        %v2562 = vadd.f32 0.0, %v2561
        %v2563 = vpop.f32.mrf.mxu0
        %v2564 = vadd.f32 0.0, %v2563
        %2565 = vmatmul.bf16.gmra.mxu0 %v1225
        %v2566 = vpop.f32.mrf.mxu0
        %v2567 = vadd.f32 0.0, %v2566
        %v2568 = vpop.f32.mrf.mxu0
        %v2569 = vadd.f32 0.0, %v2568
        %2570 = vmatmul.bf16.gmra.mxu0 %v1228
        %v2571 = vpop.f32.mrf.mxu0
        %v2572 = vadd.f32 0.0, %v2571
        %v2573 = vpop.f32.mrf.mxu0
        %v2574 = vadd.f32 0.0, %v2573
        %2575 = vdwg.mxu0
        %v2576 = vpack.c.bf16 %v2559, %v2557
        %v2577 = vpack.c.bf16 %v2564, %v2562
        %v2578 = vpack.c.bf16 %v2569, %v2567
        %v2579 = vpack.c.bf16 %v2574, %v2572
        %s2580 = scalar_lea.vmem [#allocation4], 2
        %v2581 = vld [vmem:[%s2580] sm:$0x3]
        %v2583 = vsel %vm1265, %v2576, 0
        %v2586 = vsel %vm1265, %v2577, 0
        %v2589 = vsel %vm1265, %v2578, 0
        %v2592 = vsel %vm1265, %v2579, 0
        %v2595 = vsel %vm1278, %v2581, 0
        %2597 = vmatpush.bf16.msra.mxu0 0
        %2598 = vmatpush.bf16.msra.mxu0 0
        %2599 = vmatpush.bf16.msra.mxu0 0
        %2600 = vmatpush.bf16.msra.mxu0 0
        %2601 = vmatpush.bf16.msra.mxu0 0
        %2602 = vmatpush.bf16.msra.mxu0 0
        %2603 = vmatpush.bf16.msra.mxu0 0
        %2604 = vmatpush.bf16.msra.mxu0 %v2595
        %2605 = vmatmul.bf16.gmra.mxu0 %v2583
        %v2606 = vpop.f32.mrf.mxu0
        %v2607 = vadd.f32 0.0, %v2606
        %v2608 = vpop.f32.mrf.mxu0
        %v2609 = vadd.f32 0.0, %v2608
        %2610 = vmatmul.bf16.gmra.mxu0 %v2586
        %v2611 = vpop.f32.mrf.mxu0
        %v2612 = vadd.f32 0.0, %v2611
        %v2613 = vpop.f32.mrf.mxu0
        %v2614 = vadd.f32 0.0, %v2613
        %2615 = vmatmul.bf16.gmra.mxu0 %v2589
        %v2616 = vpop.f32.mrf.mxu0
        %v2617 = vadd.f32 0.0, %v2616
        %v2618 = vpop.f32.mrf.mxu0
        %v2619 = vadd.f32 0.0, %v2618
        %2620 = vmatmul.bf16.gmra.mxu0 %v2592
        %v2621 = vpop.f32.mrf.mxu0
        %v2622 = vadd.f32 0.0, %v2621
        %v2623 = vpop.f32.mrf.mxu0
        %v2624 = vadd.f32 0.0, %v2623
        %2625 = vdwg.mxu0
        %v2627 = vsel %vm1265, %v2542, 0
        %v2630 = vsel %vm1265, %v2543, 0
        %v2633 = vsel %vm1265, %v2544, 0
        %v2636 = vsel %vm1265, %v2545, 0
        %v2639 = vsel %vm1278, %v2546, 0
        %2641 = vmatpush.bf16.msra.mxu0 0
        %2642 = vmatpush.bf16.msra.mxu0 0
        %2643 = vmatpush.bf16.msra.mxu0 0
        %2644 = vmatpush.bf16.msra.mxu0 0
        %2645 = vmatpush.bf16.msra.mxu0 0
        %2646 = vmatpush.bf16.msra.mxu0 0
        %2647 = vmatpush.bf16.msra.mxu0 0
        %2648 = vmatpush.bf16.msra.mxu0 %v2639
        %2649 = vmatmul.bf16.gmra.mxu0 %v2627
        %v2650 = vpop.f32.mrf.mxu0
        %v2651 = vadd.f32 %v2607, %v2650
        %v2652 = vpop.f32.mrf.mxu0
        %v2653 = vadd.f32 %v2609, %v2652
        %2654 = vmatmul.bf16.gmra.mxu0 %v2630
        %v2655 = vpop.f32.mrf.mxu0
        %v2656 = vadd.f32 %v2612, %v2655
        %v2657 = vpop.f32.mrf.mxu0
        %v2658 = vadd.f32 %v2614, %v2657
        %2659 = vmatmul.bf16.gmra.mxu0 %v2633
        %v2660 = vpop.f32.mrf.mxu0
        %v2661 = vadd.f32 %v2617, %v2660
        %v2662 = vpop.f32.mrf.mxu0
        %v2663 = vadd.f32 %v2619, %v2662
        %2664 = vmatmul.bf16.gmra.mxu0 %v2636
        %v2665 = vpop.f32.mrf.mxu0
        %v2666 = vadd.f32 %v2622, %v2665
        %v2667 = vpop.f32.mrf.mxu0
        %v2668 = vadd.f32 %v2624, %v2667
        %2669 = vdwg.mxu0
        %2670 = vmatpush.bf16.msra.mxu0 0
        %2671 = vmatpush.bf16.msra.mxu0 0
        %2672 = vmatpush.bf16.msra.mxu0 0
        %2673 = vmatpush.bf16.msra.mxu0 0
        %2674 = vmatpush.bf16.msra.mxu0 %v2512
        %2675 = vmatpush.bf16.msra.mxu0 %v2511
        %2676 = vmatpush.bf16.msra.mxu0 %v2510
        %2677 = vmatpush.bf16.msra.mxu0 %v2509
        %2678 = vmatmul.bf16.gmra.mxu0 %v1385
        %v2679 = vpop.f32.mrf.mxu0
        %v2680 = vadd.f32 0.0, %v2679
        %v2681 = vpop.f32.mrf.mxu0
        %v2682 = vadd.f32 0.0, %v2681
        %2683 = vmatmul.bf16.gmra.mxu0 %v1388
        %v2684 = vpop.f32.mrf.mxu0
        %v2685 = vadd.f32 0.0, %v2684
        %v2686 = vpop.f32.mrf.mxu0
        %v2687 = vadd.f32 0.0, %v2686
        %2688 = vmatmul.bf16.gmra.mxu0 %v1391
        %v2689 = vpop.f32.mrf.mxu0
        %v2690 = vadd.f32 0.0, %v2689
        %v2691 = vpop.f32.mrf.mxu0
        %v2692 = vadd.f32 0.0, %v2691
        %2693 = vmatmul.bf16.gmra.mxu0 %v1394
        %v2694 = vpop.f32.mrf.mxu0
        %v2695 = vadd.f32 0.0, %v2694
        %v2696 = vpop.f32.mrf.mxu0
        %v2697 = vadd.f32 0.0, %v2696
        %2698 = vdwg.mxu0
        %v2699 = vpack.c.bf16 %v2682, %v2680
        %v2700 = vpack.c.bf16 %v2687, %v2685
        %v2701 = vpack.c.bf16 %v2692, %v2690
        %v2702 = vpack.c.bf16 %v2697, %v2695
        %s2703 = scalar_lea.vmem [#allocation4], 4
        %v2704 = vld [vmem:[%s2703] sm:$0x3]
        %v2706 = vsel %vm1265, %v2699, 0
        %v2709 = vsel %vm1265, %v2700, 0
        %v2712 = vsel %vm1265, %v2701, 0
        %v2715 = vsel %vm1265, %v2702, 0
        %v2718 = vsel %vm1278, %v2704, 0
        %2720 = vmatpush.bf16.msra.mxu0 0
        %2721 = vmatpush.bf16.msra.mxu0 0
        %2722 = vmatpush.bf16.msra.mxu0 0
        %2723 = vmatpush.bf16.msra.mxu0 0
        %2724 = vmatpush.bf16.msra.mxu0 0
        %2725 = vmatpush.bf16.msra.mxu0 0
        %2726 = vmatpush.bf16.msra.mxu0 0
        %2727 = vmatpush.bf16.msra.mxu0 %v2718
        %2728 = vmatmul.bf16.gmra.mxu0 %v2706
        %v2729 = vpop.f32.mrf.mxu0
        %v2730 = vadd.f32 0.0, %v2729
        %v2731 = vpop.f32.mrf.mxu0
        %v2732 = vadd.f32 0.0, %v2731
        %2733 = vmatmul.bf16.gmra.mxu0 %v2709
        %v2734 = vpop.f32.mrf.mxu0
        %v2735 = vadd.f32 0.0, %v2734
        %v2736 = vpop.f32.mrf.mxu0
        %v2737 = vadd.f32 0.0, %v2736
        %2738 = vmatmul.bf16.gmra.mxu0 %v2712
        %v2739 = vpop.f32.mrf.mxu0
        %v2740 = vadd.f32 0.0, %v2739
        %v2741 = vpop.f32.mrf.mxu0
        %v2742 = vadd.f32 0.0, %v2741
        %2743 = vmatmul.bf16.gmra.mxu0 %v2715
        %v2744 = vpop.f32.mrf.mxu0
        %v2745 = vadd.f32 0.0, %v2744
        %v2746 = vpop.f32.mrf.mxu0
        %v2747 = vadd.f32 0.0, %v2746
        %2748 = vdwg.mxu0
        %v2749 = vadd.f32 %v2651, %v2730
        %v2750 = vadd.f32 %v2653, %v2732
        %v2751 = vadd.f32 %v2656, %v2735
        %v2752 = vadd.f32 %v2658, %v2737
        %v2753 = vadd.f32 %v2661, %v2740
        %v2754 = vadd.f32 %v2663, %v2742
        %v2755 = vadd.f32 %v2666, %v2745
        %v2756 = vadd.f32 %v2668, %v2747
        %2757 = vmatpush.bf16.msra.mxu0 0
        %2758 = vmatpush.bf16.msra.mxu0 0
        %2759 = vmatpush.bf16.msra.mxu0 0
        %2760 = vmatpush.bf16.msra.mxu0 0
        %2761 = vmatpush.bf16.msra.mxu0 %v2512
        %2762 = vmatpush.bf16.msra.mxu0 %v2511
        %2763 = vmatpush.bf16.msra.mxu0 %v2510
        %2764 = vmatpush.bf16.msra.mxu0 %v2509
        %2765 = vmatmul.bf16.gmra.mxu0 %v1513
        %v2766 = vpop.f32.mrf.mxu0
        %v2767 = vadd.f32 0.0, %v2766
        %v2768 = vpop.f32.mrf.mxu0
        %v2769 = vadd.f32 0.0, %v2768
        %2770 = vmatmul.bf16.gmra.mxu0 %v1516
        %v2771 = vpop.f32.mrf.mxu0
        %v2772 = vadd.f32 0.0, %v2771
        %v2773 = vpop.f32.mrf.mxu0
        %v2774 = vadd.f32 0.0, %v2773
        %2775 = vmatmul.bf16.gmra.mxu0 %v1519
        %v2776 = vpop.f32.mrf.mxu0
        %v2777 = vadd.f32 0.0, %v2776
        %v2778 = vpop.f32.mrf.mxu0
        %v2779 = vadd.f32 0.0, %v2778
        %2780 = vmatmul.bf16.gmra.mxu0 %v1522
        %v2781 = vpop.f32.mrf.mxu0
        %v2782 = vadd.f32 0.0, %v2781
        %v2783 = vpop.f32.mrf.mxu0
        %v2784 = vadd.f32 0.0, %v2783
        %2785 = vdwg.mxu0
        %v2786 = vpack.c.bf16 %v2769, %v2767
        %v2787 = vpack.c.bf16 %v2774, %v2772
        %v2788 = vpack.c.bf16 %v2779, %v2777
        %v2789 = vpack.c.bf16 %v2784, %v2782
        %s2790 = scalar_lea.vmem [#allocation4], 6
        %v2791 = vld [vmem:[%s2790] sm:$0x3]
        %v2793 = vsel %vm1265, %v2786, 0
        %v2796 = vsel %vm1265, %v2787, 0
        %v2799 = vsel %vm1265, %v2788, 0
        %v2802 = vsel %vm1265, %v2789, 0
        %v2805 = vsel %vm1278, %v2791, 0
        %2807 = vmatpush.bf16.msra.mxu0 0
        %2808 = vmatpush.bf16.msra.mxu0 0
        %2809 = vmatpush.bf16.msra.mxu0 0
        %2810 = vmatpush.bf16.msra.mxu0 0
        %2811 = vmatpush.bf16.msra.mxu0 0
        %2812 = vmatpush.bf16.msra.mxu0 0
        %2813 = vmatpush.bf16.msra.mxu0 0
        %2814 = vmatpush.bf16.msra.mxu0 %v2805
        %2815 = vmatmul.bf16.gmra.mxu0 %v2793
        %v2816 = vpop.f32.mrf.mxu0
        %v2817 = vadd.f32 0.0, %v2816
        %v2818 = vpop.f32.mrf.mxu0
        %v2819 = vadd.f32 0.0, %v2818
        %2820 = vmatmul.bf16.gmra.mxu0 %v2796
        %v2821 = vpop.f32.mrf.mxu0
        %v2822 = vadd.f32 0.0, %v2821
        %v2823 = vpop.f32.mrf.mxu0
        %v2824 = vadd.f32 0.0, %v2823
        %2825 = vmatmul.bf16.gmra.mxu0 %v2799
        %v2826 = vpop.f32.mrf.mxu0
        %v2827 = vadd.f32 0.0, %v2826
        %v2828 = vpop.f32.mrf.mxu0
        %v2829 = vadd.f32 0.0, %v2828
        %2830 = vmatmul.bf16.gmra.mxu0 %v2802
        %v2831 = vpop.f32.mrf.mxu0
        %v2832 = vadd.f32 0.0, %v2831
        %v2833 = vpop.f32.mrf.mxu0
        %v2834 = vadd.f32 0.0, %v2833
        %2835 = vdwg.mxu0
        %v2836 = vadd.f32 %v2749, %v2817
        %v2837 = vadd.f32 %v2750, %v2819
        %v2838 = vadd.f32 %v2751, %v2822
        %v2839 = vadd.f32 %v2752, %v2824
        %v2840 = vadd.f32 %v2753, %v2827
        %v2841 = vadd.f32 %v2754, %v2829
        %v2842 = vadd.f32 %v2755, %v2832
        %v2843 = vadd.f32 %v2756, %v2834
        %s2844 = scalar_lea.vmem [#allocation4], 8
        %v2845 = vld [vmem:[%s2844] sm:$0x3]
        %v2847 = vsel %vm1265, %v2509, 0
        %v2850 = vsel %vm1265, %v2510, 0
        %v2853 = vsel %vm1265, %v2511, 0
        %v2856 = vsel %vm1265, %v2512, 0
        %v2859 = vsel %vm1278, %v2845, 0
        %2861 = vmatpush.bf16.msra.mxu0 0
        %2862 = vmatpush.bf16.msra.mxu0 0
        %2863 = vmatpush.bf16.msra.mxu0 0
        %2864 = vmatpush.bf16.msra.mxu0 0
        %2865 = vmatpush.bf16.msra.mxu0 0
        %2866 = vmatpush.bf16.msra.mxu0 0
        %2867 = vmatpush.bf16.msra.mxu0 0
        %2868 = vmatpush.bf16.msra.mxu0 %v2859
        %2869 = vmatmul.bf16.gmra.mxu0 %v2847
        %v2870 = vpop.f32.mrf.mxu0
        %v2871 = vadd.f32 0.0, %v2870
        %v2872 = vpop.f32.mrf.mxu0
        %v2873 = vadd.f32 0.0, %v2872
        %2874 = vmatmul.bf16.gmra.mxu0 %v2850
        %v2875 = vpop.f32.mrf.mxu0
        %v2876 = vadd.f32 0.0, %v2875
        %v2877 = vpop.f32.mrf.mxu0
        %v2878 = vadd.f32 0.0, %v2877
        %2879 = vmatmul.bf16.gmra.mxu0 %v2853
        %v2880 = vpop.f32.mrf.mxu0
        %v2881 = vadd.f32 0.0, %v2880
        %v2882 = vpop.f32.mrf.mxu0
        %v2883 = vadd.f32 0.0, %v2882
        %2884 = vmatmul.bf16.gmra.mxu0 %v2856
        %v2885 = vpop.f32.mrf.mxu0
        %v2886 = vadd.f32 0.0, %v2885
        %v2887 = vpop.f32.mrf.mxu0
        %v2888 = vadd.f32 0.0, %v2887
        %2889 = vdwg.mxu0
        %v2890 = vadd.f32 %v2836, %v2871
        %v2891 = vadd.f32 %v2837, %v2873
        %v2892 = vadd.f32 %v2838, %v2876
        %v2893 = vadd.f32 %v2839, %v2878
        %v2894 = vadd.f32 %v2840, %v2881
        %v2895 = vadd.f32 %v2841, %v2883
        %v2896 = vadd.f32 %v2842, %v2886
        %v2897 = vadd.f32 %v2843, %v2888
        %2898 = vmatpush.bf16.msra.mxu0 0
        %2899 = vmatpush.bf16.msra.mxu0 0
        %2900 = vmatpush.bf16.msra.mxu0 0
        %2901 = vmatpush.bf16.msra.mxu0 0
        %2902 = vmatpush.bf16.msra.mxu0 %v2512
        %2903 = vmatpush.bf16.msra.mxu0 %v2511
        %2904 = vmatpush.bf16.msra.mxu0 %v2510
        %2905 = vmatpush.bf16.msra.mxu0 %v2509
        %2906 = vmatmul.bf16.gmra.mxu0 %v1695
        %v2907 = vpop.f32.mrf.mxu0
        %v2908 = vadd.f32 0.0, %v2907
        %v2909 = vpop.f32.mrf.mxu0
        %v2910 = vadd.f32 0.0, %v2909
        %2911 = vmatmul.bf16.gmra.mxu0 %v1698
        %v2912 = vpop.f32.mrf.mxu0
        %v2913 = vadd.f32 0.0, %v2912
        %v2914 = vpop.f32.mrf.mxu0
        %v2915 = vadd.f32 0.0, %v2914
        %2916 = vmatmul.bf16.gmra.mxu0 %v1701
        %v2917 = vpop.f32.mrf.mxu0
        %v2918 = vadd.f32 0.0, %v2917
        %v2919 = vpop.f32.mrf.mxu0
        %v2920 = vadd.f32 0.0, %v2919
        %2921 = vmatmul.bf16.gmra.mxu0 %v1704
        %v2922 = vpop.f32.mrf.mxu0
        %v2923 = vadd.f32 0.0, %v2922
        %v2924 = vpop.f32.mrf.mxu0
        %v2925 = vadd.f32 0.0, %v2924
        %2926 = vdwg.mxu0
        %v2927 = vpack.c.bf16 %v2910, %v2908
        %v2928 = vpack.c.bf16 %v2915, %v2913
        %v2929 = vpack.c.bf16 %v2920, %v2918
        %v2930 = vpack.c.bf16 %v2925, %v2923
        %s2931 = scalar_lea.vmem [#allocation4], 10
        %v2932 = vld [vmem:[%s2931] sm:$0x3]
        %v2934 = vsel %vm1265, %v2927, 0
        %v2937 = vsel %vm1265, %v2928, 0
        %v2940 = vsel %vm1265, %v2929, 0
        %v2943 = vsel %vm1265, %v2930, 0
        %v2946 = vsel %vm1278, %v2932, 0
        %2948 = vmatpush.bf16.msra.mxu0 0
        %2949 = vmatpush.bf16.msra.mxu0 0
        %2950 = vmatpush.bf16.msra.mxu0 0
        %2951 = vmatpush.bf16.msra.mxu0 0
        %2952 = vmatpush.bf16.msra.mxu0 0
        %2953 = vmatpush.bf16.msra.mxu0 0
        %2954 = vmatpush.bf16.msra.mxu0 0
        %2955 = vmatpush.bf16.msra.mxu0 %v2946
        %2956 = vmatmul.bf16.gmra.mxu0 %v2934
        %v2957 = vpop.f32.mrf.mxu0
        %v2958 = vadd.f32 0.0, %v2957
        %v2959 = vpop.f32.mrf.mxu0
        %v2960 = vadd.f32 0.0, %v2959
        %2961 = vmatmul.bf16.gmra.mxu0 %v2937
        %v2962 = vpop.f32.mrf.mxu0
        %v2963 = vadd.f32 0.0, %v2962
        %v2964 = vpop.f32.mrf.mxu0
        %v2965 = vadd.f32 0.0, %v2964
        %2966 = vmatmul.bf16.gmra.mxu0 %v2940
        %v2967 = vpop.f32.mrf.mxu0
        %v2968 = vadd.f32 0.0, %v2967
        %v2969 = vpop.f32.mrf.mxu0
        %v2970 = vadd.f32 0.0, %v2969
        %2971 = vmatmul.bf16.gmra.mxu0 %v2943
        %v2972 = vpop.f32.mrf.mxu0
        %v2973 = vadd.f32 0.0, %v2972
        %v2974 = vpop.f32.mrf.mxu0
        %v2975 = vadd.f32 0.0, %v2974
        %2976 = vdwg.mxu0
        %v2977 = vadd.f32 %v2890, %v2958
        %v2978 = vadd.f32 %v2891, %v2960
        %v2979 = vadd.f32 %v2892, %v2963
        %v2980 = vadd.f32 %v2893, %v2965
        %v2981 = vadd.f32 %v2894, %v2968
        %v2982 = vadd.f32 %v2895, %v2970
        %v2983 = vadd.f32 %v2896, %v2973
        %v2984 = vadd.f32 %v2897, %v2975
        %2985 = vmatpush.bf16.msra.mxu0 0
        %2986 = vmatpush.bf16.msra.mxu0 0
        %2987 = vmatpush.bf16.msra.mxu0 0
        %2988 = vmatpush.bf16.msra.mxu0 0
        %2989 = vmatpush.bf16.msra.mxu0 %v2512
        %2990 = vmatpush.bf16.msra.mxu0 %v2511
        %2991 = vmatpush.bf16.msra.mxu0 %v2510
        %2992 = vmatpush.bf16.msra.mxu0 %v2509
        %2993 = vmatmul.bf16.gmra.mxu0 %v1823
        %v2994 = vpop.f32.mrf.mxu0
        %v2995 = vadd.f32 0.0, %v2994
        %v2996 = vpop.f32.mrf.mxu0
        %v2997 = vadd.f32 0.0, %v2996
        %2998 = vmatmul.bf16.gmra.mxu0 %v1826
        %v2999 = vpop.f32.mrf.mxu0
        %v3000 = vadd.f32 0.0, %v2999
        %v3001 = vpop.f32.mrf.mxu0
        %v3002 = vadd.f32 0.0, %v3001
        %3003 = vmatmul.bf16.gmra.mxu0 %v1829
        %v3004 = vpop.f32.mrf.mxu0
        %v3005 = vadd.f32 0.0, %v3004
        %v3006 = vpop.f32.mrf.mxu0
        %v3007 = vadd.f32 0.0, %v3006
        %3008 = vmatmul.bf16.gmra.mxu0 %v1832
        %v3009 = vpop.f32.mrf.mxu0
        %v3010 = vadd.f32 0.0, %v3009
        %v3011 = vpop.f32.mrf.mxu0
        %v3012 = vadd.f32 0.0, %v3011
        %3013 = vdwg.mxu0
        %v3014 = vpack.c.bf16 %v2997, %v2995
        %v3015 = vpack.c.bf16 %v3002, %v3000
        %v3016 = vpack.c.bf16 %v3007, %v3005
        %v3017 = vpack.c.bf16 %v3012, %v3010
        %s3018 = scalar_lea.vmem [#allocation4], 12
        %v3019 = vld [vmem:[%s3018] sm:$0x3]
        %v3021 = vsel %vm1265, %v3014, 0
        %v3024 = vsel %vm1265, %v3015, 0
        %v3027 = vsel %vm1265, %v3016, 0
        %v3030 = vsel %vm1265, %v3017, 0
        %v3033 = vsel %vm1278, %v3019, 0
        %3035 = vmatpush.bf16.msra.mxu0 0
        %3036 = vmatpush.bf16.msra.mxu0 0
        %3037 = vmatpush.bf16.msra.mxu0 0
        %3038 = vmatpush.bf16.msra.mxu0 0
        %3039 = vmatpush.bf16.msra.mxu0 0
        %3040 = vmatpush.bf16.msra.mxu0 0
        %3041 = vmatpush.bf16.msra.mxu0 0
        %3042 = vmatpush.bf16.msra.mxu0 %v3033
        %3043 = vmatmul.bf16.gmra.mxu0 %v3021
        %v3044 = vpop.f32.mrf.mxu0
        %v3045 = vadd.f32 0.0, %v3044
        %v3046 = vpop.f32.mrf.mxu0
        %v3047 = vadd.f32 0.0, %v3046
        %3048 = vmatmul.bf16.gmra.mxu0 %v3024
        %v3049 = vpop.f32.mrf.mxu0
        %v3050 = vadd.f32 0.0, %v3049
        %v3051 = vpop.f32.mrf.mxu0
        %v3052 = vadd.f32 0.0, %v3051
        %3053 = vmatmul.bf16.gmra.mxu0 %v3027
        %v3054 = vpop.f32.mrf.mxu0
        %v3055 = vadd.f32 0.0, %v3054
        %v3056 = vpop.f32.mrf.mxu0
        %v3057 = vadd.f32 0.0, %v3056
        %3058 = vmatmul.bf16.gmra.mxu0 %v3030
        %v3059 = vpop.f32.mrf.mxu0
        %v3060 = vadd.f32 0.0, %v3059
        %v3061 = vpop.f32.mrf.mxu0
        %v3062 = vadd.f32 0.0, %v3061
        %3063 = vdwg.mxu0
        %v3064 = vadd.f32 %v2977, %v3045
        %v3065 = vadd.f32 %v2978, %v3047
        %v3066 = vadd.f32 %v2979, %v3050
        %v3067 = vadd.f32 %v2980, %v3052
        %v3068 = vadd.f32 %v2981, %v3055
        %v3069 = vadd.f32 %v2982, %v3057
        %v3070 = vadd.f32 %v2983, %v3060
        %v3071 = vadd.f32 %v2984, %v3062
        %3072 = vmatpush.bf16.msra.mxu0 0
        %3073 = vmatpush.bf16.msra.mxu0 0
        %3074 = vmatpush.bf16.msra.mxu0 0
        %3075 = vmatpush.bf16.msra.mxu0 0
        %3076 = vmatpush.bf16.msra.mxu0 %v2512
        %3077 = vmatpush.bf16.msra.mxu0 %v2511
        %3078 = vmatpush.bf16.msra.mxu0 %v2510
        %3079 = vmatpush.bf16.msra.mxu0 %v2509
        %3080 = vmatmul.bf16.gmra.mxu0 %v1951
        %v3081 = vpop.f32.mrf.mxu0
        %v3082 = vadd.f32 0.0, %v3081
        %v3083 = vpop.f32.mrf.mxu0
        %v3084 = vadd.f32 0.0, %v3083
        %3085 = vmatmul.bf16.gmra.mxu0 %v1954
        %v3086 = vpop.f32.mrf.mxu0
        %v3087 = vadd.f32 0.0, %v3086
        %v3088 = vpop.f32.mrf.mxu0
        %v3089 = vadd.f32 0.0, %v3088
        %3090 = vmatmul.bf16.gmra.mxu0 %v1957
        %v3091 = vpop.f32.mrf.mxu0
        %v3092 = vadd.f32 0.0, %v3091
        %v3093 = vpop.f32.mrf.mxu0
        %v3094 = vadd.f32 0.0, %v3093
        %3095 = vmatmul.bf16.gmra.mxu0 %v1960
        %v3096 = vpop.f32.mrf.mxu0
        %v3097 = vadd.f32 0.0, %v3096
        %v3098 = vpop.f32.mrf.mxu0
        %v3099 = vadd.f32 0.0, %v3098
        %3100 = vdwg.mxu0
        %v3101 = vpack.c.bf16 %v3084, %v3082
        %v3102 = vpack.c.bf16 %v3089, %v3087
        %v3103 = vpack.c.bf16 %v3094, %v3092
        %v3104 = vpack.c.bf16 %v3099, %v3097
        %s3105 = scalar_lea.vmem [#allocation4], 14
        %v3106 = vld [vmem:[%s3105] sm:$0x3]
        %v3108 = vsel %vm1265, %v3101, 0
        %v3111 = vsel %vm1265, %v3102, 0
        %v3114 = vsel %vm1265, %v3103, 0
        %v3117 = vsel %vm1265, %v3104, 0
        %v3120 = vsel %vm1278, %v3106, 0
        %3122 = vmatpush.bf16.msra.mxu0 0
        %3123 = vmatpush.bf16.msra.mxu0 0
        %3124 = vmatpush.bf16.msra.mxu0 0
        %3125 = vmatpush.bf16.msra.mxu0 0
        %3126 = vmatpush.bf16.msra.mxu0 0
        %3127 = vmatpush.bf16.msra.mxu0 0
        %3128 = vmatpush.bf16.msra.mxu0 0
        %3129 = vmatpush.bf16.msra.mxu0 %v3120
        %3130 = vmatmul.bf16.gmra.mxu0 %v3108
        %v3131 = vpop.f32.mrf.mxu0
        %v3132 = vadd.f32 0.0, %v3131
        %v3133 = vpop.f32.mrf.mxu0
        %v3134 = vadd.f32 0.0, %v3133
        %3135 = vmatmul.bf16.gmra.mxu0 %v3111
        %v3136 = vpop.f32.mrf.mxu0
        %v3137 = vadd.f32 0.0, %v3136
        %v3138 = vpop.f32.mrf.mxu0
        %v3139 = vadd.f32 0.0, %v3138
        %3140 = vmatmul.bf16.gmra.mxu0 %v3114
        %v3141 = vpop.f32.mrf.mxu0
        %v3142 = vadd.f32 0.0, %v3141
        %v3143 = vpop.f32.mrf.mxu0
        %v3144 = vadd.f32 0.0, %v3143
        %3145 = vmatmul.bf16.gmra.mxu0 %v3117
        %v3146 = vpop.f32.mrf.mxu0
        %v3147 = vadd.f32 0.0, %v3146
        %v3148 = vpop.f32.mrf.mxu0
        %v3149 = vadd.f32 0.0, %v3148
        %3150 = vdwg.mxu0
        %v3151 = vadd.f32 %v3064, %v3132
        %v3152 = vadd.f32 %v3065, %v3134
        %v3153 = vadd.f32 %v3066, %v3137
        %v3154 = vadd.f32 %v3067, %v3139
        %v3155 = vadd.f32 %v3068, %v3142
        %v3156 = vadd.f32 %v3069, %v3144
        %v3157 = vadd.f32 %v3070, %v3147
        %v3158 = vadd.f32 %v3071, %v3149
        %3159 = vmatpush.bf16.msra.mxu0 0
        %3160 = vmatpush.bf16.msra.mxu0 0
        %3161 = vmatpush.bf16.msra.mxu0 0
        %3162 = vmatpush.bf16.msra.mxu0 0
        %3163 = vmatpush.bf16.msra.mxu0 %v2512
        %3164 = vmatpush.bf16.msra.mxu0 %v2511
        %3165 = vmatpush.bf16.msra.mxu0 %v2510
        %3166 = vmatpush.bf16.msra.mxu0 %v2509
        %3167 = vmatmul.bf16.gmra.mxu0 %v2079
        %v3168 = vpop.f32.mrf.mxu0
        %v3169 = vadd.f32 0.0, %v3168
        %v3170 = vpop.f32.mrf.mxu0
        %v3171 = vadd.f32 0.0, %v3170
        %3172 = vmatmul.bf16.gmra.mxu0 %v2082
        %v3173 = vpop.f32.mrf.mxu0
        %v3174 = vadd.f32 0.0, %v3173
        %v3175 = vpop.f32.mrf.mxu0
        %v3176 = vadd.f32 0.0, %v3175
        %3177 = vmatmul.bf16.gmra.mxu0 %v2085
        %v3178 = vpop.f32.mrf.mxu0
        %v3179 = vadd.f32 0.0, %v3178
        %v3180 = vpop.f32.mrf.mxu0
        %v3181 = vadd.f32 0.0, %v3180
        %3182 = vmatmul.bf16.gmra.mxu0 %v2088
        %v3183 = vpop.f32.mrf.mxu0
        %v3184 = vadd.f32 0.0, %v3183
        %v3185 = vpop.f32.mrf.mxu0
        %v3186 = vadd.f32 0.0, %v3185
        %3187 = vdwg.mxu0
        %v3188 = vpack.c.bf16 %v3171, %v3169
        %v3189 = vpack.c.bf16 %v3176, %v3174
        %v3190 = vpack.c.bf16 %v3181, %v3179
        %v3191 = vpack.c.bf16 %v3186, %v3184
        %s3192 = scalar_lea.vmem [#allocation4], 16
        %v3193 = vld [vmem:[%s3192] sm:$0x3]
        %v3195 = vsel %vm1265, %v3188, 0
        %v3198 = vsel %vm1265, %v3189, 0
        %v3201 = vsel %vm1265, %v3190, 0
        %v3204 = vsel %vm1265, %v3191, 0
        %v3207 = vsel %vm1278, %v3193, 0
        %3209 = vmatpush.bf16.msra.mxu0 0
        %3210 = vmatpush.bf16.msra.mxu0 0
        %3211 = vmatpush.bf16.msra.mxu0 0
        %3212 = vmatpush.bf16.msra.mxu0 0
        %3213 = vmatpush.bf16.msra.mxu0 0
        %3214 = vmatpush.bf16.msra.mxu0 0
        %3215 = vmatpush.bf16.msra.mxu0 0
        %3216 = vmatpush.bf16.msra.mxu0 %v3207
        %3217 = vmatmul.bf16.gmra.mxu0 %v3195
        %v3218 = vpop.f32.mrf.mxu0
        %v3219 = vadd.f32 0.0, %v3218
        %v3220 = vpop.f32.mrf.mxu0
        %v3221 = vadd.f32 0.0, %v3220
        %3222 = vmatmul.bf16.gmra.mxu0 %v3198
        %v3223 = vpop.f32.mrf.mxu0
        %v3224 = vadd.f32 0.0, %v3223
        %v3225 = vpop.f32.mrf.mxu0
        %v3226 = vadd.f32 0.0, %v3225
        %3227 = vmatmul.bf16.gmra.mxu0 %v3201
        %v3228 = vpop.f32.mrf.mxu0
        %v3229 = vadd.f32 0.0, %v3228
        %v3230 = vpop.f32.mrf.mxu0
        %v3231 = vadd.f32 0.0, %v3230
        %3232 = vmatmul.bf16.gmra.mxu0 %v3204
        %v3233 = vpop.f32.mrf.mxu0
        %v3234 = vadd.f32 0.0, %v3233
        %v3235 = vpop.f32.mrf.mxu0
        %v3236 = vadd.f32 0.0, %v3235
        %3237 = vdwg.mxu0
        %v3238 = vadd.f32 %v3151, %v3219
        %v3239 = vadd.f32 %v3152, %v3221
        %v3240 = vadd.f32 %v3153, %v3224
        %v3241 = vadd.f32 %v3154, %v3226
        %v3242 = vadd.f32 %v3155, %v3229
        %v3243 = vadd.f32 %v3156, %v3231
        %v3244 = vadd.f32 %v3157, %v3234
        %v3245 = vadd.f32 %v3158, %v3236
        %v3246 = vld [vmem:[%s7] sm:$0x1]
        %v3248 = vperm.slane %v3246, 0
        %v3250 = vadd.f32 %v3238, %v3248
        %v3251 = vadd.f32 %v3239, %v3248
        %v3252 = vadd.f32 %v3240, %v3248
        %v3253 = vadd.f32 %v3241, %v3248
        %v3254 = vadd.f32 %v3242, %v3248
        %v3255 = vadd.f32 %v3243, %v3248
        %v3256 = vadd.f32 %v3244, %v3248
        %v3257 = vadd.f32 %v3245, %v3248
        %v3258 = vmul.f32 %v3250, 0.5
        %v3259 = vmul.f32 %v3251, 0.5
        %v3260 = vmul.f32 %v3252, 0.5
        %v3261 = vmul.f32 %v3253, 0.5
        %v3262 = vmul.f32 %v3254, 0.5
        %v3263 = vmul.f32 %v3255, 0.5
        %v3264 = vmul.f32 %v3256, 0.5
        %v3265 = vmul.f32 %v3257, 0.5
        %v3266 = vmul.f32 %v3250, 0.70710677
        %v3267 = vmul.f32 %v3251, 0.70710677
        %v3268 = vmul.f32 %v3252, 0.70710677
        %v3269 = vmul.f32 %v3253, 0.70710677
        %v3270 = vmul.f32 %v3254, 0.70710677
        %v3271 = vmul.f32 %v3255, 0.70710677
        %v3272 = vmul.f32 %v3256, 0.70710677
        %v3273 = vmul.f32 %v3257, 0.70710677
        %vm3274 = vcmp.ge.f32.partialorder %v3266, 0.0
        %vm3275 = vcmp.ge.f32.partialorder %v3267, 0.0
        %vm3276 = vcmp.ge.f32.partialorder %v3268, 0.0
        %vm3277 = vcmp.ge.f32.partialorder %v3269, 0.0
        %vm3278 = vcmp.ge.f32.partialorder %v3270, 0.0
        %vm3279 = vcmp.ge.f32.partialorder %v3271, 0.0
        %vm3280 = vcmp.ge.f32.partialorder %v3272, 0.0
        %vm3281 = vcmp.ge.f32.partialorder %v3273, 0.0
        %v3282 = vsel %vm3274, 1.0, -1.0
        %v3283 = vsel %vm3275, 1.0, -1.0
        %v3284 = vsel %vm3276, 1.0, -1.0
        %v3285 = vsel %vm3277, 1.0, -1.0
        %v3286 = vsel %vm3278, 1.0, -1.0
        %v3287 = vsel %vm3279, 1.0, -1.0
        %v3288 = vsel %vm3280, 1.0, -1.0
        %v3289 = vsel %vm3281, 1.0, -1.0
        %v3290 = vand.u32 2147483647, %v3266
        %v3291 = vand.u32 2147483647, %v3267
        %v3292 = vand.u32 2147483647, %v3268
        %v3293 = vand.u32 2147483647, %v3269
        %v3294 = vand.u32 2147483647, %v3270
        %v3295 = vand.u32 2147483647, %v3271
        %v3296 = vand.u32 2147483647, %v3272
        %v3297 = vand.u32 2147483647, %v3273
        %v3298 = vmul.f32 %v3290, 0.3275911
        %v3299 = vmul.f32 %v3291, 0.3275911
        %v3300 = vmul.f32 %v3292, 0.3275911
        %v3301 = vmul.f32 %v3293, 0.3275911
        %v3302 = vmul.f32 %v3294, 0.3275911
        %v3303 = vmul.f32 %v3295, 0.3275911
        %v3304 = vmul.f32 %v3296, 0.3275911
        %v3305 = vmul.f32 %v3297, 0.3275911
        %v3306 = vadd.f32 %v3298, 1.0
        %v3307 = vadd.f32 %v3299, 1.0
        %v3308 = vadd.f32 %v3300, 1.0
        %v3309 = vadd.f32 %v3301, 1.0
        %v3310 = vadd.f32 %v3302, 1.0
        %v3311 = vadd.f32 %v3303, 1.0
        %v3312 = vadd.f32 %v3304, 1.0
        %v3313 = vadd.f32 %v3305, 1.0
        %v3314 = vrcp.pop %v3306
        %v3315 = vmul.f32 %v3306, %v3314
        %v3316 = vsub.f32 1.0, %v3315
        %v3317 = vmul.f32 %v3314, %v3316
        %v3318 = vadd.f32 %v3314, %v3317
        %vm3319 = vweird.f32 %v3306
        %vm3320 = vweird.f32 %v3314
        %vm3321 = vmor %vm3319, %vm3320
        %v3322 = vsel %vm3321, %v3314, %v3318
        %v3323 = vand.u32 2147483647, %v3306
        %vm3324 = vcmp.eq.f32.partialorder %v3323, 8.507059e+37
        %v3325 = vand.u32 %v3306, 2147483648
        %v3326 = vor.u32 1.1754944e-38, %v3325
        %v3327 = vsel %vm3324, %v3326, %v3322
        %v3328 = vmul.f32 1.0, %v3327
        %v3329 = vrcp.pop %v3307
        %v3330 = vmul.f32 %v3307, %v3329
        %v3331 = vsub.f32 1.0, %v3330
        %v3332 = vmul.f32 %v3329, %v3331
        %v3333 = vadd.f32 %v3329, %v3332
        %vm3334 = vweird.f32 %v3307
        %vm3335 = vweird.f32 %v3329
        %vm3336 = vmor %vm3334, %vm3335
        %v3337 = vsel %vm3336, %v3329, %v3333
        %v3338 = vand.u32 2147483647, %v3307
        %vm3339 = vcmp.eq.f32.partialorder %v3338, 8.507059e+37
        %v3340 = vand.u32 %v3307, 2147483648
        %v3341 = vor.u32 1.1754944e-38, %v3340
        %v3342 = vsel %vm3339, %v3341, %v3337
        %v3343 = vmul.f32 1.0, %v3342
        %v3344 = vrcp.pop %v3308
        %v3345 = vmul.f32 %v3308, %v3344
        %v3346 = vsub.f32 1.0, %v3345
        %v3347 = vmul.f32 %v3344, %v3346
        %v3348 = vadd.f32 %v3344, %v3347
        %vm3349 = vweird.f32 %v3308
        %vm3350 = vweird.f32 %v3344
        %vm3351 = vmor %vm3349, %vm3350
        %v3352 = vsel %vm3351, %v3344, %v3348
        %v3353 = vand.u32 2147483647, %v3308
        %vm3354 = vcmp.eq.f32.partialorder %v3353, 8.507059e+37
        %v3355 = vand.u32 %v3308, 2147483648
        %v3356 = vor.u32 1.1754944e-38, %v3355
        %v3357 = vsel %vm3354, %v3356, %v3352
        %v3358 = vmul.f32 1.0, %v3357
        %v3359 = vrcp.pop %v3309
        %v3360 = vmul.f32 %v3309, %v3359
        %v3361 = vsub.f32 1.0, %v3360
        %v3362 = vmul.f32 %v3359, %v3361
        %v3363 = vadd.f32 %v3359, %v3362
        %vm3364 = vweird.f32 %v3309
        %vm3365 = vweird.f32 %v3359
        %vm3366 = vmor %vm3364, %vm3365
        %v3367 = vsel %vm3366, %v3359, %v3363
        %v3368 = vand.u32 2147483647, %v3309
        %vm3369 = vcmp.eq.f32.partialorder %v3368, 8.507059e+37
        %v3370 = vand.u32 %v3309, 2147483648
        %v3371 = vor.u32 1.1754944e-38, %v3370
        %v3372 = vsel %vm3369, %v3371, %v3367
        %v3373 = vmul.f32 1.0, %v3372
        %v3374 = vrcp.pop %v3310
        %v3375 = vmul.f32 %v3310, %v3374
        %v3376 = vsub.f32 1.0, %v3375
        %v3377 = vmul.f32 %v3374, %v3376
        %v3378 = vadd.f32 %v3374, %v3377
        %vm3379 = vweird.f32 %v3310
        %vm3380 = vweird.f32 %v3374
        %vm3381 = vmor %vm3379, %vm3380
        %v3382 = vsel %vm3381, %v3374, %v3378
        %v3383 = vand.u32 2147483647, %v3310
        %vm3384 = vcmp.eq.f32.partialorder %v3383, 8.507059e+37
        %v3385 = vand.u32 %v3310, 2147483648
        %v3386 = vor.u32 1.1754944e-38, %v3385
        %v3387 = vsel %vm3384, %v3386, %v3382
        %v3388 = vmul.f32 1.0, %v3387
        %v3389 = vrcp.pop %v3311
        %v3390 = vmul.f32 %v3311, %v3389
        %v3391 = vsub.f32 1.0, %v3390
        %v3392 = vmul.f32 %v3389, %v3391
        %v3393 = vadd.f32 %v3389, %v3392
        %vm3394 = vweird.f32 %v3311
        %vm3395 = vweird.f32 %v3389
        %vm3396 = vmor %vm3394, %vm3395
        %v3397 = vsel %vm3396, %v3389, %v3393
        %v3398 = vand.u32 2147483647, %v3311
        %vm3399 = vcmp.eq.f32.partialorder %v3398, 8.507059e+37
        %v3400 = vand.u32 %v3311, 2147483648
        %v3401 = vor.u32 1.1754944e-38, %v3400
        %v3402 = vsel %vm3399, %v3401, %v3397
        %v3403 = vmul.f32 1.0, %v3402
        %v3404 = vrcp.pop %v3312
        %v3405 = vmul.f32 %v3312, %v3404
        %v3406 = vsub.f32 1.0, %v3405
        %v3407 = vmul.f32 %v3404, %v3406
        %v3408 = vadd.f32 %v3404, %v3407
        %vm3409 = vweird.f32 %v3312
        %vm3410 = vweird.f32 %v3404
        %vm3411 = vmor %vm3409, %vm3410
        %v3412 = vsel %vm3411, %v3404, %v3408
        %v3413 = vand.u32 2147483647, %v3312
        %vm3414 = vcmp.eq.f32.partialorder %v3413, 8.507059e+37
        %v3415 = vand.u32 %v3312, 2147483648
        %v3416 = vor.u32 1.1754944e-38, %v3415
        %v3417 = vsel %vm3414, %v3416, %v3412
        %v3418 = vmul.f32 1.0, %v3417
        %v3419 = vrcp.pop %v3313
        %v3420 = vmul.f32 %v3313, %v3419
        %v3421 = vsub.f32 1.0, %v3420
        %v3422 = vmul.f32 %v3419, %v3421
        %v3423 = vadd.f32 %v3419, %v3422
        %vm3424 = vweird.f32 %v3313
        %vm3425 = vweird.f32 %v3419
        %vm3426 = vmor %vm3424, %vm3425
        %v3427 = vsel %vm3426, %v3419, %v3423
        %v3428 = vand.u32 2147483647, %v3313
        %vm3429 = vcmp.eq.f32.partialorder %v3428, 8.507059e+37
        %v3430 = vand.u32 %v3313, 2147483648
        %v3431 = vor.u32 1.1754944e-38, %v3430
        %v3432 = vsel %vm3429, %v3431, %v3427
        %v3433 = vmul.f32 1.0, %v3432
        %v3434 = vmul.f32 %v3328, 1.0614054
        %v3435 = vmul.f32 %v3343, 1.0614054
        %v3436 = vmul.f32 %v3358, 1.0614054
        %v3437 = vmul.f32 %v3373, 1.0614054
        %v3438 = vmul.f32 %v3388, 1.0614054
        %v3439 = vmul.f32 %v3403, 1.0614054
        %v3440 = vmul.f32 %v3418, 1.0614054
        %v3441 = vmul.f32 %v3433, 1.0614054
        %v3442 = vadd.f32 %v3434, -1.4531521
        %v3443 = vadd.f32 %v3435, -1.4531521
        %v3444 = vadd.f32 %v3436, -1.4531521
        %v3445 = vadd.f32 %v3437, -1.4531521
        %v3446 = vadd.f32 %v3438, -1.4531521
        %v3447 = vadd.f32 %v3439, -1.4531521
        %v3448 = vadd.f32 %v3440, -1.4531521
        %v3449 = vadd.f32 %v3441, -1.4531521
        %v3450 = vmul.f32 %v3442, %v3328
        %v3451 = vmul.f32 %v3443, %v3343
        %v3452 = vmul.f32 %v3444, %v3358
        %v3453 = vmul.f32 %v3445, %v3373
        %v3454 = vmul.f32 %v3446, %v3388
        %v3455 = vmul.f32 %v3447, %v3403
        %v3456 = vmul.f32 %v3448, %v3418
        %v3457 = vmul.f32 %v3449, %v3433
        %v3458 = vadd.f32 %v3450, 1.4214138
        %v3459 = vadd.f32 %v3451, 1.4214138
        %v3460 = vadd.f32 %v3452, 1.4214138
        %v3461 = vadd.f32 %v3453, 1.4214138
        %v3462 = vadd.f32 %v3454, 1.4214138
        %v3463 = vadd.f32 %v3455, 1.4214138
        %v3464 = vadd.f32 %v3456, 1.4214138
        %v3465 = vadd.f32 %v3457, 1.4214138
        %v3466 = vmul.f32 %v3458, %v3328
        %v3467 = vmul.f32 %v3459, %v3343
        %v3468 = vmul.f32 %v3460, %v3358
        %v3469 = vmul.f32 %v3461, %v3373
        %v3470 = vmul.f32 %v3462, %v3388
        %v3471 = vmul.f32 %v3463, %v3403
        %v3472 = vmul.f32 %v3464, %v3418
        %v3473 = vmul.f32 %v3465, %v3433
        %v3474 = vadd.f32 %v3466, -0.28449672
        %v3475 = vadd.f32 %v3467, -0.28449672
        %v3476 = vadd.f32 %v3468, -0.28449672
        %v3477 = vadd.f32 %v3469, -0.28449672
        %v3478 = vadd.f32 %v3470, -0.28449672
        %v3479 = vadd.f32 %v3471, -0.28449672
        %v3480 = vadd.f32 %v3472, -0.28449672
        %v3481 = vadd.f32 %v3473, -0.28449672
        %v3482 = vmul.f32 %v3474, %v3328
        %v3483 = vmul.f32 %v3475, %v3343
        %v3484 = vmul.f32 %v3476, %v3358
        %v3485 = vmul.f32 %v3477, %v3373
        %v3486 = vmul.f32 %v3478, %v3388
        %v3487 = vmul.f32 %v3479, %v3403
        %v3488 = vmul.f32 %v3480, %v3418
        %v3489 = vmul.f32 %v3481, %v3433
        %v3490 = vadd.f32 %v3482, 0.2548296
        %v3491 = vadd.f32 %v3483, 0.2548296
        %v3492 = vadd.f32 %v3484, 0.2548296
        %v3493 = vadd.f32 %v3485, 0.2548296
        %v3494 = vadd.f32 %v3486, 0.2548296
        %v3495 = vadd.f32 %v3487, 0.2548296
        %v3496 = vadd.f32 %v3488, 0.2548296
        %v3497 = vadd.f32 %v3489, 0.2548296
        %v3498 = vmul.f32 %v3490, %v3328
        %v3499 = vmul.f32 %v3491, %v3343
        %v3500 = vmul.f32 %v3492, %v3358
        %v3501 = vmul.f32 %v3493, %v3373
        %v3502 = vmul.f32 %v3494, %v3388
        %v3503 = vmul.f32 %v3495, %v3403
        %v3504 = vmul.f32 %v3496, %v3418
        %v3505 = vmul.f32 %v3497, %v3433
        %v3506 = vsub.f32 0.0, %v3290
        %v3507 = vsub.f32 0.0, %v3291
        %v3508 = vsub.f32 0.0, %v3292
        %v3509 = vsub.f32 0.0, %v3293
        %v3510 = vsub.f32 0.0, %v3294
        %v3511 = vsub.f32 0.0, %v3295
        %v3512 = vsub.f32 0.0, %v3296
        %v3513 = vsub.f32 0.0, %v3297
        %v3514 = vmul.f32 %v3506, %v3290
        %v3515 = vmul.f32 %v3507, %v3291
        %v3516 = vmul.f32 %v3508, %v3292
        %v3517 = vmul.f32 %v3509, %v3293
        %v3518 = vmul.f32 %v3510, %v3294
        %v3519 = vmul.f32 %v3511, %v3295
        %v3520 = vmul.f32 %v3512, %v3296
        %v3521 = vmul.f32 %v3513, %v3297
        %v3522 = vmul.f32 %v3514, 1.442695
        %v3523 = vpow.pop %v3522
        %v3524 = vmul.f32 %v3515, 1.442695
        %v3525 = vpow.pop %v3524
        %v3526 = vmul.f32 %v3516, 1.442695
        %v3527 = vpow.pop %v3526
        %v3528 = vmul.f32 %v3517, 1.442695
        %v3529 = vpow.pop %v3528
        %v3530 = vmul.f32 %v3518, 1.442695
        %v3531 = vpow.pop %v3530
        %v3532 = vmul.f32 %v3519, 1.442695
        %v3533 = vpow.pop %v3532
        %v3534 = vmul.f32 %v3520, 1.442695
        %v3535 = vpow.pop %v3534
        %v3536 = vmul.f32 %v3521, 1.442695
        %v3537 = vpow.pop %v3536
        %v3538 = vmul.f32 %v3498, %v3523
        %v3539 = vmul.f32 %v3499, %v3525
        %v3540 = vmul.f32 %v3500, %v3527
        %v3541 = vmul.f32 %v3501, %v3529
        %v3542 = vmul.f32 %v3502, %v3531
        %v3543 = vmul.f32 %v3503, %v3533
        %v3544 = vmul.f32 %v3504, %v3535
        %v3545 = vmul.f32 %v3505, %v3537
        %v3546 = vsub.f32 1.0, %v3538
        %v3547 = vsub.f32 1.0, %v3539
        %v3548 = vsub.f32 1.0, %v3540
        %v3549 = vsub.f32 1.0, %v3541
        %v3550 = vsub.f32 1.0, %v3542
        %v3551 = vsub.f32 1.0, %v3543
        %v3552 = vsub.f32 1.0, %v3544
        %v3553 = vsub.f32 1.0, %v3545
        %v3554 = vmul.f32 %v3282, %v3546
        %v3555 = vmul.f32 %v3283, %v3547
        %v3556 = vmul.f32 %v3284, %v3548
        %v3557 = vmul.f32 %v3285, %v3549
        %v3558 = vmul.f32 %v3286, %v3550
        %v3559 = vmul.f32 %v3287, %v3551
        %v3560 = vmul.f32 %v3288, %v3552
        %v3561 = vmul.f32 %v3289, %v3553
        %v3562 = vadd.f32 %v3554, 1.0
        %v3563 = vadd.f32 %v3555, 1.0
        %v3564 = vadd.f32 %v3556, 1.0
        %v3565 = vadd.f32 %v3557, 1.0
        %v3566 = vadd.f32 %v3558, 1.0
        %v3567 = vadd.f32 %v3559, 1.0
        %v3568 = vadd.f32 %v3560, 1.0
        %v3569 = vadd.f32 %v3561, 1.0
        %v3570 = vmul.f32 %v3258, %v3562
        %v3571 = vmul.f32 %v3259, %v3563
        %v3572 = vmul.f32 %v3260, %v3564
        %v3573 = vmul.f32 %v3261, %v3565
        %v3574 = vmul.f32 %v3262, %v3566
        %v3575 = vmul.f32 %v3263, %v3567
        %v3576 = vmul.f32 %v3264, %v3568
        %v3577 = vmul.f32 %v3265, %v3569
        %v3578 = vld [vmem:[#allocation6] sm:$0x3]
        %v3579 = vpack.c.bf16 %v3571, %v3570
        %v3580 = vpack.c.bf16 %v3573, %v3572
        %v3581 = vpack.c.bf16 %v3575, %v3574
        %v3582 = vpack.c.bf16 %v3577, %v3576
        %v3583 = vld [vmem:[%s9] sm:$0x1]
        %v3585 = vperm.slane %v3583, 0
        %v3588 = vsel %vm1265, %v3579, 0
        %v3591 = vsel %vm1265, %v3580, 0
        %v3594 = vsel %vm1265, %v3581, 0
        %v3597 = vsel %vm1265, %v3582, 0
        %v3600 = vsel %vm1278, %v3578, 0
        %3602 = vmatpush.bf16.msra.mxu0 0
        %3603 = vmatpush.bf16.msra.mxu0 0
        %3604 = vmatpush.bf16.msra.mxu0 0
        %3605 = vmatpush.bf16.msra.mxu0 0
        %3606 = vmatpush.bf16.msra.mxu0 0
        %3607 = vmatpush.bf16.msra.mxu0 0
        %3608 = vmatpush.bf16.msra.mxu0 0
        %3609 = vmatpush.bf16.msra.mxu0 %v3600
        %3610 = vmatmul.bf16.gmra.mxu0 %v3588
        %v3611 = vpop.f32.mrf.mxu0
        %v3612 = vadd.f32 %v3585, %v3611
        %v3613 = vpop.f32.mrf.mxu0
        %v3614 = vadd.f32 %v3585, %v3613
        %3615 = vmatmul.bf16.gmra.mxu0 %v3591
        %v3616 = vpop.f32.mrf.mxu0
        %v3617 = vadd.f32 %v3585, %v3616
        %v3618 = vpop.f32.mrf.mxu0
        %v3619 = vadd.f32 %v3585, %v3618
        %3620 = vmatmul.bf16.gmra.mxu0 %v3594
        %v3621 = vpop.f32.mrf.mxu0
        %v3622 = vadd.f32 %v3585, %v3621
        %v3623 = vpop.f32.mrf.mxu0
        %v3624 = vadd.f32 %v3585, %v3623
        %3625 = vmatmul.bf16.gmra.mxu0 %v3597
        %v3626 = vpop.f32.mrf.mxu0
        %v3627 = vadd.f32 %v3585, %v3626
        %v3628 = vpop.f32.mrf.mxu0
        %v3629 = vadd.f32 %v3585, %v3628
        %3630 = vdwg.mxu0
        %v3631 = vadd.f32 %v407, %v3612
        %v3632 = vadd.f32 %v408, %v3614
        %v3633 = vadd.f32 %v409, %v3617
        %v3634 = vadd.f32 %v410, %v3619
        %v3635 = vadd.f32 %v411, %v3622
        %v3636 = vadd.f32 %v412, %v3624
        %v3637 = vadd.f32 %v413, %v3627
        %v3638 = vadd.f32 %v414, %v3629
        %3639 = vst.msk [vmem:[%s405] sm:$0xff] %vm744, %v3631
        %3640 = vst.msk [vmem:[%s405 + $0x8] sm:$0xff] %vm744, %v3632
        %3641 = vst.msk [vmem:[%s405 + $0x10] sm:$0xff] %vm744, %v3633
        %3642 = vst.msk [vmem:[%s405 + $0x18] sm:$0xff] %vm744, %v3634
        %3643 = vst.msk [vmem:[%s405 + $0x20] sm:$0xff] %vm744, %v3635
        %3644 = vst.msk [vmem:[%s405 + $0x28] sm:$0xff] %vm744, %v3636
        %3645 = vst.msk [vmem:[%s405 + $0x30] sm:$0xff] %vm744, %v3637
        %3646 = vst.msk [vmem:[%s405 + $0x38] sm:$0xff] %vm744, %v3638
        %p3647 = scmp.lt.s32.totalorder %s23, 1
        %s3648 = scalar_select %p3647, %s23, 1
        %s3649 = smul.addr %s3648, 8
        %s3650 = smul.addr %s3649, 8
        %s3651 = scalar_lea.vmem %s10, %s3650
        // Predicated region
        $region73: #{_lambda_.6} parent=59 // pred_check
          %p3652 = pneg %p256
        $region74: #{_lambda_.6} parent=59 // pred_check_branch
          %3654 = sbr.rel (%p3652) target = $region76
        $region75: #{_lambda_.6} parent=59 // pred_region
          _
        $region76: #{_lambda_.6} parent=59 // pred_fallthru
          _
      $region60: #{_lambda_.6} parent=5 // pred_fallthru
        _
      %p3655 = scmp.le.s32.totalorder 2, %s18
      // Predicated region
      $region77: #{_lambda_.6} parent=5 // pred_check
        %p3656 = pneg %p3655
      $region78: #{_lambda_.6} parent=5 // pred_check_branch
        %3658 = sbr.rel (%p3656) target = $region80
      $region79: #{_lambda_.6} parent=5 // pred_region
        %s3659 = ssub.s32 %s18, 2
        // Predicated region
        $region81: #{_lambda_.6} parent=79 // pred_check
          %p3660 = pneg %p262
        $region82: #{_lambda_.6} parent=79 // pred_check_branch
          %3662 = sbr.rel (%p3660) target = $region84
        $region83: #{_lambda_.6} parent=79 // pred_region
          %p3663 = scmp.lt.s32.totalorder %s24, 1
          %s3664 = scalar_select %p3663, %s24, 1
          %s3665 = smul.addr %s3664, 8
          %s3666 = smul.addr %s3665, 8
          %s3667 = scalar_lea.vmem %s10, %s3666
        $region84: #{_lambda_.6} parent=79 // pred_fallthru
          _
      $region80: #{_lambda_.6} parent=5 // pred_fallthru
        _
    $region6: #{_lambda_.6} parent=1 // loop_footer
      %s22 = sadd.s32 1, %s18
    $region7: #{_lambda_.6} parent=1 // loop_footer_branch
      %17 = sbr.rel target = $region3
    $region8: #{_lambda_.6} parent=1 // loop_exit
      _
    %3668 = vsyncpa [#allocation3], 1
    %s3669 = scalar_lea.sflag [#allocation3], 1
    %3670 = vsyncpa %s3669, 1
    %3671 = vsyncpa [#allocation5], 1

</llo_original>
